<compile_context>
chip_gen: v7x
topology: tpu7x:2x2x1
jax: 0.10.0
libtpu: 0.0.40
codegen_flags: <defaults>
</compile_context>

<pallas_src>
import math
import jax
import jax.numpy as jnp
from jax.experimental import pallas as pl
from jax.experimental.pallas import tpu as pltpu


# ----------------------------- Pallas kernel --------------------------------
def _resnet_block_kernel(xp_ref, w1_ref, b1_ref, w2_ref, b2_ref, o_ref):
    # xp_ref: (1, H+2, W+2, C) reflect-padded input, NHWC, f32
    # w*_ref: (9, C, C)  tap-major weights (k = kh*3 + kw, layout [in, out])
    # b*_ref: (1, C)
    # o_ref : (1, H, W, C)
    _, H, W, C = o_ref.shape
    xp = xp_ref[0]                                            # (H+2, W+2, C)

    def conv3x3(pad_img, w_ref, b_ref):
        # 3x3 conv as 9 MXU dots; accumulate in f32.
        acc = jnp.zeros((H * W, C), jnp.float32)
        for k in range(9):
            ki, kj = k // 3, k % 3
            patch = pad_img[ki:ki + H, kj:kj + W, :].reshape(H * W, C)
            acc = acc + jnp.dot(patch, w_ref[k],
                                preferred_element_type=jnp.float32)
        return acc + b_ref[...]                               # (H*W, C)

    def instance_norm(y):
        # Per-channel stats over the spatial rows (biased variance, eps=1e-5),
        # matching nn.InstanceNorm2d(affine=False).
        mean = jnp.mean(y, axis=0, keepdims=True)
        var = jnp.mean(jnp.square(y - mean), axis=0, keepdims=True)
        return (y - mean) * jax.lax.rsqrt(var + 1e-5)

    def reflect_pad1(a):
        # (H, W, C) -> (H+2, W+2, C) reflection pad of 1 (ReflectionPad2d(1)).
        rows = jnp.concatenate([a[1:2], a, a[H - 2:H - 1]], axis=0)
        return jnp.concatenate([rows[:, 1:2], rows, rows[:, W - 2:W - 1]],
                               axis=1)

    h = jnp.maximum(instance_norm(conv3x3(xp, w1_ref, b1_ref)), 0.0)
    h = instance_norm(conv3x3(reflect_pad1(h.reshape(H, W, C)),
                              w2_ref, b2_ref))
    x_center = xp[1:H + 1, 1:W + 1, :].reshape(H * W, C)
    o_ref[0] = (x_center + h).reshape(H, W, C)


# ------------------------------- wrapper -------------------------------------
def resnet_block_forward(x, params):
    """x: (B, C, H, W) f32 NCHW -> (B, C, H, W) f32 (out = x + conv_block(x))."""
    w1, b1, w2, b2 = params
    B, C, H, W = x.shape
    Cp = ((C + 127) // 128) * 128                 # lane-dense channel padding

    x_nhwc = jnp.transpose(x, (0, 2, 3, 1))                       # (B,H,W,C)
    xp = jnp.pad(x_nhwc, ((0, 0), (1, 1), (1, 1), (0, 0)), mode="reflect")
    if Cp != C:
        pc = Cp - C
        xp = jnp.pad(xp, ((0, 0), (0, 0), (0, 0), (0, pc)))
        w1 = jnp.pad(w1, ((0, 0), (0, pc), (0, pc)))
        b1 = jnp.pad(b1, ((0, 0), (0, pc)))
        w2 = jnp.pad(w2, ((0, 0), (0, pc), (0, pc)))
        b2 = jnp.pad(b2, ((0, 0), (0, pc)))

    out = pl.pallas_call(
        _resnet_block_kernel,
        out_shape=jax.ShapeDtypeStruct((B, H, W, Cp), jnp.float32),
        grid_spec=pltpu.PrefetchScalarGridSpec(
            num_scalar_prefetch=0,
            grid=(B,),
            in_specs=[
                pl.BlockSpec((1, H + 2, W + 2, Cp), lambda b: (b, 0, 0, 0)),
                pl.BlockSpec((9, Cp, Cp), lambda b: (0, 0, 0)),
                pl.BlockSpec((1, Cp), lambda b: (0, 0)),
                pl.BlockSpec((9, Cp, Cp), lambda b: (0, 0, 0)),
                pl.BlockSpec((1, Cp), lambda b: (0, 0)),
            ],
            out_specs=pl.BlockSpec((1, H, W, Cp), lambda b: (b, 0, 0, 0)),
        ),
        compiler_params=pltpu.CompilerParams(
            dimension_semantics=("parallel",)),
    )(xp, w1, b1, w2, b2)

    out = out[..., :C]                                            # drop pad
    return jnp.transpose(out, (0, 3, 1, 2))                       # NCHW


# -------------------------- params & JAX reference ---------------------------
def init_resnet_block_params(key, dim):
    """nn.Conv2d-style init; weights stored tap-major as (9, in, out)."""
    bound = 1.0 / math.sqrt(dim * 9)
    params = []
    for _ in range(2):
        key, kw, kb = jax.random.split(key, 3)
        w = jax.random.uniform(kw, (9, dim, dim), jnp.float32, -bound, bound)
        b = jax.random.uniform(kb, (1, dim), jnp.float32, -bound, bound)
        params += [w, b]
    return params


def resnet_block_ref(x, w1, b1, w2, b2):
    """Pure-JAX reference (lax.conv) for correctness checking."""
    B, C, H, W = x.shape

    def conv(xin, w, b):
        wk = w.reshape(3, 3, C, C).transpose(3, 2, 0, 1)     # (out, in, kh, kw)
        xpad = jnp.pad(xin, ((0, 0), (0, 0), (1, 1), (1, 1)), mode="reflect")
        y = jax.lax.conv_general_dilated(
            xpad, wk, (1, 1), "VALID",
            dimension_numbers=("NCHW", "OIHW", "NCHW"))
        return y + b.reshape(1, C, 1, 1)

    def inorm(y):
        m = y.mean(axis=(2, 3), keepdims=True)
        v = jnp.square(y - m).mean(axis=(2, 3), keepdims=True)
        return (y - m) * jax.lax.rsqrt(v + 1e-5)

    h = jax.nn.relu(inorm(conv(x, w1, b1)))
    return x + inorm(conv(h, w2, b2))


# ----------------------------------- main ------------------------------------
if __name__ == "__main__":
    key = jax.random.PRNGKey(0)
    B, C, H, W = 2, 64, 16, 16          # small synthetic ResnetBlock shapes
    k_x, k_p = jax.random.split(key)
    x = jax.random.normal(k_x, (B, C, H, W), jnp.float32)
    params = init_resnet_block_params(k_p, C)

    out = jax.block_until_ready(resnet_block_forward(x, params))
    ref = jax.block_until_ready(resnet_block_ref(x, *params))

    assert out.shape == (B, C, H, W), out.shape
    err = float(jnp.max(jnp.abs(out - ref)))
    assert err < 5e-2, f"max abs error vs JAX reference: {err}"
    print("KERNEL_OK")
</pallas_src>

<mosaic_0001>
module attributes {stable_mosaic.version = 11 : i64} {
  func.func @_resnet_block_kernel(%arg0: i32, %arg1: memref<1x18x18x128xf32, #tpu.memory_space<vmem>>, %arg2: memref<9x128x128xf32, #tpu.memory_space<vmem>>, %arg3: memref<1x128xf32, #tpu.memory_space<vmem>>, %arg4: memref<9x128x128xf32, #tpu.memory_space<vmem>>, %arg5: memref<1x128xf32, #tpu.memory_space<vmem>>, %arg6: memref<1x16x16x128xf32, #tpu.memory_space<vmem>>) attributes {dimension_semantics = [#tpu.dimension_semantics<parallel>], iteration_bounds = array<i64: 2>, scalar_prefetch = 0 : i64, scratch_operands = 0 : i64, tpu.core_type = #tpu.core_type<tc>, window_params = [{transform_indices = @transform_0, window_bounds = array<i64: 1, 18, 18, 128>}, {pipeline_mode = #tpu.pipeline_mode<synchronous>, transform_indices = @transform_1, window_bounds = array<i64: 9, 128, 128>}, {pipeline_mode = #tpu.pipeline_mode<synchronous>, transform_indices = @transform_2, window_bounds = array<i64: 1, 128>}, {pipeline_mode = #tpu.pipeline_mode<synchronous>, transform_indices = @transform_3, window_bounds = array<i64: 9, 128, 128>}, {pipeline_mode = #tpu.pipeline_mode<synchronous>, transform_indices = @transform_4, window_bounds = array<i64: 1, 128>}, {transform_indices = @transform_5, window_bounds = array<i64: 1, 16, 16, 128>}]} {
    %c0 = arith.constant 0 : index
    %c0_0 = arith.constant 0 : index
    %c0_1 = arith.constant 0 : index
    %c0_2 = arith.constant 0 : index
    %0 = vector.load %arg1[%c0, %c0_0, %c0_1, %c0_2] : memref<1x18x18x128xf32, #tpu.memory_space<vmem>>, vector<1x18x18x128xf32>
    %1 = vector.shape_cast %0 : vector<1x18x18x128xf32> to vector<18x18x128xf32>
    %cst = arith.constant 0.000000e+00 : f32
    %2 = vector.broadcast %cst : f32 to vector<256x128xf32>
    %3 = vector.extract_strided_slice %1 {offsets = [0, 0, 0], sizes = [16, 16, 128], strides = [1, 1, 1]} : vector<18x18x128xf32> to vector<16x16x128xf32>
    %4 = vector.shape_cast %3 : vector<16x16x128xf32> to vector<256x128xf32>
    %c0_3 = arith.constant 0 : index
    %c0_4 = arith.constant 0 : index
    %c0_5 = arith.constant 0 : index
    %5 = vector.load %arg2[%c0_3, %c0_4, %c0_5] : memref<9x128x128xf32, #tpu.memory_space<vmem>>, vector<1x128x128xf32>
    %6 = vector.shape_cast %5 : vector<1x128x128xf32> to vector<128x128xf32>
    %cst_6 = arith.constant dense<0.000000e+00> : vector<256x128xf32>
    %7 = tpu.matmul %4, %6, %cst_6 {dimension_numbers = #tpu.dot_dimension_numbers<[1], [0], [0], [1], [0, 0, 1, 1], [], []>} : vector<256x128xf32>, vector<128x128xf32>, vector<256x128xf32> -> vector<256x128xf32>
    %8 = arith.addf %2, %7 : vector<256x128xf32>
    %9 = vector.extract_strided_slice %1 {offsets = [0, 1, 0], sizes = [16, 16, 128], strides = [1, 1, 1]} : vector<18x18x128xf32> to vector<16x16x128xf32>
    %10 = vector.shape_cast %9 : vector<16x16x128xf32> to vector<256x128xf32>
    %c1 = arith.constant 1 : index
    %c0_7 = arith.constant 0 : index
    %c0_8 = arith.constant 0 : index
    %11 = vector.load %arg2[%c1, %c0_7, %c0_8] : memref<9x128x128xf32, #tpu.memory_space<vmem>>, vector<1x128x128xf32>
    %12 = vector.shape_cast %11 : vector<1x128x128xf32> to vector<128x128xf32>
    %cst_9 = arith.constant dense<0.000000e+00> : vector<256x128xf32>
    %13 = tpu.matmul %10, %12, %cst_9 {dimension_numbers = #tpu.dot_dimension_numbers<[1], [0], [0], [1], [0, 0, 1, 1], [], []>} : vector<256x128xf32>, vector<128x128xf32>, vector<256x128xf32> -> vector<256x128xf32>
    %14 = arith.addf %8, %13 : vector<256x128xf32>
    %15 = vector.extract_strided_slice %1 {offsets = [0, 2, 0], sizes = [16, 16, 128], strides = [1, 1, 1]} : vector<18x18x128xf32> to vector<16x16x128xf32>
    %16 = vector.shape_cast %15 : vector<16x16x128xf32> to vector<256x128xf32>
    %c2 = arith.constant 2 : index
    %c0_10 = arith.constant 0 : index
    %c0_11 = arith.constant 0 : index
    %17 = vector.load %arg2[%c2, %c0_10, %c0_11] : memref<9x128x128xf32, #tpu.memory_space<vmem>>, vector<1x128x128xf32>
    %18 = vector.shape_cast %17 : vector<1x128x128xf32> to vector<128x128xf32>
    %cst_12 = arith.constant dense<0.000000e+00> : vector<256x128xf32>
    %19 = tpu.matmul %16, %18, %cst_12 {dimension_numbers = #tpu.dot_dimension_numbers<[1], [0], [0], [1], [0, 0, 1, 1], [], []>} : vector<256x128xf32>, vector<128x128xf32>, vector<256x128xf32> -> vector<256x128xf32>
    %20 = arith.addf %14, %19 : vector<256x128xf32>
    %21 = vector.extract_strided_slice %1 {offsets = [1, 0, 0], sizes = [16, 16, 128], strides = [1, 1, 1]} : vector<18x18x128xf32> to vector<16x16x128xf32>
    %22 = vector.shape_cast %21 : vector<16x16x128xf32> to vector<256x128xf32>
    %c3 = arith.constant 3 : index
    %c0_13 = arith.constant 0 : index
    %c0_14 = arith.constant 0 : index
    %23 = vector.load %arg2[%c3, %c0_13, %c0_14] : memref<9x128x128xf32, #tpu.memory_space<vmem>>, vector<1x128x128xf32>
    %24 = vector.shape_cast %23 : vector<1x128x128xf32> to vector<128x128xf32>
    %cst_15 = arith.constant dense<0.000000e+00> : vector<256x128xf32>
    %25 = tpu.matmul %22, %24, %cst_15 {dimension_numbers = #tpu.dot_dimension_numbers<[1], [0], [0], [1], [0, 0, 1, 1], [], []>} : vector<256x128xf32>, vector<128x128xf32>, vector<256x128xf32> -> vector<256x128xf32>
    %26 = arith.addf %20, %25 : vector<256x128xf32>
    %27 = vector.extract_strided_slice %1 {offsets = [1, 1, 0], sizes = [16, 16, 128], strides = [1, 1, 1]} : vector<18x18x128xf32> to vector<16x16x128xf32>
    %28 = vector.shape_cast %27 : vector<16x16x128xf32> to vector<256x128xf32>
    %c4 = arith.constant 4 : index
    %c0_16 = arith.constant 0 : index
    %c0_17 = arith.constant 0 : index
    %29 = vector.load %arg2[%c4, %c0_16, %c0_17] : memref<9x128x128xf32, #tpu.memory_space<vmem>>, vector<1x128x128xf32>
    %30 = vector.shape_cast %29 : vector<1x128x128xf32> to vector<128x128xf32>
    %cst_18 = arith.constant dense<0.000000e+00> : vector<256x128xf32>
    %31 = tpu.matmul %28, %30, %cst_18 {dimension_numbers = #tpu.dot_dimension_numbers<[1], [0], [0], [1], [0, 0, 1, 1], [], []>} : vector<256x128xf32>, vector<128x128xf32>, vector<256x128xf32> -> vector<256x128xf32>
    %32 = arith.addf %26, %31 : vector<256x128xf32>
    %33 = vector.extract_strided_slice %1 {offsets = [1, 2, 0], sizes = [16, 16, 128], strides = [1, 1, 1]} : vector<18x18x128xf32> to vector<16x16x128xf32>
    %34 = vector.shape_cast %33 : vector<16x16x128xf32> to vector<256x128xf32>
    %c5 = arith.constant 5 : index
    %c0_19 = arith.constant 0 : index
    %c0_20 = arith.constant 0 : index
    %35 = vector.load %arg2[%c5, %c0_19, %c0_20] : memref<9x128x128xf32, #tpu.memory_space<vmem>>, vector<1x128x128xf32>
    %36 = vector.shape_cast %35 : vector<1x128x128xf32> to vector<128x128xf32>
    %cst_21 = arith.constant dense<0.000000e+00> : vector<256x128xf32>
    %37 = tpu.matmul %34, %36, %cst_21 {dimension_numbers = #tpu.dot_dimension_numbers<[1], [0], [0], [1], [0, 0, 1, 1], [], []>} : vector<256x128xf32>, vector<128x128xf32>, vector<256x128xf32> -> vector<256x128xf32>
    %38 = arith.addf %32, %37 : vector<256x128xf32>
    %39 = vector.extract_strided_slice %1 {offsets = [2, 0, 0], sizes = [16, 16, 128], strides = [1, 1, 1]} : vector<18x18x128xf32> to vector<16x16x128xf32>
    %40 = vector.shape_cast %39 : vector<16x16x128xf32> to vector<256x128xf32>
    %c6 = arith.constant 6 : index
    %c0_22 = arith.constant 0 : index
    %c0_23 = arith.constant 0 : index
    %41 = vector.load %arg2[%c6, %c0_22, %c0_23] : memref<9x128x128xf32, #tpu.memory_space<vmem>>, vector<1x128x128xf32>
    %42 = vector.shape_cast %41 : vector<1x128x128xf32> to vector<128x128xf32>
    %cst_24 = arith.constant dense<0.000000e+00> : vector<256x128xf32>
    %43 = tpu.matmul %40, %42, %cst_24 {dimension_numbers = #tpu.dot_dimension_numbers<[1], [0], [0], [1], [0, 0, 1, 1], [], []>} : vector<256x128xf32>, vector<128x128xf32>, vector<256x128xf32> -> vector<256x128xf32>
    %44 = arith.addf %38, %43 : vector<256x128xf32>
    %45 = vector.extract_strided_slice %1 {offsets = [2, 1, 0], sizes = [16, 16, 128], strides = [1, 1, 1]} : vector<18x18x128xf32> to vector<16x16x128xf32>
    %46 = vector.shape_cast %45 : vector<16x16x128xf32> to vector<256x128xf32>
    %c7 = arith.constant 7 : index
    %c0_25 = arith.constant 0 : index
    %c0_26 = arith.constant 0 : index
    %47 = vector.load %arg2[%c7, %c0_25, %c0_26] : memref<9x128x128xf32, #tpu.memory_space<vmem>>, vector<1x128x128xf32>
    %48 = vector.shape_cast %47 : vector<1x128x128xf32> to vector<128x128xf32>
    %cst_27 = arith.constant dense<0.000000e+00> : vector<256x128xf32>
    %49 = tpu.matmul %46, %48, %cst_27 {dimension_numbers = #tpu.dot_dimension_numbers<[1], [0], [0], [1], [0, 0, 1, 1], [], []>} : vector<256x128xf32>, vector<128x128xf32>, vector<256x128xf32> -> vector<256x128xf32>
    %50 = arith.addf %44, %49 : vector<256x128xf32>
    %51 = vector.extract_strided_slice %1 {offsets = [2, 2, 0], sizes = [16, 16, 128], strides = [1, 1, 1]} : vector<18x18x128xf32> to vector<16x16x128xf32>
    %52 = vector.shape_cast %51 : vector<16x16x128xf32> to vector<256x128xf32>
    %c8 = arith.constant 8 : index
    %c0_28 = arith.constant 0 : index
    %c0_29 = arith.constant 0 : index
    %53 = vector.load %arg2[%c8, %c0_28, %c0_29] : memref<9x128x128xf32, #tpu.memory_space<vmem>>, vector<1x128x128xf32>
    %54 = vector.shape_cast %53 : vector<1x128x128xf32> to vector<128x128xf32>
    %cst_30 = arith.constant dense<0.000000e+00> : vector<256x128xf32>
    %55 = tpu.matmul %52, %54, %cst_30 {dimension_numbers = #tpu.dot_dimension_numbers<[1], [0], [0], [1], [0, 0, 1, 1], [], []>} : vector<256x128xf32>, vector<128x128xf32>, vector<256x128xf32> -> vector<256x128xf32>
    %56 = arith.addf %50, %55 : vector<256x128xf32>
    %c0_31 = arith.constant 0 : index
    %c0_32 = arith.constant 0 : index
    %57 = vector.load %arg3[%c0_31, %c0_32] : memref<1x128xf32, #tpu.memory_space<vmem>>, vector<1x128xf32>
    %58 = vector.broadcast %57 : vector<1x128xf32> to vector<256x128xf32>
    %59 = arith.addf %56, %58 : vector<256x128xf32>
    %cst_33 = arith.constant dense<0.000000e+00> : vector<128xf32>
    %60 = vector.multi_reduction <add>, %59, %cst_33 [0] : vector<256x128xf32> to vector<128xf32>
    %61 = vector.shape_cast %60 : vector<128xf32> to vector<1x128xf32>
    %cst_34 = arith.constant 2.560000e+02 : f32
    %62 = vector.broadcast %cst_34 : f32 to vector<1x128xf32>
    %63 = arith.divf %61, %62 : vector<1x128xf32>
    %64 = vector.broadcast %63 : vector<1x128xf32> to vector<256x128xf32>
    %65 = arith.subf %59, %64 : vector<256x128xf32>
    %66 = arith.mulf %65, %65 : vector<256x128xf32>
    %cst_35 = arith.constant dense<0.000000e+00> : vector<128xf32>
    %67 = vector.multi_reduction <add>, %66, %cst_35 [0] : vector<256x128xf32> to vector<128xf32>
    %68 = vector.shape_cast %67 : vector<128xf32> to vector<1x128xf32>
    %cst_36 = arith.constant 2.560000e+02 : f32
    %69 = vector.broadcast %cst_36 : f32 to vector<1x128xf32>
    %70 = arith.divf %68, %69 : vector<1x128xf32>
    %71 = vector.broadcast %63 : vector<1x128xf32> to vector<256x128xf32>
    %72 = arith.subf %59, %71 : vector<256x128xf32>
    %cst_37 = arith.constant 9.99999974E-6 : f32
    %73 = vector.broadcast %cst_37 : f32 to vector<1x128xf32>
    %74 = arith.addf %70, %73 : vector<1x128xf32>
    %75 = math.rsqrt %74 : vector<1x128xf32>
    %76 = vector.broadcast %75 : vector<1x128xf32> to vector<256x128xf32>
    %77 = arith.mulf %72, %76 : vector<256x128xf32>
    %cst_38 = arith.constant 0.000000e+00 : f32
    %78 = vector.broadcast %cst_38 : f32 to vector<256x128xf32>
    %79 = arith.maximumf %77, %78 : vector<256x128xf32>
    %80 = vector.shape_cast %79 : vector<256x128xf32> to vector<16x16x128xf32>
    %81 = vector.extract_strided_slice %80 {offsets = [1, 0, 0], sizes = [1, 16, 128], strides = [1, 1, 1]} : vector<16x16x128xf32> to vector<1x16x128xf32>
    %82 = vector.extract_strided_slice %80 {offsets = [14, 0, 0], sizes = [1, 16, 128], strides = [1, 1, 1]} : vector<16x16x128xf32> to vector<1x16x128xf32>
    %83 = tpu.concatenate %81, %80, %82 in 0 : vector<1x16x128xf32>, vector<16x16x128xf32>, vector<1x16x128xf32> -> vector<18x16x128xf32>
    %84 = vector.extract_strided_slice %83 {offsets = [0, 1, 0], sizes = [18, 1, 128], strides = [1, 1, 1]} : vector<18x16x128xf32> to vector<18x1x128xf32>
    %85 = vector.extract_strided_slice %83 {offsets = [0, 14, 0], sizes = [18, 1, 128], strides = [1, 1, 1]} : vector<18x16x128xf32> to vector<18x1x128xf32>
    %86 = tpu.concatenate %84, %83, %85 in 1 : vector<18x1x128xf32>, vector<18x16x128xf32>, vector<18x1x128xf32> -> vector<18x18x128xf32>
    %cst_39 = arith.constant 0.000000e+00 : f32
    %87 = vector.broadcast %cst_39 : f32 to vector<256x128xf32>
    %88 = vector.extract_strided_slice %86 {offsets = [0, 0, 0], sizes = [16, 16, 128], strides = [1, 1, 1]} : vector<18x18x128xf32> to vector<16x16x128xf32>
    %89 = vector.shape_cast %88 : vector<16x16x128xf32> to vector<256x128xf32>
    %c0_40 = arith.constant 0 : index
    %c0_41 = arith.constant 0 : index
    %c0_42 = arith.constant 0 : index
    %90 = vector.load %arg4[%c0_40, %c0_41, %c0_42] : memref<9x128x128xf32, #tpu.memory_space<vmem>>, vector<1x128x128xf32>
    %91 = vector.shape_cast %90 : vector<1x128x128xf32> to vector<128x128xf32>
    %cst_43 = arith.constant dense<0.000000e+00> : vector<256x128xf32>
    %92 = tpu.matmul %89, %91, %cst_43 {dimension_numbers = #tpu.dot_dimension_numbers<[1], [0], [0], [1], [0, 0, 1, 1], [], []>} : vector<256x128xf32>, vector<128x128xf32>, vector<256x128xf32> -> vector<256x128xf32>
    %93 = arith.addf %87, %92 : vector<256x128xf32>
    %94 = vector.extract_strided_slice %86 {offsets = [0, 1, 0], sizes = [16, 16, 128], strides = [1, 1, 1]} : vector<18x18x128xf32> to vector<16x16x128xf32>
    %95 = vector.shape_cast %94 : vector<16x16x128xf32> to vector<256x128xf32>
    %c1_44 = arith.constant 1 : index
    %c0_45 = arith.constant 0 : index
    %c0_46 = arith.constant 0 : index
    %96 = vector.load %arg4[%c1_44, %c0_45, %c0_46] : memref<9x128x128xf32, #tpu.memory_space<vmem>>, vector<1x128x128xf32>
    %97 = vector.shape_cast %96 : vector<1x128x128xf32> to vector<128x128xf32>
    %cst_47 = arith.constant dense<0.000000e+00> : vector<256x128xf32>
    %98 = tpu.matmul %95, %97, %cst_47 {dimension_numbers = #tpu.dot_dimension_numbers<[1], [0], [0], [1], [0, 0, 1, 1], [], []>} : vector<256x128xf32>, vector<128x128xf32>, vector<256x128xf32> -> vector<256x128xf32>
    %99 = arith.addf %93, %98 : vector<256x128xf32>
    %100 = vector.extract_strided_slice %86 {offsets = [0, 2, 0], sizes = [16, 16, 128], strides = [1, 1, 1]} : vector<18x18x128xf32> to vector<16x16x128xf32>
    %101 = vector.shape_cast %100 : vector<16x16x128xf32> to vector<256x128xf32>
    %c2_48 = arith.constant 2 : index
    %c0_49 = arith.constant 0 : index
    %c0_50 = arith.constant 0 : index
    %102 = vector.load %arg4[%c2_48, %c0_49, %c0_50] : memref<9x128x128xf32, #tpu.memory_space<vmem>>, vector<1x128x128xf32>
    %103 = vector.shape_cast %102 : vector<1x128x128xf32> to vector<128x128xf32>
    %cst_51 = arith.constant dense<0.000000e+00> : vector<256x128xf32>
    %104 = tpu.matmul %101, %103, %cst_51 {dimension_numbers = #tpu.dot_dimension_numbers<[1], [0], [0], [1], [0, 0, 1, 1], [], []>} : vector<256x128xf32>, vector<128x128xf32>, vector<256x128xf32> -> vector<256x128xf32>
    %105 = arith.addf %99, %104 : vector<256x128xf32>
    %106 = vector.extract_strided_slice %86 {offsets = [1, 0, 0], sizes = [16, 16, 128], strides = [1, 1, 1]} : vector<18x18x128xf32> to vector<16x16x128xf32>
    %107 = vector.shape_cast %106 : vector<16x16x128xf32> to vector<256x128xf32>
    %c3_52 = arith.constant 3 : index
    %c0_53 = arith.constant 0 : index
    %c0_54 = arith.constant 0 : index
    %108 = vector.load %arg4[%c3_52, %c0_53, %c0_54] : memref<9x128x128xf32, #tpu.memory_space<vmem>>, vector<1x128x128xf32>
    %109 = vector.shape_cast %108 : vector<1x128x128xf32> to vector<128x128xf32>
    %cst_55 = arith.constant dense<0.000000e+00> : vector<256x128xf32>
    %110 = tpu.matmul %107, %109, %cst_55 {dimension_numbers = #tpu.dot_dimension_numbers<[1], [0], [0], [1], [0, 0, 1, 1], [], []>} : vector<256x128xf32>, vector<128x128xf32>, vector<256x128xf32> -> vector<256x128xf32>
    %111 = arith.addf %105, %110 : vector<256x128xf32>
    %112 = vector.extract_strided_slice %86 {offsets = [1, 1, 0], sizes = [16, 16, 128], strides = [1, 1, 1]} : vector<18x18x128xf32> to vector<16x16x128xf32>
    %113 = vector.shape_cast %112 : vector<16x16x128xf32> to vector<256x128xf32>
    %c4_56 = arith.constant 4 : index
    %c0_57 = arith.constant 0 : index
    %c0_58 = arith.constant 0 : index
    %114 = vector.load %arg4[%c4_56, %c0_57, %c0_58] : memref<9x128x128xf32, #tpu.memory_space<vmem>>, vector<1x128x128xf32>
    %115 = vector.shape_cast %114 : vector<1x128x128xf32> to vector<128x128xf32>
    %cst_59 = arith.constant dense<0.000000e+00> : vector<256x128xf32>
    %116 = tpu.matmul %113, %115, %cst_59 {dimension_numbers = #tpu.dot_dimension_numbers<[1], [0], [0], [1], [0, 0, 1, 1], [], []>} : vector<256x128xf32>, vector<128x128xf32>, vector<256x128xf32> -> vector<256x128xf32>
    %117 = arith.addf %111, %116 : vector<256x128xf32>
    %118 = vector.extract_strided_slice %86 {offsets = [1, 2, 0], sizes = [16, 16, 128], strides = [1, 1, 1]} : vector<18x18x128xf32> to vector<16x16x128xf32>
    %119 = vector.shape_cast %118 : vector<16x16x128xf32> to vector<256x128xf32>
    %c5_60 = arith.constant 5 : index
    %c0_61 = arith.constant 0 : index
    %c0_62 = arith.constant 0 : index
    %120 = vector.load %arg4[%c5_60, %c0_61, %c0_62] : memref<9x128x128xf32, #tpu.memory_space<vmem>>, vector<1x128x128xf32>
    %121 = vector.shape_cast %120 : vector<1x128x128xf32> to vector<128x128xf32>
    %cst_63 = arith.constant dense<0.000000e+00> : vector<256x128xf32>
    %122 = tpu.matmul %119, %121, %cst_63 {dimension_numbers = #tpu.dot_dimension_numbers<[1], [0], [0], [1], [0, 0, 1, 1], [], []>} : vector<256x128xf32>, vector<128x128xf32>, vector<256x128xf32> -> vector<256x128xf32>
    %123 = arith.addf %117, %122 : vector<256x128xf32>
    %124 = vector.extract_strided_slice %86 {offsets = [2, 0, 0], sizes = [16, 16, 128], strides = [1, 1, 1]} : vector<18x18x128xf32> to vector<16x16x128xf32>
    %125 = vector.shape_cast %124 : vector<16x16x128xf32> to vector<256x128xf32>
    %c6_64 = arith.constant 6 : index
    %c0_65 = arith.constant 0 : index
    %c0_66 = arith.constant 0 : index
    %126 = vector.load %arg4[%c6_64, %c0_65, %c0_66] : memref<9x128x128xf32, #tpu.memory_space<vmem>>, vector<1x128x128xf32>
    %127 = vector.shape_cast %126 : vector<1x128x128xf32> to vector<128x128xf32>
    %cst_67 = arith.constant dense<0.000000e+00> : vector<256x128xf32>
    %128 = tpu.matmul %125, %127, %cst_67 {dimension_numbers = #tpu.dot_dimension_numbers<[1], [0], [0], [1], [0, 0, 1, 1], [], []>} : vector<256x128xf32>, vector<128x128xf32>, vector<256x128xf32> -> vector<256x128xf32>
    %129 = arith.addf %123, %128 : vector<256x128xf32>
    %130 = vector.extract_strided_slice %86 {offsets = [2, 1, 0], sizes = [16, 16, 128], strides = [1, 1, 1]} : vector<18x18x128xf32> to vector<16x16x128xf32>
    %131 = vector.shape_cast %130 : vector<16x16x128xf32> to vector<256x128xf32>
    %c7_68 = arith.constant 7 : index
    %c0_69 = arith.constant 0 : index
    %c0_70 = arith.constant 0 : index
    %132 = vector.load %arg4[%c7_68, %c0_69, %c0_70] : memref<9x128x128xf32, #tpu.memory_space<vmem>>, vector<1x128x128xf32>
    %133 = vector.shape_cast %132 : vector<1x128x128xf32> to vector<128x128xf32>
    %cst_71 = arith.constant dense<0.000000e+00> : vector<256x128xf32>
    %134 = tpu.matmul %131, %133, %cst_71 {dimension_numbers = #tpu.dot_dimension_numbers<[1], [0], [0], [1], [0, 0, 1, 1], [], []>} : vector<256x128xf32>, vector<128x128xf32>, vector<256x128xf32> -> vector<256x128xf32>
    %135 = arith.addf %129, %134 : vector<256x128xf32>
    %136 = vector.extract_strided_slice %86 {offsets = [2, 2, 0], sizes = [16, 16, 128], strides = [1, 1, 1]} : vector<18x18x128xf32> to vector<16x16x128xf32>
    %137 = vector.shape_cast %136 : vector<16x16x128xf32> to vector<256x128xf32>
    %c8_72 = arith.constant 8 : index
    %c0_73 = arith.constant 0 : index
    %c0_74 = arith.constant 0 : index
    %138 = vector.load %arg4[%c8_72, %c0_73, %c0_74] : memref<9x128x128xf32, #tpu.memory_space<vmem>>, vector<1x128x128xf32>
    %139 = vector.shape_cast %138 : vector<1x128x128xf32> to vector<128x128xf32>
    %cst_75 = arith.constant dense<0.000000e+00> : vector<256x128xf32>
    %140 = tpu.matmul %137, %139, %cst_75 {dimension_numbers = #tpu.dot_dimension_numbers<[1], [0], [0], [1], [0, 0, 1, 1], [], []>} : vector<256x128xf32>, vector<128x128xf32>, vector<256x128xf32> -> vector<256x128xf32>
    %141 = arith.addf %135, %140 : vector<256x128xf32>
    %c0_76 = arith.constant 0 : index
    %c0_77 = arith.constant 0 : index
    %142 = vector.load %arg5[%c0_76, %c0_77] : memref<1x128xf32, #tpu.memory_space<vmem>>, vector<1x128xf32>
    %143 = vector.broadcast %142 : vector<1x128xf32> to vector<256x128xf32>
    %144 = arith.addf %141, %143 : vector<256x128xf32>
    %cst_78 = arith.constant dense<0.000000e+00> : vector<128xf32>
    %145 = vector.multi_reduction <add>, %144, %cst_78 [0] : vector<256x128xf32> to vector<128xf32>
    %146 = vector.shape_cast %145 : vector<128xf32> to vector<1x128xf32>
    %cst_79 = arith.constant 2.560000e+02 : f32
    %147 = vector.broadcast %cst_79 : f32 to vector<1x128xf32>
    %148 = arith.divf %146, %147 : vector<1x128xf32>
    %149 = vector.broadcast %148 : vector<1x128xf32> to vector<256x128xf32>
    %150 = arith.subf %144, %149 : vector<256x128xf32>
    %151 = arith.mulf %150, %150 : vector<256x128xf32>
    %cst_80 = arith.constant dense<0.000000e+00> : vector<128xf32>
    %152 = vector.multi_reduction <add>, %151, %cst_80 [0] : vector<256x128xf32> to vector<128xf32>
    %153 = vector.shape_cast %152 : vector<128xf32> to vector<1x128xf32>
    %cst_81 = arith.constant 2.560000e+02 : f32
    %154 = vector.broadcast %cst_81 : f32 to vector<1x128xf32>
    %155 = arith.divf %153, %154 : vector<1x128xf32>
    %156 = vector.broadcast %148 : vector<1x128xf32> to vector<256x128xf32>
    %157 = arith.subf %144, %156 : vector<256x128xf32>
    %cst_82 = arith.constant 9.99999974E-6 : f32
    %158 = vector.broadcast %cst_82 : f32 to vector<1x128xf32>
    %159 = arith.addf %155, %158 : vector<1x128xf32>
    %160 = math.rsqrt %159 : vector<1x128xf32>
    %161 = vector.broadcast %160 : vector<1x128xf32> to vector<256x128xf32>
    %162 = arith.mulf %157, %161 : vector<256x128xf32>
    %163 = vector.extract_strided_slice %1 {offsets = [1, 1, 0], sizes = [16, 16, 128], strides = [1, 1, 1]} : vector<18x18x128xf32> to vector<16x16x128xf32>
    %164 = vector.shape_cast %163 : vector<16x16x128xf32> to vector<256x128xf32>
    %165 = arith.addf %164, %162 : vector<256x128xf32>
    %166 = vector.shape_cast %165 : vector<256x128xf32> to vector<16x16x128xf32>
    %c0_83 = arith.constant 0 : index
    %c0_84 = arith.constant 0 : index
    %c0_85 = arith.constant 0 : index
    %c0_86 = arith.constant 0 : index
    %167 = vector.load %arg6[%c0_83, %c0_84, %c0_85, %c0_86] : memref<1x16x16x128xf32, #tpu.memory_space<vmem>>, vector<1x16x16x128xf32>
    %168 = vector.shape_cast %167 : vector<1x16x16x128xf32> to vector<16x16x128xf32>
    %169 = vector.shape_cast %166 : vector<16x16x128xf32> to vector<1x16x16x128xf32>
    tpu.vector_store %arg6[%c0_83, %c0_84, %c0_85, %c0_86], %169 {strides = array<i32>} : memref<1x16x16x128xf32, #tpu.memory_space<vmem>>, vector<1x16x16x128xf32>,
    return
  }
  func.func @transform_0(%arg0: i32) -> (i32, i32, i32, i32) {
    %c0_i32 = arith.constant 0 : i32
    %c0_i32_0 = arith.constant 0 : i32
    %c0_i32_1 = arith.constant 0 : i32
    %c0_i32_2 = arith.constant 0 : i32
    return %arg0, %c0_i32, %c0_i32_0, %c0_i32_1 : i32, i32, i32, i32
  }
  func.func @transform_1(%arg0: i32) -> (i32, i32, i32) {
    %c0_i32 = arith.constant 0 : i32
    %c0_i32_0 = arith.constant 0 : i32
    %c0_i32_1 = arith.constant 0 : i32
    %c0_i32_2 = arith.constant 0 : i32
    return %c0_i32, %c0_i32_0, %c0_i32_1 : i32, i32, i32
  }
  func.func @transform_2(%arg0: i32) -> (i32, i32) {
    %c0_i32 = arith.constant 0 : i32
    %c0_i32_0 = arith.constant 0 : i32
    %c0_i32_1 = arith.constant 0 : i32
    return %c0_i32, %c0_i32_0 : i32, i32
  }
  func.func @transform_3(%arg0: i32) -> (i32, i32, i32) {
    %c0_i32 = arith.constant 0 : i32
    %c0_i32_0 = arith.constant 0 : i32
    %c0_i32_1 = arith.constant 0 : i32
    %c0_i32_2 = arith.constant 0 : i32
    return %c0_i32, %c0_i32_0, %c0_i32_1 : i32, i32, i32
  }
  func.func @transform_4(%arg0: i32) -> (i32, i32) {
    %c0_i32 = arith.constant 0 : i32
    %c0_i32_0 = arith.constant 0 : i32
    %c0_i32_1 = arith.constant 0 : i32
    return %c0_i32, %c0_i32_0 : i32, i32
  }
  func.func @transform_5(%arg0: i32) -> (i32, i32, i32, i32) {
    %c0_i32 = arith.constant 0 : i32
    %c0_i32_0 = arith.constant 0 : i32
    %c0_i32_1 = arith.constant 0 : i32
    %c0_i32_2 = arith.constant 0 : i32
    return %arg0, %c0_i32, %c0_i32_0, %c0_i32_1 : i32, i32, i32, i32
  }
}

</mosaic_0001>

<llo_original>
// kernel: tpu_custom_call.1
$region0: #{tpu_custom_call.1}
  #allocation0 [shape = 'u32[]', space=smem, size = 0x4, offset = 0x4, fixed_abs, tag = 'smem constant byte address 0x4 - core index']
  #allocation1 [shape = 'u32[144,128]{1,0:T(1,128)}', space=vmem, size = 0x12000, scoped, tag = 'internal scratch']
  %s0 = inlined_call_operand.vmem [shape: f32[2,18,18,128], index: 0, kind: input, shape index: {}]
  %s1 = inlined_call_operand.vmem [shape: f32[9,128,128], index: 1, kind: input, shape index: {}]
  %s2 = inlined_call_operand.vmem [shape: f32[1,128], index: 2, kind: input, shape index: {}]
  %s3 = inlined_call_operand.hbm [shape: f32[9,128,128], index: 3, kind: input, shape index: {}]
  %s4 = inlined_call_operand.vmem [shape: f32[1,128], index: 4, kind: input, shape index: {}]
  %s5 = inlined_call_operand.hbm [shape: f32[2,16,16,128], index: 5, kind: output, shape index: {}]
  %s6 = sld [smem:[#allocation0]]
  $region57: #{tpu_custom_call.1} parent=0
    _
  %s8 = ssub.s32 1, %s6
  %s9 = scalar_select 0, %s8, %s6
  $region1: #{tpu_custom_call.1} parent=0
    #allocation2 [shape = 'u8[589824]{0}', space=vmem, size = 0x90000, scoped, tag = 'input window, operand 3, single buffered']
    #allocation3 [shape = 's32[2]{0}', space=sflag, size = 0x8, scoped, tag = 'scoped memory for tpu_custom_call.1']
    #allocation4 [shape = 's32[2]{0}', space=sflag, size = 0x8, scoped, tag = 'scoped memory for tpu_custom_call.1']
    #allocation5 [shape = 'u8[262144]{0}', space=vmem, size = 0x40000, scoped, tag = 'output window, operand 0']
    %10 = vsyncpa [#allocation3], 0
    %11 = vsyncpa [#allocation4], 0
    %s12 = scalar_lea.sflag [#allocation4], 1
    %13 = vsyncpa %s12, 0
    loop: start=0, step=1, limit=4
    $region2: #{tpu_custom_call.1} parent=1 // loop_pre_header
      _
    $region3: #{tpu_custom_call.1} parent=1 // loop_header
      %s15 = sphi 0, %s19
      %p16 = scmp.ge.s32.totalorder %s15, 4
      %s25 = sphi 0, %s27
      %s28 = sphi 0, %s25
      %s29 = sphi 0, %s28
      %s45 = sphi 0, %s29
      %s49 = sphi 0, %s49
      %s51 = sphi 0, %s49
      %s52 = sphi 0, %s51
      %s66 = sphi 0, %s52
      %s70 = sphi 0, %s70
      %s72 = sphi 0, %s70
      %s73 = sphi 0, %s72
      %s87 = sphi 0, %s73
      %s91 = sphi 0, %s91
      %s93 = sphi 0, %s91
      %s94 = sphi 0, %s93
      %s108 = sphi 0, %s94
      %s112 = sphi 0, %s112
      %s114 = sphi 0, %s112
      %s115 = sphi 0, %s114
      %s129 = sphi 0, %s115
      %s135 = sphi 0, %s137
      %s138 = sphi 0, %s135
      %s139 = sphi 0, %s138
      %s155 = sphi 0, %s139
    $region4: #{tpu_custom_call.1} parent=1 // loop_header_branch
      %18 = sbr.rel (%p16) target = $region8
    $region5: #{tpu_custom_call.1} parent=1 // loop_body
      %s20 = ssub.s32 %s15, 1
      %s21 = ssub.s32 %s15, 2
      %s22 = sadd.s32 %s15, 1
      %s23 = ssub.s32 %s15, %s22
      %p24 = scmp.eq.s32.totalorder %s23, 0
      %s26 = sadd.s32 %s25, 1
      %s27 = scalar_select %p24, %s25, %s26
      %p30 = pneg %p24
      %p31 = scmp.eq.s32.totalorder %s15, 1
      %p32 = por %p30, %p31
      %p33 = scmp.ne.s32.totalorder %s25, %s28
      %p34 = scmp.eq.s32.totalorder %s15, 0
      %p35 = por %p33, %p34
      %p36 = scmp.ne.s32.totalorder %s25, %s28
      %p37 = scmp.eq.s32.totalorder %s20, 1
      %p38 = por %p36, %p37
      %p39 = scmp.ne.s32.totalorder %s28, %s29
      %p40 = scmp.eq.s32.totalorder %s20, 0
      %p41 = por %p39, %p40
      %p42 = scmp.ne.s32.totalorder %s28, %s29
      %p43 = scmp.eq.s32.totalorder %s21, 1
      %p44 = por %p42, %p43
      %p46 = scmp.ne.s32.totalorder %s29, %s45
      %p47 = scmp.eq.s32.totalorder %s21, 0
      %p48 = por %p46, %p47
      %s50 = sadd.s32 %s49, 1
      %p53 = scmp.eq.s32.totalorder %s15, 1
      %p54 = scmp.ne.s32.totalorder %s49, %s51
      %p55 = scmp.eq.s32.totalorder %s15, 0
      %p56 = por %p54, %p55
      %p57 = scmp.ne.s32.totalorder %s49, %s51
      %p58 = scmp.eq.s32.totalorder %s20, 1
      %p59 = por %p57, %p58
      %p60 = scmp.ne.s32.totalorder %s51, %s52
      %p61 = scmp.eq.s32.totalorder %s20, 0
      %p62 = por %p60, %p61
      %p63 = scmp.ne.s32.totalorder %s51, %s52
      %p64 = scmp.eq.s32.totalorder %s21, 1
      %p65 = por %p63, %p64
      %p67 = scmp.ne.s32.totalorder %s52, %s66
      %p68 = scmp.eq.s32.totalorder %s21, 0
      %p69 = por %p67, %p68
      %s71 = sadd.s32 %s70, 1
      %p74 = scmp.eq.s32.totalorder %s15, 1
      %p75 = scmp.ne.s32.totalorder %s70, %s72
      %p76 = scmp.eq.s32.totalorder %s15, 0
      %p77 = por %p75, %p76
      %p78 = scmp.ne.s32.totalorder %s70, %s72
      %p79 = scmp.eq.s32.totalorder %s20, 1
      %p80 = por %p78, %p79
      %p81 = scmp.ne.s32.totalorder %s72, %s73
      %p82 = scmp.eq.s32.totalorder %s20, 0
      %p83 = por %p81, %p82
      %p84 = scmp.ne.s32.totalorder %s72, %s73
      %p85 = scmp.eq.s32.totalorder %s21, 1
      %p86 = por %p84, %p85
      %p88 = scmp.ne.s32.totalorder %s73, %s87
      %p89 = scmp.eq.s32.totalorder %s21, 0
      %p90 = por %p88, %p89
      %s92 = sadd.s32 %s91, 1
      %p95 = scmp.eq.s32.totalorder %s15, 1
      %p96 = scmp.ne.s32.totalorder %s91, %s93
      %p97 = scmp.eq.s32.totalorder %s15, 0
      %p98 = por %p96, %p97
      %p99 = scmp.ne.s32.totalorder %s91, %s93
      %p100 = scmp.eq.s32.totalorder %s20, 1
      %p101 = por %p99, %p100
      %p102 = scmp.ne.s32.totalorder %s93, %s94
      %p103 = scmp.eq.s32.totalorder %s20, 0
      %p104 = por %p102, %p103
      %p105 = scmp.ne.s32.totalorder %s93, %s94
      %p106 = scmp.eq.s32.totalorder %s21, 1
      %p107 = por %p105, %p106
      %p109 = scmp.ne.s32.totalorder %s94, %s108
      %p110 = scmp.eq.s32.totalorder %s21, 0
      %p111 = por %p109, %p110
      %s113 = sadd.s32 %s112, 1
      %p116 = scmp.eq.s32.totalorder %s15, 1
      %p117 = scmp.ne.s32.totalorder %s112, %s114
      %p118 = scmp.eq.s32.totalorder %s15, 0
      %p119 = por %p117, %p118
      %p120 = scmp.ne.s32.totalorder %s112, %s114
      %p121 = scmp.eq.s32.totalorder %s20, 1
      %p122 = por %p120, %p121
      %p123 = scmp.ne.s32.totalorder %s114, %s115
      %p124 = scmp.eq.s32.totalorder %s20, 0
      %p125 = por %p123, %p124
      %p126 = scmp.ne.s32.totalorder %s114, %s115
      %p127 = scmp.eq.s32.totalorder %s21, 1
      %p128 = por %p126, %p127
      %p130 = scmp.ne.s32.totalorder %s115, %s129
      %p131 = scmp.eq.s32.totalorder %s21, 0
      %p132 = por %p130, %p131
      %s133 = ssub.s32 %s15, %s22
      %p134 = scmp.eq.s32.totalorder %s133, 0
      %s136 = sadd.s32 %s135, 1
      %s137 = scalar_select %p134, %s135, %s136
      %p140 = pneg %p134
      %p141 = scmp.eq.s32.totalorder %s15, 1
      %p142 = por %p140, %p141
      %p143 = scmp.ne.s32.totalorder %s135, %s138
      %p144 = scmp.eq.s32.totalorder %s15, 0
      %p145 = por %p143, %p144
      %p146 = scmp.ne.s32.totalorder %s135, %s138
      %p147 = scmp.eq.s32.totalorder %s20, 1
      %p148 = por %p146, %p147
      %p149 = scmp.ne.s32.totalorder %s138, %s139
      %p150 = scmp.eq.s32.totalorder %s20, 0
      %p151 = por %p149, %p150
      %p152 = scmp.ne.s32.totalorder %s138, %s139
      %p153 = scmp.eq.s32.totalorder %s21, 1
      %p154 = por %p152, %p153
      %p156 = scmp.ne.s32.totalorder %s139, %s155
      %p157 = scmp.eq.s32.totalorder %s21, 0
      %p158 = por %p156, %p157
      %p159 = scmp.le.s32.totalorder 1, %s15
      %p160 = scmp.lt.s32.totalorder %s15, 3
      %p161 = pnand %p159, %p160
      %p162 = pneg %p161
      // Predicated region
      $region9: #{tpu_custom_call.1} parent=5 // pred_check
        _
      $region10: #{tpu_custom_call.1} parent=5 // pred_check_branch
        %164 = sbr.rel (%p161) target = $region12
      $region11: #{tpu_custom_call.1} parent=5 // pred_region
        %s165 = ssub.s32 %s15, 1
        // Predicated region
        $region13: #{tpu_custom_call.1} parent=11 // pred_check
          %p166 = pneg %p62
        $region14: #{tpu_custom_call.1} parent=11 // pred_check_branch
          %168 = sbr.rel (%p166) target = $region16
        $region15: #{tpu_custom_call.1} parent=11 // pred_region
          _
        $region16: #{tpu_custom_call.1} parent=11 // pred_fallthru
          _
        // Predicated region
        $region17: #{tpu_custom_call.1} parent=11 // pred_check
          %p169 = pneg %p83
        $region18: #{tpu_custom_call.1} parent=11 // pred_check_branch
          %171 = sbr.rel (%p169) target = $region20
        $region19: #{tpu_custom_call.1} parent=11 // pred_region
          _
        $region20: #{tpu_custom_call.1} parent=11 // pred_fallthru
          _
        // Predicated region
        $region21: #{tpu_custom_call.1} parent=11 // pred_check
          %p172 = pneg %p104
        $region22: #{tpu_custom_call.1} parent=11 // pred_check_branch
          %174 = sbr.rel (%p172) target = $region24
        $region23: #{tpu_custom_call.1} parent=11 // pred_region
          %s176 = ssub.s32 18432, 18432
          %177 = vsyncadd [#allocation3], %s176
          %s178 = sshll.u32 [#allocation2], 4
          %s179 = int_to_ptr.vmem [resolvable:$true] %s178
          %184 = dma.hbm_to_vmem [thread:$0]  %s3, 18432, %s179, [#allocation3], 128, 128, 8
        $region24: #{tpu_custom_call.1} parent=11 // pred_fallthru
          _
        // Predicated region
        $region25: #{tpu_custom_call.1} parent=11 // pred_check
          %p185 = pneg %p125
        $region26: #{tpu_custom_call.1} parent=11 // pred_check_branch
          %187 = sbr.rel (%p185) target = $region28
        $region27: #{tpu_custom_call.1} parent=11 // pred_region
          _
        $region28: #{tpu_custom_call.1} parent=11 // pred_fallthru
          _
      $region12: #{tpu_custom_call.1} parent=5 // pred_fallthru
        _
      %p188 = scmp.lt.s32.totalorder %s15, 2
      // Predicated region
      $region29: #{tpu_custom_call.1} parent=5 // pred_check
        %p189 = pneg %p188
      $region30: #{tpu_custom_call.1} parent=5 // pred_check_branch
        %191 = sbr.rel (%p189) target = $region32
      $region31: #{tpu_custom_call.1} parent=5 // pred_region
        // Predicated region
        $region33: #{tpu_custom_call.1} parent=31 // pred_check
          %p192 = pneg %p35
        $region34: #{tpu_custom_call.1} parent=31 // pred_check_branch
          %194 = sbr.rel (%p192) target = $region36
        $region35: #{tpu_custom_call.1} parent=31 // pred_region
          %p195 = scmp.lt.s32.totalorder %s15, 1
          %s196 = scalar_select %p195, %s15, 1
          %s197 = smul.addr %s196, 54
          %s198 = smul.addr %s197, 8
          %s199 = scalar_lea.vmem %s0, %s198
        $region36: #{tpu_custom_call.1} parent=31 // pred_fallthru
          _
      $region32: #{tpu_custom_call.1} parent=5 // pred_fallthru
        _
      %p200 = scmp.le.s32.totalorder 1, %s15
      %p201 = scmp.lt.s32.totalorder %s15, 3
      %p202 = pnand %p200, %p201
      %p203 = pneg %p202
      // Predicated region
      $region37: #{tpu_custom_call.1} parent=5 // pred_check
        _
      $region38: #{tpu_custom_call.1} parent=5 // pred_check_branch
        %205 = sbr.rel (%p202) target = $region40
      $region39: #{tpu_custom_call.1} parent=5 // pred_region
        %s206 = ssub.s32 %s15, 1
        // Predicated region
        $region41: #{tpu_custom_call.1} parent=39 // pred_check
          %p207 = pneg %p104
        $region42: #{tpu_custom_call.1} parent=39 // pred_check_branch
          %209 = sbr.rel (%p207) target = $region44
        $region43: #{tpu_custom_call.1} parent=39 // pred_region
          %210 = dma.done [#allocation3], 18432
        $region44: #{tpu_custom_call.1} parent=39 // pred_fallthru
          _
        %p211 = scmp.lt.s32.totalorder %s20, 1
        %s212 = scalar_select %p211, %s20, 1
        %s213 = smul.addr %s212, 54
        %s214 = smul.addr %s213, 8
        %s215 = scalar_lea.vmem %s0, %s214
        %p216 = pneg %p41
        %p217 = pneg %p38
        %p218 = pneg %p62
        %p219 = pneg %p59
        %p220 = pneg %p83
        %p221 = pneg %p80
        %p222 = pneg %p104
        %p223 = pneg %p101
        %p224 = pneg %p125
        %p225 = pneg %p122
        %p226 = pneg %p151
        %p227 = pneg %p148
        %s228 = sand.u32 %s138, 1
        %s229 = scalar_lea.sflag [#allocation4], %s228
        %s230 = sand.u32 %s138, 1
        %s231 = smul.addr %s230, 256
        %s232 = scalar_lea.vmem [#allocation5], %s231
        %p233 = scmp.lt.s32.totalorder %s20, 1
        %s234 = scalar_select %p233, %s20, 1
        %s235 = smul.addr %s234, 54
        %s236 = smul.addr %s235, 8
        %s237 = scalar_lea.vmem %s0, %s236
        %v238 = vld [vmem:[%s237] sm:$0xff]
        %v239 = vld [vmem:[%s237 + $0x8] sm:$0xff]
        %v240 = vld [vmem:[%s237 + $0x10] sm:$0x3]
        %v241 = vld [vmem:[%s237 + $0x18] sm:$0xff]
        %v242 = vld [vmem:[%s237 + $0x20] sm:$0xff]
        %v243 = vld [vmem:[%s237 + $0x28] sm:$0x3]
        %v244 = vld [vmem:[%s237 + $0x30] sm:$0xff]
        %v245 = vld [vmem:[%s237 + $0x38] sm:$0xff]
        %v246 = vld [vmem:[%s237 + $0x40] sm:$0x3]
        %v247 = vld [vmem:[%s237 + $0x48] sm:$0xff]
        %v248 = vld [vmem:[%s237 + $0x50] sm:$0xff]
        %v249 = vld [vmem:[%s237 + $0x58] sm:$0x3]
        %v250 = vld [vmem:[%s237 + $0x60] sm:$0xff]
        %v251 = vld [vmem:[%s237 + $0x68] sm:$0xff]
        %v252 = vld [vmem:[%s237 + $0x70] sm:$0x3]
        %v253 = vld [vmem:[%s237 + $0x78] sm:$0xff]
        %v254 = vld [vmem:[%s237 + $0x80] sm:$0xff]
        %v255 = vld [vmem:[%s237 + $0x88] sm:$0x3]
        %v256 = vld [vmem:[%s237 + $0x90] sm:$0xff]
        %v257 = vld [vmem:[%s237 + $0x98] sm:$0xff]
        %v258 = vld [vmem:[%s237 + $0xa0] sm:$0x3]
        %v259 = vld [vmem:[%s237 + $0xa8] sm:$0xff]
        %v260 = vld [vmem:[%s237 + $0xb0] sm:$0xff]
        %v261 = vld [vmem:[%s237 + $0xb8] sm:$0x3]
        %v262 = vld [vmem:[%s237 + $0xc0] sm:$0xff]
        %v263 = vld [vmem:[%s237 + $0xc8] sm:$0xff]
        %v264 = vld [vmem:[%s237 + $0xd0] sm:$0x3]
        %v265 = vld [vmem:[%s237 + $0xd8] sm:$0xff]
        %v266 = vld [vmem:[%s237 + $0xe0] sm:$0xff]
        %v267 = vld [vmem:[%s237 + $0xe8] sm:$0x3]
        %v268 = vld [vmem:[%s237 + $0xf0] sm:$0xff]
        %v269 = vld [vmem:[%s237 + $0xf8] sm:$0xff]
        %v270 = vld [vmem:[%s237 + $0x100] sm:$0x3]
        %v271 = vld [vmem:[%s237 + $0x108] sm:$0xff]
        %v272 = vld [vmem:[%s237 + $0x110] sm:$0xff]
        %v273 = vld [vmem:[%s237 + $0x118] sm:$0x3]
        %v274 = vld [vmem:[%s237 + $0x120] sm:$0xff]
        %v275 = vld [vmem:[%s237 + $0x128] sm:$0xff]
        %v276 = vld [vmem:[%s237 + $0x130] sm:$0x3]
        %v277 = vld [vmem:[%s237 + $0x138] sm:$0xff]
        %v278 = vld [vmem:[%s237 + $0x140] sm:$0xff]
        %v279 = vld [vmem:[%s237 + $0x148] sm:$0x3]
        %v280 = vld [vmem:[%s237 + $0x150] sm:$0xff]
        %v281 = vld [vmem:[%s237 + $0x158] sm:$0xff]
        %v282 = vld [vmem:[%s237 + $0x160] sm:$0x3]
        %v283 = vld [vmem:[%s237 + $0x168] sm:$0xff]
        %v284 = vld [vmem:[%s237 + $0x170] sm:$0xff]
        %v285 = vld [vmem:[%s237 + $0x178] sm:$0x3]
        %v286 = vld [vmem:[%s237 + $0x180] sm:$0xff]
        %v287 = vld [vmem:[%s237 + $0x188] sm:$0xff]
        %v288 = vld [vmem:[%s237 + $0x190] sm:$0x3]
        %v289 = vld [vmem:[%s237 + $0x198] sm:$0xff]
        %v290 = vld [vmem:[%s237 + $0x1a0] sm:$0xff]
        %v291 = vld [vmem:[%s237 + $0x1a8] sm:$0x3]
        %v292 = vld [vmem:[%s1] sm:$0xff]
        %v293 = vld [vmem:[%s1 + $0x8] sm:$0xff]
        %v294 = vld [vmem:[%s1 + $0x10] sm:$0xff]
        %v295 = vld [vmem:[%s1 + $0x18] sm:$0xff]
        %v296 = vld [vmem:[%s1 + $0x20] sm:$0xff]
        %v297 = vld [vmem:[%s1 + $0x28] sm:$0xff]
        %v298 = vld [vmem:[%s1 + $0x30] sm:$0xff]
        %v299 = vld [vmem:[%s1 + $0x38] sm:$0xff]
        %v300 = vld [vmem:[%s1 + $0x40] sm:$0xff]
        %v301 = vld [vmem:[%s1 + $0x48] sm:$0xff]
        %v302 = vld [vmem:[%s1 + $0x50] sm:$0xff]
        %v303 = vld [vmem:[%s1 + $0x58] sm:$0xff]
        %v304 = vld [vmem:[%s1 + $0x60] sm:$0xff]
        %v305 = vld [vmem:[%s1 + $0x68] sm:$0xff]
        %v306 = vld [vmem:[%s1 + $0x70] sm:$0xff]
        %v307 = vld [vmem:[%s1 + $0x78] sm:$0xff]
        %vm356 = vcmask 1046528
        %v357 = vrot.slane %v238, 1
        %v358 = vrot.slane %v239, 1
        %v359 = vsel %vm356, %v357, %v358
        %v360 = vrot.slane %v240, 1
        %v361 = vsel %vm356, %v358, %v360
        %v362 = vrot.slane %v241, 1
        %v363 = vrot.slane %v242, 1
        %v364 = vsel %vm356, %v362, %v363
        %v365 = vrot.slane %v243, 1
        %v366 = vsel %vm356, %v363, %v365
        %v367 = vrot.slane %v244, 1
        %v368 = vrot.slane %v245, 1
        %v369 = vsel %vm356, %v367, %v368
        %v370 = vrot.slane %v246, 1
        %v371 = vsel %vm356, %v368, %v370
        %v372 = vrot.slane %v247, 1
        %v373 = vrot.slane %v248, 1
        %v374 = vsel %vm356, %v372, %v373
        %v375 = vrot.slane %v249, 1
        %v376 = vsel %vm356, %v373, %v375
        %v377 = vrot.slane %v250, 1
        %v378 = vrot.slane %v251, 1
        %v379 = vsel %vm356, %v377, %v378
        %v380 = vrot.slane %v252, 1
        %v381 = vsel %vm356, %v378, %v380
        %v382 = vrot.slane %v253, 1
        %v383 = vrot.slane %v254, 1
        %v384 = vsel %vm356, %v382, %v383
        %v385 = vrot.slane %v255, 1
        %v386 = vsel %vm356, %v383, %v385
        %v387 = vrot.slane %v256, 1
        %v388 = vrot.slane %v257, 1
        %v389 = vsel %vm356, %v387, %v388
        %v390 = vrot.slane %v258, 1
        %v391 = vsel %vm356, %v388, %v390
        %v392 = vrot.slane %v259, 1
        %v393 = vrot.slane %v260, 1
        %v394 = vsel %vm356, %v392, %v393
        %v395 = vrot.slane %v261, 1
        %v396 = vsel %vm356, %v393, %v395
        %v397 = vrot.slane %v262, 1
        %v398 = vrot.slane %v263, 1
        %v399 = vsel %vm356, %v397, %v398
        %v400 = vrot.slane %v264, 1
        %v401 = vsel %vm356, %v398, %v400
        %v402 = vrot.slane %v265, 1
        %v403 = vrot.slane %v266, 1
        %v404 = vsel %vm356, %v402, %v403
        %v405 = vrot.slane %v267, 1
        %v406 = vsel %vm356, %v403, %v405
        %v407 = vrot.slane %v268, 1
        %v408 = vrot.slane %v269, 1
        %v409 = vsel %vm356, %v407, %v408
        %v410 = vrot.slane %v270, 1
        %v411 = vsel %vm356, %v408, %v410
        %v412 = vrot.slane %v271, 1
        %v413 = vrot.slane %v272, 1
        %v414 = vsel %vm356, %v412, %v413
        %v415 = vrot.slane %v273, 1
        %v416 = vsel %vm356, %v413, %v415
        %v417 = vrot.slane %v274, 1
        %v418 = vrot.slane %v275, 1
        %v419 = vsel %vm356, %v417, %v418
        %v420 = vrot.slane %v276, 1
        %v421 = vsel %vm356, %v418, %v420
        %v422 = vrot.slane %v277, 1
        %v423 = vrot.slane %v278, 1
        %v424 = vsel %vm356, %v422, %v423
        %v425 = vrot.slane %v279, 1
        %v426 = vsel %vm356, %v423, %v425
        %v427 = vrot.slane %v280, 1
        %v428 = vrot.slane %v281, 1
        %v429 = vsel %vm356, %v427, %v428
        %v430 = vrot.slane %v282, 1
        %v431 = vsel %vm356, %v428, %v430
        %v432 = vrot.slane %v283, 1
        %v433 = vrot.slane %v284, 1
        %v434 = vsel %vm356, %v432, %v433
        %v435 = vrot.slane %v285, 1
        %v436 = vsel %vm356, %v433, %v435
        %s469 = scalar_lea.vmem %s1, 128
        %v470 = vld [vmem:[%s469] sm:$0xff]
        %v471 = vld [vmem:[%s469 + $0x8] sm:$0xff]
        %v472 = vld [vmem:[%s469 + $0x10] sm:$0xff]
        %v473 = vld [vmem:[%s469 + $0x18] sm:$0xff]
        %v474 = vld [vmem:[%s469 + $0x20] sm:$0xff]
        %v475 = vld [vmem:[%s469 + $0x28] sm:$0xff]
        %v476 = vld [vmem:[%s469 + $0x30] sm:$0xff]
        %v477 = vld [vmem:[%s469 + $0x38] sm:$0xff]
        %v478 = vld [vmem:[%s469 + $0x40] sm:$0xff]
        %v479 = vld [vmem:[%s469 + $0x48] sm:$0xff]
        %v480 = vld [vmem:[%s469 + $0x50] sm:$0xff]
        %v481 = vld [vmem:[%s469 + $0x58] sm:$0xff]
        %v482 = vld [vmem:[%s469 + $0x60] sm:$0xff]
        %v483 = vld [vmem:[%s469 + $0x68] sm:$0xff]
        %v484 = vld [vmem:[%s469 + $0x70] sm:$0xff]
        %v485 = vld [vmem:[%s469 + $0x78] sm:$0xff]
        %486 = vmatprep.subr.mxu0 0.0
        %487 = vmatpush1.msra.mxu0 %v470
        %488 = vmatprep.subr.mxu0 0.0
        %489 = vmatpush1.msra.mxu0 %v471
        %490 = vmatprep.subr.mxu0 0.0
        %491 = vmatpush1.msra.mxu0 %v472
        %492 = vmatprep.subr.mxu0 0.0
        %493 = vmatpush1.msra.mxu0 %v473
        %494 = vmatprep.subr.mxu0 0.0
        %495 = vmatpush1.msra.mxu0 %v474
        %496 = vmatprep.subr.mxu0 0.0
        %497 = vmatpush1.msra.mxu0 %v475
        %498 = vmatprep.subr.mxu0 0.0
        %499 = vmatpush1.msra.mxu0 %v476
        %500 = vmatprep.subr.mxu0 0.0
        %501 = vmatpush1.msra.mxu0 %v477
        %502 = vmatprep.subr.mxu0 0.0
        %503 = vmatpush1.msra.mxu0 %v478
        %504 = vmatprep.subr.mxu0 0.0
        %505 = vmatpush1.msra.mxu0 %v479
        %506 = vmatprep.subr.mxu0 0.0
        %507 = vmatpush1.msra.mxu0 %v480
        %508 = vmatprep.subr.mxu0 0.0
        %509 = vmatpush1.msra.mxu0 %v481
        %510 = vmatprep.subr.mxu0 0.0
        %511 = vmatpush1.msra.mxu0 %v482
        %512 = vmatprep.subr.mxu0 0.0
        %513 = vmatpush1.msra.mxu0 %v483
        %514 = vmatprep.subr.mxu0 0.0
        %515 = vmatpush1.msra.mxu0 %v484
        %516 = vmatprep.subr.mxu0 0.0
        %517 = vmatpush1.msra.mxu0 %v485
        %518 = vmatprep.subr.mxu0 0.0
        %519 = vmatpush1.msra.mxu0 0.0
        %520 = vmatprep.subr.mxu0 0.0
        %521 = vmatpush1.msra.mxu0 0.0
        %522 = vmatprep.subr.mxu0 0.0
        %523 = vmatpush1.msra.mxu0 0.0
        %524 = vmatprep.subr.mxu0 0.0
        %525 = vmatpush1.msra.mxu0 0.0
        %526 = vmatprep.subr.mxu0 0.0
        %527 = vmatpush1.msra.mxu0 0.0
        %528 = vmatprep.subr.mxu0 0.0
        %529 = vmatpush1.msra.mxu0 0.0
        %530 = vmatprep.subr.mxu0 0.0
        %531 = vmatpush1.msra.mxu0 0.0
        %532 = vmatprep.subr.mxu0 0.0
        %533 = vmatpush1.msra.mxu0 0.0
        %534 = vmatprep.subr.mxu0 0.0
        %535 = vmatpush1.msra.mxu0 0.0
        %536 = vmatprep.subr.mxu0 0.0
        %537 = vmatpush1.msra.mxu0 0.0
        %538 = vmatprep.subr.mxu0 0.0
        %539 = vmatpush1.msra.mxu0 0.0
        %540 = vmatprep.subr.mxu0 0.0
        %541 = vmatpush1.msra.mxu0 0.0
        %542 = vmatprep.subr.mxu0 0.0
        %543 = vmatpush1.msra.mxu0 0.0
        %544 = vmatprep.subr.mxu0 0.0
        %545 = vmatpush1.msra.mxu0 0.0
        %546 = vmatprep.subr.mxu0 0.0
        %547 = vmatpush1.msra.mxu0 0.0
        %548 = vmatprep.subr.mxu0 0.0
        %549 = vmatpush1.msra.mxu0 0.0
        %550 = vmatprep.mubr.f32.mxu0 0.0
        %551 = vmatmul.mubr.f32.gmra.mrb[0].mxu0 %v359
        %v552 = vpop.f32.mrb[0].mxu0
        %v553 = vadd.f32 0.0, %v552
        %v554 = vpop.f32.mrb[0].mxu0
        %555 = vmatprep.mubr.f32.mxu0 0.0
        %556 = vmatmul.mubr.f32.gmra.mrb[0].mxu0 %v361
        %v557 = vpop.f32.mrb[0].mxu0
        %v558 = vadd.f32 0.0, %v557
        %v559 = vpop.f32.mrb[0].mxu0
        %560 = vmatprep.mubr.f32.mxu0 0.0
        %561 = vmatmul.mubr.f32.gmra.mrb[0].mxu0 %v364
        %v562 = vpop.f32.mrb[0].mxu0
        %v563 = vadd.f32 0.0, %v562
        %v564 = vpop.f32.mrb[0].mxu0
        %565 = vmatprep.mubr.f32.mxu0 0.0
        %566 = vmatmul.mubr.f32.gmra.mrb[0].mxu0 %v366
        %v567 = vpop.f32.mrb[0].mxu0
        %v568 = vadd.f32 0.0, %v567
        %v569 = vpop.f32.mrb[0].mxu0
        %570 = vmatprep.mubr.f32.mxu0 0.0
        %571 = vmatmul.mubr.f32.gmra.mrb[0].mxu0 %v369
        %v572 = vpop.f32.mrb[0].mxu0
        %v573 = vadd.f32 0.0, %v572
        %v574 = vpop.f32.mrb[0].mxu0
        %575 = vmatprep.mubr.f32.mxu0 0.0
        %576 = vmatmul.mubr.f32.gmra.mrb[0].mxu0 %v371
        %v577 = vpop.f32.mrb[0].mxu0
        %v578 = vadd.f32 0.0, %v577
        %v579 = vpop.f32.mrb[0].mxu0
        %580 = vmatprep.mubr.f32.mxu0 0.0
        %581 = vmatmul.mubr.f32.gmra.mrb[0].mxu0 %v374
        %v582 = vpop.f32.mrb[0].mxu0
        %v583 = vadd.f32 0.0, %v582
        %v584 = vpop.f32.mrb[0].mxu0
        %585 = vmatprep.mubr.f32.mxu0 0.0
        %586 = vmatmul.mubr.f32.gmra.mrb[0].mxu0 %v376
        %v587 = vpop.f32.mrb[0].mxu0
        %v588 = vadd.f32 0.0, %v587
        %v589 = vpop.f32.mrb[0].mxu0
        %590 = vmatprep.mubr.f32.mxu0 0.0
        %591 = vmatmul.mubr.f32.gmra.mrb[0].mxu0 %v379
        %v592 = vpop.f32.mrb[0].mxu0
        %v593 = vadd.f32 0.0, %v592
        %v594 = vpop.f32.mrb[0].mxu0
        %595 = vmatprep.mubr.f32.mxu0 0.0
        %596 = vmatmul.mubr.f32.gmra.mrb[0].mxu0 %v381
        %v597 = vpop.f32.mrb[0].mxu0
        %v598 = vadd.f32 0.0, %v597
        %v599 = vpop.f32.mrb[0].mxu0
        %600 = vmatprep.mubr.f32.mxu0 0.0
        %601 = vmatmul.mubr.f32.gmra.mrb[0].mxu0 %v384
        %v602 = vpop.f32.mrb[0].mxu0
        %v603 = vadd.f32 0.0, %v602
        %v604 = vpop.f32.mrb[0].mxu0
        %605 = vmatprep.mubr.f32.mxu0 0.0
        %606 = vmatmul.mubr.f32.gmra.mrb[0].mxu0 %v386
        %v607 = vpop.f32.mrb[0].mxu0
        %v608 = vadd.f32 0.0, %v607
        %v609 = vpop.f32.mrb[0].mxu0
        %610 = vmatprep.mubr.f32.mxu0 0.0
        %611 = vmatmul.mubr.f32.gmra.mrb[0].mxu0 %v389
        %v612 = vpop.f32.mrb[0].mxu0
        %v613 = vadd.f32 0.0, %v612
        %v614 = vpop.f32.mrb[0].mxu0
        %615 = vmatprep.mubr.f32.mxu0 0.0
        %616 = vmatmul.mubr.f32.gmra.mrb[0].mxu0 %v391
        %v617 = vpop.f32.mrb[0].mxu0
        %v618 = vadd.f32 0.0, %v617
        %v619 = vpop.f32.mrb[0].mxu0
        %620 = vmatprep.mubr.f32.mxu0 0.0
        %621 = vmatmul.mubr.f32.gmra.mrb[0].mxu0 %v394
        %v622 = vpop.f32.mrb[0].mxu0
        %v623 = vadd.f32 0.0, %v622
        %v624 = vpop.f32.mrb[0].mxu0
        %625 = vmatprep.mubr.f32.mxu0 0.0
        %626 = vmatmul.mubr.f32.gmra.mrb[0].mxu0 %v396
        %v627 = vpop.f32.mrb[0].mxu0
        %v628 = vadd.f32 0.0, %v627
        %v629 = vpop.f32.mrb[0].mxu0
        %630 = vmatprep.mubr.f32.mxu0 0.0
        %631 = vmatmul.mubr.f32.gmra.mrb[0].mxu0 %v399
        %v632 = vpop.f32.mrb[0].mxu0
        %v633 = vadd.f32 0.0, %v632
        %v634 = vpop.f32.mrb[0].mxu0
        %635 = vmatprep.mubr.f32.mxu0 0.0
        %636 = vmatmul.mubr.f32.gmra.mrb[0].mxu0 %v401
        %v637 = vpop.f32.mrb[0].mxu0
        %v638 = vadd.f32 0.0, %v637
        %v639 = vpop.f32.mrb[0].mxu0
        %640 = vmatprep.mubr.f32.mxu0 0.0
        %641 = vmatmul.mubr.f32.gmra.mrb[0].mxu0 %v404
        %v642 = vpop.f32.mrb[0].mxu0
        %v643 = vadd.f32 0.0, %v642
        %v644 = vpop.f32.mrb[0].mxu0
        %645 = vmatprep.mubr.f32.mxu0 0.0
        %646 = vmatmul.mubr.f32.gmra.mrb[0].mxu0 %v406
        %v647 = vpop.f32.mrb[0].mxu0
        %v648 = vadd.f32 0.0, %v647
        %v649 = vpop.f32.mrb[0].mxu0
        %650 = vmatprep.mubr.f32.mxu0 0.0
        %651 = vmatmul.mubr.f32.gmra.mrb[0].mxu0 %v409
        %v652 = vpop.f32.mrb[0].mxu0
        %v653 = vadd.f32 0.0, %v652
        %v654 = vpop.f32.mrb[0].mxu0
        %655 = vmatprep.mubr.f32.mxu0 0.0
        %656 = vmatmul.mubr.f32.gmra.mrb[0].mxu0 %v411
        %v657 = vpop.f32.mrb[0].mxu0
        %v658 = vadd.f32 0.0, %v657
        %v659 = vpop.f32.mrb[0].mxu0
        %660 = vmatprep.mubr.f32.mxu0 0.0
        %661 = vmatmul.mubr.f32.gmra.mrb[0].mxu0 %v414
        %v662 = vpop.f32.mrb[0].mxu0
        %v663 = vadd.f32 0.0, %v662
        %v664 = vpop.f32.mrb[0].mxu0
        %665 = vmatprep.mubr.f32.mxu0 0.0
        %666 = vmatmul.mubr.f32.gmra.mrb[0].mxu0 %v416
        %v667 = vpop.f32.mrb[0].mxu0
        %v668 = vadd.f32 0.0, %v667
        %v669 = vpop.f32.mrb[0].mxu0
        %670 = vmatprep.mubr.f32.mxu0 0.0
        %671 = vmatmul.mubr.f32.gmra.mrb[0].mxu0 %v419
        %v672 = vpop.f32.mrb[0].mxu0
        %v673 = vadd.f32 0.0, %v672
        %v674 = vpop.f32.mrb[0].mxu0
        %675 = vmatprep.mubr.f32.mxu0 0.0
        %676 = vmatmul.mubr.f32.gmra.mrb[0].mxu0 %v421
        %v677 = vpop.f32.mrb[0].mxu0
        %v678 = vadd.f32 0.0, %v677
        %v679 = vpop.f32.mrb[0].mxu0
        %680 = vmatprep.mubr.f32.mxu0 0.0
        %681 = vmatmul.mubr.f32.gmra.mrb[0].mxu0 %v424
        %v682 = vpop.f32.mrb[0].mxu0
        %v683 = vadd.f32 0.0, %v682
        %v684 = vpop.f32.mrb[0].mxu0
        %685 = vmatprep.mubr.f32.mxu0 0.0
        %686 = vmatmul.mubr.f32.gmra.mrb[0].mxu0 %v426
        %v687 = vpop.f32.mrb[0].mxu0
        %v688 = vadd.f32 0.0, %v687
        %v689 = vpop.f32.mrb[0].mxu0
        %690 = vmatprep.mubr.f32.mxu0 0.0
        %691 = vmatmul.mubr.f32.gmra.mrb[0].mxu0 %v429
        %v692 = vpop.f32.mrb[0].mxu0
        %v693 = vadd.f32 0.0, %v692
        %v694 = vpop.f32.mrb[0].mxu0
        %695 = vmatprep.mubr.f32.mxu0 0.0
        %696 = vmatmul.mubr.f32.gmra.mrb[0].mxu0 %v431
        %v697 = vpop.f32.mrb[0].mxu0
        %v698 = vadd.f32 0.0, %v697
        %v699 = vpop.f32.mrb[0].mxu0
        %700 = vmatprep.mubr.f32.mxu0 0.0
        %701 = vmatmul.mubr.f32.gmra.mrb[0].mxu0 %v434
        %v702 = vpop.f32.mrb[0].mxu0
        %v703 = vadd.f32 0.0, %v702
        %v704 = vpop.f32.mrb[0].mxu0
        %705 = vmatprep.mubr.f32.mxu0 0.0
        %706 = vmatmul.mubr.f32.gmra.mrb[0].mxu0 %v436
        %v707 = vpop.f32.mrb[0].mxu0
        %v708 = vadd.f32 0.0, %v707
        %v709 = vpop.f32.mrb[0].mxu0
        %710 = vdwg.mxu0
        %711 = vmatprep.subr.mxu0 0.0
        %712 = vmatpush1.msra.mxu0 %v292
        %713 = vmatprep.subr.mxu0 0.0
        %714 = vmatpush1.msra.mxu0 %v293
        %715 = vmatprep.subr.mxu0 0.0
        %716 = vmatpush1.msra.mxu0 %v294
        %717 = vmatprep.subr.mxu0 0.0
        %718 = vmatpush1.msra.mxu0 %v295
        %719 = vmatprep.subr.mxu0 0.0
        %720 = vmatpush1.msra.mxu0 %v296
        %721 = vmatprep.subr.mxu0 0.0
        %722 = vmatpush1.msra.mxu0 %v297
        %723 = vmatprep.subr.mxu0 0.0
        %724 = vmatpush1.msra.mxu0 %v298
        %725 = vmatprep.subr.mxu0 0.0
        %726 = vmatpush1.msra.mxu0 %v299
        %727 = vmatprep.subr.mxu0 0.0
        %728 = vmatpush1.msra.mxu0 %v300
        %729 = vmatprep.subr.mxu0 0.0
        %730 = vmatpush1.msra.mxu0 %v301
        %731 = vmatprep.subr.mxu0 0.0
        %732 = vmatpush1.msra.mxu0 %v302
        %733 = vmatprep.subr.mxu0 0.0
        %734 = vmatpush1.msra.mxu0 %v303
        %735 = vmatprep.subr.mxu0 0.0
        %736 = vmatpush1.msra.mxu0 %v304
        %737 = vmatprep.subr.mxu0 0.0
        %738 = vmatpush1.msra.mxu0 %v305
        %739 = vmatprep.subr.mxu0 0.0
        %740 = vmatpush1.msra.mxu0 %v306
        %741 = vmatprep.subr.mxu0 0.0
        %742 = vmatpush1.msra.mxu0 %v307
        %743 = vmatprep.subr.mxu0 0.0
        %744 = vmatpush1.msra.mxu0 0.0
        %745 = vmatprep.subr.mxu0 0.0
        %746 = vmatpush1.msra.mxu0 0.0
        %747 = vmatprep.subr.mxu0 0.0
        %748 = vmatpush1.msra.mxu0 0.0
        %749 = vmatprep.subr.mxu0 0.0
        %750 = vmatpush1.msra.mxu0 0.0
        %751 = vmatprep.subr.mxu0 0.0
        %752 = vmatpush1.msra.mxu0 0.0
        %753 = vmatprep.subr.mxu0 0.0
        %754 = vmatpush1.msra.mxu0 0.0
        %755 = vmatprep.subr.mxu0 0.0
        %756 = vmatpush1.msra.mxu0 0.0
        %757 = vmatprep.subr.mxu0 0.0
        %758 = vmatpush1.msra.mxu0 0.0
        %759 = vmatprep.subr.mxu0 0.0
        %760 = vmatpush1.msra.mxu0 0.0
        %761 = vmatprep.subr.mxu0 0.0
        %762 = vmatpush1.msra.mxu0 0.0
        %763 = vmatprep.subr.mxu0 0.0
        %764 = vmatpush1.msra.mxu0 0.0
        %765 = vmatprep.subr.mxu0 0.0
        %766 = vmatpush1.msra.mxu0 0.0
        %767 = vmatprep.subr.mxu0 0.0
        %768 = vmatpush1.msra.mxu0 0.0
        %769 = vmatprep.subr.mxu0 0.0
        %770 = vmatpush1.msra.mxu0 0.0
        %771 = vmatprep.subr.mxu0 0.0
        %772 = vmatpush1.msra.mxu0 0.0
        %773 = vmatprep.subr.mxu0 0.0
        %774 = vmatpush1.msra.mxu0 0.0
        %775 = vmatprep.mubr.f32.mxu0 0.0
        %776 = vmatmul.mubr.f32.gmra.mrb[0].mxu0 %v238
        %v777 = vpop.f32.mrb[0].mxu0
        %v778 = vadd.f32 %v553, %v777
        %v779 = vpop.f32.mrb[0].mxu0
        %780 = vmatprep.mubr.f32.mxu0 0.0
        %781 = vmatmul.mubr.f32.gmra.mrb[0].mxu0 %v239
        %v782 = vpop.f32.mrb[0].mxu0
        %v783 = vadd.f32 %v558, %v782
        %v784 = vpop.f32.mrb[0].mxu0
        %785 = vmatprep.mubr.f32.mxu0 0.0
        %786 = vmatmul.mubr.f32.gmra.mrb[0].mxu0 %v241
        %v787 = vpop.f32.mrb[0].mxu0
        %v788 = vadd.f32 %v563, %v787
        %v789 = vpop.f32.mrb[0].mxu0
        %790 = vmatprep.mubr.f32.mxu0 0.0
        %791 = vmatmul.mubr.f32.gmra.mrb[0].mxu0 %v242
        %v792 = vpop.f32.mrb[0].mxu0
        %v793 = vadd.f32 %v568, %v792
        %v794 = vpop.f32.mrb[0].mxu0
        %795 = vmatprep.mubr.f32.mxu0 0.0
        %796 = vmatmul.mubr.f32.gmra.mrb[0].mxu0 %v244
        %v797 = vpop.f32.mrb[0].mxu0
        %v798 = vadd.f32 %v573, %v797
        %v799 = vpop.f32.mrb[0].mxu0
        %800 = vmatprep.mubr.f32.mxu0 0.0
        %801 = vmatmul.mubr.f32.gmra.mrb[0].mxu0 %v245
        %v802 = vpop.f32.mrb[0].mxu0
        %v803 = vadd.f32 %v578, %v802
        %v804 = vpop.f32.mrb[0].mxu0
        %805 = vmatprep.mubr.f32.mxu0 0.0
        %806 = vmatmul.mubr.f32.gmra.mrb[0].mxu0 %v247
        %v807 = vpop.f32.mrb[0].mxu0
        %v808 = vadd.f32 %v583, %v807
        %v809 = vpop.f32.mrb[0].mxu0
        %810 = vmatprep.mubr.f32.mxu0 0.0
        %811 = vmatmul.mubr.f32.gmra.mrb[0].mxu0 %v248
        %v812 = vpop.f32.mrb[0].mxu0
        %v813 = vadd.f32 %v588, %v812
        %v814 = vpop.f32.mrb[0].mxu0
        %815 = vmatprep.mubr.f32.mxu0 0.0
        %816 = vmatmul.mubr.f32.gmra.mrb[0].mxu0 %v250
        %v817 = vpop.f32.mrb[0].mxu0
        %v818 = vadd.f32 %v593, %v817
        %v819 = vpop.f32.mrb[0].mxu0
        %820 = vmatprep.mubr.f32.mxu0 0.0
        %821 = vmatmul.mubr.f32.gmra.mrb[0].mxu0 %v251
        %v822 = vpop.f32.mrb[0].mxu0
        %v823 = vadd.f32 %v598, %v822
        %v824 = vpop.f32.mrb[0].mxu0
        %825 = vmatprep.mubr.f32.mxu0 0.0
        %826 = vmatmul.mubr.f32.gmra.mrb[0].mxu0 %v253
        %v827 = vpop.f32.mrb[0].mxu0
        %v828 = vadd.f32 %v603, %v827
        %v829 = vpop.f32.mrb[0].mxu0
        %830 = vmatprep.mubr.f32.mxu0 0.0
        %831 = vmatmul.mubr.f32.gmra.mrb[0].mxu0 %v254
        %v832 = vpop.f32.mrb[0].mxu0
        %v833 = vadd.f32 %v608, %v832
        %v834 = vpop.f32.mrb[0].mxu0
        %835 = vmatprep.mubr.f32.mxu0 0.0
        %836 = vmatmul.mubr.f32.gmra.mrb[0].mxu0 %v256
        %v837 = vpop.f32.mrb[0].mxu0
        %v838 = vadd.f32 %v613, %v837
        %v839 = vpop.f32.mrb[0].mxu0
        %840 = vmatprep.mubr.f32.mxu0 0.0
        %841 = vmatmul.mubr.f32.gmra.mrb[0].mxu0 %v257
        %v842 = vpop.f32.mrb[0].mxu0
        %v843 = vadd.f32 %v618, %v842
        %v844 = vpop.f32.mrb[0].mxu0
        %845 = vmatprep.mubr.f32.mxu0 0.0
        %846 = vmatmul.mubr.f32.gmra.mrb[0].mxu0 %v259
        %v847 = vpop.f32.mrb[0].mxu0
        %v848 = vadd.f32 %v623, %v847
        %v849 = vpop.f32.mrb[0].mxu0
        %850 = vmatprep.mubr.f32.mxu0 0.0
        %851 = vmatmul.mubr.f32.gmra.mrb[0].mxu0 %v260
        %v852 = vpop.f32.mrb[0].mxu0
        %v853 = vadd.f32 %v628, %v852
        %v854 = vpop.f32.mrb[0].mxu0
        %855 = vmatprep.mubr.f32.mxu0 0.0
        %856 = vmatmul.mubr.f32.gmra.mrb[0].mxu0 %v262
        %v857 = vpop.f32.mrb[0].mxu0
        %v858 = vadd.f32 %v633, %v857
        %v859 = vpop.f32.mrb[0].mxu0
        %860 = vmatprep.mubr.f32.mxu0 0.0
        %861 = vmatmul.mubr.f32.gmra.mrb[0].mxu0 %v263
        %v862 = vpop.f32.mrb[0].mxu0
        %v863 = vadd.f32 %v638, %v862
        %v864 = vpop.f32.mrb[0].mxu0
        %865 = vmatprep.mubr.f32.mxu0 0.0
        %866 = vmatmul.mubr.f32.gmra.mrb[0].mxu0 %v265
        %v867 = vpop.f32.mrb[0].mxu0
        %v868 = vadd.f32 %v643, %v867
        %v869 = vpop.f32.mrb[0].mxu0
        %870 = vmatprep.mubr.f32.mxu0 0.0
        %871 = vmatmul.mubr.f32.gmra.mrb[0].mxu0 %v266
        %v872 = vpop.f32.mrb[0].mxu0
        %v873 = vadd.f32 %v648, %v872
        %v874 = vpop.f32.mrb[0].mxu0
        %875 = vmatprep.mubr.f32.mxu0 0.0
        %876 = vmatmul.mubr.f32.gmra.mrb[0].mxu0 %v268
        %v877 = vpop.f32.mrb[0].mxu0
        %v878 = vadd.f32 %v653, %v877
        %v879 = vpop.f32.mrb[0].mxu0
        %880 = vmatprep.mubr.f32.mxu0 0.0
        %881 = vmatmul.mubr.f32.gmra.mrb[0].mxu0 %v269
        %v882 = vpop.f32.mrb[0].mxu0
        %v883 = vadd.f32 %v658, %v882
        %v884 = vpop.f32.mrb[0].mxu0
        %885 = vmatprep.mubr.f32.mxu0 0.0
        %886 = vmatmul.mubr.f32.gmra.mrb[0].mxu0 %v271
        %v887 = vpop.f32.mrb[0].mxu0
        %v888 = vadd.f32 %v663, %v887
        %v889 = vpop.f32.mrb[0].mxu0
        %890 = vmatprep.mubr.f32.mxu0 0.0
        %891 = vmatmul.mubr.f32.gmra.mrb[0].mxu0 %v272
        %v892 = vpop.f32.mrb[0].mxu0
        %v893 = vadd.f32 %v668, %v892
        %v894 = vpop.f32.mrb[0].mxu0
        %895 = vmatprep.mubr.f32.mxu0 0.0
        %896 = vmatmul.mubr.f32.gmra.mrb[0].mxu0 %v274
        %v897 = vpop.f32.mrb[0].mxu0
        %v898 = vadd.f32 %v673, %v897
        %v899 = vpop.f32.mrb[0].mxu0
        %900 = vmatprep.mubr.f32.mxu0 0.0
        %901 = vmatmul.mubr.f32.gmra.mrb[0].mxu0 %v275
        %v902 = vpop.f32.mrb[0].mxu0
        %v903 = vadd.f32 %v678, %v902
        %v904 = vpop.f32.mrb[0].mxu0
        %905 = vmatprep.mubr.f32.mxu0 0.0
        %906 = vmatmul.mubr.f32.gmra.mrb[0].mxu0 %v277
        %v907 = vpop.f32.mrb[0].mxu0
        %v908 = vadd.f32 %v683, %v907
        %v909 = vpop.f32.mrb[0].mxu0
        %910 = vmatprep.mubr.f32.mxu0 0.0
        %911 = vmatmul.mubr.f32.gmra.mrb[0].mxu0 %v278
        %v912 = vpop.f32.mrb[0].mxu0
        %v913 = vadd.f32 %v688, %v912
        %v914 = vpop.f32.mrb[0].mxu0
        %915 = vmatprep.mubr.f32.mxu0 0.0
        %916 = vmatmul.mubr.f32.gmra.mrb[0].mxu0 %v280
        %v917 = vpop.f32.mrb[0].mxu0
        %v918 = vadd.f32 %v693, %v917
        %v919 = vpop.f32.mrb[0].mxu0
        %920 = vmatprep.mubr.f32.mxu0 0.0
        %921 = vmatmul.mubr.f32.gmra.mrb[0].mxu0 %v281
        %v922 = vpop.f32.mrb[0].mxu0
        %v923 = vadd.f32 %v698, %v922
        %v924 = vpop.f32.mrb[0].mxu0
        %925 = vmatprep.mubr.f32.mxu0 0.0
        %926 = vmatmul.mubr.f32.gmra.mrb[0].mxu0 %v283
        %v927 = vpop.f32.mrb[0].mxu0
        %v928 = vadd.f32 %v703, %v927
        %v929 = vpop.f32.mrb[0].mxu0
        %930 = vmatprep.mubr.f32.mxu0 0.0
        %931 = vmatmul.mubr.f32.gmra.mrb[0].mxu0 %v284
        %v932 = vpop.f32.mrb[0].mxu0
        %v933 = vadd.f32 %v708, %v932
        %v934 = vpop.f32.mrb[0].mxu0
        %935 = vdwg.mxu0
        %vm936 = vcmask 1045504
        %v937 = vrot.slane %v238, 2
        %v938 = vrot.slane %v239, 2
        %v939 = vsel %vm936, %v937, %v938
        %v940 = vrot.slane %v240, 2
        %v941 = vsel %vm936, %v938, %v940
        %v942 = vrot.slane %v241, 2
        %v943 = vrot.slane %v242, 2
        %v944 = vsel %vm936, %v942, %v943
        %v945 = vrot.slane %v243, 2
        %v946 = vsel %vm936, %v943, %v945
        %v947 = vrot.slane %v244, 2
        %v948 = vrot.slane %v245, 2
        %v949 = vsel %vm936, %v947, %v948
        %v950 = vrot.slane %v246, 2
        %v951 = vsel %vm936, %v948, %v950
        %v952 = vrot.slane %v247, 2
        %v953 = vrot.slane %v248, 2
        %v954 = vsel %vm936, %v952, %v953
        %v955 = vrot.slane %v249, 2
        %v956 = vsel %vm936, %v953, %v955
        %v957 = vrot.slane %v250, 2
        %v958 = vrot.slane %v251, 2
        %v959 = vsel %vm936, %v957, %v958
        %v960 = vrot.slane %v252, 2
        %v961 = vsel %vm936, %v958, %v960
        %v962 = vrot.slane %v253, 2
        %v963 = vrot.slane %v254, 2
        %v964 = vsel %vm936, %v962, %v963
        %v965 = vrot.slane %v255, 2
        %v966 = vsel %vm936, %v963, %v965
        %v967 = vrot.slane %v256, 2
        %v968 = vrot.slane %v257, 2
        %v969 = vsel %vm936, %v967, %v968
        %v970 = vrot.slane %v258, 2
        %v971 = vsel %vm936, %v968, %v970
        %v972 = vrot.slane %v259, 2
        %v973 = vrot.slane %v260, 2
        %v974 = vsel %vm936, %v972, %v973
        %v975 = vrot.slane %v261, 2
        %v976 = vsel %vm936, %v973, %v975
        %v977 = vrot.slane %v262, 2
        %v978 = vrot.slane %v263, 2
        %v979 = vsel %vm936, %v977, %v978
        %v980 = vrot.slane %v264, 2
        %v981 = vsel %vm936, %v978, %v980
        %v982 = vrot.slane %v265, 2
        %v983 = vrot.slane %v266, 2
        %v984 = vsel %vm936, %v982, %v983
        %v985 = vrot.slane %v267, 2
        %v986 = vsel %vm936, %v983, %v985
        %v987 = vrot.slane %v268, 2
        %v988 = vrot.slane %v269, 2
        %v989 = vsel %vm936, %v987, %v988
        %v990 = vrot.slane %v270, 2
        %v991 = vsel %vm936, %v988, %v990
        %v992 = vrot.slane %v271, 2
        %v993 = vrot.slane %v272, 2
        %v994 = vsel %vm936, %v992, %v993
        %v995 = vrot.slane %v273, 2
        %v996 = vsel %vm936, %v993, %v995
        %v997 = vrot.slane %v274, 2
        %v998 = vrot.slane %v275, 2
        %v999 = vsel %vm936, %v997, %v998
        %v1000 = vrot.slane %v276, 2
        %v1001 = vsel %vm936, %v998, %v1000
        %v1002 = vrot.slane %v277, 2
        %v1003 = vrot.slane %v278, 2
        %v1004 = vsel %vm936, %v1002, %v1003
        %v1005 = vrot.slane %v279, 2
        %v1006 = vsel %vm936, %v1003, %v1005
        %v1007 = vrot.slane %v280, 2
        %v1008 = vrot.slane %v281, 2
        %v1009 = vsel %vm936, %v1007, %v1008
        %v1010 = vrot.slane %v282, 2
        %v1011 = vsel %vm936, %v1008, %v1010
        %v1012 = vrot.slane %v283, 2
        %v1013 = vrot.slane %v284, 2
        %v1014 = vsel %vm936, %v1012, %v1013
        %v1015 = vrot.slane %v285, 2
        %v1016 = vsel %vm936, %v1013, %v1015
        %s1049 = scalar_lea.vmem %s1, 256
        %v1050 = vld [vmem:[%s1049] sm:$0xff]
        %v1051 = vld [vmem:[%s1049 + $0x8] sm:$0xff]
        %v1052 = vld [vmem:[%s1049 + $0x10] sm:$0xff]
        %v1053 = vld [vmem:[%s1049 + $0x18] sm:$0xff]
        %v1054 = vld [vmem:[%s1049 + $0x20] sm:$0xff]
        %v1055 = vld [vmem:[%s1049 + $0x28] sm:$0xff]
        %v1056 = vld [vmem:[%s1049 + $0x30] sm:$0xff]
        %v1057 = vld [vmem:[%s1049 + $0x38] sm:$0xff]
        %v1058 = vld [vmem:[%s1049 + $0x40] sm:$0xff]
        %v1059 = vld [vmem:[%s1049 + $0x48] sm:$0xff]
        %v1060 = vld [vmem:[%s1049 + $0x50] sm:$0xff]
        %v1061 = vld [vmem:[%s1049 + $0x58] sm:$0xff]
        %v1062 = vld [vmem:[%s1049 + $0x60] sm:$0xff]
        %v1063 = vld [vmem:[%s1049 + $0x68] sm:$0xff]
        %v1064 = vld [vmem:[%s1049 + $0x70] sm:$0xff]
        %v1065 = vld [vmem:[%s1049 + $0x78] sm:$0xff]
        %1066 = vmatprep.subr.mxu0 0.0
        %1067 = vmatpush1.msra.mxu0 %v1050
        %1068 = vmatprep.subr.mxu0 0.0
        %1069 = vmatpush1.msra.mxu0 %v1051
        %1070 = vmatprep.subr.mxu0 0.0
        %1071 = vmatpush1.msra.mxu0 %v1052
        %1072 = vmatprep.subr.mxu0 0.0
        %1073 = vmatpush1.msra.mxu0 %v1053
        %1074 = vmatprep.subr.mxu0 0.0
        %1075 = vmatpush1.msra.mxu0 %v1054
        %1076 = vmatprep.subr.mxu0 0.0
        %1077 = vmatpush1.msra.mxu0 %v1055
        %1078 = vmatprep.subr.mxu0 0.0
        %1079 = vmatpush1.msra.mxu0 %v1056
        %1080 = vmatprep.subr.mxu0 0.0
        %1081 = vmatpush1.msra.mxu0 %v1057
        %1082 = vmatprep.subr.mxu0 0.0
        %1083 = vmatpush1.msra.mxu0 %v1058
        %1084 = vmatprep.subr.mxu0 0.0
        %1085 = vmatpush1.msra.mxu0 %v1059
        %1086 = vmatprep.subr.mxu0 0.0
        %1087 = vmatpush1.msra.mxu0 %v1060
        %1088 = vmatprep.subr.mxu0 0.0
        %1089 = vmatpush1.msra.mxu0 %v1061
        %1090 = vmatprep.subr.mxu0 0.0
        %1091 = vmatpush1.msra.mxu0 %v1062
        %1092 = vmatprep.subr.mxu0 0.0
        %1093 = vmatpush1.msra.mxu0 %v1063
        %1094 = vmatprep.subr.mxu0 0.0
        %1095 = vmatpush1.msra.mxu0 %v1064
        %1096 = vmatprep.subr.mxu0 0.0
        %1097 = vmatpush1.msra.mxu0 %v1065
        %1098 = vmatprep.subr.mxu0 0.0
        %1099 = vmatpush1.msra.mxu0 0.0
        %1100 = vmatprep.subr.mxu0 0.0
        %1101 = vmatpush1.msra.mxu0 0.0
        %1102 = vmatprep.subr.mxu0 0.0
        %1103 = vmatpush1.msra.mxu0 0.0
        %1104 = vmatprep.subr.mxu0 0.0
        %1105 = vmatpush1.msra.mxu0 0.0
        %1106 = vmatprep.subr.mxu0 0.0
        %1107 = vmatpush1.msra.mxu0 0.0
        %1108 = vmatprep.subr.mxu0 0.0
        %1109 = vmatpush1.msra.mxu0 0.0
        %1110 = vmatprep.subr.mxu0 0.0
        %1111 = vmatpush1.msra.mxu0 0.0
        %1112 = vmatprep.subr.mxu0 0.0
        %1113 = vmatpush1.msra.mxu0 0.0
        %1114 = vmatprep.subr.mxu0 0.0
        %1115 = vmatpush1.msra.mxu0 0.0
        %1116 = vmatprep.subr.mxu0 0.0
        %1117 = vmatpush1.msra.mxu0 0.0
        %1118 = vmatprep.subr.mxu0 0.0
        %1119 = vmatpush1.msra.mxu0 0.0
        %1120 = vmatprep.subr.mxu0 0.0
        %1121 = vmatpush1.msra.mxu0 0.0
        %1122 = vmatprep.subr.mxu0 0.0
        %1123 = vmatpush1.msra.mxu0 0.0
        %1124 = vmatprep.subr.mxu0 0.0
        %1125 = vmatpush1.msra.mxu0 0.0
        %1126 = vmatprep.subr.mxu0 0.0
        %1127 = vmatpush1.msra.mxu0 0.0
        %1128 = vmatprep.subr.mxu0 0.0
        %1129 = vmatpush1.msra.mxu0 0.0
        %1130 = vmatprep.mubr.f32.mxu0 0.0
        %1131 = vmatmul.mubr.f32.gmra.mrb[0].mxu0 %v939
        %v1132 = vpop.f32.mrb[0].mxu0
        %v1133 = vadd.f32 0.0, %v1132
        %v1134 = vpop.f32.mrb[0].mxu0
        %1135 = vmatprep.mubr.f32.mxu0 0.0
        %1136 = vmatmul.mubr.f32.gmra.mrb[0].mxu0 %v941
        %v1137 = vpop.f32.mrb[0].mxu0
        %v1138 = vadd.f32 0.0, %v1137
        %v1139 = vpop.f32.mrb[0].mxu0
        %1140 = vmatprep.mubr.f32.mxu0 0.0
        %1141 = vmatmul.mubr.f32.gmra.mrb[0].mxu0 %v944
        %v1142 = vpop.f32.mrb[0].mxu0
        %v1143 = vadd.f32 0.0, %v1142
        %v1144 = vpop.f32.mrb[0].mxu0
        %1145 = vmatprep.mubr.f32.mxu0 0.0
        %1146 = vmatmul.mubr.f32.gmra.mrb[0].mxu0 %v946
        %v1147 = vpop.f32.mrb[0].mxu0
        %v1148 = vadd.f32 0.0, %v1147
        %v1149 = vpop.f32.mrb[0].mxu0
        %1150 = vmatprep.mubr.f32.mxu0 0.0
        %1151 = vmatmul.mubr.f32.gmra.mrb[0].mxu0 %v949
        %v1152 = vpop.f32.mrb[0].mxu0
        %v1153 = vadd.f32 0.0, %v1152
        %v1154 = vpop.f32.mrb[0].mxu0
        %1155 = vmatprep.mubr.f32.mxu0 0.0
        %1156 = vmatmul.mubr.f32.gmra.mrb[0].mxu0 %v951
        %v1157 = vpop.f32.mrb[0].mxu0
        %v1158 = vadd.f32 0.0, %v1157
        %v1159 = vpop.f32.mrb[0].mxu0
        %1160 = vmatprep.mubr.f32.mxu0 0.0
        %1161 = vmatmul.mubr.f32.gmra.mrb[0].mxu0 %v954
        %v1162 = vpop.f32.mrb[0].mxu0
        %v1163 = vadd.f32 0.0, %v1162
        %v1164 = vpop.f32.mrb[0].mxu0
        %1165 = vmatprep.mubr.f32.mxu0 0.0
        %1166 = vmatmul.mubr.f32.gmra.mrb[0].mxu0 %v956
        %v1167 = vpop.f32.mrb[0].mxu0
        %v1168 = vadd.f32 0.0, %v1167
        %v1169 = vpop.f32.mrb[0].mxu0
        %1170 = vmatprep.mubr.f32.mxu0 0.0
        %1171 = vmatmul.mubr.f32.gmra.mrb[0].mxu0 %v959
        %v1172 = vpop.f32.mrb[0].mxu0
        %v1173 = vadd.f32 0.0, %v1172
        %v1174 = vpop.f32.mrb[0].mxu0
        %1175 = vmatprep.mubr.f32.mxu0 0.0
        %1176 = vmatmul.mubr.f32.gmra.mrb[0].mxu0 %v961
        %v1177 = vpop.f32.mrb[0].mxu0
        %v1178 = vadd.f32 0.0, %v1177
        %v1179 = vpop.f32.mrb[0].mxu0
        %1180 = vmatprep.mubr.f32.mxu0 0.0
        %1181 = vmatmul.mubr.f32.gmra.mrb[0].mxu0 %v964
        %v1182 = vpop.f32.mrb[0].mxu0
        %v1183 = vadd.f32 0.0, %v1182
        %v1184 = vpop.f32.mrb[0].mxu0
        %1185 = vmatprep.mubr.f32.mxu0 0.0
        %1186 = vmatmul.mubr.f32.gmra.mrb[0].mxu0 %v966
        %v1187 = vpop.f32.mrb[0].mxu0
        %v1188 = vadd.f32 0.0, %v1187
        %v1189 = vpop.f32.mrb[0].mxu0
        %1190 = vmatprep.mubr.f32.mxu0 0.0
        %1191 = vmatmul.mubr.f32.gmra.mrb[0].mxu0 %v969
        %v1192 = vpop.f32.mrb[0].mxu0
        %v1193 = vadd.f32 0.0, %v1192
        %v1194 = vpop.f32.mrb[0].mxu0
        %1195 = vmatprep.mubr.f32.mxu0 0.0
        %1196 = vmatmul.mubr.f32.gmra.mrb[0].mxu0 %v971
        %v1197 = vpop.f32.mrb[0].mxu0
        %v1198 = vadd.f32 0.0, %v1197
        %v1199 = vpop.f32.mrb[0].mxu0
        %1200 = vmatprep.mubr.f32.mxu0 0.0
        %1201 = vmatmul.mubr.f32.gmra.mrb[0].mxu0 %v974
        %v1202 = vpop.f32.mrb[0].mxu0
        %v1203 = vadd.f32 0.0, %v1202
        %v1204 = vpop.f32.mrb[0].mxu0
        %1205 = vmatprep.mubr.f32.mxu0 0.0
        %1206 = vmatmul.mubr.f32.gmra.mrb[0].mxu0 %v976
        %v1207 = vpop.f32.mrb[0].mxu0
        %v1208 = vadd.f32 0.0, %v1207
        %v1209 = vpop.f32.mrb[0].mxu0
        %1210 = vmatprep.mubr.f32.mxu0 0.0
        %1211 = vmatmul.mubr.f32.gmra.mrb[0].mxu0 %v979
        %v1212 = vpop.f32.mrb[0].mxu0
        %v1213 = vadd.f32 0.0, %v1212
        %v1214 = vpop.f32.mrb[0].mxu0
        %1215 = vmatprep.mubr.f32.mxu0 0.0
        %1216 = vmatmul.mubr.f32.gmra.mrb[0].mxu0 %v981
        %v1217 = vpop.f32.mrb[0].mxu0
        %v1218 = vadd.f32 0.0, %v1217
        %v1219 = vpop.f32.mrb[0].mxu0
        %1220 = vmatprep.mubr.f32.mxu0 0.0
        %1221 = vmatmul.mubr.f32.gmra.mrb[0].mxu0 %v984
        %v1222 = vpop.f32.mrb[0].mxu0
        %v1223 = vadd.f32 0.0, %v1222
        %v1224 = vpop.f32.mrb[0].mxu0
        %1225 = vmatprep.mubr.f32.mxu0 0.0
        %1226 = vmatmul.mubr.f32.gmra.mrb[0].mxu0 %v986
        %v1227 = vpop.f32.mrb[0].mxu0
        %v1228 = vadd.f32 0.0, %v1227
        %v1229 = vpop.f32.mrb[0].mxu0
        %1230 = vmatprep.mubr.f32.mxu0 0.0
        %1231 = vmatmul.mubr.f32.gmra.mrb[0].mxu0 %v989
        %v1232 = vpop.f32.mrb[0].mxu0
        %v1233 = vadd.f32 0.0, %v1232
        %v1234 = vpop.f32.mrb[0].mxu0
        %1235 = vmatprep.mubr.f32.mxu0 0.0
        %1236 = vmatmul.mubr.f32.gmra.mrb[0].mxu0 %v991
        %v1237 = vpop.f32.mrb[0].mxu0
        %v1238 = vadd.f32 0.0, %v1237
        %v1239 = vpop.f32.mrb[0].mxu0
        %1240 = vmatprep.mubr.f32.mxu0 0.0
        %1241 = vmatmul.mubr.f32.gmra.mrb[0].mxu0 %v994
        %v1242 = vpop.f32.mrb[0].mxu0
        %v1243 = vadd.f32 0.0, %v1242
        %v1244 = vpop.f32.mrb[0].mxu0
        %1245 = vmatprep.mubr.f32.mxu0 0.0
        %1246 = vmatmul.mubr.f32.gmra.mrb[0].mxu0 %v996
        %v1247 = vpop.f32.mrb[0].mxu0
        %v1248 = vadd.f32 0.0, %v1247
        %v1249 = vpop.f32.mrb[0].mxu0
        %1250 = vmatprep.mubr.f32.mxu0 0.0
        %1251 = vmatmul.mubr.f32.gmra.mrb[0].mxu0 %v999
        %v1252 = vpop.f32.mrb[0].mxu0
        %v1253 = vadd.f32 0.0, %v1252
        %v1254 = vpop.f32.mrb[0].mxu0
        %1255 = vmatprep.mubr.f32.mxu0 0.0
        %1256 = vmatmul.mubr.f32.gmra.mrb[0].mxu0 %v1001
        %v1257 = vpop.f32.mrb[0].mxu0
        %v1258 = vadd.f32 0.0, %v1257
        %v1259 = vpop.f32.mrb[0].mxu0
        %1260 = vmatprep.mubr.f32.mxu0 0.0
        %1261 = vmatmul.mubr.f32.gmra.mrb[0].mxu0 %v1004
        %v1262 = vpop.f32.mrb[0].mxu0
        %v1263 = vadd.f32 0.0, %v1262
        %v1264 = vpop.f32.mrb[0].mxu0
        %1265 = vmatprep.mubr.f32.mxu0 0.0
        %1266 = vmatmul.mubr.f32.gmra.mrb[0].mxu0 %v1006
        %v1267 = vpop.f32.mrb[0].mxu0
        %v1268 = vadd.f32 0.0, %v1267
        %v1269 = vpop.f32.mrb[0].mxu0
        %1270 = vmatprep.mubr.f32.mxu0 0.0
        %1271 = vmatmul.mubr.f32.gmra.mrb[0].mxu0 %v1009
        %v1272 = vpop.f32.mrb[0].mxu0
        %v1273 = vadd.f32 0.0, %v1272
        %v1274 = vpop.f32.mrb[0].mxu0
        %1275 = vmatprep.mubr.f32.mxu0 0.0
        %1276 = vmatmul.mubr.f32.gmra.mrb[0].mxu0 %v1011
        %v1277 = vpop.f32.mrb[0].mxu0
        %v1278 = vadd.f32 0.0, %v1277
        %v1279 = vpop.f32.mrb[0].mxu0
        %1280 = vmatprep.mubr.f32.mxu0 0.0
        %1281 = vmatmul.mubr.f32.gmra.mrb[0].mxu0 %v1014
        %v1282 = vpop.f32.mrb[0].mxu0
        %v1283 = vadd.f32 0.0, %v1282
        %v1284 = vpop.f32.mrb[0].mxu0
        %1285 = vmatprep.mubr.f32.mxu0 0.0
        %1286 = vmatmul.mubr.f32.gmra.mrb[0].mxu0 %v1016
        %v1287 = vpop.f32.mrb[0].mxu0
        %v1288 = vadd.f32 0.0, %v1287
        %v1289 = vpop.f32.mrb[0].mxu0
        %1290 = vdwg.mxu0
        %v1291 = vadd.f32 %v778, %v1133
        %v1292 = vadd.f32 %v783, %v1138
        %v1293 = vadd.f32 %v788, %v1143
        %v1294 = vadd.f32 %v793, %v1148
        %v1295 = vadd.f32 %v798, %v1153
        %v1296 = vadd.f32 %v803, %v1158
        %v1297 = vadd.f32 %v808, %v1163
        %v1298 = vadd.f32 %v813, %v1168
        %v1299 = vadd.f32 %v818, %v1173
        %v1300 = vadd.f32 %v823, %v1178
        %v1301 = vadd.f32 %v828, %v1183
        %v1302 = vadd.f32 %v833, %v1188
        %v1303 = vadd.f32 %v838, %v1193
        %v1304 = vadd.f32 %v843, %v1198
        %v1305 = vadd.f32 %v848, %v1203
        %v1306 = vadd.f32 %v853, %v1208
        %v1307 = vadd.f32 %v858, %v1213
        %v1308 = vadd.f32 %v863, %v1218
        %v1309 = vadd.f32 %v868, %v1223
        %v1310 = vadd.f32 %v873, %v1228
        %v1311 = vadd.f32 %v878, %v1233
        %v1312 = vadd.f32 %v883, %v1238
        %v1313 = vadd.f32 %v888, %v1243
        %v1314 = vadd.f32 %v893, %v1248
        %v1315 = vadd.f32 %v898, %v1253
        %v1316 = vadd.f32 %v903, %v1258
        %v1317 = vadd.f32 %v908, %v1263
        %v1318 = vadd.f32 %v913, %v1268
        %v1319 = vadd.f32 %v918, %v1273
        %v1320 = vadd.f32 %v923, %v1278
        %v1321 = vadd.f32 %v928, %v1283
        %v1322 = vadd.f32 %v933, %v1288
        %s1323 = scalar_lea.vmem %s1, 384
        %v1324 = vld [vmem:[%s1323] sm:$0xff]
        %v1325 = vld [vmem:[%s1323 + $0x8] sm:$0xff]
        %v1326 = vld [vmem:[%s1323 + $0x10] sm:$0xff]
        %v1327 = vld [vmem:[%s1323 + $0x18] sm:$0xff]
        %v1328 = vld [vmem:[%s1323 + $0x20] sm:$0xff]
        %v1329 = vld [vmem:[%s1323 + $0x28] sm:$0xff]
        %v1330 = vld [vmem:[%s1323 + $0x30] sm:$0xff]
        %v1331 = vld [vmem:[%s1323 + $0x38] sm:$0xff]
        %v1332 = vld [vmem:[%s1323 + $0x40] sm:$0xff]
        %v1333 = vld [vmem:[%s1323 + $0x48] sm:$0xff]
        %v1334 = vld [vmem:[%s1323 + $0x50] sm:$0xff]
        %v1335 = vld [vmem:[%s1323 + $0x58] sm:$0xff]
        %v1336 = vld [vmem:[%s1323 + $0x60] sm:$0xff]
        %v1337 = vld [vmem:[%s1323 + $0x68] sm:$0xff]
        %v1338 = vld [vmem:[%s1323 + $0x70] sm:$0xff]
        %v1339 = vld [vmem:[%s1323 + $0x78] sm:$0xff]
        %1340 = vmatprep.subr.mxu0 0.0
        %1341 = vmatpush1.msra.mxu0 %v1324
        %1342 = vmatprep.subr.mxu0 0.0
        %1343 = vmatpush1.msra.mxu0 %v1325
        %1344 = vmatprep.subr.mxu0 0.0
        %1345 = vmatpush1.msra.mxu0 %v1326
        %1346 = vmatprep.subr.mxu0 0.0
        %1347 = vmatpush1.msra.mxu0 %v1327
        %1348 = vmatprep.subr.mxu0 0.0
        %1349 = vmatpush1.msra.mxu0 %v1328
        %1350 = vmatprep.subr.mxu0 0.0
        %1351 = vmatpush1.msra.mxu0 %v1329
        %1352 = vmatprep.subr.mxu0 0.0
        %1353 = vmatpush1.msra.mxu0 %v1330
        %1354 = vmatprep.subr.mxu0 0.0
        %1355 = vmatpush1.msra.mxu0 %v1331
        %1356 = vmatprep.subr.mxu0 0.0
        %1357 = vmatpush1.msra.mxu0 %v1332
        %1358 = vmatprep.subr.mxu0 0.0
        %1359 = vmatpush1.msra.mxu0 %v1333
        %1360 = vmatprep.subr.mxu0 0.0
        %1361 = vmatpush1.msra.mxu0 %v1334
        %1362 = vmatprep.subr.mxu0 0.0
        %1363 = vmatpush1.msra.mxu0 %v1335
        %1364 = vmatprep.subr.mxu0 0.0
        %1365 = vmatpush1.msra.mxu0 %v1336
        %1366 = vmatprep.subr.mxu0 0.0
        %1367 = vmatpush1.msra.mxu0 %v1337
        %1368 = vmatprep.subr.mxu0 0.0
        %1369 = vmatpush1.msra.mxu0 %v1338
        %1370 = vmatprep.subr.mxu0 0.0
        %1371 = vmatpush1.msra.mxu0 %v1339
        %1372 = vmatprep.subr.mxu0 0.0
        %1373 = vmatpush1.msra.mxu0 0.0
        %1374 = vmatprep.subr.mxu0 0.0
        %1375 = vmatpush1.msra.mxu0 0.0
        %1376 = vmatprep.subr.mxu0 0.0
        %1377 = vmatpush1.msra.mxu0 0.0
        %1378 = vmatprep.subr.mxu0 0.0
        %1379 = vmatpush1.msra.mxu0 0.0
        %1380 = vmatprep.subr.mxu0 0.0
        %1381 = vmatpush1.msra.mxu0 0.0
        %1382 = vmatprep.subr.mxu0 0.0
        %1383 = vmatpush1.msra.mxu0 0.0
        %1384 = vmatprep.subr.mxu0 0.0
        %1385 = vmatpush1.msra.mxu0 0.0
        %1386 = vmatprep.subr.mxu0 0.0
        %1387 = vmatpush1.msra.mxu0 0.0
        %1388 = vmatprep.subr.mxu0 0.0
        %1389 = vmatpush1.msra.mxu0 0.0
        %1390 = vmatprep.subr.mxu0 0.0
        %1391 = vmatpush1.msra.mxu0 0.0
        %1392 = vmatprep.subr.mxu0 0.0
        %1393 = vmatpush1.msra.mxu0 0.0
        %1394 = vmatprep.subr.mxu0 0.0
        %1395 = vmatpush1.msra.mxu0 0.0
        %1396 = vmatprep.subr.mxu0 0.0
        %1397 = vmatpush1.msra.mxu0 0.0
        %1398 = vmatprep.subr.mxu0 0.0
        %1399 = vmatpush1.msra.mxu0 0.0
        %1400 = vmatprep.subr.mxu0 0.0
        %1401 = vmatpush1.msra.mxu0 0.0
        %1402 = vmatprep.subr.mxu0 0.0
        %1403 = vmatpush1.msra.mxu0 0.0
        %1404 = vmatprep.mubr.f32.mxu0 0.0
        %1405 = vmatmul.mubr.f32.gmra.mrb[0].mxu0 %v241
        %v1406 = vpop.f32.mrb[0].mxu0
        %v1407 = vadd.f32 0.0, %v1406
        %v1408 = vpop.f32.mrb[0].mxu0
        %1409 = vmatprep.mubr.f32.mxu0 0.0
        %1410 = vmatmul.mubr.f32.gmra.mrb[0].mxu0 %v242
        %v1411 = vpop.f32.mrb[0].mxu0
        %v1412 = vadd.f32 0.0, %v1411
        %v1413 = vpop.f32.mrb[0].mxu0
        %1414 = vmatprep.mubr.f32.mxu0 0.0
        %1415 = vmatmul.mubr.f32.gmra.mrb[0].mxu0 %v244
        %v1416 = vpop.f32.mrb[0].mxu0
        %v1417 = vadd.f32 0.0, %v1416
        %v1418 = vpop.f32.mrb[0].mxu0
        %1419 = vmatprep.mubr.f32.mxu0 0.0
        %1420 = vmatmul.mubr.f32.gmra.mrb[0].mxu0 %v245
        %v1421 = vpop.f32.mrb[0].mxu0
        %v1422 = vadd.f32 0.0, %v1421
        %v1423 = vpop.f32.mrb[0].mxu0
        %1424 = vmatprep.mubr.f32.mxu0 0.0
        %1425 = vmatmul.mubr.f32.gmra.mrb[0].mxu0 %v247
        %v1426 = vpop.f32.mrb[0].mxu0
        %v1427 = vadd.f32 0.0, %v1426
        %v1428 = vpop.f32.mrb[0].mxu0
        %1429 = vmatprep.mubr.f32.mxu0 0.0
        %1430 = vmatmul.mubr.f32.gmra.mrb[0].mxu0 %v248
        %v1431 = vpop.f32.mrb[0].mxu0
        %v1432 = vadd.f32 0.0, %v1431
        %v1433 = vpop.f32.mrb[0].mxu0
        %1434 = vmatprep.mubr.f32.mxu0 0.0
        %1435 = vmatmul.mubr.f32.gmra.mrb[0].mxu0 %v250
        %v1436 = vpop.f32.mrb[0].mxu0
        %v1437 = vadd.f32 0.0, %v1436
        %v1438 = vpop.f32.mrb[0].mxu0
        %1439 = vmatprep.mubr.f32.mxu0 0.0
        %1440 = vmatmul.mubr.f32.gmra.mrb[0].mxu0 %v251
        %v1441 = vpop.f32.mrb[0].mxu0
        %v1442 = vadd.f32 0.0, %v1441
        %v1443 = vpop.f32.mrb[0].mxu0
        %1444 = vmatprep.mubr.f32.mxu0 0.0
        %1445 = vmatmul.mubr.f32.gmra.mrb[0].mxu0 %v253
        %v1446 = vpop.f32.mrb[0].mxu0
        %v1447 = vadd.f32 0.0, %v1446
        %v1448 = vpop.f32.mrb[0].mxu0
        %1449 = vmatprep.mubr.f32.mxu0 0.0
        %1450 = vmatmul.mubr.f32.gmra.mrb[0].mxu0 %v254
        %v1451 = vpop.f32.mrb[0].mxu0
        %v1452 = vadd.f32 0.0, %v1451
        %v1453 = vpop.f32.mrb[0].mxu0
        %1454 = vmatprep.mubr.f32.mxu0 0.0
        %1455 = vmatmul.mubr.f32.gmra.mrb[0].mxu0 %v256
        %v1456 = vpop.f32.mrb[0].mxu0
        %v1457 = vadd.f32 0.0, %v1456
        %v1458 = vpop.f32.mrb[0].mxu0
        %1459 = vmatprep.mubr.f32.mxu0 0.0
        %1460 = vmatmul.mubr.f32.gmra.mrb[0].mxu0 %v257
        %v1461 = vpop.f32.mrb[0].mxu0
        %v1462 = vadd.f32 0.0, %v1461
        %v1463 = vpop.f32.mrb[0].mxu0
        %1464 = vmatprep.mubr.f32.mxu0 0.0
        %1465 = vmatmul.mubr.f32.gmra.mrb[0].mxu0 %v259
        %v1466 = vpop.f32.mrb[0].mxu0
        %v1467 = vadd.f32 0.0, %v1466
        %v1468 = vpop.f32.mrb[0].mxu0
        %1469 = vmatprep.mubr.f32.mxu0 0.0
        %1470 = vmatmul.mubr.f32.gmra.mrb[0].mxu0 %v260
        %v1471 = vpop.f32.mrb[0].mxu0
        %v1472 = vadd.f32 0.0, %v1471
        %v1473 = vpop.f32.mrb[0].mxu0
        %1474 = vmatprep.mubr.f32.mxu0 0.0
        %1475 = vmatmul.mubr.f32.gmra.mrb[0].mxu0 %v262
        %v1476 = vpop.f32.mrb[0].mxu0
        %v1477 = vadd.f32 0.0, %v1476
        %v1478 = vpop.f32.mrb[0].mxu0
        %1479 = vmatprep.mubr.f32.mxu0 0.0
        %1480 = vmatmul.mubr.f32.gmra.mrb[0].mxu0 %v263
        %v1481 = vpop.f32.mrb[0].mxu0
        %v1482 = vadd.f32 0.0, %v1481
        %v1483 = vpop.f32.mrb[0].mxu0
        %1484 = vmatprep.mubr.f32.mxu0 0.0
        %1485 = vmatmul.mubr.f32.gmra.mrb[0].mxu0 %v265
        %v1486 = vpop.f32.mrb[0].mxu0
        %v1487 = vadd.f32 0.0, %v1486
        %v1488 = vpop.f32.mrb[0].mxu0
        %1489 = vmatprep.mubr.f32.mxu0 0.0
        %1490 = vmatmul.mubr.f32.gmra.mrb[0].mxu0 %v266
        %v1491 = vpop.f32.mrb[0].mxu0
        %v1492 = vadd.f32 0.0, %v1491
        %v1493 = vpop.f32.mrb[0].mxu0
        %1494 = vmatprep.mubr.f32.mxu0 0.0
        %1495 = vmatmul.mubr.f32.gmra.mrb[0].mxu0 %v268
        %v1496 = vpop.f32.mrb[0].mxu0
        %v1497 = vadd.f32 0.0, %v1496
        %v1498 = vpop.f32.mrb[0].mxu0
        %1499 = vmatprep.mubr.f32.mxu0 0.0
        %1500 = vmatmul.mubr.f32.gmra.mrb[0].mxu0 %v269
        %v1501 = vpop.f32.mrb[0].mxu0
        %v1502 = vadd.f32 0.0, %v1501
        %v1503 = vpop.f32.mrb[0].mxu0
        %1504 = vmatprep.mubr.f32.mxu0 0.0
        %1505 = vmatmul.mubr.f32.gmra.mrb[0].mxu0 %v271
        %v1506 = vpop.f32.mrb[0].mxu0
        %v1507 = vadd.f32 0.0, %v1506
        %v1508 = vpop.f32.mrb[0].mxu0
        %1509 = vmatprep.mubr.f32.mxu0 0.0
        %1510 = vmatmul.mubr.f32.gmra.mrb[0].mxu0 %v272
        %v1511 = vpop.f32.mrb[0].mxu0
        %v1512 = vadd.f32 0.0, %v1511
        %v1513 = vpop.f32.mrb[0].mxu0
        %1514 = vmatprep.mubr.f32.mxu0 0.0
        %1515 = vmatmul.mubr.f32.gmra.mrb[0].mxu0 %v274
        %v1516 = vpop.f32.mrb[0].mxu0
        %v1517 = vadd.f32 0.0, %v1516
        %v1518 = vpop.f32.mrb[0].mxu0
        %1519 = vmatprep.mubr.f32.mxu0 0.0
        %1520 = vmatmul.mubr.f32.gmra.mrb[0].mxu0 %v275
        %v1521 = vpop.f32.mrb[0].mxu0
        %v1522 = vadd.f32 0.0, %v1521
        %v1523 = vpop.f32.mrb[0].mxu0
        %1524 = vmatprep.mubr.f32.mxu0 0.0
        %1525 = vmatmul.mubr.f32.gmra.mrb[0].mxu0 %v277
        %v1526 = vpop.f32.mrb[0].mxu0
        %v1527 = vadd.f32 0.0, %v1526
        %v1528 = vpop.f32.mrb[0].mxu0
        %1529 = vmatprep.mubr.f32.mxu0 0.0
        %1530 = vmatmul.mubr.f32.gmra.mrb[0].mxu0 %v278
        %v1531 = vpop.f32.mrb[0].mxu0
        %v1532 = vadd.f32 0.0, %v1531
        %v1533 = vpop.f32.mrb[0].mxu0
        %1534 = vmatprep.mubr.f32.mxu0 0.0
        %1535 = vmatmul.mubr.f32.gmra.mrb[0].mxu0 %v280
        %v1536 = vpop.f32.mrb[0].mxu0
        %v1537 = vadd.f32 0.0, %v1536
        %v1538 = vpop.f32.mrb[0].mxu0
        %1539 = vmatprep.mubr.f32.mxu0 0.0
        %1540 = vmatmul.mubr.f32.gmra.mrb[0].mxu0 %v281
        %v1541 = vpop.f32.mrb[0].mxu0
        %v1542 = vadd.f32 0.0, %v1541
        %v1543 = vpop.f32.mrb[0].mxu0
        %1544 = vmatprep.mubr.f32.mxu0 0.0
        %1545 = vmatmul.mubr.f32.gmra.mrb[0].mxu0 %v283
        %v1546 = vpop.f32.mrb[0].mxu0
        %v1547 = vadd.f32 0.0, %v1546
        %v1548 = vpop.f32.mrb[0].mxu0
        %1549 = vmatprep.mubr.f32.mxu0 0.0
        %1550 = vmatmul.mubr.f32.gmra.mrb[0].mxu0 %v284
        %v1551 = vpop.f32.mrb[0].mxu0
        %v1552 = vadd.f32 0.0, %v1551
        %v1553 = vpop.f32.mrb[0].mxu0
        %1554 = vmatprep.mubr.f32.mxu0 0.0
        %1555 = vmatmul.mubr.f32.gmra.mrb[0].mxu0 %v286
        %v1556 = vpop.f32.mrb[0].mxu0
        %v1557 = vadd.f32 0.0, %v1556
        %v1558 = vpop.f32.mrb[0].mxu0
        %1559 = vmatprep.mubr.f32.mxu0 0.0
        %1560 = vmatmul.mubr.f32.gmra.mrb[0].mxu0 %v287
        %v1561 = vpop.f32.mrb[0].mxu0
        %v1562 = vadd.f32 0.0, %v1561
        %v1563 = vpop.f32.mrb[0].mxu0
        %1564 = vdwg.mxu0
        %v1565 = vadd.f32 %v1291, %v1407
        %v1566 = vadd.f32 %v1292, %v1412
        %v1567 = vadd.f32 %v1293, %v1417
        %v1568 = vadd.f32 %v1294, %v1422
        %v1569 = vadd.f32 %v1295, %v1427
        %v1570 = vadd.f32 %v1296, %v1432
        %v1571 = vadd.f32 %v1297, %v1437
        %v1572 = vadd.f32 %v1298, %v1442
        %v1573 = vadd.f32 %v1299, %v1447
        %v1574 = vadd.f32 %v1300, %v1452
        %v1575 = vadd.f32 %v1301, %v1457
        %v1576 = vadd.f32 %v1302, %v1462
        %v1577 = vadd.f32 %v1303, %v1467
        %v1578 = vadd.f32 %v1304, %v1472
        %v1579 = vadd.f32 %v1305, %v1477
        %v1580 = vadd.f32 %v1306, %v1482
        %v1581 = vadd.f32 %v1307, %v1487
        %v1582 = vadd.f32 %v1308, %v1492
        %v1583 = vadd.f32 %v1309, %v1497
        %v1584 = vadd.f32 %v1310, %v1502
        %v1585 = vadd.f32 %v1311, %v1507
        %v1586 = vadd.f32 %v1312, %v1512
        %v1587 = vadd.f32 %v1313, %v1517
        %v1588 = vadd.f32 %v1314, %v1522
        %v1589 = vadd.f32 %v1315, %v1527
        %v1590 = vadd.f32 %v1316, %v1532
        %v1591 = vadd.f32 %v1317, %v1537
        %v1592 = vadd.f32 %v1318, %v1542
        %v1593 = vadd.f32 %v1319, %v1547
        %v1594 = vadd.f32 %v1320, %v1552
        %v1595 = vadd.f32 %v1321, %v1557
        %v1596 = vadd.f32 %v1322, %v1562
        %v1600 = vrot.slane %v286, 1
        %v1601 = vrot.slane %v287, 1
        %v1602 = vsel %vm356, %v1600, %v1601
        %v1603 = vrot.slane %v288, 1
        %v1604 = vsel %vm356, %v1601, %v1603
        %s1607 = scalar_lea.vmem %s1, 512
        %v1608 = vld [vmem:[%s1607] sm:$0xff]
        %v1609 = vld [vmem:[%s1607 + $0x8] sm:$0xff]
        %v1610 = vld [vmem:[%s1607 + $0x10] sm:$0xff]
        %v1611 = vld [vmem:[%s1607 + $0x18] sm:$0xff]
        %v1612 = vld [vmem:[%s1607 + $0x20] sm:$0xff]
        %v1613 = vld [vmem:[%s1607 + $0x28] sm:$0xff]
        %v1614 = vld [vmem:[%s1607 + $0x30] sm:$0xff]
        %v1615 = vld [vmem:[%s1607 + $0x38] sm:$0xff]
        %v1616 = vld [vmem:[%s1607 + $0x40] sm:$0xff]
        %v1617 = vld [vmem:[%s1607 + $0x48] sm:$0xff]
        %v1618 = vld [vmem:[%s1607 + $0x50] sm:$0xff]
        %v1619 = vld [vmem:[%s1607 + $0x58] sm:$0xff]
        %v1620 = vld [vmem:[%s1607 + $0x60] sm:$0xff]
        %v1621 = vld [vmem:[%s1607 + $0x68] sm:$0xff]
        %v1622 = vld [vmem:[%s1607 + $0x70] sm:$0xff]
        %v1623 = vld [vmem:[%s1607 + $0x78] sm:$0xff]
        %1624 = vmatprep.subr.mxu0 0.0
        %1625 = vmatpush1.msra.mxu0 %v1608
        %1626 = vmatprep.subr.mxu0 0.0
        %1627 = vmatpush1.msra.mxu0 %v1609
        %1628 = vmatprep.subr.mxu0 0.0
        %1629 = vmatpush1.msra.mxu0 %v1610
        %1630 = vmatprep.subr.mxu0 0.0
        %1631 = vmatpush1.msra.mxu0 %v1611
        %1632 = vmatprep.subr.mxu0 0.0
        %1633 = vmatpush1.msra.mxu0 %v1612
        %1634 = vmatprep.subr.mxu0 0.0
        %1635 = vmatpush1.msra.mxu0 %v1613
        %1636 = vmatprep.subr.mxu0 0.0
        %1637 = vmatpush1.msra.mxu0 %v1614
        %1638 = vmatprep.subr.mxu0 0.0
        %1639 = vmatpush1.msra.mxu0 %v1615
        %1640 = vmatprep.subr.mxu0 0.0
        %1641 = vmatpush1.msra.mxu0 %v1616
        %1642 = vmatprep.subr.mxu0 0.0
        %1643 = vmatpush1.msra.mxu0 %v1617
        %1644 = vmatprep.subr.mxu0 0.0
        %1645 = vmatpush1.msra.mxu0 %v1618
        %1646 = vmatprep.subr.mxu0 0.0
        %1647 = vmatpush1.msra.mxu0 %v1619
        %1648 = vmatprep.subr.mxu0 0.0
        %1649 = vmatpush1.msra.mxu0 %v1620
        %1650 = vmatprep.subr.mxu0 0.0
        %1651 = vmatpush1.msra.mxu0 %v1621
        %1652 = vmatprep.subr.mxu0 0.0
        %1653 = vmatpush1.msra.mxu0 %v1622
        %1654 = vmatprep.subr.mxu0 0.0
        %1655 = vmatpush1.msra.mxu0 %v1623
        %1656 = vmatprep.subr.mxu0 0.0
        %1657 = vmatpush1.msra.mxu0 0.0
        %1658 = vmatprep.subr.mxu0 0.0
        %1659 = vmatpush1.msra.mxu0 0.0
        %1660 = vmatprep.subr.mxu0 0.0
        %1661 = vmatpush1.msra.mxu0 0.0
        %1662 = vmatprep.subr.mxu0 0.0
        %1663 = vmatpush1.msra.mxu0 0.0
        %1664 = vmatprep.subr.mxu0 0.0
        %1665 = vmatpush1.msra.mxu0 0.0
        %1666 = vmatprep.subr.mxu0 0.0
        %1667 = vmatpush1.msra.mxu0 0.0
        %1668 = vmatprep.subr.mxu0 0.0
        %1669 = vmatpush1.msra.mxu0 0.0
        %1670 = vmatprep.subr.mxu0 0.0
        %1671 = vmatpush1.msra.mxu0 0.0
        %1672 = vmatprep.subr.mxu0 0.0
        %1673 = vmatpush1.msra.mxu0 0.0
        %1674 = vmatprep.subr.mxu0 0.0
        %1675 = vmatpush1.msra.mxu0 0.0
        %1676 = vmatprep.subr.mxu0 0.0
        %1677 = vmatpush1.msra.mxu0 0.0
        %1678 = vmatprep.subr.mxu0 0.0
        %1679 = vmatpush1.msra.mxu0 0.0
        %1680 = vmatprep.subr.mxu0 0.0
        %1681 = vmatpush1.msra.mxu0 0.0
        %1682 = vmatprep.subr.mxu0 0.0
        %1683 = vmatpush1.msra.mxu0 0.0
        %1684 = vmatprep.subr.mxu0 0.0
        %1685 = vmatpush1.msra.mxu0 0.0
        %1686 = vmatprep.subr.mxu0 0.0
        %1687 = vmatpush1.msra.mxu0 0.0
        %1688 = vmatprep.mubr.f32.mxu0 0.0
        %1689 = vmatmul.mubr.f32.gmra.mrb[0].mxu0 %v364
        %v1690 = vpop.f32.mrb[0].mxu0
        %v1691 = vadd.f32 0.0, %v1690
        %v1692 = vpop.f32.mrb[0].mxu0
        %1693 = vmatprep.mubr.f32.mxu0 0.0
        %1694 = vmatmul.mubr.f32.gmra.mrb[0].mxu0 %v366
        %v1695 = vpop.f32.mrb[0].mxu0
        %v1696 = vadd.f32 0.0, %v1695
        %v1697 = vpop.f32.mrb[0].mxu0
        %1698 = vmatprep.mubr.f32.mxu0 0.0
        %1699 = vmatmul.mubr.f32.gmra.mrb[0].mxu0 %v369
        %v1700 = vpop.f32.mrb[0].mxu0
        %v1701 = vadd.f32 0.0, %v1700
        %v1702 = vpop.f32.mrb[0].mxu0
        %1703 = vmatprep.mubr.f32.mxu0 0.0
        %1704 = vmatmul.mubr.f32.gmra.mrb[0].mxu0 %v371
        %v1705 = vpop.f32.mrb[0].mxu0
        %v1706 = vadd.f32 0.0, %v1705
        %v1707 = vpop.f32.mrb[0].mxu0
        %1708 = vmatprep.mubr.f32.mxu0 0.0
        %1709 = vmatmul.mubr.f32.gmra.mrb[0].mxu0 %v374
        %v1710 = vpop.f32.mrb[0].mxu0
        %v1711 = vadd.f32 0.0, %v1710
        %v1712 = vpop.f32.mrb[0].mxu0
        %1713 = vmatprep.mubr.f32.mxu0 0.0
        %1714 = vmatmul.mubr.f32.gmra.mrb[0].mxu0 %v376
        %v1715 = vpop.f32.mrb[0].mxu0
        %v1716 = vadd.f32 0.0, %v1715
        %v1717 = vpop.f32.mrb[0].mxu0
        %1718 = vmatprep.mubr.f32.mxu0 0.0
        %1719 = vmatmul.mubr.f32.gmra.mrb[0].mxu0 %v379
        %v1720 = vpop.f32.mrb[0].mxu0
        %v1721 = vadd.f32 0.0, %v1720
        %v1722 = vpop.f32.mrb[0].mxu0
        %1723 = vmatprep.mubr.f32.mxu0 0.0
        %1724 = vmatmul.mubr.f32.gmra.mrb[0].mxu0 %v381
        %v1725 = vpop.f32.mrb[0].mxu0
        %v1726 = vadd.f32 0.0, %v1725
        %v1727 = vpop.f32.mrb[0].mxu0
        %1728 = vmatprep.mubr.f32.mxu0 0.0
        %1729 = vmatmul.mubr.f32.gmra.mrb[0].mxu0 %v384
        %v1730 = vpop.f32.mrb[0].mxu0
        %v1731 = vadd.f32 0.0, %v1730
        %v1732 = vpop.f32.mrb[0].mxu0
        %1733 = vmatprep.mubr.f32.mxu0 0.0
        %1734 = vmatmul.mubr.f32.gmra.mrb[0].mxu0 %v386
        %v1735 = vpop.f32.mrb[0].mxu0
        %v1736 = vadd.f32 0.0, %v1735
        %v1737 = vpop.f32.mrb[0].mxu0
        %1738 = vmatprep.mubr.f32.mxu0 0.0
        %1739 = vmatmul.mubr.f32.gmra.mrb[0].mxu0 %v389
        %v1740 = vpop.f32.mrb[0].mxu0
        %v1741 = vadd.f32 0.0, %v1740
        %v1742 = vpop.f32.mrb[0].mxu0
        %1743 = vmatprep.mubr.f32.mxu0 0.0
        %1744 = vmatmul.mubr.f32.gmra.mrb[0].mxu0 %v391
        %v1745 = vpop.f32.mrb[0].mxu0
        %v1746 = vadd.f32 0.0, %v1745
        %v1747 = vpop.f32.mrb[0].mxu0
        %1748 = vmatprep.mubr.f32.mxu0 0.0
        %1749 = vmatmul.mubr.f32.gmra.mrb[0].mxu0 %v394
        %v1750 = vpop.f32.mrb[0].mxu0
        %v1751 = vadd.f32 0.0, %v1750
        %v1752 = vpop.f32.mrb[0].mxu0
        %1753 = vmatprep.mubr.f32.mxu0 0.0
        %1754 = vmatmul.mubr.f32.gmra.mrb[0].mxu0 %v396
        %v1755 = vpop.f32.mrb[0].mxu0
        %v1756 = vadd.f32 0.0, %v1755
        %v1757 = vpop.f32.mrb[0].mxu0
        %1758 = vmatprep.mubr.f32.mxu0 0.0
        %1759 = vmatmul.mubr.f32.gmra.mrb[0].mxu0 %v399
        %v1760 = vpop.f32.mrb[0].mxu0
        %v1761 = vadd.f32 0.0, %v1760
        %v1762 = vpop.f32.mrb[0].mxu0
        %1763 = vmatprep.mubr.f32.mxu0 0.0
        %1764 = vmatmul.mubr.f32.gmra.mrb[0].mxu0 %v401
        %v1765 = vpop.f32.mrb[0].mxu0
        %v1766 = vadd.f32 0.0, %v1765
        %v1767 = vpop.f32.mrb[0].mxu0
        %1768 = vmatprep.mubr.f32.mxu0 0.0
        %1769 = vmatmul.mubr.f32.gmra.mrb[0].mxu0 %v404
        %v1770 = vpop.f32.mrb[0].mxu0
        %v1771 = vadd.f32 0.0, %v1770
        %v1772 = vpop.f32.mrb[0].mxu0
        %1773 = vmatprep.mubr.f32.mxu0 0.0
        %1774 = vmatmul.mubr.f32.gmra.mrb[0].mxu0 %v406
        %v1775 = vpop.f32.mrb[0].mxu0
        %v1776 = vadd.f32 0.0, %v1775
        %v1777 = vpop.f32.mrb[0].mxu0
        %1778 = vmatprep.mubr.f32.mxu0 0.0
        %1779 = vmatmul.mubr.f32.gmra.mrb[0].mxu0 %v409
        %v1780 = vpop.f32.mrb[0].mxu0
        %v1781 = vadd.f32 0.0, %v1780
        %v1782 = vpop.f32.mrb[0].mxu0
        %1783 = vmatprep.mubr.f32.mxu0 0.0
        %1784 = vmatmul.mubr.f32.gmra.mrb[0].mxu0 %v411
        %v1785 = vpop.f32.mrb[0].mxu0
        %v1786 = vadd.f32 0.0, %v1785
        %v1787 = vpop.f32.mrb[0].mxu0
        %1788 = vmatprep.mubr.f32.mxu0 0.0
        %1789 = vmatmul.mubr.f32.gmra.mrb[0].mxu0 %v414
        %v1790 = vpop.f32.mrb[0].mxu0
        %v1791 = vadd.f32 0.0, %v1790
        %v1792 = vpop.f32.mrb[0].mxu0
        %1793 = vmatprep.mubr.f32.mxu0 0.0
        %1794 = vmatmul.mubr.f32.gmra.mrb[0].mxu0 %v416
        %v1795 = vpop.f32.mrb[0].mxu0
        %v1796 = vadd.f32 0.0, %v1795
        %v1797 = vpop.f32.mrb[0].mxu0
        %1798 = vmatprep.mubr.f32.mxu0 0.0
        %1799 = vmatmul.mubr.f32.gmra.mrb[0].mxu0 %v419
        %v1800 = vpop.f32.mrb[0].mxu0
        %v1801 = vadd.f32 0.0, %v1800
        %v1802 = vpop.f32.mrb[0].mxu0
        %1803 = vmatprep.mubr.f32.mxu0 0.0
        %1804 = vmatmul.mubr.f32.gmra.mrb[0].mxu0 %v421
        %v1805 = vpop.f32.mrb[0].mxu0
        %v1806 = vadd.f32 0.0, %v1805
        %v1807 = vpop.f32.mrb[0].mxu0
        %1808 = vmatprep.mubr.f32.mxu0 0.0
        %1809 = vmatmul.mubr.f32.gmra.mrb[0].mxu0 %v424
        %v1810 = vpop.f32.mrb[0].mxu0
        %v1811 = vadd.f32 0.0, %v1810
        %v1812 = vpop.f32.mrb[0].mxu0
        %1813 = vmatprep.mubr.f32.mxu0 0.0
        %1814 = vmatmul.mubr.f32.gmra.mrb[0].mxu0 %v426
        %v1815 = vpop.f32.mrb[0].mxu0
        %v1816 = vadd.f32 0.0, %v1815
        %v1817 = vpop.f32.mrb[0].mxu0
        %1818 = vmatprep.mubr.f32.mxu0 0.0
        %1819 = vmatmul.mubr.f32.gmra.mrb[0].mxu0 %v429
        %v1820 = vpop.f32.mrb[0].mxu0
        %v1821 = vadd.f32 0.0, %v1820
        %v1822 = vpop.f32.mrb[0].mxu0
        %1823 = vmatprep.mubr.f32.mxu0 0.0
        %1824 = vmatmul.mubr.f32.gmra.mrb[0].mxu0 %v431
        %v1825 = vpop.f32.mrb[0].mxu0
        %v1826 = vadd.f32 0.0, %v1825
        %v1827 = vpop.f32.mrb[0].mxu0
        %1828 = vmatprep.mubr.f32.mxu0 0.0
        %1829 = vmatmul.mubr.f32.gmra.mrb[0].mxu0 %v434
        %v1830 = vpop.f32.mrb[0].mxu0
        %v1831 = vadd.f32 0.0, %v1830
        %v1832 = vpop.f32.mrb[0].mxu0
        %1833 = vmatprep.mubr.f32.mxu0 0.0
        %1834 = vmatmul.mubr.f32.gmra.mrb[0].mxu0 %v436
        %v1835 = vpop.f32.mrb[0].mxu0
        %v1836 = vadd.f32 0.0, %v1835
        %v1837 = vpop.f32.mrb[0].mxu0
        %1838 = vmatprep.mubr.f32.mxu0 0.0
        %1839 = vmatmul.mubr.f32.gmra.mrb[0].mxu0 %v1602
        %v1840 = vpop.f32.mrb[0].mxu0
        %v1841 = vadd.f32 0.0, %v1840
        %v1842 = vpop.f32.mrb[0].mxu0
        %1843 = vmatprep.mubr.f32.mxu0 0.0
        %1844 = vmatmul.mubr.f32.gmra.mrb[0].mxu0 %v1604
        %v1845 = vpop.f32.mrb[0].mxu0
        %v1846 = vadd.f32 0.0, %v1845
        %v1847 = vpop.f32.mrb[0].mxu0
        %1848 = vdwg.mxu0
        %v1849 = vadd.f32 %v1565, %v1691
        %v1850 = vadd.f32 %v1566, %v1696
        %v1851 = vadd.f32 %v1567, %v1701
        %v1852 = vadd.f32 %v1568, %v1706
        %v1853 = vadd.f32 %v1569, %v1711
        %v1854 = vadd.f32 %v1570, %v1716
        %v1855 = vadd.f32 %v1571, %v1721
        %v1856 = vadd.f32 %v1572, %v1726
        %v1857 = vadd.f32 %v1573, %v1731
        %v1858 = vadd.f32 %v1574, %v1736
        %v1859 = vadd.f32 %v1575, %v1741
        %v1860 = vadd.f32 %v1576, %v1746
        %v1861 = vadd.f32 %v1577, %v1751
        %v1862 = vadd.f32 %v1578, %v1756
        %v1863 = vadd.f32 %v1579, %v1761
        %v1864 = vadd.f32 %v1580, %v1766
        %v1865 = vadd.f32 %v1581, %v1771
        %v1866 = vadd.f32 %v1582, %v1776
        %v1867 = vadd.f32 %v1583, %v1781
        %v1868 = vadd.f32 %v1584, %v1786
        %v1869 = vadd.f32 %v1585, %v1791
        %v1870 = vadd.f32 %v1586, %v1796
        %v1871 = vadd.f32 %v1587, %v1801
        %v1872 = vadd.f32 %v1588, %v1806
        %v1873 = vadd.f32 %v1589, %v1811
        %v1874 = vadd.f32 %v1590, %v1816
        %v1875 = vadd.f32 %v1591, %v1821
        %v1876 = vadd.f32 %v1592, %v1826
        %v1877 = vadd.f32 %v1593, %v1831
        %v1878 = vadd.f32 %v1594, %v1836
        %v1879 = vadd.f32 %v1595, %v1841
        %v1880 = vadd.f32 %v1596, %v1846
        %v1881 = vrot.slane %v286, 2
        %v1882 = vrot.slane %v287, 2
        %v1883 = vsel %vm936, %v1881, %v1882
        %v1884 = vrot.slane %v288, 2
        %v1885 = vsel %vm936, %v1882, %v1884
        %s1888 = scalar_lea.vmem %s1, 640
        %v1889 = vld [vmem:[%s1888] sm:$0xff]
        %v1890 = vld [vmem:[%s1888 + $0x8] sm:$0xff]
        %v1891 = vld [vmem:[%s1888 + $0x10] sm:$0xff]
        %v1892 = vld [vmem:[%s1888 + $0x18] sm:$0xff]
        %v1893 = vld [vmem:[%s1888 + $0x20] sm:$0xff]
        %v1894 = vld [vmem:[%s1888 + $0x28] sm:$0xff]
        %v1895 = vld [vmem:[%s1888 + $0x30] sm:$0xff]
        %v1896 = vld [vmem:[%s1888 + $0x38] sm:$0xff]
        %v1897 = vld [vmem:[%s1888 + $0x40] sm:$0xff]
        %v1898 = vld [vmem:[%s1888 + $0x48] sm:$0xff]
        %v1899 = vld [vmem:[%s1888 + $0x50] sm:$0xff]
        %v1900 = vld [vmem:[%s1888 + $0x58] sm:$0xff]
        %v1901 = vld [vmem:[%s1888 + $0x60] sm:$0xff]
        %v1902 = vld [vmem:[%s1888 + $0x68] sm:$0xff]
        %v1903 = vld [vmem:[%s1888 + $0x70] sm:$0xff]
        %v1904 = vld [vmem:[%s1888 + $0x78] sm:$0xff]
        %1905 = vmatprep.subr.mxu0 0.0
        %1906 = vmatpush1.msra.mxu0 %v1889
        %1907 = vmatprep.subr.mxu0 0.0
        %1908 = vmatpush1.msra.mxu0 %v1890
        %1909 = vmatprep.subr.mxu0 0.0
        %1910 = vmatpush1.msra.mxu0 %v1891
        %1911 = vmatprep.subr.mxu0 0.0
        %1912 = vmatpush1.msra.mxu0 %v1892
        %1913 = vmatprep.subr.mxu0 0.0
        %1914 = vmatpush1.msra.mxu0 %v1893
        %1915 = vmatprep.subr.mxu0 0.0
        %1916 = vmatpush1.msra.mxu0 %v1894
        %1917 = vmatprep.subr.mxu0 0.0
        %1918 = vmatpush1.msra.mxu0 %v1895
        %1919 = vmatprep.subr.mxu0 0.0
        %1920 = vmatpush1.msra.mxu0 %v1896
        %1921 = vmatprep.subr.mxu0 0.0
        %1922 = vmatpush1.msra.mxu0 %v1897
        %1923 = vmatprep.subr.mxu0 0.0
        %1924 = vmatpush1.msra.mxu0 %v1898
        %1925 = vmatprep.subr.mxu0 0.0
        %1926 = vmatpush1.msra.mxu0 %v1899
        %1927 = vmatprep.subr.mxu0 0.0
        %1928 = vmatpush1.msra.mxu0 %v1900
        %1929 = vmatprep.subr.mxu0 0.0
        %1930 = vmatpush1.msra.mxu0 %v1901
        %1931 = vmatprep.subr.mxu0 0.0
        %1932 = vmatpush1.msra.mxu0 %v1902
        %1933 = vmatprep.subr.mxu0 0.0
        %1934 = vmatpush1.msra.mxu0 %v1903
        %1935 = vmatprep.subr.mxu0 0.0
        %1936 = vmatpush1.msra.mxu0 %v1904
        %1937 = vmatprep.subr.mxu0 0.0
        %1938 = vmatpush1.msra.mxu0 0.0
        %1939 = vmatprep.subr.mxu0 0.0
        %1940 = vmatpush1.msra.mxu0 0.0
        %1941 = vmatprep.subr.mxu0 0.0
        %1942 = vmatpush1.msra.mxu0 0.0
        %1943 = vmatprep.subr.mxu0 0.0
        %1944 = vmatpush1.msra.mxu0 0.0
        %1945 = vmatprep.subr.mxu0 0.0
        %1946 = vmatpush1.msra.mxu0 0.0
        %1947 = vmatprep.subr.mxu0 0.0
        %1948 = vmatpush1.msra.mxu0 0.0
        %1949 = vmatprep.subr.mxu0 0.0
        %1950 = vmatpush1.msra.mxu0 0.0
        %1951 = vmatprep.subr.mxu0 0.0
        %1952 = vmatpush1.msra.mxu0 0.0
        %1953 = vmatprep.subr.mxu0 0.0
        %1954 = vmatpush1.msra.mxu0 0.0
        %1955 = vmatprep.subr.mxu0 0.0
        %1956 = vmatpush1.msra.mxu0 0.0
        %1957 = vmatprep.subr.mxu0 0.0
        %1958 = vmatpush1.msra.mxu0 0.0
        %1959 = vmatprep.subr.mxu0 0.0
        %1960 = vmatpush1.msra.mxu0 0.0
        %1961 = vmatprep.subr.mxu0 0.0
        %1962 = vmatpush1.msra.mxu0 0.0
        %1963 = vmatprep.subr.mxu0 0.0
        %1964 = vmatpush1.msra.mxu0 0.0
        %1965 = vmatprep.subr.mxu0 0.0
        %1966 = vmatpush1.msra.mxu0 0.0
        %1967 = vmatprep.subr.mxu0 0.0
        %1968 = vmatpush1.msra.mxu0 0.0
        %1969 = vmatprep.mubr.f32.mxu0 0.0
        %1970 = vmatmul.mubr.f32.gmra.mrb[0].mxu0 %v944
        %v1971 = vpop.f32.mrb[0].mxu0
        %v1972 = vadd.f32 0.0, %v1971
        %v1973 = vpop.f32.mrb[0].mxu0
        %1974 = vmatprep.mubr.f32.mxu0 0.0
        %1975 = vmatmul.mubr.f32.gmra.mrb[0].mxu0 %v946
        %v1976 = vpop.f32.mrb[0].mxu0
        %v1977 = vadd.f32 0.0, %v1976
        %v1978 = vpop.f32.mrb[0].mxu0
        %1979 = vmatprep.mubr.f32.mxu0 0.0
        %1980 = vmatmul.mubr.f32.gmra.mrb[0].mxu0 %v949
        %v1981 = vpop.f32.mrb[0].mxu0
        %v1982 = vadd.f32 0.0, %v1981
        %v1983 = vpop.f32.mrb[0].mxu0
        %1984 = vmatprep.mubr.f32.mxu0 0.0
        %1985 = vmatmul.mubr.f32.gmra.mrb[0].mxu0 %v951
        %v1986 = vpop.f32.mrb[0].mxu0
        %v1987 = vadd.f32 0.0, %v1986
        %v1988 = vpop.f32.mrb[0].mxu0
        %1989 = vmatprep.mubr.f32.mxu0 0.0
        %1990 = vmatmul.mubr.f32.gmra.mrb[0].mxu0 %v954
        %v1991 = vpop.f32.mrb[0].mxu0
        %v1992 = vadd.f32 0.0, %v1991
        %v1993 = vpop.f32.mrb[0].mxu0
        %1994 = vmatprep.mubr.f32.mxu0 0.0
        %1995 = vmatmul.mubr.f32.gmra.mrb[0].mxu0 %v956
        %v1996 = vpop.f32.mrb[0].mxu0
        %v1997 = vadd.f32 0.0, %v1996
        %v1998 = vpop.f32.mrb[0].mxu0
        %1999 = vmatprep.mubr.f32.mxu0 0.0
        %2000 = vmatmul.mubr.f32.gmra.mrb[0].mxu0 %v959
        %v2001 = vpop.f32.mrb[0].mxu0
        %v2002 = vadd.f32 0.0, %v2001
        %v2003 = vpop.f32.mrb[0].mxu0
        %2004 = vmatprep.mubr.f32.mxu0 0.0
        %2005 = vmatmul.mubr.f32.gmra.mrb[0].mxu0 %v961
        %v2006 = vpop.f32.mrb[0].mxu0
        %v2007 = vadd.f32 0.0, %v2006
        %v2008 = vpop.f32.mrb[0].mxu0
        %2009 = vmatprep.mubr.f32.mxu0 0.0
        %2010 = vmatmul.mubr.f32.gmra.mrb[0].mxu0 %v964
        %v2011 = vpop.f32.mrb[0].mxu0
        %v2012 = vadd.f32 0.0, %v2011
        %v2013 = vpop.f32.mrb[0].mxu0
        %2014 = vmatprep.mubr.f32.mxu0 0.0
        %2015 = vmatmul.mubr.f32.gmra.mrb[0].mxu0 %v966
        %v2016 = vpop.f32.mrb[0].mxu0
        %v2017 = vadd.f32 0.0, %v2016
        %v2018 = vpop.f32.mrb[0].mxu0
        %2019 = vmatprep.mubr.f32.mxu0 0.0
        %2020 = vmatmul.mubr.f32.gmra.mrb[0].mxu0 %v969
        %v2021 = vpop.f32.mrb[0].mxu0
        %v2022 = vadd.f32 0.0, %v2021
        %v2023 = vpop.f32.mrb[0].mxu0
        %2024 = vmatprep.mubr.f32.mxu0 0.0
        %2025 = vmatmul.mubr.f32.gmra.mrb[0].mxu0 %v971
        %v2026 = vpop.f32.mrb[0].mxu0
        %v2027 = vadd.f32 0.0, %v2026
        %v2028 = vpop.f32.mrb[0].mxu0
        %2029 = vmatprep.mubr.f32.mxu0 0.0
        %2030 = vmatmul.mubr.f32.gmra.mrb[0].mxu0 %v974
        %v2031 = vpop.f32.mrb[0].mxu0
        %v2032 = vadd.f32 0.0, %v2031
        %v2033 = vpop.f32.mrb[0].mxu0
        %2034 = vmatprep.mubr.f32.mxu0 0.0
        %2035 = vmatmul.mubr.f32.gmra.mrb[0].mxu0 %v976
        %v2036 = vpop.f32.mrb[0].mxu0
        %v2037 = vadd.f32 0.0, %v2036
        %v2038 = vpop.f32.mrb[0].mxu0
        %2039 = vmatprep.mubr.f32.mxu0 0.0
        %2040 = vmatmul.mubr.f32.gmra.mrb[0].mxu0 %v979
        %v2041 = vpop.f32.mrb[0].mxu0
        %v2042 = vadd.f32 0.0, %v2041
        %v2043 = vpop.f32.mrb[0].mxu0
        %2044 = vmatprep.mubr.f32.mxu0 0.0
        %2045 = vmatmul.mubr.f32.gmra.mrb[0].mxu0 %v981
        %v2046 = vpop.f32.mrb[0].mxu0
        %v2047 = vadd.f32 0.0, %v2046
        %v2048 = vpop.f32.mrb[0].mxu0
        %2049 = vmatprep.mubr.f32.mxu0 0.0
        %2050 = vmatmul.mubr.f32.gmra.mrb[0].mxu0 %v984
        %v2051 = vpop.f32.mrb[0].mxu0
        %v2052 = vadd.f32 0.0, %v2051
        %v2053 = vpop.f32.mrb[0].mxu0
        %2054 = vmatprep.mubr.f32.mxu0 0.0
        %2055 = vmatmul.mubr.f32.gmra.mrb[0].mxu0 %v986
        %v2056 = vpop.f32.mrb[0].mxu0
        %v2057 = vadd.f32 0.0, %v2056
        %v2058 = vpop.f32.mrb[0].mxu0
        %2059 = vmatprep.mubr.f32.mxu0 0.0
        %2060 = vmatmul.mubr.f32.gmra.mrb[0].mxu0 %v989
        %v2061 = vpop.f32.mrb[0].mxu0
        %v2062 = vadd.f32 0.0, %v2061
        %v2063 = vpop.f32.mrb[0].mxu0
        %2064 = vmatprep.mubr.f32.mxu0 0.0
        %2065 = vmatmul.mubr.f32.gmra.mrb[0].mxu0 %v991
        %v2066 = vpop.f32.mrb[0].mxu0
        %v2067 = vadd.f32 0.0, %v2066
        %v2068 = vpop.f32.mrb[0].mxu0
        %2069 = vmatprep.mubr.f32.mxu0 0.0
        %2070 = vmatmul.mubr.f32.gmra.mrb[0].mxu0 %v994
        %v2071 = vpop.f32.mrb[0].mxu0
        %v2072 = vadd.f32 0.0, %v2071
        %v2073 = vpop.f32.mrb[0].mxu0
        %2074 = vmatprep.mubr.f32.mxu0 0.0
        %2075 = vmatmul.mubr.f32.gmra.mrb[0].mxu0 %v996
        %v2076 = vpop.f32.mrb[0].mxu0
        %v2077 = vadd.f32 0.0, %v2076
        %v2078 = vpop.f32.mrb[0].mxu0
        %2079 = vmatprep.mubr.f32.mxu0 0.0
        %2080 = vmatmul.mubr.f32.gmra.mrb[0].mxu0 %v999
        %v2081 = vpop.f32.mrb[0].mxu0
        %v2082 = vadd.f32 0.0, %v2081
        %v2083 = vpop.f32.mrb[0].mxu0
        %2084 = vmatprep.mubr.f32.mxu0 0.0
        %2085 = vmatmul.mubr.f32.gmra.mrb[0].mxu0 %v1001
        %v2086 = vpop.f32.mrb[0].mxu0
        %v2087 = vadd.f32 0.0, %v2086
        %v2088 = vpop.f32.mrb[0].mxu0
        %2089 = vmatprep.mubr.f32.mxu0 0.0
        %2090 = vmatmul.mubr.f32.gmra.mrb[0].mxu0 %v1004
        %v2091 = vpop.f32.mrb[0].mxu0
        %v2092 = vadd.f32 0.0, %v2091
        %v2093 = vpop.f32.mrb[0].mxu0
        %2094 = vmatprep.mubr.f32.mxu0 0.0
        %2095 = vmatmul.mubr.f32.gmra.mrb[0].mxu0 %v1006
        %v2096 = vpop.f32.mrb[0].mxu0
        %v2097 = vadd.f32 0.0, %v2096
        %v2098 = vpop.f32.mrb[0].mxu0
        %2099 = vmatprep.mubr.f32.mxu0 0.0
        %2100 = vmatmul.mubr.f32.gmra.mrb[0].mxu0 %v1009
        %v2101 = vpop.f32.mrb[0].mxu0
        %v2102 = vadd.f32 0.0, %v2101
        %v2103 = vpop.f32.mrb[0].mxu0
        %2104 = vmatprep.mubr.f32.mxu0 0.0
        %2105 = vmatmul.mubr.f32.gmra.mrb[0].mxu0 %v1011
        %v2106 = vpop.f32.mrb[0].mxu0
        %v2107 = vadd.f32 0.0, %v2106
        %v2108 = vpop.f32.mrb[0].mxu0
        %2109 = vmatprep.mubr.f32.mxu0 0.0
        %2110 = vmatmul.mubr.f32.gmra.mrb[0].mxu0 %v1014
        %v2111 = vpop.f32.mrb[0].mxu0
        %v2112 = vadd.f32 0.0, %v2111
        %v2113 = vpop.f32.mrb[0].mxu0
        %2114 = vmatprep.mubr.f32.mxu0 0.0
        %2115 = vmatmul.mubr.f32.gmra.mrb[0].mxu0 %v1016
        %v2116 = vpop.f32.mrb[0].mxu0
        %v2117 = vadd.f32 0.0, %v2116
        %v2118 = vpop.f32.mrb[0].mxu0
        %2119 = vmatprep.mubr.f32.mxu0 0.0
        %2120 = vmatmul.mubr.f32.gmra.mrb[0].mxu0 %v1883
        %v2121 = vpop.f32.mrb[0].mxu0
        %v2122 = vadd.f32 0.0, %v2121
        %v2123 = vpop.f32.mrb[0].mxu0
        %2124 = vmatprep.mubr.f32.mxu0 0.0
        %2125 = vmatmul.mubr.f32.gmra.mrb[0].mxu0 %v1885
        %v2126 = vpop.f32.mrb[0].mxu0
        %v2127 = vadd.f32 0.0, %v2126
        %v2128 = vpop.f32.mrb[0].mxu0
        %2129 = vdwg.mxu0
        %v2130 = vadd.f32 %v1849, %v1972
        %v2131 = vadd.f32 %v1850, %v1977
        %v2132 = vadd.f32 %v1851, %v1982
        %v2133 = vadd.f32 %v1852, %v1987
        %v2134 = vadd.f32 %v1853, %v1992
        %v2135 = vadd.f32 %v1854, %v1997
        %v2136 = vadd.f32 %v1855, %v2002
        %v2137 = vadd.f32 %v1856, %v2007
        %v2138 = vadd.f32 %v1857, %v2012
        %v2139 = vadd.f32 %v1858, %v2017
        %v2140 = vadd.f32 %v1859, %v2022
        %v2141 = vadd.f32 %v1860, %v2027
        %v2142 = vadd.f32 %v1861, %v2032
        %v2143 = vadd.f32 %v1862, %v2037
        %v2144 = vadd.f32 %v1863, %v2042
        %v2145 = vadd.f32 %v1864, %v2047
        %v2146 = vadd.f32 %v1865, %v2052
        %v2147 = vadd.f32 %v1866, %v2057
        %v2148 = vadd.f32 %v1867, %v2062
        %v2149 = vadd.f32 %v1868, %v2067
        %v2150 = vadd.f32 %v1869, %v2072
        %v2151 = vadd.f32 %v1870, %v2077
        %v2152 = vadd.f32 %v1871, %v2082
        %v2153 = vadd.f32 %v1872, %v2087
        %v2154 = vadd.f32 %v1873, %v2092
        %v2155 = vadd.f32 %v1874, %v2097
        %v2156 = vadd.f32 %v1875, %v2102
        %v2157 = vadd.f32 %v1876, %v2107
        %v2158 = vadd.f32 %v1877, %v2112
        %v2159 = vadd.f32 %v1878, %v2117
        %v2160 = vadd.f32 %v1879, %v2122
        %v2161 = vadd.f32 %v1880, %v2127
        %s2162 = scalar_lea.vmem %s1, 768
        %v2163 = vld [vmem:[%s2162] sm:$0xff]
        %v2164 = vld [vmem:[%s2162 + $0x8] sm:$0xff]
        %v2165 = vld [vmem:[%s2162 + $0x10] sm:$0xff]
        %v2166 = vld [vmem:[%s2162 + $0x18] sm:$0xff]
        %v2167 = vld [vmem:[%s2162 + $0x20] sm:$0xff]
        %v2168 = vld [vmem:[%s2162 + $0x28] sm:$0xff]
        %v2169 = vld [vmem:[%s2162 + $0x30] sm:$0xff]
        %v2170 = vld [vmem:[%s2162 + $0x38] sm:$0xff]
        %v2171 = vld [vmem:[%s2162 + $0x40] sm:$0xff]
        %v2172 = vld [vmem:[%s2162 + $0x48] sm:$0xff]
        %v2173 = vld [vmem:[%s2162 + $0x50] sm:$0xff]
        %v2174 = vld [vmem:[%s2162 + $0x58] sm:$0xff]
        %v2175 = vld [vmem:[%s2162 + $0x60] sm:$0xff]
        %v2176 = vld [vmem:[%s2162 + $0x68] sm:$0xff]
        %v2177 = vld [vmem:[%s2162 + $0x70] sm:$0xff]
        %v2178 = vld [vmem:[%s2162 + $0x78] sm:$0xff]
        %2179 = vmatprep.subr.mxu0 0.0
        %2180 = vmatpush1.msra.mxu0 %v2163
        %2181 = vmatprep.subr.mxu0 0.0
        %2182 = vmatpush1.msra.mxu0 %v2164
        %2183 = vmatprep.subr.mxu0 0.0
        %2184 = vmatpush1.msra.mxu0 %v2165
        %2185 = vmatprep.subr.mxu0 0.0
        %2186 = vmatpush1.msra.mxu0 %v2166
        %2187 = vmatprep.subr.mxu0 0.0
        %2188 = vmatpush1.msra.mxu0 %v2167
        %2189 = vmatprep.subr.mxu0 0.0
        %2190 = vmatpush1.msra.mxu0 %v2168
        %2191 = vmatprep.subr.mxu0 0.0
        %2192 = vmatpush1.msra.mxu0 %v2169
        %2193 = vmatprep.subr.mxu0 0.0
        %2194 = vmatpush1.msra.mxu0 %v2170
        %2195 = vmatprep.subr.mxu0 0.0
        %2196 = vmatpush1.msra.mxu0 %v2171
        %2197 = vmatprep.subr.mxu0 0.0
        %2198 = vmatpush1.msra.mxu0 %v2172
        %2199 = vmatprep.subr.mxu0 0.0
        %2200 = vmatpush1.msra.mxu0 %v2173
        %2201 = vmatprep.subr.mxu0 0.0
        %2202 = vmatpush1.msra.mxu0 %v2174
        %2203 = vmatprep.subr.mxu0 0.0
        %2204 = vmatpush1.msra.mxu0 %v2175
        %2205 = vmatprep.subr.mxu0 0.0
        %2206 = vmatpush1.msra.mxu0 %v2176
        %2207 = vmatprep.subr.mxu0 0.0
        %2208 = vmatpush1.msra.mxu0 %v2177
        %2209 = vmatprep.subr.mxu0 0.0
        %2210 = vmatpush1.msra.mxu0 %v2178
        %2211 = vmatprep.subr.mxu0 0.0
        %2212 = vmatpush1.msra.mxu0 0.0
        %2213 = vmatprep.subr.mxu0 0.0
        %2214 = vmatpush1.msra.mxu0 0.0
        %2215 = vmatprep.subr.mxu0 0.0
        %2216 = vmatpush1.msra.mxu0 0.0
        %2217 = vmatprep.subr.mxu0 0.0
        %2218 = vmatpush1.msra.mxu0 0.0
        %2219 = vmatprep.subr.mxu0 0.0
        %2220 = vmatpush1.msra.mxu0 0.0
        %2221 = vmatprep.subr.mxu0 0.0
        %2222 = vmatpush1.msra.mxu0 0.0
        %2223 = vmatprep.subr.mxu0 0.0
        %2224 = vmatpush1.msra.mxu0 0.0
        %2225 = vmatprep.subr.mxu0 0.0
        %2226 = vmatpush1.msra.mxu0 0.0
        %2227 = vmatprep.subr.mxu0 0.0
        %2228 = vmatpush1.msra.mxu0 0.0
        %2229 = vmatprep.subr.mxu0 0.0
        %2230 = vmatpush1.msra.mxu0 0.0
        %2231 = vmatprep.subr.mxu0 0.0
        %2232 = vmatpush1.msra.mxu0 0.0
        %2233 = vmatprep.subr.mxu0 0.0
        %2234 = vmatpush1.msra.mxu0 0.0
        %2235 = vmatprep.subr.mxu0 0.0
        %2236 = vmatpush1.msra.mxu0 0.0
        %2237 = vmatprep.subr.mxu0 0.0
        %2238 = vmatpush1.msra.mxu0 0.0
        %2239 = vmatprep.subr.mxu0 0.0
        %2240 = vmatpush1.msra.mxu0 0.0
        %2241 = vmatprep.subr.mxu0 0.0
        %2242 = vmatpush1.msra.mxu0 0.0
        %2243 = vmatprep.mubr.f32.mxu0 0.0
        %2244 = vmatmul.mubr.f32.gmra.mrb[0].mxu0 %v244
        %v2245 = vpop.f32.mrb[0].mxu0
        %v2246 = vadd.f32 0.0, %v2245
        %v2247 = vpop.f32.mrb[0].mxu0
        %2248 = vmatprep.mubr.f32.mxu0 0.0
        %2249 = vmatmul.mubr.f32.gmra.mrb[0].mxu0 %v245
        %v2250 = vpop.f32.mrb[0].mxu0
        %v2251 = vadd.f32 0.0, %v2250
        %v2252 = vpop.f32.mrb[0].mxu0
        %2253 = vmatprep.mubr.f32.mxu0 0.0
        %2254 = vmatmul.mubr.f32.gmra.mrb[0].mxu0 %v247
        %v2255 = vpop.f32.mrb[0].mxu0
        %v2256 = vadd.f32 0.0, %v2255
        %v2257 = vpop.f32.mrb[0].mxu0
        %2258 = vmatprep.mubr.f32.mxu0 0.0
        %2259 = vmatmul.mubr.f32.gmra.mrb[0].mxu0 %v248
        %v2260 = vpop.f32.mrb[0].mxu0
        %v2261 = vadd.f32 0.0, %v2260
        %v2262 = vpop.f32.mrb[0].mxu0
        %2263 = vmatprep.mubr.f32.mxu0 0.0
        %2264 = vmatmul.mubr.f32.gmra.mrb[0].mxu0 %v250
        %v2265 = vpop.f32.mrb[0].mxu0
        %v2266 = vadd.f32 0.0, %v2265
        %v2267 = vpop.f32.mrb[0].mxu0
        %2268 = vmatprep.mubr.f32.mxu0 0.0
        %2269 = vmatmul.mubr.f32.gmra.mrb[0].mxu0 %v251
        %v2270 = vpop.f32.mrb[0].mxu0
        %v2271 = vadd.f32 0.0, %v2270
        %v2272 = vpop.f32.mrb[0].mxu0
        %2273 = vmatprep.mubr.f32.mxu0 0.0
        %2274 = vmatmul.mubr.f32.gmra.mrb[0].mxu0 %v253
        %v2275 = vpop.f32.mrb[0].mxu0
        %v2276 = vadd.f32 0.0, %v2275
        %v2277 = vpop.f32.mrb[0].mxu0
        %2278 = vmatprep.mubr.f32.mxu0 0.0
        %2279 = vmatmul.mubr.f32.gmra.mrb[0].mxu0 %v254
        %v2280 = vpop.f32.mrb[0].mxu0
        %v2281 = vadd.f32 0.0, %v2280
        %v2282 = vpop.f32.mrb[0].mxu0
        %2283 = vmatprep.mubr.f32.mxu0 0.0
        %2284 = vmatmul.mubr.f32.gmra.mrb[0].mxu0 %v256
        %v2285 = vpop.f32.mrb[0].mxu0
        %v2286 = vadd.f32 0.0, %v2285
        %v2287 = vpop.f32.mrb[0].mxu0
        %2288 = vmatprep.mubr.f32.mxu0 0.0
        %2289 = vmatmul.mubr.f32.gmra.mrb[0].mxu0 %v257
        %v2290 = vpop.f32.mrb[0].mxu0
        %v2291 = vadd.f32 0.0, %v2290
        %v2292 = vpop.f32.mrb[0].mxu0
        %2293 = vmatprep.mubr.f32.mxu0 0.0
        %2294 = vmatmul.mubr.f32.gmra.mrb[0].mxu0 %v259
        %v2295 = vpop.f32.mrb[0].mxu0
        %v2296 = vadd.f32 0.0, %v2295
        %v2297 = vpop.f32.mrb[0].mxu0
        %2298 = vmatprep.mubr.f32.mxu0 0.0
        %2299 = vmatmul.mubr.f32.gmra.mrb[0].mxu0 %v260
        %v2300 = vpop.f32.mrb[0].mxu0
        %v2301 = vadd.f32 0.0, %v2300
        %v2302 = vpop.f32.mrb[0].mxu0
        %2303 = vmatprep.mubr.f32.mxu0 0.0
        %2304 = vmatmul.mubr.f32.gmra.mrb[0].mxu0 %v262
        %v2305 = vpop.f32.mrb[0].mxu0
        %v2306 = vadd.f32 0.0, %v2305
        %v2307 = vpop.f32.mrb[0].mxu0
        %2308 = vmatprep.mubr.f32.mxu0 0.0
        %2309 = vmatmul.mubr.f32.gmra.mrb[0].mxu0 %v263
        %v2310 = vpop.f32.mrb[0].mxu0
        %v2311 = vadd.f32 0.0, %v2310
        %v2312 = vpop.f32.mrb[0].mxu0
        %2313 = vmatprep.mubr.f32.mxu0 0.0
        %2314 = vmatmul.mubr.f32.gmra.mrb[0].mxu0 %v265
        %v2315 = vpop.f32.mrb[0].mxu0
        %v2316 = vadd.f32 0.0, %v2315
        %v2317 = vpop.f32.mrb[0].mxu0
        %2318 = vmatprep.mubr.f32.mxu0 0.0
        %2319 = vmatmul.mubr.f32.gmra.mrb[0].mxu0 %v266
        %v2320 = vpop.f32.mrb[0].mxu0
        %v2321 = vadd.f32 0.0, %v2320
        %v2322 = vpop.f32.mrb[0].mxu0
        %2323 = vmatprep.mubr.f32.mxu0 0.0
        %2324 = vmatmul.mubr.f32.gmra.mrb[0].mxu0 %v268
        %v2325 = vpop.f32.mrb[0].mxu0
        %v2326 = vadd.f32 0.0, %v2325
        %v2327 = vpop.f32.mrb[0].mxu0
        %2328 = vmatprep.mubr.f32.mxu0 0.0
        %2329 = vmatmul.mubr.f32.gmra.mrb[0].mxu0 %v269
        %v2330 = vpop.f32.mrb[0].mxu0
        %v2331 = vadd.f32 0.0, %v2330
        %v2332 = vpop.f32.mrb[0].mxu0
        %2333 = vmatprep.mubr.f32.mxu0 0.0
        %2334 = vmatmul.mubr.f32.gmra.mrb[0].mxu0 %v271
        %v2335 = vpop.f32.mrb[0].mxu0
        %v2336 = vadd.f32 0.0, %v2335
        %v2337 = vpop.f32.mrb[0].mxu0
        %2338 = vmatprep.mubr.f32.mxu0 0.0
        %2339 = vmatmul.mubr.f32.gmra.mrb[0].mxu0 %v272
        %v2340 = vpop.f32.mrb[0].mxu0
        %v2341 = vadd.f32 0.0, %v2340
        %v2342 = vpop.f32.mrb[0].mxu0
        %2343 = vmatprep.mubr.f32.mxu0 0.0
        %2344 = vmatmul.mubr.f32.gmra.mrb[0].mxu0 %v274
        %v2345 = vpop.f32.mrb[0].mxu0
        %v2346 = vadd.f32 0.0, %v2345
        %v2347 = vpop.f32.mrb[0].mxu0
        %2348 = vmatprep.mubr.f32.mxu0 0.0
        %2349 = vmatmul.mubr.f32.gmra.mrb[0].mxu0 %v275
        %v2350 = vpop.f32.mrb[0].mxu0
        %v2351 = vadd.f32 0.0, %v2350
        %v2352 = vpop.f32.mrb[0].mxu0
        %2353 = vmatprep.mubr.f32.mxu0 0.0
        %2354 = vmatmul.mubr.f32.gmra.mrb[0].mxu0 %v277
        %v2355 = vpop.f32.mrb[0].mxu0
        %v2356 = vadd.f32 0.0, %v2355
        %v2357 = vpop.f32.mrb[0].mxu0
        %2358 = vmatprep.mubr.f32.mxu0 0.0
        %2359 = vmatmul.mubr.f32.gmra.mrb[0].mxu0 %v278
        %v2360 = vpop.f32.mrb[0].mxu0
        %v2361 = vadd.f32 0.0, %v2360
        %v2362 = vpop.f32.mrb[0].mxu0
        %2363 = vmatprep.mubr.f32.mxu0 0.0
        %2364 = vmatmul.mubr.f32.gmra.mrb[0].mxu0 %v280
        %v2365 = vpop.f32.mrb[0].mxu0
        %v2366 = vadd.f32 0.0, %v2365
        %v2367 = vpop.f32.mrb[0].mxu0
        %2368 = vmatprep.mubr.f32.mxu0 0.0
        %2369 = vmatmul.mubr.f32.gmra.mrb[0].mxu0 %v281
        %v2370 = vpop.f32.mrb[0].mxu0
        %v2371 = vadd.f32 0.0, %v2370
        %v2372 = vpop.f32.mrb[0].mxu0
        %2373 = vmatprep.mubr.f32.mxu0 0.0
        %2374 = vmatmul.mubr.f32.gmra.mrb[0].mxu0 %v283
        %v2375 = vpop.f32.mrb[0].mxu0
        %v2376 = vadd.f32 0.0, %v2375
        %v2377 = vpop.f32.mrb[0].mxu0
        %2378 = vmatprep.mubr.f32.mxu0 0.0
        %2379 = vmatmul.mubr.f32.gmra.mrb[0].mxu0 %v284
        %v2380 = vpop.f32.mrb[0].mxu0
        %v2381 = vadd.f32 0.0, %v2380
        %v2382 = vpop.f32.mrb[0].mxu0
        %2383 = vmatprep.mubr.f32.mxu0 0.0
        %2384 = vmatmul.mubr.f32.gmra.mrb[0].mxu0 %v286
        %v2385 = vpop.f32.mrb[0].mxu0
        %v2386 = vadd.f32 0.0, %v2385
        %v2387 = vpop.f32.mrb[0].mxu0
        %2388 = vmatprep.mubr.f32.mxu0 0.0
        %2389 = vmatmul.mubr.f32.gmra.mrb[0].mxu0 %v287
        %v2390 = vpop.f32.mrb[0].mxu0
        %v2391 = vadd.f32 0.0, %v2390
        %v2392 = vpop.f32.mrb[0].mxu0
        %2393 = vmatprep.mubr.f32.mxu0 0.0
        %2394 = vmatmul.mubr.f32.gmra.mrb[0].mxu0 %v289
        %v2395 = vpop.f32.mrb[0].mxu0
        %v2396 = vadd.f32 0.0, %v2395
        %v2397 = vpop.f32.mrb[0].mxu0
        %2398 = vmatprep.mubr.f32.mxu0 0.0
        %2399 = vmatmul.mubr.f32.gmra.mrb[0].mxu0 %v290
        %v2400 = vpop.f32.mrb[0].mxu0
        %v2401 = vadd.f32 0.0, %v2400
        %v2402 = vpop.f32.mrb[0].mxu0
        %2403 = vdwg.mxu0
        %v2404 = vadd.f32 %v2130, %v2246
        %v2405 = vadd.f32 %v2131, %v2251
        %v2406 = vadd.f32 %v2132, %v2256
        %v2407 = vadd.f32 %v2133, %v2261
        %v2408 = vadd.f32 %v2134, %v2266
        %v2409 = vadd.f32 %v2135, %v2271
        %v2410 = vadd.f32 %v2136, %v2276
        %v2411 = vadd.f32 %v2137, %v2281
        %v2412 = vadd.f32 %v2138, %v2286
        %v2413 = vadd.f32 %v2139, %v2291
        %v2414 = vadd.f32 %v2140, %v2296
        %v2415 = vadd.f32 %v2141, %v2301
        %v2416 = vadd.f32 %v2142, %v2306
        %v2417 = vadd.f32 %v2143, %v2311
        %v2418 = vadd.f32 %v2144, %v2316
        %v2419 = vadd.f32 %v2145, %v2321
        %v2420 = vadd.f32 %v2146, %v2326
        %v2421 = vadd.f32 %v2147, %v2331
        %v2422 = vadd.f32 %v2148, %v2336
        %v2423 = vadd.f32 %v2149, %v2341
        %v2424 = vadd.f32 %v2150, %v2346
        %v2425 = vadd.f32 %v2151, %v2351
        %v2426 = vadd.f32 %v2152, %v2356
        %v2427 = vadd.f32 %v2153, %v2361
        %v2428 = vadd.f32 %v2154, %v2366
        %v2429 = vadd.f32 %v2155, %v2371
        %v2430 = vadd.f32 %v2156, %v2376
        %v2431 = vadd.f32 %v2157, %v2381
        %v2432 = vadd.f32 %v2158, %v2386
        %v2433 = vadd.f32 %v2159, %v2391
        %v2434 = vadd.f32 %v2160, %v2396
        %v2435 = vadd.f32 %v2161, %v2401
        %v2439 = vrot.slane %v289, 1
        %v2440 = vrot.slane %v290, 1
        %v2441 = vsel %vm356, %v2439, %v2440
        %v2442 = vrot.slane %v291, 1
        %v2443 = vsel %vm356, %v2440, %v2442
        %s2446 = scalar_lea.vmem %s1, 896
        %v2447 = vld [vmem:[%s2446] sm:$0xff]
        %v2448 = vld [vmem:[%s2446 + $0x8] sm:$0xff]
        %v2449 = vld [vmem:[%s2446 + $0x10] sm:$0xff]
        %v2450 = vld [vmem:[%s2446 + $0x18] sm:$0xff]
        %v2451 = vld [vmem:[%s2446 + $0x20] sm:$0xff]
        %v2452 = vld [vmem:[%s2446 + $0x28] sm:$0xff]
        %v2453 = vld [vmem:[%s2446 + $0x30] sm:$0xff]
        %v2454 = vld [vmem:[%s2446 + $0x38] sm:$0xff]
        %v2455 = vld [vmem:[%s2446 + $0x40] sm:$0xff]
        %v2456 = vld [vmem:[%s2446 + $0x48] sm:$0xff]
        %v2457 = vld [vmem:[%s2446 + $0x50] sm:$0xff]
        %v2458 = vld [vmem:[%s2446 + $0x58] sm:$0xff]
        %v2459 = vld [vmem:[%s2446 + $0x60] sm:$0xff]
        %v2460 = vld [vmem:[%s2446 + $0x68] sm:$0xff]
        %v2461 = vld [vmem:[%s2446 + $0x70] sm:$0xff]
        %v2462 = vld [vmem:[%s2446 + $0x78] sm:$0xff]
        %2463 = vmatprep.subr.mxu0 0.0
        %2464 = vmatpush1.msra.mxu0 %v2447
        %2465 = vmatprep.subr.mxu0 0.0
        %2466 = vmatpush1.msra.mxu0 %v2448
        %2467 = vmatprep.subr.mxu0 0.0
        %2468 = vmatpush1.msra.mxu0 %v2449
        %2469 = vmatprep.subr.mxu0 0.0
        %2470 = vmatpush1.msra.mxu0 %v2450
        %2471 = vmatprep.subr.mxu0 0.0
        %2472 = vmatpush1.msra.mxu0 %v2451
        %2473 = vmatprep.subr.mxu0 0.0
        %2474 = vmatpush1.msra.mxu0 %v2452
        %2475 = vmatprep.subr.mxu0 0.0
        %2476 = vmatpush1.msra.mxu0 %v2453
        %2477 = vmatprep.subr.mxu0 0.0
        %2478 = vmatpush1.msra.mxu0 %v2454
        %2479 = vmatprep.subr.mxu0 0.0
        %2480 = vmatpush1.msra.mxu0 %v2455
        %2481 = vmatprep.subr.mxu0 0.0
        %2482 = vmatpush1.msra.mxu0 %v2456
        %2483 = vmatprep.subr.mxu0 0.0
        %2484 = vmatpush1.msra.mxu0 %v2457
        %2485 = vmatprep.subr.mxu0 0.0
        %2486 = vmatpush1.msra.mxu0 %v2458
        %2487 = vmatprep.subr.mxu0 0.0
        %2488 = vmatpush1.msra.mxu0 %v2459
        %2489 = vmatprep.subr.mxu0 0.0
        %2490 = vmatpush1.msra.mxu0 %v2460
        %2491 = vmatprep.subr.mxu0 0.0
        %2492 = vmatpush1.msra.mxu0 %v2461
        %2493 = vmatprep.subr.mxu0 0.0
        %2494 = vmatpush1.msra.mxu0 %v2462
        %2495 = vmatprep.subr.mxu0 0.0
        %2496 = vmatpush1.msra.mxu0 0.0
        %2497 = vmatprep.subr.mxu0 0.0
        %2498 = vmatpush1.msra.mxu0 0.0
        %2499 = vmatprep.subr.mxu0 0.0
        %2500 = vmatpush1.msra.mxu0 0.0
        %2501 = vmatprep.subr.mxu0 0.0
        %2502 = vmatpush1.msra.mxu0 0.0
        %2503 = vmatprep.subr.mxu0 0.0
        %2504 = vmatpush1.msra.mxu0 0.0
        %2505 = vmatprep.subr.mxu0 0.0
        %2506 = vmatpush1.msra.mxu0 0.0
        %2507 = vmatprep.subr.mxu0 0.0
        %2508 = vmatpush1.msra.mxu0 0.0
        %2509 = vmatprep.subr.mxu0 0.0
        %2510 = vmatpush1.msra.mxu0 0.0
        %2511 = vmatprep.subr.mxu0 0.0
        %2512 = vmatpush1.msra.mxu0 0.0
        %2513 = vmatprep.subr.mxu0 0.0
        %2514 = vmatpush1.msra.mxu0 0.0
        %2515 = vmatprep.subr.mxu0 0.0
        %2516 = vmatpush1.msra.mxu0 0.0
        %2517 = vmatprep.subr.mxu0 0.0
        %2518 = vmatpush1.msra.mxu0 0.0
        %2519 = vmatprep.subr.mxu0 0.0
        %2520 = vmatpush1.msra.mxu0 0.0
        %2521 = vmatprep.subr.mxu0 0.0
        %2522 = vmatpush1.msra.mxu0 0.0
        %2523 = vmatprep.subr.mxu0 0.0
        %2524 = vmatpush1.msra.mxu0 0.0
        %2525 = vmatprep.subr.mxu0 0.0
        %2526 = vmatpush1.msra.mxu0 0.0
        %2527 = vmatprep.mubr.f32.mxu0 0.0
        %2528 = vmatmul.mubr.f32.gmra.mrb[0].mxu0 %v369
        %v2529 = vpop.f32.mrb[0].mxu0
        %v2530 = vadd.f32 0.0, %v2529
        %v2531 = vpop.f32.mrb[0].mxu0
        %2532 = vmatprep.mubr.f32.mxu0 0.0
        %2533 = vmatmul.mubr.f32.gmra.mrb[0].mxu0 %v371
        %v2534 = vpop.f32.mrb[0].mxu0
        %v2535 = vadd.f32 0.0, %v2534
        %v2536 = vpop.f32.mrb[0].mxu0
        %2537 = vmatprep.mubr.f32.mxu0 0.0
        %2538 = vmatmul.mubr.f32.gmra.mrb[0].mxu0 %v374
        %v2539 = vpop.f32.mrb[0].mxu0
        %v2540 = vadd.f32 0.0, %v2539
        %v2541 = vpop.f32.mrb[0].mxu0
        %2542 = vmatprep.mubr.f32.mxu0 0.0
        %2543 = vmatmul.mubr.f32.gmra.mrb[0].mxu0 %v376
        %v2544 = vpop.f32.mrb[0].mxu0
        %v2545 = vadd.f32 0.0, %v2544
        %v2546 = vpop.f32.mrb[0].mxu0
        %2547 = vmatprep.mubr.f32.mxu0 0.0
        %2548 = vmatmul.mubr.f32.gmra.mrb[0].mxu0 %v379
        %v2549 = vpop.f32.mrb[0].mxu0
        %v2550 = vadd.f32 0.0, %v2549
        %v2551 = vpop.f32.mrb[0].mxu0
        %2552 = vmatprep.mubr.f32.mxu0 0.0
        %2553 = vmatmul.mubr.f32.gmra.mrb[0].mxu0 %v381
        %v2554 = vpop.f32.mrb[0].mxu0
        %v2555 = vadd.f32 0.0, %v2554
        %v2556 = vpop.f32.mrb[0].mxu0
        %2557 = vmatprep.mubr.f32.mxu0 0.0
        %2558 = vmatmul.mubr.f32.gmra.mrb[0].mxu0 %v384
        %v2559 = vpop.f32.mrb[0].mxu0
        %v2560 = vadd.f32 0.0, %v2559
        %v2561 = vpop.f32.mrb[0].mxu0
        %2562 = vmatprep.mubr.f32.mxu0 0.0
        %2563 = vmatmul.mubr.f32.gmra.mrb[0].mxu0 %v386
        %v2564 = vpop.f32.mrb[0].mxu0
        %v2565 = vadd.f32 0.0, %v2564
        %v2566 = vpop.f32.mrb[0].mxu0
        %2567 = vmatprep.mubr.f32.mxu0 0.0
        %2568 = vmatmul.mubr.f32.gmra.mrb[0].mxu0 %v389
        %v2569 = vpop.f32.mrb[0].mxu0
        %v2570 = vadd.f32 0.0, %v2569
        %v2571 = vpop.f32.mrb[0].mxu0
        %2572 = vmatprep.mubr.f32.mxu0 0.0
        %2573 = vmatmul.mubr.f32.gmra.mrb[0].mxu0 %v391
        %v2574 = vpop.f32.mrb[0].mxu0
        %v2575 = vadd.f32 0.0, %v2574
        %v2576 = vpop.f32.mrb[0].mxu0
        %2577 = vmatprep.mubr.f32.mxu0 0.0
        %2578 = vmatmul.mubr.f32.gmra.mrb[0].mxu0 %v394
        %v2579 = vpop.f32.mrb[0].mxu0
        %v2580 = vadd.f32 0.0, %v2579
        %v2581 = vpop.f32.mrb[0].mxu0
        %2582 = vmatprep.mubr.f32.mxu0 0.0
        %2583 = vmatmul.mubr.f32.gmra.mrb[0].mxu0 %v396
        %v2584 = vpop.f32.mrb[0].mxu0
        %v2585 = vadd.f32 0.0, %v2584
        %v2586 = vpop.f32.mrb[0].mxu0
        %2587 = vmatprep.mubr.f32.mxu0 0.0
        %2588 = vmatmul.mubr.f32.gmra.mrb[0].mxu0 %v399
        %v2589 = vpop.f32.mrb[0].mxu0
        %v2590 = vadd.f32 0.0, %v2589
        %v2591 = vpop.f32.mrb[0].mxu0
        %2592 = vmatprep.mubr.f32.mxu0 0.0
        %2593 = vmatmul.mubr.f32.gmra.mrb[0].mxu0 %v401
        %v2594 = vpop.f32.mrb[0].mxu0
        %v2595 = vadd.f32 0.0, %v2594
        %v2596 = vpop.f32.mrb[0].mxu0
        %2597 = vmatprep.mubr.f32.mxu0 0.0
        %2598 = vmatmul.mubr.f32.gmra.mrb[0].mxu0 %v404
        %v2599 = vpop.f32.mrb[0].mxu0
        %v2600 = vadd.f32 0.0, %v2599
        %v2601 = vpop.f32.mrb[0].mxu0
        %2602 = vmatprep.mubr.f32.mxu0 0.0
        %2603 = vmatmul.mubr.f32.gmra.mrb[0].mxu0 %v406
        %v2604 = vpop.f32.mrb[0].mxu0
        %v2605 = vadd.f32 0.0, %v2604
        %v2606 = vpop.f32.mrb[0].mxu0
        %2607 = vmatprep.mubr.f32.mxu0 0.0
        %2608 = vmatmul.mubr.f32.gmra.mrb[0].mxu0 %v409
        %v2609 = vpop.f32.mrb[0].mxu0
        %v2610 = vadd.f32 0.0, %v2609
        %v2611 = vpop.f32.mrb[0].mxu0
        %2612 = vmatprep.mubr.f32.mxu0 0.0
        %2613 = vmatmul.mubr.f32.gmra.mrb[0].mxu0 %v411
        %v2614 = vpop.f32.mrb[0].mxu0
        %v2615 = vadd.f32 0.0, %v2614
        %v2616 = vpop.f32.mrb[0].mxu0
        %2617 = vmatprep.mubr.f32.mxu0 0.0
        %2618 = vmatmul.mubr.f32.gmra.mrb[0].mxu0 %v414
        %v2619 = vpop.f32.mrb[0].mxu0
        %v2620 = vadd.f32 0.0, %v2619
        %v2621 = vpop.f32.mrb[0].mxu0
        %2622 = vmatprep.mubr.f32.mxu0 0.0
        %2623 = vmatmul.mubr.f32.gmra.mrb[0].mxu0 %v416
        %v2624 = vpop.f32.mrb[0].mxu0
        %v2625 = vadd.f32 0.0, %v2624
        %v2626 = vpop.f32.mrb[0].mxu0
        %2627 = vmatprep.mubr.f32.mxu0 0.0
        %2628 = vmatmul.mubr.f32.gmra.mrb[0].mxu0 %v419
        %v2629 = vpop.f32.mrb[0].mxu0
        %v2630 = vadd.f32 0.0, %v2629
        %v2631 = vpop.f32.mrb[0].mxu0
        %2632 = vmatprep.mubr.f32.mxu0 0.0
        %2633 = vmatmul.mubr.f32.gmra.mrb[0].mxu0 %v421
        %v2634 = vpop.f32.mrb[0].mxu0
        %v2635 = vadd.f32 0.0, %v2634
        %v2636 = vpop.f32.mrb[0].mxu0
        %2637 = vmatprep.mubr.f32.mxu0 0.0
        %2638 = vmatmul.mubr.f32.gmra.mrb[0].mxu0 %v424
        %v2639 = vpop.f32.mrb[0].mxu0
        %v2640 = vadd.f32 0.0, %v2639
        %v2641 = vpop.f32.mrb[0].mxu0
        %2642 = vmatprep.mubr.f32.mxu0 0.0
        %2643 = vmatmul.mubr.f32.gmra.mrb[0].mxu0 %v426
        %v2644 = vpop.f32.mrb[0].mxu0
        %v2645 = vadd.f32 0.0, %v2644
        %v2646 = vpop.f32.mrb[0].mxu0
        %2647 = vmatprep.mubr.f32.mxu0 0.0
        %2648 = vmatmul.mubr.f32.gmra.mrb[0].mxu0 %v429
        %v2649 = vpop.f32.mrb[0].mxu0
        %v2650 = vadd.f32 0.0, %v2649
        %v2651 = vpop.f32.mrb[0].mxu0
        %2652 = vmatprep.mubr.f32.mxu0 0.0
        %2653 = vmatmul.mubr.f32.gmra.mrb[0].mxu0 %v431
        %v2654 = vpop.f32.mrb[0].mxu0
        %v2655 = vadd.f32 0.0, %v2654
        %v2656 = vpop.f32.mrb[0].mxu0
        %2657 = vmatprep.mubr.f32.mxu0 0.0
        %2658 = vmatmul.mubr.f32.gmra.mrb[0].mxu0 %v434
        %v2659 = vpop.f32.mrb[0].mxu0
        %v2660 = vadd.f32 0.0, %v2659
        %v2661 = vpop.f32.mrb[0].mxu0
        %2662 = vmatprep.mubr.f32.mxu0 0.0
        %2663 = vmatmul.mubr.f32.gmra.mrb[0].mxu0 %v436
        %v2664 = vpop.f32.mrb[0].mxu0
        %v2665 = vadd.f32 0.0, %v2664
        %v2666 = vpop.f32.mrb[0].mxu0
        %2667 = vmatprep.mubr.f32.mxu0 0.0
        %2668 = vmatmul.mubr.f32.gmra.mrb[0].mxu0 %v1602
        %v2669 = vpop.f32.mrb[0].mxu0
        %v2670 = vadd.f32 0.0, %v2669
        %v2671 = vpop.f32.mrb[0].mxu0
        %2672 = vmatprep.mubr.f32.mxu0 0.0
        %2673 = vmatmul.mubr.f32.gmra.mrb[0].mxu0 %v1604
        %v2674 = vpop.f32.mrb[0].mxu0
        %v2675 = vadd.f32 0.0, %v2674
        %v2676 = vpop.f32.mrb[0].mxu0
        %2677 = vmatprep.mubr.f32.mxu0 0.0
        %2678 = vmatmul.mubr.f32.gmra.mrb[0].mxu0 %v2441
        %v2679 = vpop.f32.mrb[0].mxu0
        %v2680 = vadd.f32 0.0, %v2679
        %v2681 = vpop.f32.mrb[0].mxu0
        %2682 = vmatprep.mubr.f32.mxu0 0.0
        %2683 = vmatmul.mubr.f32.gmra.mrb[0].mxu0 %v2443
        %v2684 = vpop.f32.mrb[0].mxu0
        %v2685 = vadd.f32 0.0, %v2684
        %v2686 = vpop.f32.mrb[0].mxu0
        %2687 = vdwg.mxu0
        %v2688 = vadd.f32 %v2404, %v2530
        %v2689 = vadd.f32 %v2405, %v2535
        %v2690 = vadd.f32 %v2406, %v2540
        %v2691 = vadd.f32 %v2407, %v2545
        %v2692 = vadd.f32 %v2408, %v2550
        %v2693 = vadd.f32 %v2409, %v2555
        %v2694 = vadd.f32 %v2410, %v2560
        %v2695 = vadd.f32 %v2411, %v2565
        %v2696 = vadd.f32 %v2412, %v2570
        %v2697 = vadd.f32 %v2413, %v2575
        %v2698 = vadd.f32 %v2414, %v2580
        %v2699 = vadd.f32 %v2415, %v2585
        %v2700 = vadd.f32 %v2416, %v2590
        %v2701 = vadd.f32 %v2417, %v2595
        %v2702 = vadd.f32 %v2418, %v2600
        %v2703 = vadd.f32 %v2419, %v2605
        %v2704 = vadd.f32 %v2420, %v2610
        %v2705 = vadd.f32 %v2421, %v2615
        %v2706 = vadd.f32 %v2422, %v2620
        %v2707 = vadd.f32 %v2423, %v2625
        %v2708 = vadd.f32 %v2424, %v2630
        %v2709 = vadd.f32 %v2425, %v2635
        %v2710 = vadd.f32 %v2426, %v2640
        %v2711 = vadd.f32 %v2427, %v2645
        %v2712 = vadd.f32 %v2428, %v2650
        %v2713 = vadd.f32 %v2429, %v2655
        %v2714 = vadd.f32 %v2430, %v2660
        %v2715 = vadd.f32 %v2431, %v2665
        %v2716 = vadd.f32 %v2432, %v2670
        %v2717 = vadd.f32 %v2433, %v2675
        %v2718 = vadd.f32 %v2434, %v2680
        %v2719 = vadd.f32 %v2435, %v2685
        %v2720 = vrot.slane %v289, 2
        %v2721 = vrot.slane %v290, 2
        %v2722 = vsel %vm936, %v2720, %v2721
        %v2723 = vrot.slane %v291, 2
        %v2724 = vsel %vm936, %v2721, %v2723
        %s2727 = scalar_lea.vmem %s1, 1024
        %v2728 = vld [vmem:[%s2727] sm:$0xff]
        %v2729 = vld [vmem:[%s2727 + $0x8] sm:$0xff]
        %v2730 = vld [vmem:[%s2727 + $0x10] sm:$0xff]
        %v2731 = vld [vmem:[%s2727 + $0x18] sm:$0xff]
        %v2732 = vld [vmem:[%s2727 + $0x20] sm:$0xff]
        %v2733 = vld [vmem:[%s2727 + $0x28] sm:$0xff]
        %v2734 = vld [vmem:[%s2727 + $0x30] sm:$0xff]
        %v2735 = vld [vmem:[%s2727 + $0x38] sm:$0xff]
        %v2736 = vld [vmem:[%s2727 + $0x40] sm:$0xff]
        %v2737 = vld [vmem:[%s2727 + $0x48] sm:$0xff]
        %v2738 = vld [vmem:[%s2727 + $0x50] sm:$0xff]
        %v2739 = vld [vmem:[%s2727 + $0x58] sm:$0xff]
        %v2740 = vld [vmem:[%s2727 + $0x60] sm:$0xff]
        %v2741 = vld [vmem:[%s2727 + $0x68] sm:$0xff]
        %v2742 = vld [vmem:[%s2727 + $0x70] sm:$0xff]
        %v2743 = vld [vmem:[%s2727 + $0x78] sm:$0xff]
        %2744 = vmatprep.subr.mxu0 0.0
        %2745 = vmatpush1.msra.mxu0 %v2728
        %2746 = vmatprep.subr.mxu0 0.0
        %2747 = vmatpush1.msra.mxu0 %v2729
        %2748 = vmatprep.subr.mxu0 0.0
        %2749 = vmatpush1.msra.mxu0 %v2730
        %2750 = vmatprep.subr.mxu0 0.0
        %2751 = vmatpush1.msra.mxu0 %v2731
        %2752 = vmatprep.subr.mxu0 0.0
        %2753 = vmatpush1.msra.mxu0 %v2732
        %2754 = vmatprep.subr.mxu0 0.0
        %2755 = vmatpush1.msra.mxu0 %v2733
        %2756 = vmatprep.subr.mxu0 0.0
        %2757 = vmatpush1.msra.mxu0 %v2734
        %2758 = vmatprep.subr.mxu0 0.0
        %2759 = vmatpush1.msra.mxu0 %v2735
        %2760 = vmatprep.subr.mxu0 0.0
        %2761 = vmatpush1.msra.mxu0 %v2736
        %2762 = vmatprep.subr.mxu0 0.0
        %2763 = vmatpush1.msra.mxu0 %v2737
        %2764 = vmatprep.subr.mxu0 0.0
        %2765 = vmatpush1.msra.mxu0 %v2738
        %2766 = vmatprep.subr.mxu0 0.0
        %2767 = vmatpush1.msra.mxu0 %v2739
        %2768 = vmatprep.subr.mxu0 0.0
        %2769 = vmatpush1.msra.mxu0 %v2740
        %2770 = vmatprep.subr.mxu0 0.0
        %2771 = vmatpush1.msra.mxu0 %v2741
        %2772 = vmatprep.subr.mxu0 0.0
        %2773 = vmatpush1.msra.mxu0 %v2742
        %2774 = vmatprep.subr.mxu0 0.0
        %2775 = vmatpush1.msra.mxu0 %v2743
        %2776 = vmatprep.subr.mxu0 0.0
        %2777 = vmatpush1.msra.mxu0 0.0
        %2778 = vmatprep.subr.mxu0 0.0
        %2779 = vmatpush1.msra.mxu0 0.0
        %2780 = vmatprep.subr.mxu0 0.0
        %2781 = vmatpush1.msra.mxu0 0.0
        %2782 = vmatprep.subr.mxu0 0.0
        %2783 = vmatpush1.msra.mxu0 0.0
        %2784 = vmatprep.subr.mxu0 0.0
        %2785 = vmatpush1.msra.mxu0 0.0
        %2786 = vmatprep.subr.mxu0 0.0
        %2787 = vmatpush1.msra.mxu0 0.0
        %2788 = vmatprep.subr.mxu0 0.0
        %2789 = vmatpush1.msra.mxu0 0.0
        %2790 = vmatprep.subr.mxu0 0.0
        %2791 = vmatpush1.msra.mxu0 0.0
        %2792 = vmatprep.subr.mxu0 0.0
        %2793 = vmatpush1.msra.mxu0 0.0
        %2794 = vmatprep.subr.mxu0 0.0
        %2795 = vmatpush1.msra.mxu0 0.0
        %2796 = vmatprep.subr.mxu0 0.0
        %2797 = vmatpush1.msra.mxu0 0.0
        %2798 = vmatprep.subr.mxu0 0.0
        %2799 = vmatpush1.msra.mxu0 0.0
        %2800 = vmatprep.subr.mxu0 0.0
        %2801 = vmatpush1.msra.mxu0 0.0
        %2802 = vmatprep.subr.mxu0 0.0
        %2803 = vmatpush1.msra.mxu0 0.0
        %2804 = vmatprep.subr.mxu0 0.0
        %2805 = vmatpush1.msra.mxu0 0.0
        %2806 = vmatprep.subr.mxu0 0.0
        %2807 = vmatpush1.msra.mxu0 0.0
        %2808 = vmatprep.mubr.f32.mxu0 0.0
        %2809 = vmatmul.mubr.f32.gmra.mrb[0].mxu0 %v949
        %v2810 = vpop.f32.mrb[0].mxu0
        %v2811 = vadd.f32 0.0, %v2810
        %v2812 = vpop.f32.mrb[0].mxu0
        %2813 = vmatprep.mubr.f32.mxu0 0.0
        %2814 = vmatmul.mubr.f32.gmra.mrb[0].mxu0 %v951
        %v2815 = vpop.f32.mrb[0].mxu0
        %v2816 = vadd.f32 0.0, %v2815
        %v2817 = vpop.f32.mrb[0].mxu0
        %2818 = vmatprep.mubr.f32.mxu0 0.0
        %2819 = vmatmul.mubr.f32.gmra.mrb[0].mxu0 %v954
        %v2820 = vpop.f32.mrb[0].mxu0
        %v2821 = vadd.f32 0.0, %v2820
        %v2822 = vpop.f32.mrb[0].mxu0
        %2823 = vmatprep.mubr.f32.mxu0 0.0
        %2824 = vmatmul.mubr.f32.gmra.mrb[0].mxu0 %v956
        %v2825 = vpop.f32.mrb[0].mxu0
        %v2826 = vadd.f32 0.0, %v2825
        %v2827 = vpop.f32.mrb[0].mxu0
        %2828 = vmatprep.mubr.f32.mxu0 0.0
        %2829 = vmatmul.mubr.f32.gmra.mrb[0].mxu0 %v959
        %v2830 = vpop.f32.mrb[0].mxu0
        %v2831 = vadd.f32 0.0, %v2830
        %v2832 = vpop.f32.mrb[0].mxu0
        %2833 = vmatprep.mubr.f32.mxu0 0.0
        %2834 = vmatmul.mubr.f32.gmra.mrb[0].mxu0 %v961
        %v2835 = vpop.f32.mrb[0].mxu0
        %v2836 = vadd.f32 0.0, %v2835
        %v2837 = vpop.f32.mrb[0].mxu0
        %2838 = vmatprep.mubr.f32.mxu0 0.0
        %2839 = vmatmul.mubr.f32.gmra.mrb[0].mxu0 %v964
        %v2840 = vpop.f32.mrb[0].mxu0
        %v2841 = vadd.f32 0.0, %v2840
        %v2842 = vpop.f32.mrb[0].mxu0
        %2843 = vmatprep.mubr.f32.mxu0 0.0
        %2844 = vmatmul.mubr.f32.gmra.mrb[0].mxu0 %v966
        %v2845 = vpop.f32.mrb[0].mxu0
        %v2846 = vadd.f32 0.0, %v2845
        %v2847 = vpop.f32.mrb[0].mxu0
        %2848 = vmatprep.mubr.f32.mxu0 0.0
        %2849 = vmatmul.mubr.f32.gmra.mrb[0].mxu0 %v969
        %v2850 = vpop.f32.mrb[0].mxu0
        %v2851 = vadd.f32 0.0, %v2850
        %v2852 = vpop.f32.mrb[0].mxu0
        %2853 = vmatprep.mubr.f32.mxu0 0.0
        %2854 = vmatmul.mubr.f32.gmra.mrb[0].mxu0 %v971
        %v2855 = vpop.f32.mrb[0].mxu0
        %v2856 = vadd.f32 0.0, %v2855
        %v2857 = vpop.f32.mrb[0].mxu0
        %2858 = vmatprep.mubr.f32.mxu0 0.0
        %2859 = vmatmul.mubr.f32.gmra.mrb[0].mxu0 %v974
        %v2860 = vpop.f32.mrb[0].mxu0
        %v2861 = vadd.f32 0.0, %v2860
        %v2862 = vpop.f32.mrb[0].mxu0
        %2863 = vmatprep.mubr.f32.mxu0 0.0
        %2864 = vmatmul.mubr.f32.gmra.mrb[0].mxu0 %v976
        %v2865 = vpop.f32.mrb[0].mxu0
        %v2866 = vadd.f32 0.0, %v2865
        %v2867 = vpop.f32.mrb[0].mxu0
        %2868 = vmatprep.mubr.f32.mxu0 0.0
        %2869 = vmatmul.mubr.f32.gmra.mrb[0].mxu0 %v979
        %v2870 = vpop.f32.mrb[0].mxu0
        %v2871 = vadd.f32 0.0, %v2870
        %v2872 = vpop.f32.mrb[0].mxu0
        %2873 = vmatprep.mubr.f32.mxu0 0.0
        %2874 = vmatmul.mubr.f32.gmra.mrb[0].mxu0 %v981
        %v2875 = vpop.f32.mrb[0].mxu0
        %v2876 = vadd.f32 0.0, %v2875
        %v2877 = vpop.f32.mrb[0].mxu0
        %2878 = vmatprep.mubr.f32.mxu0 0.0
        %2879 = vmatmul.mubr.f32.gmra.mrb[0].mxu0 %v984
        %v2880 = vpop.f32.mrb[0].mxu0
        %v2881 = vadd.f32 0.0, %v2880
        %v2882 = vpop.f32.mrb[0].mxu0
        %2883 = vmatprep.mubr.f32.mxu0 0.0
        %2884 = vmatmul.mubr.f32.gmra.mrb[0].mxu0 %v986
        %v2885 = vpop.f32.mrb[0].mxu0
        %v2886 = vadd.f32 0.0, %v2885
        %v2887 = vpop.f32.mrb[0].mxu0
        %2888 = vmatprep.mubr.f32.mxu0 0.0
        %2889 = vmatmul.mubr.f32.gmra.mrb[0].mxu0 %v989
        %v2890 = vpop.f32.mrb[0].mxu0
        %v2891 = vadd.f32 0.0, %v2890
        %v2892 = vpop.f32.mrb[0].mxu0
        %2893 = vmatprep.mubr.f32.mxu0 0.0
        %2894 = vmatmul.mubr.f32.gmra.mrb[0].mxu0 %v991
        %v2895 = vpop.f32.mrb[0].mxu0
        %v2896 = vadd.f32 0.0, %v2895
        %v2897 = vpop.f32.mrb[0].mxu0
        %2898 = vmatprep.mubr.f32.mxu0 0.0
        %2899 = vmatmul.mubr.f32.gmra.mrb[0].mxu0 %v994
        %v2900 = vpop.f32.mrb[0].mxu0
        %v2901 = vadd.f32 0.0, %v2900
        %v2902 = vpop.f32.mrb[0].mxu0
        %2903 = vmatprep.mubr.f32.mxu0 0.0
        %2904 = vmatmul.mubr.f32.gmra.mrb[0].mxu0 %v996
        %v2905 = vpop.f32.mrb[0].mxu0
        %v2906 = vadd.f32 0.0, %v2905
        %v2907 = vpop.f32.mrb[0].mxu0
        %2908 = vmatprep.mubr.f32.mxu0 0.0
        %2909 = vmatmul.mubr.f32.gmra.mrb[0].mxu0 %v999
        %v2910 = vpop.f32.mrb[0].mxu0
        %v2911 = vadd.f32 0.0, %v2910
        %v2912 = vpop.f32.mrb[0].mxu0
        %2913 = vmatprep.mubr.f32.mxu0 0.0
        %2914 = vmatmul.mubr.f32.gmra.mrb[0].mxu0 %v1001
        %v2915 = vpop.f32.mrb[0].mxu0
        %v2916 = vadd.f32 0.0, %v2915
        %v2917 = vpop.f32.mrb[0].mxu0
        %2918 = vmatprep.mubr.f32.mxu0 0.0
        %2919 = vmatmul.mubr.f32.gmra.mrb[0].mxu0 %v1004
        %v2920 = vpop.f32.mrb[0].mxu0
        %v2921 = vadd.f32 0.0, %v2920
        %v2922 = vpop.f32.mrb[0].mxu0
        %2923 = vmatprep.mubr.f32.mxu0 0.0
        %2924 = vmatmul.mubr.f32.gmra.mrb[0].mxu0 %v1006
        %v2925 = vpop.f32.mrb[0].mxu0
        %v2926 = vadd.f32 0.0, %v2925
        %v2927 = vpop.f32.mrb[0].mxu0
        %2928 = vmatprep.mubr.f32.mxu0 0.0
        %2929 = vmatmul.mubr.f32.gmra.mrb[0].mxu0 %v1009
        %v2930 = vpop.f32.mrb[0].mxu0
        %v2931 = vadd.f32 0.0, %v2930
        %v2932 = vpop.f32.mrb[0].mxu0
        %2933 = vmatprep.mubr.f32.mxu0 0.0
        %2934 = vmatmul.mubr.f32.gmra.mrb[0].mxu0 %v1011
        %v2935 = vpop.f32.mrb[0].mxu0
        %v2936 = vadd.f32 0.0, %v2935
        %v2937 = vpop.f32.mrb[0].mxu0
        %2938 = vmatprep.mubr.f32.mxu0 0.0
        %2939 = vmatmul.mubr.f32.gmra.mrb[0].mxu0 %v1014
        %v2940 = vpop.f32.mrb[0].mxu0
        %v2941 = vadd.f32 0.0, %v2940
        %v2942 = vpop.f32.mrb[0].mxu0
        %2943 = vmatprep.mubr.f32.mxu0 0.0
        %2944 = vmatmul.mubr.f32.gmra.mrb[0].mxu0 %v1016
        %v2945 = vpop.f32.mrb[0].mxu0
        %v2946 = vadd.f32 0.0, %v2945
        %v2947 = vpop.f32.mrb[0].mxu0
        %2948 = vmatprep.mubr.f32.mxu0 0.0
        %2949 = vmatmul.mubr.f32.gmra.mrb[0].mxu0 %v1883
        %v2950 = vpop.f32.mrb[0].mxu0
        %v2951 = vadd.f32 0.0, %v2950
        %v2952 = vpop.f32.mrb[0].mxu0
        %2953 = vmatprep.mubr.f32.mxu0 0.0
        %2954 = vmatmul.mubr.f32.gmra.mrb[0].mxu0 %v1885
        %v2955 = vpop.f32.mrb[0].mxu0
        %v2956 = vadd.f32 0.0, %v2955
        %v2957 = vpop.f32.mrb[0].mxu0
        %2958 = vmatprep.mubr.f32.mxu0 0.0
        %2959 = vmatmul.mubr.f32.gmra.mrb[0].mxu0 %v2722
        %v2960 = vpop.f32.mrb[0].mxu0
        %v2961 = vadd.f32 0.0, %v2960
        %v2962 = vpop.f32.mrb[0].mxu0
        %2963 = vmatprep.mubr.f32.mxu0 0.0
        %2964 = vmatmul.mubr.f32.gmra.mrb[0].mxu0 %v2724
        %v2965 = vpop.f32.mrb[0].mxu0
        %v2966 = vadd.f32 0.0, %v2965
        %v2967 = vpop.f32.mrb[0].mxu0
        %2968 = vdwg.mxu0
        %v2969 = vadd.f32 %v2688, %v2811
        %v2970 = vadd.f32 %v2689, %v2816
        %v2971 = vadd.f32 %v2690, %v2821
        %v2972 = vadd.f32 %v2691, %v2826
        %v2973 = vadd.f32 %v2692, %v2831
        %v2974 = vadd.f32 %v2693, %v2836
        %v2975 = vadd.f32 %v2694, %v2841
        %v2976 = vadd.f32 %v2695, %v2846
        %v2977 = vadd.f32 %v2696, %v2851
        %v2978 = vadd.f32 %v2697, %v2856
        %v2979 = vadd.f32 %v2698, %v2861
        %v2980 = vadd.f32 %v2699, %v2866
        %v2981 = vadd.f32 %v2700, %v2871
        %v2982 = vadd.f32 %v2701, %v2876
        %v2983 = vadd.f32 %v2702, %v2881
        %v2984 = vadd.f32 %v2703, %v2886
        %v2985 = vadd.f32 %v2704, %v2891
        %v2986 = vadd.f32 %v2705, %v2896
        %v2987 = vadd.f32 %v2706, %v2901
        %v2988 = vadd.f32 %v2707, %v2906
        %v2989 = vadd.f32 %v2708, %v2911
        %v2990 = vadd.f32 %v2709, %v2916
        %v2991 = vadd.f32 %v2710, %v2921
        %v2992 = vadd.f32 %v2711, %v2926
        %v2993 = vadd.f32 %v2712, %v2931
        %v2994 = vadd.f32 %v2713, %v2936
        %v2995 = vadd.f32 %v2714, %v2941
        %v2996 = vadd.f32 %v2715, %v2946
        %v2997 = vadd.f32 %v2716, %v2951
        %v2998 = vadd.f32 %v2717, %v2956
        %v2999 = vadd.f32 %v2718, %v2961
        %v3000 = vadd.f32 %v2719, %v2966
        %v3001 = vld [vmem:[%s2] sm:$0x1]
        %v3003 = vlaneseq
        %v3004 = vshrl.u32 %v3003, 7
        %v3005 = vsub.s32 0, %v3004
        %v3006 = vrot.slane %v3001, %v3005
        %v3008 = vadd.f32 %v2969, %v3006
        %v3009 = vadd.f32 %v2970, %v3006
        %v3010 = vadd.f32 %v2971, %v3006
        %v3011 = vadd.f32 %v2972, %v3006
        %v3012 = vadd.f32 %v2973, %v3006
        %v3013 = vadd.f32 %v2974, %v3006
        %v3014 = vadd.f32 %v2975, %v3006
        %v3015 = vadd.f32 %v2976, %v3006
        %v3016 = vadd.f32 %v2977, %v3006
        %v3017 = vadd.f32 %v2978, %v3006
        %v3018 = vadd.f32 %v2979, %v3006
        %v3019 = vadd.f32 %v2980, %v3006
        %v3020 = vadd.f32 %v2981, %v3006
        %v3021 = vadd.f32 %v2982, %v3006
        %v3022 = vadd.f32 %v2983, %v3006
        %v3023 = vadd.f32 %v2984, %v3006
        %v3024 = vadd.f32 %v2985, %v3006
        %v3025 = vadd.f32 %v2986, %v3006
        %v3026 = vadd.f32 %v2987, %v3006
        %v3027 = vadd.f32 %v2988, %v3006
        %v3028 = vadd.f32 %v2989, %v3006
        %v3029 = vadd.f32 %v2990, %v3006
        %v3030 = vadd.f32 %v2991, %v3006
        %v3031 = vadd.f32 %v2992, %v3006
        %v3032 = vadd.f32 %v2993, %v3006
        %v3033 = vadd.f32 %v2994, %v3006
        %v3034 = vadd.f32 %v2995, %v3006
        %v3035 = vadd.f32 %v2996, %v3006
        %v3036 = vadd.f32 %v2997, %v3006
        %v3037 = vadd.f32 %v2998, %v3006
        %v3038 = vadd.f32 %v2999, %v3006
        %v3039 = vadd.f32 %v3000, %v3006
        %v3040 = vadd.f32 %v3008, %v3009
        %v3041 = vadd.f32 %v3040, %v3010
        %v3042 = vadd.f32 %v3041, %v3011
        %v3043 = vadd.f32 %v3042, %v3012
        %v3044 = vadd.f32 %v3043, %v3013
        %v3045 = vadd.f32 %v3044, %v3014
        %v3046 = vadd.f32 %v3045, %v3015
        %v3047 = vadd.f32 %v3046, %v3016
        %v3048 = vadd.f32 %v3047, %v3017
        %v3049 = vadd.f32 %v3048, %v3018
        %v3050 = vadd.f32 %v3049, %v3019
        %v3051 = vadd.f32 %v3050, %v3020
        %v3052 = vadd.f32 %v3051, %v3021
        %v3053 = vadd.f32 %v3052, %v3022
        %v3054 = vadd.f32 %v3053, %v3023
        %v3055 = vadd.f32 %v3054, %v3024
        %v3056 = vadd.f32 %v3055, %v3025
        %v3057 = vadd.f32 %v3056, %v3026
        %v3058 = vadd.f32 %v3057, %v3027
        %v3059 = vadd.f32 %v3058, %v3028
        %v3060 = vadd.f32 %v3059, %v3029
        %v3061 = vadd.f32 %v3060, %v3030
        %v3062 = vadd.f32 %v3061, %v3031
        %v3063 = vadd.f32 %v3062, %v3032
        %v3064 = vadd.f32 %v3063, %v3033
        %v3065 = vadd.f32 %v3064, %v3034
        %v3066 = vadd.f32 %v3065, %v3035
        %v3067 = vadd.f32 %v3066, %v3036
        %v3068 = vadd.f32 %v3067, %v3037
        %v3069 = vadd.f32 %v3068, %v3038
        %v3070 = vadd.f32 %v3069, %v3039
        %v3071 = vrot.slane %v3070, 4
        %v3072 = vadd.f32 %v3070, %v3071
        %v3073 = vrot.slane %v3072, 2
        %v3074 = vadd.f32 %v3072, %v3073
        %v3075 = vrot.slane %v3074, 1
        %v3076 = vadd.f32 %v3074, %v3075
        %v3077 = vrcp.pop 256.0
        %v3078 = vmul.f32 %v3076, %v3077
        %v3079 = vsub.f32 %v3008, %v3078
        %v3080 = vsub.f32 %v3009, %v3078
        %v3081 = vsub.f32 %v3010, %v3078
        %v3082 = vsub.f32 %v3011, %v3078
        %v3083 = vsub.f32 %v3012, %v3078
        %v3084 = vsub.f32 %v3013, %v3078
        %v3085 = vsub.f32 %v3014, %v3078
        %v3086 = vsub.f32 %v3015, %v3078
        %v3087 = vsub.f32 %v3016, %v3078
        %v3088 = vsub.f32 %v3017, %v3078
        %v3089 = vsub.f32 %v3018, %v3078
        %v3090 = vsub.f32 %v3019, %v3078
        %v3091 = vsub.f32 %v3020, %v3078
        %v3092 = vsub.f32 %v3021, %v3078
        %v3093 = vsub.f32 %v3022, %v3078
        %v3094 = vsub.f32 %v3023, %v3078
        %v3095 = vsub.f32 %v3024, %v3078
        %v3096 = vsub.f32 %v3025, %v3078
        %v3097 = vsub.f32 %v3026, %v3078
        %v3098 = vsub.f32 %v3027, %v3078
        %v3099 = vsub.f32 %v3028, %v3078
        %v3100 = vsub.f32 %v3029, %v3078
        %v3101 = vsub.f32 %v3030, %v3078
        %v3102 = vsub.f32 %v3031, %v3078
        %v3103 = vsub.f32 %v3032, %v3078
        %v3104 = vsub.f32 %v3033, %v3078
        %v3105 = vsub.f32 %v3034, %v3078
        %v3106 = vsub.f32 %v3035, %v3078
        %v3107 = vsub.f32 %v3036, %v3078
        %v3108 = vsub.f32 %v3037, %v3078
        %v3109 = vsub.f32 %v3038, %v3078
        %v3110 = vsub.f32 %v3039, %v3078
        %v3111 = vmul.f32 %v3079, %v3079
        %v3112 = vmul.f32 %v3080, %v3080
        %v3113 = vmul.f32 %v3081, %v3081
        %v3114 = vmul.f32 %v3082, %v3082
        %v3115 = vmul.f32 %v3083, %v3083
        %v3116 = vmul.f32 %v3084, %v3084
        %v3117 = vmul.f32 %v3085, %v3085
        %v3118 = vmul.f32 %v3086, %v3086
        %v3119 = vmul.f32 %v3087, %v3087
        %v3120 = vmul.f32 %v3088, %v3088
        %v3121 = vmul.f32 %v3089, %v3089
        %v3122 = vmul.f32 %v3090, %v3090
        %v3123 = vmul.f32 %v3091, %v3091
        %v3124 = vmul.f32 %v3092, %v3092
        %v3125 = vmul.f32 %v3093, %v3093
        %v3126 = vmul.f32 %v3094, %v3094
        %v3127 = vmul.f32 %v3095, %v3095
        %v3128 = vmul.f32 %v3096, %v3096
        %v3129 = vmul.f32 %v3097, %v3097
        %v3130 = vmul.f32 %v3098, %v3098
        %v3131 = vmul.f32 %v3099, %v3099
        %v3132 = vmul.f32 %v3100, %v3100
        %v3133 = vmul.f32 %v3101, %v3101
        %v3134 = vmul.f32 %v3102, %v3102
        %v3135 = vmul.f32 %v3103, %v3103
        %v3136 = vmul.f32 %v3104, %v3104
        %v3137 = vmul.f32 %v3105, %v3105
        %v3138 = vmul.f32 %v3106, %v3106
        %v3139 = vmul.f32 %v3107, %v3107
        %v3140 = vmul.f32 %v3108, %v3108
        %v3141 = vmul.f32 %v3109, %v3109
        %v3142 = vmul.f32 %v3110, %v3110
        %v3143 = vadd.f32 %v3111, %v3112
        %v3144 = vadd.f32 %v3143, %v3113
        %v3145 = vadd.f32 %v3144, %v3114
        %v3146 = vadd.f32 %v3145, %v3115
        %v3147 = vadd.f32 %v3146, %v3116
        %v3148 = vadd.f32 %v3147, %v3117
        %v3149 = vadd.f32 %v3148, %v3118
        %v3150 = vadd.f32 %v3149, %v3119
        %v3151 = vadd.f32 %v3150, %v3120
        %v3152 = vadd.f32 %v3151, %v3121
        %v3153 = vadd.f32 %v3152, %v3122
        %v3154 = vadd.f32 %v3153, %v3123
        %v3155 = vadd.f32 %v3154, %v3124
        %v3156 = vadd.f32 %v3155, %v3125
        %v3157 = vadd.f32 %v3156, %v3126
        %v3158 = vadd.f32 %v3157, %v3127
        %v3159 = vadd.f32 %v3158, %v3128
        %v3160 = vadd.f32 %v3159, %v3129
        %v3161 = vadd.f32 %v3160, %v3130
        %v3162 = vadd.f32 %v3161, %v3131
        %v3163 = vadd.f32 %v3162, %v3132
        %v3164 = vadd.f32 %v3163, %v3133
        %v3165 = vadd.f32 %v3164, %v3134
        %v3166 = vadd.f32 %v3165, %v3135
        %v3167 = vadd.f32 %v3166, %v3136
        %v3168 = vadd.f32 %v3167, %v3137
        %v3169 = vadd.f32 %v3168, %v3138
        %v3170 = vadd.f32 %v3169, %v3139
        %v3171 = vadd.f32 %v3170, %v3140
        %v3172 = vadd.f32 %v3171, %v3141
        %v3173 = vadd.f32 %v3172, %v3142
        %v3174 = vrot.slane %v3173, 4
        %v3175 = vadd.f32 %v3173, %v3174
        %v3176 = vrot.slane %v3175, 2
        %v3177 = vadd.f32 %v3175, %v3176
        %v3178 = vrot.slane %v3177, 1
        %v3179 = vadd.f32 %v3177, %v3178
        %v3180 = vmul.f32 %v3179, %v3077
        %v3181 = vadd.f32 %v3180, 1e-05
        %v3182 = vrsqrt.pop %v3181
        %v3183 = vmul.f32 %v3079, %v3182
        %v3184 = vmul.f32 %v3080, %v3182
        %v3185 = vmul.f32 %v3081, %v3182
        %v3186 = vmul.f32 %v3082, %v3182
        %v3187 = vmul.f32 %v3083, %v3182
        %v3188 = vmul.f32 %v3084, %v3182
        %v3189 = vmul.f32 %v3085, %v3182
        %v3190 = vmul.f32 %v3086, %v3182
        %v3191 = vmul.f32 %v3087, %v3182
        %v3192 = vmul.f32 %v3088, %v3182
        %v3193 = vmul.f32 %v3089, %v3182
        %v3194 = vmul.f32 %v3090, %v3182
        %v3195 = vmul.f32 %v3091, %v3182
        %v3196 = vmul.f32 %v3092, %v3182
        %v3197 = vmul.f32 %v3093, %v3182
        %v3198 = vmul.f32 %v3094, %v3182
        %v3199 = vmul.f32 %v3095, %v3182
        %v3200 = vmul.f32 %v3096, %v3182
        %v3201 = vmul.f32 %v3097, %v3182
        %v3202 = vmul.f32 %v3098, %v3182
        %v3203 = vmul.f32 %v3099, %v3182
        %v3204 = vmul.f32 %v3100, %v3182
        %v3205 = vmul.f32 %v3101, %v3182
        %v3206 = vmul.f32 %v3102, %v3182
        %v3207 = vmul.f32 %v3103, %v3182
        %v3208 = vmul.f32 %v3104, %v3182
        %v3209 = vmul.f32 %v3105, %v3182
        %v3210 = vmul.f32 %v3106, %v3182
        %v3211 = vmul.f32 %v3107, %v3182
        %v3212 = vmul.f32 %v3108, %v3182
        %v3213 = vmul.f32 %v3109, %v3182
        %v3214 = vmul.f32 %v3110, %v3182
        %v3215 = vmax.f32 %v3183, 0.0
        %v3216 = vmax.f32 %v3184, 0.0
        %v3217 = vmax.f32 %v3185, 0.0
        %v3218 = vmax.f32 %v3186, 0.0
        %v3219 = vmax.f32 %v3187, 0.0
        %v3220 = vmax.f32 %v3188, 0.0
        %v3221 = vmax.f32 %v3189, 0.0
        %v3222 = vmax.f32 %v3190, 0.0
        %v3223 = vmax.f32 %v3191, 0.0
        %v3224 = vmax.f32 %v3192, 0.0
        %v3225 = vmax.f32 %v3193, 0.0
        %v3226 = vmax.f32 %v3194, 0.0
        %v3227 = vmax.f32 %v3195, 0.0
        %v3228 = vmax.f32 %v3196, 0.0
        %v3229 = vmax.f32 %v3197, 0.0
        %v3230 = vmax.f32 %v3198, 0.0
        %v3231 = vmax.f32 %v3199, 0.0
        %v3232 = vmax.f32 %v3200, 0.0
        %v3233 = vmax.f32 %v3201, 0.0
        %v3234 = vmax.f32 %v3202, 0.0
        %v3235 = vmax.f32 %v3203, 0.0
        %v3236 = vmax.f32 %v3204, 0.0
        %v3237 = vmax.f32 %v3205, 0.0
        %v3238 = vmax.f32 %v3206, 0.0
        %v3239 = vmax.f32 %v3207, 0.0
        %v3240 = vmax.f32 %v3208, 0.0
        %v3241 = vmax.f32 %v3209, 0.0
        %v3242 = vmax.f32 %v3210, 0.0
        %v3243 = vmax.f32 %v3211, 0.0
        %v3244 = vmax.f32 %v3212, 0.0
        %v3245 = vmax.f32 %v3213, 0.0
        %v3246 = vmax.f32 %v3214, 0.0
        %v3263 = vrot.slane %v3217, 1
        %v3264 = vrot.slane %v3215, 1
        %v3265 = vrot.slane %v3219, 1
        %v3266 = vrot.slane %v3221, 1
        %v3267 = vrot.slane %v3223, 1
        %v3268 = vrot.slane %v3225, 1
        %v3269 = vrot.slane %v3227, 1
        %v3270 = vrot.slane %v3229, 1
        %v3271 = vrot.slane %v3231, 1
        %v3272 = vrot.slane %v3233, 1
        %v3273 = vrot.slane %v3235, 1
        %v3274 = vrot.slane %v3237, 1
        %v3275 = vrot.slane %v3239, 1
        %v3276 = vrot.slane %v3241, 1
        %v3277 = vrot.slane %v3243, 1
        %v3278 = vrot.slane %v3245, 1
        %vm3311 = vcmask 1040384
        %v3312 = vrot.slane %v3217, 7
        %v3313 = vrot.slane %v3218, 7
        %v3314 = vsel %vm3311, %v3312, %v3313
        %v3315 = vrot.slane %v3215, 7
        %v3316 = vrot.slane %v3216, 7
        %v3317 = vsel %vm3311, %v3315, %v3316
        %v3318 = vrot.slane %v3219, 7
        %v3319 = vrot.slane %v3220, 7
        %v3320 = vsel %vm3311, %v3318, %v3319
        %v3321 = vrot.slane %v3221, 7
        %v3322 = vrot.slane %v3222, 7
        %v3323 = vsel %vm3311, %v3321, %v3322
        %v3324 = vrot.slane %v3223, 7
        %v3325 = vrot.slane %v3224, 7
        %v3326 = vsel %vm3311, %v3324, %v3325
        %v3327 = vrot.slane %v3225, 7
        %v3328 = vrot.slane %v3226, 7
        %v3329 = vsel %vm3311, %v3327, %v3328
        %v3330 = vrot.slane %v3227, 7
        %v3331 = vrot.slane %v3228, 7
        %v3332 = vsel %vm3311, %v3330, %v3331
        %v3333 = vrot.slane %v3229, 7
        %v3334 = vrot.slane %v3230, 7
        %v3335 = vsel %vm3311, %v3333, %v3334
        %v3336 = vrot.slane %v3231, 7
        %v3337 = vrot.slane %v3232, 7
        %v3338 = vsel %vm3311, %v3336, %v3337
        %v3339 = vrot.slane %v3233, 7
        %v3340 = vrot.slane %v3234, 7
        %v3341 = vsel %vm3311, %v3339, %v3340
        %v3342 = vrot.slane %v3235, 7
        %v3343 = vrot.slane %v3236, 7
        %v3344 = vsel %vm3311, %v3342, %v3343
        %v3345 = vrot.slane %v3237, 7
        %v3346 = vrot.slane %v3238, 7
        %v3347 = vsel %vm3311, %v3345, %v3346
        %v3348 = vrot.slane %v3239, 7
        %v3349 = vrot.slane %v3240, 7
        %v3350 = vsel %vm3311, %v3348, %v3349
        %v3351 = vrot.slane %v3241, 7
        %v3352 = vrot.slane %v3242, 7
        %v3353 = vsel %vm3311, %v3351, %v3352
        %v3354 = vrot.slane %v3243, 7
        %v3355 = vrot.slane %v3244, 7
        %v3356 = vsel %vm3311, %v3354, %v3355
        %v3357 = vrot.slane %v3245, 7
        %v3358 = vrot.slane %v3246, 7
        %v3359 = vsel %vm3311, %v3357, %v3358
        %v3408 = vrot.slane %v3218, 5
        %v3409 = vrot.slane %v3216, 5
        %v3410 = vrot.slane %v3220, 5
        %v3411 = vrot.slane %v3222, 5
        %v3412 = vrot.slane %v3224, 5
        %v3413 = vrot.slane %v3226, 5
        %v3414 = vrot.slane %v3228, 5
        %v3415 = vrot.slane %v3230, 5
        %v3416 = vrot.slane %v3232, 5
        %v3417 = vrot.slane %v3234, 5
        %v3418 = vrot.slane %v3236, 5
        %v3419 = vrot.slane %v3238, 5
        %v3420 = vrot.slane %v3240, 5
        %v3421 = vrot.slane %v3242, 5
        %v3422 = vrot.slane %v3244, 5
        %v3423 = vrot.slane %v3246, 5
        %v3440 = vsel %vm3311, %v3263, %v3312
        %v3441 = vsel %vm3311, %v3264, %v3315
        %v3442 = vsel %vm3311, %v3265, %v3318
        %v3443 = vsel %vm3311, %v3266, %v3321
        %v3444 = vsel %vm3311, %v3267, %v3324
        %v3445 = vsel %vm3311, %v3268, %v3327
        %v3446 = vsel %vm3311, %v3269, %v3330
        %v3447 = vsel %vm3311, %v3270, %v3333
        %v3448 = vsel %vm3311, %v3271, %v3336
        %v3449 = vsel %vm3311, %v3272, %v3339
        %v3450 = vsel %vm3311, %v3273, %v3342
        %v3451 = vsel %vm3311, %v3274, %v3345
        %v3452 = vsel %vm3311, %v3275, %v3348
        %v3453 = vsel %vm3311, %v3276, %v3351
        %v3454 = vsel %vm3311, %v3277, %v3354
        %v3455 = vsel %vm3311, %v3278, %v3357
        %v3456 = vsel %vm3311, %v3313, %v3408
        %v3457 = vsel %vm3311, %v3316, %v3409
        %v3458 = vsel %vm3311, %v3319, %v3410
        %v3459 = vsel %vm3311, %v3322, %v3411
        %v3460 = vsel %vm3311, %v3325, %v3412
        %v3461 = vsel %vm3311, %v3328, %v3413
        %v3462 = vsel %vm3311, %v3331, %v3414
        %v3463 = vsel %vm3311, %v3334, %v3415
        %v3464 = vsel %vm3311, %v3337, %v3416
        %v3465 = vsel %vm3311, %v3340, %v3417
        %v3466 = vsel %vm3311, %v3343, %v3418
        %v3467 = vsel %vm3311, %v3346, %v3419
        %v3468 = vsel %vm3311, %v3349, %v3420
        %v3469 = vsel %vm3311, %v3352, %v3421
        %v3470 = vsel %vm3311, %v3355, %v3422
        %v3471 = vsel %vm3311, %v3358, %v3423
        %v3472 = vld [vmem:[#allocation2] sm:$0xff]
        %v3473 = vld [vmem:[#allocation2 + $0x8] sm:$0xff]
        %v3474 = vld [vmem:[#allocation2 + $0x10] sm:$0xff]
        %v3475 = vld [vmem:[#allocation2 + $0x18] sm:$0xff]
        %v3476 = vld [vmem:[#allocation2 + $0x20] sm:$0xff]
        %v3477 = vld [vmem:[#allocation2 + $0x28] sm:$0xff]
        %v3478 = vld [vmem:[#allocation2 + $0x30] sm:$0xff]
        %v3479 = vld [vmem:[#allocation2 + $0x38] sm:$0xff]
        %v3480 = vld [vmem:[#allocation2 + $0x40] sm:$0xff]
        %v3481 = vld [vmem:[#allocation2 + $0x48] sm:$0xff]
        %v3482 = vld [vmem:[#allocation2 + $0x50] sm:$0xff]
        %v3483 = vld [vmem:[#allocation2 + $0x58] sm:$0xff]
        %v3484 = vld [vmem:[#allocation2 + $0x60] sm:$0xff]
        %v3485 = vld [vmem:[#allocation2 + $0x68] sm:$0xff]
        %v3486 = vld [vmem:[#allocation2 + $0x70] sm:$0xff]
        %v3487 = vld [vmem:[#allocation2 + $0x78] sm:$0xff]
        %v3518 = vrot.slane %v3440, 1
        %v3519 = vrot.slane %v3314, 1
        %v3520 = vsel %vm356, %v3518, %v3519
        %v3521 = vrot.slane %v3456, 1
        %v3522 = vsel %vm356, %v3519, %v3521
        %v3523 = vrot.slane %v3441, 1
        %v3524 = vrot.slane %v3317, 1
        %v3525 = vsel %vm356, %v3523, %v3524
        %v3526 = vrot.slane %v3457, 1
        %v3527 = vsel %vm356, %v3524, %v3526
        %v3528 = vrot.slane %v3442, 1
        %v3529 = vrot.slane %v3320, 1
        %v3530 = vsel %vm356, %v3528, %v3529
        %v3531 = vrot.slane %v3458, 1
        %v3532 = vsel %vm356, %v3529, %v3531
        %v3533 = vrot.slane %v3443, 1
        %v3534 = vrot.slane %v3323, 1
        %v3535 = vsel %vm356, %v3533, %v3534
        %v3536 = vrot.slane %v3459, 1
        %v3537 = vsel %vm356, %v3534, %v3536
        %v3538 = vrot.slane %v3444, 1
        %v3539 = vrot.slane %v3326, 1
        %v3540 = vsel %vm356, %v3538, %v3539
        %v3541 = vrot.slane %v3460, 1
        %v3542 = vsel %vm356, %v3539, %v3541
        %v3543 = vrot.slane %v3445, 1
        %v3544 = vrot.slane %v3329, 1
        %v3545 = vsel %vm356, %v3543, %v3544
        %v3546 = vrot.slane %v3461, 1
        %v3547 = vsel %vm356, %v3544, %v3546
        %v3548 = vrot.slane %v3446, 1
        %v3549 = vrot.slane %v3332, 1
        %v3550 = vsel %vm356, %v3548, %v3549
        %v3551 = vrot.slane %v3462, 1
        %v3552 = vsel %vm356, %v3549, %v3551
        %v3553 = vrot.slane %v3447, 1
        %v3554 = vrot.slane %v3335, 1
        %v3555 = vsel %vm356, %v3553, %v3554
        %v3556 = vrot.slane %v3463, 1
        %v3557 = vsel %vm356, %v3554, %v3556
        %v3558 = vrot.slane %v3448, 1
        %v3559 = vrot.slane %v3338, 1
        %v3560 = vsel %vm356, %v3558, %v3559
        %v3561 = vrot.slane %v3464, 1
        %v3562 = vsel %vm356, %v3559, %v3561
        %v3563 = vrot.slane %v3449, 1
        %v3564 = vrot.slane %v3341, 1
        %v3565 = vsel %vm356, %v3563, %v3564
        %v3566 = vrot.slane %v3465, 1
        %v3567 = vsel %vm356, %v3564, %v3566
        %v3568 = vrot.slane %v3450, 1
        %v3569 = vrot.slane %v3344, 1
        %v3570 = vsel %vm356, %v3568, %v3569
        %v3571 = vrot.slane %v3466, 1
        %v3572 = vsel %vm356, %v3569, %v3571
        %v3573 = vrot.slane %v3451, 1
        %v3574 = vrot.slane %v3347, 1
        %v3575 = vsel %vm356, %v3573, %v3574
        %v3576 = vrot.slane %v3467, 1
        %v3577 = vsel %vm356, %v3574, %v3576
        %v3578 = vrot.slane %v3452, 1
        %v3579 = vrot.slane %v3350, 1
        %v3580 = vsel %vm356, %v3578, %v3579
        %v3581 = vrot.slane %v3468, 1
        %v3582 = vsel %vm356, %v3579, %v3581
        %v3583 = vrot.slane %v3453, 1
        %v3584 = vrot.slane %v3353, 1
        %v3585 = vsel %vm356, %v3583, %v3584
        %v3586 = vrot.slane %v3469, 1
        %v3587 = vsel %vm356, %v3584, %v3586
        %v3588 = vrot.slane %v3454, 1
        %v3589 = vrot.slane %v3356, 1
        %v3590 = vsel %vm356, %v3588, %v3589
        %v3591 = vrot.slane %v3470, 1
        %v3592 = vsel %vm356, %v3589, %v3591
        %s3623 = scalar_lea.vmem [#allocation2], 128
        %v3624 = vld [vmem:[%s3623] sm:$0xff]
        %v3625 = vld [vmem:[%s3623 + $0x8] sm:$0xff]
        %v3626 = vld [vmem:[%s3623 + $0x10] sm:$0xff]
        %v3627 = vld [vmem:[%s3623 + $0x18] sm:$0xff]
        %v3628 = vld [vmem:[%s3623 + $0x20] sm:$0xff]
        %v3629 = vld [vmem:[%s3623 + $0x28] sm:$0xff]
        %v3630 = vld [vmem:[%s3623 + $0x30] sm:$0xff]
        %v3631 = vld [vmem:[%s3623 + $0x38] sm:$0xff]
        %v3632 = vld [vmem:[%s3623 + $0x40] sm:$0xff]
        %v3633 = vld [vmem:[%s3623 + $0x48] sm:$0xff]
        %v3634 = vld [vmem:[%s3623 + $0x50] sm:$0xff]
        %v3635 = vld [vmem:[%s3623 + $0x58] sm:$0xff]
        %v3636 = vld [vmem:[%s3623 + $0x60] sm:$0xff]
        %v3637 = vld [vmem:[%s3623 + $0x68] sm:$0xff]
        %v3638 = vld [vmem:[%s3623 + $0x70] sm:$0xff]
        %v3639 = vld [vmem:[%s3623 + $0x78] sm:$0xff]
        %3640 = vmatprep.subr.mxu0 0.0
        %3641 = vmatpush1.msra.mxu0 %v3624
        %3642 = vmatprep.subr.mxu0 0.0
        %3643 = vmatpush1.msra.mxu0 %v3625
        %3644 = vmatprep.subr.mxu0 0.0
        %3645 = vmatpush1.msra.mxu0 %v3626
        %3646 = vmatprep.subr.mxu0 0.0
        %3647 = vmatpush1.msra.mxu0 %v3627
        %3648 = vmatprep.subr.mxu0 0.0
        %3649 = vmatpush1.msra.mxu0 %v3628
        %3650 = vmatprep.subr.mxu0 0.0
        %3651 = vmatpush1.msra.mxu0 %v3629
        %3652 = vmatprep.subr.mxu0 0.0
        %3653 = vmatpush1.msra.mxu0 %v3630
        %3654 = vmatprep.subr.mxu0 0.0
        %3655 = vmatpush1.msra.mxu0 %v3631
        %3656 = vmatprep.subr.mxu0 0.0
        %3657 = vmatpush1.msra.mxu0 %v3632
        %3658 = vmatprep.subr.mxu0 0.0
        %3659 = vmatpush1.msra.mxu0 %v3633
        %3660 = vmatprep.subr.mxu0 0.0
        %3661 = vmatpush1.msra.mxu0 %v3634
        %3662 = vmatprep.subr.mxu0 0.0
        %3663 = vmatpush1.msra.mxu0 %v3635
        %3664 = vmatprep.subr.mxu0 0.0
        %3665 = vmatpush1.msra.mxu0 %v3636
        %3666 = vmatprep.subr.mxu0 0.0
        %3667 = vmatpush1.msra.mxu0 %v3637
        %3668 = vmatprep.subr.mxu0 0.0
        %3669 = vmatpush1.msra.mxu0 %v3638
        %3670 = vmatprep.subr.mxu0 0.0
        %3671 = vmatpush1.msra.mxu0 %v3639
        %3672 = vmatprep.subr.mxu0 0.0
        %3673 = vmatpush1.msra.mxu0 0.0
        %3674 = vmatprep.subr.mxu0 0.0
        %3675 = vmatpush1.msra.mxu0 0.0
        %3676 = vmatprep.subr.mxu0 0.0
        %3677 = vmatpush1.msra.mxu0 0.0
        %3678 = vmatprep.subr.mxu0 0.0
        %3679 = vmatpush1.msra.mxu0 0.0
        %3680 = vmatprep.subr.mxu0 0.0
        %3681 = vmatpush1.msra.mxu0 0.0
        %3682 = vmatprep.subr.mxu0 0.0
        %3683 = vmatpush1.msra.mxu0 0.0
        %3684 = vmatprep.subr.mxu0 0.0
        %3685 = vmatpush1.msra.mxu0 0.0
        %3686 = vmatprep.subr.mxu0 0.0
        %3687 = vmatpush1.msra.mxu0 0.0
        %3688 = vmatprep.subr.mxu0 0.0
        %3689 = vmatpush1.msra.mxu0 0.0
        %3690 = vmatprep.subr.mxu0 0.0
        %3691 = vmatpush1.msra.mxu0 0.0
        %3692 = vmatprep.subr.mxu0 0.0
        %3693 = vmatpush1.msra.mxu0 0.0
        %3694 = vmatprep.subr.mxu0 0.0
        %3695 = vmatpush1.msra.mxu0 0.0
        %3696 = vmatprep.subr.mxu0 0.0
        %3697 = vmatpush1.msra.mxu0 0.0
        %3698 = vmatprep.subr.mxu0 0.0
        %3699 = vmatpush1.msra.mxu0 0.0
        %3700 = vmatprep.subr.mxu0 0.0
        %3701 = vmatpush1.msra.mxu0 0.0
        %3702 = vmatprep.subr.mxu0 0.0
        %3703 = vmatpush1.msra.mxu0 0.0
        %3704 = vmatprep.mubr.f32.mxu0 0.0
        %3705 = vmatmul.mubr.f32.gmra.mrb[0].mxu0 %v3520
        %v3706 = vpop.f32.mrb[0].mxu0
        %v3707 = vadd.f32 0.0, %v3706
        %v3708 = vpop.f32.mrb[0].mxu0
        %3709 = vmatprep.mubr.f32.mxu0 0.0
        %3710 = vmatmul.mubr.f32.gmra.mrb[0].mxu0 %v3522
        %v3711 = vpop.f32.mrb[0].mxu0
        %v3712 = vadd.f32 0.0, %v3711
        %v3713 = vpop.f32.mrb[0].mxu0
        %3714 = vmatprep.mubr.f32.mxu0 0.0
        %3715 = vmatmul.mubr.f32.gmra.mrb[0].mxu0 %v3525
        %v3716 = vpop.f32.mrb[0].mxu0
        %v3717 = vadd.f32 0.0, %v3716
        %v3718 = vpop.f32.mrb[0].mxu0
        %3719 = vmatprep.mubr.f32.mxu0 0.0
        %3720 = vmatmul.mubr.f32.gmra.mrb[0].mxu0 %v3527
        %v3721 = vpop.f32.mrb[0].mxu0
        %v3722 = vadd.f32 0.0, %v3721
        %v3723 = vpop.f32.mrb[0].mxu0
        %3724 = vmatprep.mubr.f32.mxu0 0.0
        %3725 = vmatmul.mubr.f32.gmra.mrb[0].mxu0 %v3520
        %v3726 = vpop.f32.mrb[0].mxu0
        %v3727 = vadd.f32 0.0, %v3726
        %v3728 = vpop.f32.mrb[0].mxu0
        %3729 = vmatprep.mubr.f32.mxu0 0.0
        %3730 = vmatmul.mubr.f32.gmra.mrb[0].mxu0 %v3522
        %v3731 = vpop.f32.mrb[0].mxu0
        %v3732 = vadd.f32 0.0, %v3731
        %v3733 = vpop.f32.mrb[0].mxu0
        %3734 = vmatprep.mubr.f32.mxu0 0.0
        %3735 = vmatmul.mubr.f32.gmra.mrb[0].mxu0 %v3530
        %v3736 = vpop.f32.mrb[0].mxu0
        %v3737 = vadd.f32 0.0, %v3736
        %v3738 = vpop.f32.mrb[0].mxu0
        %3739 = vmatprep.mubr.f32.mxu0 0.0
        %3740 = vmatmul.mubr.f32.gmra.mrb[0].mxu0 %v3532
        %v3741 = vpop.f32.mrb[0].mxu0
        %v3742 = vadd.f32 0.0, %v3741
        %v3743 = vpop.f32.mrb[0].mxu0
        %3744 = vmatprep.mubr.f32.mxu0 0.0
        %3745 = vmatmul.mubr.f32.gmra.mrb[0].mxu0 %v3535
        %v3746 = vpop.f32.mrb[0].mxu0
        %v3747 = vadd.f32 0.0, %v3746
        %v3748 = vpop.f32.mrb[0].mxu0
        %3749 = vmatprep.mubr.f32.mxu0 0.0
        %3750 = vmatmul.mubr.f32.gmra.mrb[0].mxu0 %v3537
        %v3751 = vpop.f32.mrb[0].mxu0
        %v3752 = vadd.f32 0.0, %v3751
        %v3753 = vpop.f32.mrb[0].mxu0
        %3754 = vmatprep.mubr.f32.mxu0 0.0
        %3755 = vmatmul.mubr.f32.gmra.mrb[0].mxu0 %v3540
        %v3756 = vpop.f32.mrb[0].mxu0
        %v3757 = vadd.f32 0.0, %v3756
        %v3758 = vpop.f32.mrb[0].mxu0
        %3759 = vmatprep.mubr.f32.mxu0 0.0
        %3760 = vmatmul.mubr.f32.gmra.mrb[0].mxu0 %v3542
        %v3761 = vpop.f32.mrb[0].mxu0
        %v3762 = vadd.f32 0.0, %v3761
        %v3763 = vpop.f32.mrb[0].mxu0
        %3764 = vmatprep.mubr.f32.mxu0 0.0
        %3765 = vmatmul.mubr.f32.gmra.mrb[0].mxu0 %v3545
        %v3766 = vpop.f32.mrb[0].mxu0
        %v3767 = vadd.f32 0.0, %v3766
        %v3768 = vpop.f32.mrb[0].mxu0
        %3769 = vmatprep.mubr.f32.mxu0 0.0
        %3770 = vmatmul.mubr.f32.gmra.mrb[0].mxu0 %v3547
        %v3771 = vpop.f32.mrb[0].mxu0
        %v3772 = vadd.f32 0.0, %v3771
        %v3773 = vpop.f32.mrb[0].mxu0
        %3774 = vmatprep.mubr.f32.mxu0 0.0
        %3775 = vmatmul.mubr.f32.gmra.mrb[0].mxu0 %v3550
        %v3776 = vpop.f32.mrb[0].mxu0
        %v3777 = vadd.f32 0.0, %v3776
        %v3778 = vpop.f32.mrb[0].mxu0
        %3779 = vmatprep.mubr.f32.mxu0 0.0
        %3780 = vmatmul.mubr.f32.gmra.mrb[0].mxu0 %v3552
        %v3781 = vpop.f32.mrb[0].mxu0
        %v3782 = vadd.f32 0.0, %v3781
        %v3783 = vpop.f32.mrb[0].mxu0
        %3784 = vmatprep.mubr.f32.mxu0 0.0
        %3785 = vmatmul.mubr.f32.gmra.mrb[0].mxu0 %v3555
        %v3786 = vpop.f32.mrb[0].mxu0
        %v3787 = vadd.f32 0.0, %v3786
        %v3788 = vpop.f32.mrb[0].mxu0
        %3789 = vmatprep.mubr.f32.mxu0 0.0
        %3790 = vmatmul.mubr.f32.gmra.mrb[0].mxu0 %v3557
        %v3791 = vpop.f32.mrb[0].mxu0
        %v3792 = vadd.f32 0.0, %v3791
        %v3793 = vpop.f32.mrb[0].mxu0
        %3794 = vmatprep.mubr.f32.mxu0 0.0
        %3795 = vmatmul.mubr.f32.gmra.mrb[0].mxu0 %v3560
        %v3796 = vpop.f32.mrb[0].mxu0
        %v3797 = vadd.f32 0.0, %v3796
        %v3798 = vpop.f32.mrb[0].mxu0
        %3799 = vmatprep.mubr.f32.mxu0 0.0
        %3800 = vmatmul.mubr.f32.gmra.mrb[0].mxu0 %v3562
        %v3801 = vpop.f32.mrb[0].mxu0
        %v3802 = vadd.f32 0.0, %v3801
        %v3803 = vpop.f32.mrb[0].mxu0
        %3804 = vmatprep.mubr.f32.mxu0 0.0
        %3805 = vmatmul.mubr.f32.gmra.mrb[0].mxu0 %v3565
        %v3806 = vpop.f32.mrb[0].mxu0
        %v3807 = vadd.f32 0.0, %v3806
        %v3808 = vpop.f32.mrb[0].mxu0
        %3809 = vmatprep.mubr.f32.mxu0 0.0
        %3810 = vmatmul.mubr.f32.gmra.mrb[0].mxu0 %v3567
        %v3811 = vpop.f32.mrb[0].mxu0
        %v3812 = vadd.f32 0.0, %v3811
        %v3813 = vpop.f32.mrb[0].mxu0
        %3814 = vmatprep.mubr.f32.mxu0 0.0
        %3815 = vmatmul.mubr.f32.gmra.mrb[0].mxu0 %v3570
        %v3816 = vpop.f32.mrb[0].mxu0
        %v3817 = vadd.f32 0.0, %v3816
        %v3818 = vpop.f32.mrb[0].mxu0
        %3819 = vmatprep.mubr.f32.mxu0 0.0
        %3820 = vmatmul.mubr.f32.gmra.mrb[0].mxu0 %v3572
        %v3821 = vpop.f32.mrb[0].mxu0
        %v3822 = vadd.f32 0.0, %v3821
        %v3823 = vpop.f32.mrb[0].mxu0
        %3824 = vmatprep.mubr.f32.mxu0 0.0
        %3825 = vmatmul.mubr.f32.gmra.mrb[0].mxu0 %v3575
        %v3826 = vpop.f32.mrb[0].mxu0
        %v3827 = vadd.f32 0.0, %v3826
        %v3828 = vpop.f32.mrb[0].mxu0
        %3829 = vmatprep.mubr.f32.mxu0 0.0
        %3830 = vmatmul.mubr.f32.gmra.mrb[0].mxu0 %v3577
        %v3831 = vpop.f32.mrb[0].mxu0
        %v3832 = vadd.f32 0.0, %v3831
        %v3833 = vpop.f32.mrb[0].mxu0
        %3834 = vmatprep.mubr.f32.mxu0 0.0
        %3835 = vmatmul.mubr.f32.gmra.mrb[0].mxu0 %v3580
        %v3836 = vpop.f32.mrb[0].mxu0
        %v3837 = vadd.f32 0.0, %v3836
        %v3838 = vpop.f32.mrb[0].mxu0
        %3839 = vmatprep.mubr.f32.mxu0 0.0
        %3840 = vmatmul.mubr.f32.gmra.mrb[0].mxu0 %v3582
        %v3841 = vpop.f32.mrb[0].mxu0
        %v3842 = vadd.f32 0.0, %v3841
        %v3843 = vpop.f32.mrb[0].mxu0
        %3844 = vmatprep.mubr.f32.mxu0 0.0
        %3845 = vmatmul.mubr.f32.gmra.mrb[0].mxu0 %v3585
        %v3846 = vpop.f32.mrb[0].mxu0
        %v3847 = vadd.f32 0.0, %v3846
        %v3848 = vpop.f32.mrb[0].mxu0
        %3849 = vmatprep.mubr.f32.mxu0 0.0
        %3850 = vmatmul.mubr.f32.gmra.mrb[0].mxu0 %v3587
        %v3851 = vpop.f32.mrb[0].mxu0
        %v3852 = vadd.f32 0.0, %v3851
        %v3853 = vpop.f32.mrb[0].mxu0
        %3854 = vmatprep.mubr.f32.mxu0 0.0
        %3855 = vmatmul.mubr.f32.gmra.mrb[0].mxu0 %v3590
        %v3856 = vpop.f32.mrb[0].mxu0
        %v3857 = vadd.f32 0.0, %v3856
        %v3858 = vpop.f32.mrb[0].mxu0
        %3859 = vmatprep.mubr.f32.mxu0 0.0
        %3860 = vmatmul.mubr.f32.gmra.mrb[0].mxu0 %v3592
        %v3861 = vpop.f32.mrb[0].mxu0
        %v3862 = vadd.f32 0.0, %v3861
        %v3863 = vpop.f32.mrb[0].mxu0
        %3864 = vdwg.mxu0
        %3865 = vmatprep.subr.mxu0 0.0
        %3866 = vmatpush1.msra.mxu0 %v3472
        %3867 = vmatprep.subr.mxu0 0.0
        %3868 = vmatpush1.msra.mxu0 %v3473
        %3869 = vmatprep.subr.mxu0 0.0
        %3870 = vmatpush1.msra.mxu0 %v3474
        %3871 = vmatprep.subr.mxu0 0.0
        %3872 = vmatpush1.msra.mxu0 %v3475
        %3873 = vmatprep.subr.mxu0 0.0
        %3874 = vmatpush1.msra.mxu0 %v3476
        %3875 = vmatprep.subr.mxu0 0.0
        %3876 = vmatpush1.msra.mxu0 %v3477
        %3877 = vmatprep.subr.mxu0 0.0
        %3878 = vmatpush1.msra.mxu0 %v3478
        %3879 = vmatprep.subr.mxu0 0.0
        %3880 = vmatpush1.msra.mxu0 %v3479
        %3881 = vmatprep.subr.mxu0 0.0
        %3882 = vmatpush1.msra.mxu0 %v3480
        %3883 = vmatprep.subr.mxu0 0.0
        %3884 = vmatpush1.msra.mxu0 %v3481
        %3885 = vmatprep.subr.mxu0 0.0
        %3886 = vmatpush1.msra.mxu0 %v3482
        %3887 = vmatprep.subr.mxu0 0.0
        %3888 = vmatpush1.msra.mxu0 %v3483
        %3889 = vmatprep.subr.mxu0 0.0
        %3890 = vmatpush1.msra.mxu0 %v3484
        %3891 = vmatprep.subr.mxu0 0.0
        %3892 = vmatpush1.msra.mxu0 %v3485
        %3893 = vmatprep.subr.mxu0 0.0
        %3894 = vmatpush1.msra.mxu0 %v3486
        %3895 = vmatprep.subr.mxu0 0.0
        %3896 = vmatpush1.msra.mxu0 %v3487
        %3897 = vmatprep.subr.mxu0 0.0
        %3898 = vmatpush1.msra.mxu0 0.0
        %3899 = vmatprep.subr.mxu0 0.0
        %3900 = vmatpush1.msra.mxu0 0.0
        %3901 = vmatprep.subr.mxu0 0.0
        %3902 = vmatpush1.msra.mxu0 0.0
        %3903 = vmatprep.subr.mxu0 0.0
        %3904 = vmatpush1.msra.mxu0 0.0
        %3905 = vmatprep.subr.mxu0 0.0
        %3906 = vmatpush1.msra.mxu0 0.0
        %3907 = vmatprep.subr.mxu0 0.0
        %3908 = vmatpush1.msra.mxu0 0.0
        %3909 = vmatprep.subr.mxu0 0.0
        %3910 = vmatpush1.msra.mxu0 0.0
        %3911 = vmatprep.subr.mxu0 0.0
        %3912 = vmatpush1.msra.mxu0 0.0
        %3913 = vmatprep.subr.mxu0 0.0
        %3914 = vmatpush1.msra.mxu0 0.0
        %3915 = vmatprep.subr.mxu0 0.0
        %3916 = vmatpush1.msra.mxu0 0.0
        %3917 = vmatprep.subr.mxu0 0.0
        %3918 = vmatpush1.msra.mxu0 0.0
        %3919 = vmatprep.subr.mxu0 0.0
        %3920 = vmatpush1.msra.mxu0 0.0
        %3921 = vmatprep.subr.mxu0 0.0
        %3922 = vmatpush1.msra.mxu0 0.0
        %3923 = vmatprep.subr.mxu0 0.0
        %3924 = vmatpush1.msra.mxu0 0.0
        %3925 = vmatprep.subr.mxu0 0.0
        %3926 = vmatpush1.msra.mxu0 0.0
        %3927 = vmatprep.subr.mxu0 0.0
        %3928 = vmatpush1.msra.mxu0 0.0
        %3929 = vmatprep.mubr.f32.mxu0 0.0
        %3930 = vmatmul.mubr.f32.gmra.mrb[0].mxu0 %v3440
        %v3931 = vpop.f32.mrb[0].mxu0
        %v3932 = vadd.f32 %v3707, %v3931
        %v3933 = vpop.f32.mrb[0].mxu0
        %3934 = vmatprep.mubr.f32.mxu0 0.0
        %3935 = vmatmul.mubr.f32.gmra.mrb[0].mxu0 %v3314
        %v3936 = vpop.f32.mrb[0].mxu0
        %v3937 = vadd.f32 %v3712, %v3936
        %v3938 = vpop.f32.mrb[0].mxu0
        %3939 = vmatprep.mubr.f32.mxu0 0.0
        %3940 = vmatmul.mubr.f32.gmra.mrb[0].mxu0 %v3441
        %v3941 = vpop.f32.mrb[0].mxu0
        %v3942 = vadd.f32 %v3717, %v3941
        %v3943 = vpop.f32.mrb[0].mxu0
        %3944 = vmatprep.mubr.f32.mxu0 0.0
        %3945 = vmatmul.mubr.f32.gmra.mrb[0].mxu0 %v3317
        %v3946 = vpop.f32.mrb[0].mxu0
        %v3947 = vadd.f32 %v3722, %v3946
        %v3948 = vpop.f32.mrb[0].mxu0
        %3949 = vmatprep.mubr.f32.mxu0 0.0
        %3950 = vmatmul.mubr.f32.gmra.mrb[0].mxu0 %v3440
        %v3951 = vpop.f32.mrb[0].mxu0
        %v3952 = vadd.f32 %v3727, %v3951
        %v3953 = vpop.f32.mrb[0].mxu0
        %3954 = vmatprep.mubr.f32.mxu0 0.0
        %3955 = vmatmul.mubr.f32.gmra.mrb[0].mxu0 %v3314
        %v3956 = vpop.f32.mrb[0].mxu0
        %v3957 = vadd.f32 %v3732, %v3956
        %v3958 = vpop.f32.mrb[0].mxu0
        %3959 = vmatprep.mubr.f32.mxu0 0.0
        %3960 = vmatmul.mubr.f32.gmra.mrb[0].mxu0 %v3442
        %v3961 = vpop.f32.mrb[0].mxu0
        %v3962 = vadd.f32 %v3737, %v3961
        %v3963 = vpop.f32.mrb[0].mxu0
        %3964 = vmatprep.mubr.f32.mxu0 0.0
        %3965 = vmatmul.mubr.f32.gmra.mrb[0].mxu0 %v3320
        %v3966 = vpop.f32.mrb[0].mxu0
        %v3967 = vadd.f32 %v3742, %v3966
        %v3968 = vpop.f32.mrb[0].mxu0
        %3969 = vmatprep.mubr.f32.mxu0 0.0
        %3970 = vmatmul.mubr.f32.gmra.mrb[0].mxu0 %v3443
        %v3971 = vpop.f32.mrb[0].mxu0
        %v3972 = vadd.f32 %v3747, %v3971
        %v3973 = vpop.f32.mrb[0].mxu0
        %3974 = vmatprep.mubr.f32.mxu0 0.0
        %3975 = vmatmul.mubr.f32.gmra.mrb[0].mxu0 %v3323
        %v3976 = vpop.f32.mrb[0].mxu0
        %v3977 = vadd.f32 %v3752, %v3976
        %v3978 = vpop.f32.mrb[0].mxu0
        %3979 = vmatprep.mubr.f32.mxu0 0.0
        %3980 = vmatmul.mubr.f32.gmra.mrb[0].mxu0 %v3444
        %v3981 = vpop.f32.mrb[0].mxu0
        %v3982 = vadd.f32 %v3757, %v3981
        %v3983 = vpop.f32.mrb[0].mxu0
        %3984 = vmatprep.mubr.f32.mxu0 0.0
        %3985 = vmatmul.mubr.f32.gmra.mrb[0].mxu0 %v3326
        %v3986 = vpop.f32.mrb[0].mxu0
        %v3987 = vadd.f32 %v3762, %v3986
        %v3988 = vpop.f32.mrb[0].mxu0
        %3989 = vmatprep.mubr.f32.mxu0 0.0
        %3990 = vmatmul.mubr.f32.gmra.mrb[0].mxu0 %v3445
        %v3991 = vpop.f32.mrb[0].mxu0
        %v3992 = vadd.f32 %v3767, %v3991
        %v3993 = vpop.f32.mrb[0].mxu0
        %3994 = vmatprep.mubr.f32.mxu0 0.0
        %3995 = vmatmul.mubr.f32.gmra.mrb[0].mxu0 %v3329
        %v3996 = vpop.f32.mrb[0].mxu0
        %v3997 = vadd.f32 %v3772, %v3996
        %v3998 = vpop.f32.mrb[0].mxu0
        %3999 = vmatprep.mubr.f32.mxu0 0.0
        %4000 = vmatmul.mubr.f32.gmra.mrb[0].mxu0 %v3446
        %v4001 = vpop.f32.mrb[0].mxu0
        %v4002 = vadd.f32 %v3777, %v4001
        %v4003 = vpop.f32.mrb[0].mxu0
        %4004 = vmatprep.mubr.f32.mxu0 0.0
        %4005 = vmatmul.mubr.f32.gmra.mrb[0].mxu0 %v3332
        %v4006 = vpop.f32.mrb[0].mxu0
        %v4007 = vadd.f32 %v3782, %v4006
        %v4008 = vpop.f32.mrb[0].mxu0
        %4009 = vmatprep.mubr.f32.mxu0 0.0
        %4010 = vmatmul.mubr.f32.gmra.mrb[0].mxu0 %v3447
        %v4011 = vpop.f32.mrb[0].mxu0
        %v4012 = vadd.f32 %v3787, %v4011
        %v4013 = vpop.f32.mrb[0].mxu0
        %4014 = vmatprep.mubr.f32.mxu0 0.0
        %4015 = vmatmul.mubr.f32.gmra.mrb[0].mxu0 %v3335
        %v4016 = vpop.f32.mrb[0].mxu0
        %v4017 = vadd.f32 %v3792, %v4016
        %v4018 = vpop.f32.mrb[0].mxu0
        %4019 = vmatprep.mubr.f32.mxu0 0.0
        %4020 = vmatmul.mubr.f32.gmra.mrb[0].mxu0 %v3448
        %v4021 = vpop.f32.mrb[0].mxu0
        %v4022 = vadd.f32 %v3797, %v4021
        %v4023 = vpop.f32.mrb[0].mxu0
        %4024 = vmatprep.mubr.f32.mxu0 0.0
        %4025 = vmatmul.mubr.f32.gmra.mrb[0].mxu0 %v3338
        %v4026 = vpop.f32.mrb[0].mxu0
        %v4027 = vadd.f32 %v3802, %v4026
        %v4028 = vpop.f32.mrb[0].mxu0
        %4029 = vmatprep.mubr.f32.mxu0 0.0
        %4030 = vmatmul.mubr.f32.gmra.mrb[0].mxu0 %v3449
        %v4031 = vpop.f32.mrb[0].mxu0
        %v4032 = vadd.f32 %v3807, %v4031
        %v4033 = vpop.f32.mrb[0].mxu0
        %4034 = vmatprep.mubr.f32.mxu0 0.0
        %4035 = vmatmul.mubr.f32.gmra.mrb[0].mxu0 %v3341
        %v4036 = vpop.f32.mrb[0].mxu0
        %v4037 = vadd.f32 %v3812, %v4036
        %v4038 = vpop.f32.mrb[0].mxu0
        %4039 = vmatprep.mubr.f32.mxu0 0.0
        %4040 = vmatmul.mubr.f32.gmra.mrb[0].mxu0 %v3450
        %v4041 = vpop.f32.mrb[0].mxu0
        %v4042 = vadd.f32 %v3817, %v4041
        %v4043 = vpop.f32.mrb[0].mxu0
        %4044 = vmatprep.mubr.f32.mxu0 0.0
        %4045 = vmatmul.mubr.f32.gmra.mrb[0].mxu0 %v3344
        %v4046 = vpop.f32.mrb[0].mxu0
        %v4047 = vadd.f32 %v3822, %v4046
        %v4048 = vpop.f32.mrb[0].mxu0
        %4049 = vmatprep.mubr.f32.mxu0 0.0
        %4050 = vmatmul.mubr.f32.gmra.mrb[0].mxu0 %v3451
        %v4051 = vpop.f32.mrb[0].mxu0
        %v4052 = vadd.f32 %v3827, %v4051
        %v4053 = vpop.f32.mrb[0].mxu0
        %4054 = vmatprep.mubr.f32.mxu0 0.0
        %4055 = vmatmul.mubr.f32.gmra.mrb[0].mxu0 %v3347
        %v4056 = vpop.f32.mrb[0].mxu0
        %v4057 = vadd.f32 %v3832, %v4056
        %v4058 = vpop.f32.mrb[0].mxu0
        %4059 = vmatprep.mubr.f32.mxu0 0.0
        %4060 = vmatmul.mubr.f32.gmra.mrb[0].mxu0 %v3452
        %v4061 = vpop.f32.mrb[0].mxu0
        %v4062 = vadd.f32 %v3837, %v4061
        %v4063 = vpop.f32.mrb[0].mxu0
        %4064 = vmatprep.mubr.f32.mxu0 0.0
        %4065 = vmatmul.mubr.f32.gmra.mrb[0].mxu0 %v3350
        %v4066 = vpop.f32.mrb[0].mxu0
        %v4067 = vadd.f32 %v3842, %v4066
        %v4068 = vpop.f32.mrb[0].mxu0
        %4069 = vmatprep.mubr.f32.mxu0 0.0
        %4070 = vmatmul.mubr.f32.gmra.mrb[0].mxu0 %v3453
        %v4071 = vpop.f32.mrb[0].mxu0
        %v4072 = vadd.f32 %v3847, %v4071
        %v4073 = vpop.f32.mrb[0].mxu0
        %4074 = vmatprep.mubr.f32.mxu0 0.0
        %4075 = vmatmul.mubr.f32.gmra.mrb[0].mxu0 %v3353
        %v4076 = vpop.f32.mrb[0].mxu0
        %v4077 = vadd.f32 %v3852, %v4076
        %v4078 = vpop.f32.mrb[0].mxu0
        %4079 = vmatprep.mubr.f32.mxu0 0.0
        %4080 = vmatmul.mubr.f32.gmra.mrb[0].mxu0 %v3454
        %v4081 = vpop.f32.mrb[0].mxu0
        %v4082 = vadd.f32 %v3857, %v4081
        %v4083 = vpop.f32.mrb[0].mxu0
        %4084 = vmatprep.mubr.f32.mxu0 0.0
        %4085 = vmatmul.mubr.f32.gmra.mrb[0].mxu0 %v3356
        %v4086 = vpop.f32.mrb[0].mxu0
        %v4087 = vadd.f32 %v3862, %v4086
        %v4088 = vpop.f32.mrb[0].mxu0
        %4089 = vdwg.mxu0
        %v4090 = vrot.slane %v3440, 2
        %v4091 = vrot.slane %v3314, 2
        %v4092 = vsel %vm936, %v4090, %v4091
        %v4093 = vrot.slane %v3456, 2
        %v4094 = vsel %vm936, %v4091, %v4093
        %v4095 = vrot.slane %v3441, 2
        %v4096 = vrot.slane %v3317, 2
        %v4097 = vsel %vm936, %v4095, %v4096
        %v4098 = vrot.slane %v3457, 2
        %v4099 = vsel %vm936, %v4096, %v4098
        %v4100 = vrot.slane %v3442, 2
        %v4101 = vrot.slane %v3320, 2
        %v4102 = vsel %vm936, %v4100, %v4101
        %v4103 = vrot.slane %v3458, 2
        %v4104 = vsel %vm936, %v4101, %v4103
        %v4105 = vrot.slane %v3443, 2
        %v4106 = vrot.slane %v3323, 2
        %v4107 = vsel %vm936, %v4105, %v4106
        %v4108 = vrot.slane %v3459, 2
        %v4109 = vsel %vm936, %v4106, %v4108
        %v4110 = vrot.slane %v3444, 2
        %v4111 = vrot.slane %v3326, 2
        %v4112 = vsel %vm936, %v4110, %v4111
        %v4113 = vrot.slane %v3460, 2
        %v4114 = vsel %vm936, %v4111, %v4113
        %v4115 = vrot.slane %v3445, 2
        %v4116 = vrot.slane %v3329, 2
        %v4117 = vsel %vm936, %v4115, %v4116
        %v4118 = vrot.slane %v3461, 2
        %v4119 = vsel %vm936, %v4116, %v4118
        %v4120 = vrot.slane %v3446, 2
        %v4121 = vrot.slane %v3332, 2
        %v4122 = vsel %vm936, %v4120, %v4121
        %v4123 = vrot.slane %v3462, 2
        %v4124 = vsel %vm936, %v4121, %v4123
        %v4125 = vrot.slane %v3447, 2
        %v4126 = vrot.slane %v3335, 2
        %v4127 = vsel %vm936, %v4125, %v4126
        %v4128 = vrot.slane %v3463, 2
        %v4129 = vsel %vm936, %v4126, %v4128
        %v4130 = vrot.slane %v3448, 2
        %v4131 = vrot.slane %v3338, 2
        %v4132 = vsel %vm936, %v4130, %v4131
        %v4133 = vrot.slane %v3464, 2
        %v4134 = vsel %vm936, %v4131, %v4133
        %v4135 = vrot.slane %v3449, 2
        %v4136 = vrot.slane %v3341, 2
        %v4137 = vsel %vm936, %v4135, %v4136
        %v4138 = vrot.slane %v3465, 2
        %v4139 = vsel %vm936, %v4136, %v4138
        %v4140 = vrot.slane %v3450, 2
        %v4141 = vrot.slane %v3344, 2
        %v4142 = vsel %vm936, %v4140, %v4141
        %v4143 = vrot.slane %v3466, 2
        %v4144 = vsel %vm936, %v4141, %v4143
        %v4145 = vrot.slane %v3451, 2
        %v4146 = vrot.slane %v3347, 2
        %v4147 = vsel %vm936, %v4145, %v4146
        %v4148 = vrot.slane %v3467, 2
        %v4149 = vsel %vm936, %v4146, %v4148
        %v4150 = vrot.slane %v3452, 2
        %v4151 = vrot.slane %v3350, 2
        %v4152 = vsel %vm936, %v4150, %v4151
        %v4153 = vrot.slane %v3468, 2
        %v4154 = vsel %vm936, %v4151, %v4153
        %v4155 = vrot.slane %v3453, 2
        %v4156 = vrot.slane %v3353, 2
        %v4157 = vsel %vm936, %v4155, %v4156
        %v4158 = vrot.slane %v3469, 2
        %v4159 = vsel %vm936, %v4156, %v4158
        %v4160 = vrot.slane %v3454, 2
        %v4161 = vrot.slane %v3356, 2
        %v4162 = vsel %vm936, %v4160, %v4161
        %v4163 = vrot.slane %v3470, 2
        %v4164 = vsel %vm936, %v4161, %v4163
        %s4195 = scalar_lea.vmem [#allocation2], 256
        %v4196 = vld [vmem:[%s4195] sm:$0xff]
        %v4197 = vld [vmem:[%s4195 + $0x8] sm:$0xff]
        %v4198 = vld [vmem:[%s4195 + $0x10] sm:$0xff]
        %v4199 = vld [vmem:[%s4195 + $0x18] sm:$0xff]
        %v4200 = vld [vmem:[%s4195 + $0x20] sm:$0xff]
        %v4201 = vld [vmem:[%s4195 + $0x28] sm:$0xff]
        %v4202 = vld [vmem:[%s4195 + $0x30] sm:$0xff]
        %v4203 = vld [vmem:[%s4195 + $0x38] sm:$0xff]
        %v4204 = vld [vmem:[%s4195 + $0x40] sm:$0xff]
        %v4205 = vld [vmem:[%s4195 + $0x48] sm:$0xff]
        %v4206 = vld [vmem:[%s4195 + $0x50] sm:$0xff]
        %v4207 = vld [vmem:[%s4195 + $0x58] sm:$0xff]
        %v4208 = vld [vmem:[%s4195 + $0x60] sm:$0xff]
        %v4209 = vld [vmem:[%s4195 + $0x68] sm:$0xff]
        %v4210 = vld [vmem:[%s4195 + $0x70] sm:$0xff]
        %v4211 = vld [vmem:[%s4195 + $0x78] sm:$0xff]
        %4212 = vmatprep.subr.mxu0 0.0
        %4213 = vmatpush1.msra.mxu0 %v4196
        %4214 = vmatprep.subr.mxu0 0.0
        %4215 = vmatpush1.msra.mxu0 %v4197
        %4216 = vmatprep.subr.mxu0 0.0
        %4217 = vmatpush1.msra.mxu0 %v4198
        %4218 = vmatprep.subr.mxu0 0.0
        %4219 = vmatpush1.msra.mxu0 %v4199
        %4220 = vmatprep.subr.mxu0 0.0
        %4221 = vmatpush1.msra.mxu0 %v4200
        %4222 = vmatprep.subr.mxu0 0.0
        %4223 = vmatpush1.msra.mxu0 %v4201
        %4224 = vmatprep.subr.mxu0 0.0
        %4225 = vmatpush1.msra.mxu0 %v4202
        %4226 = vmatprep.subr.mxu0 0.0
        %4227 = vmatpush1.msra.mxu0 %v4203
        %4228 = vmatprep.subr.mxu0 0.0
        %4229 = vmatpush1.msra.mxu0 %v4204
        %4230 = vmatprep.subr.mxu0 0.0
        %4231 = vmatpush1.msra.mxu0 %v4205
        %4232 = vmatprep.subr.mxu0 0.0
        %4233 = vmatpush1.msra.mxu0 %v4206
        %4234 = vmatprep.subr.mxu0 0.0
        %4235 = vmatpush1.msra.mxu0 %v4207
        %4236 = vmatprep.subr.mxu0 0.0
        %4237 = vmatpush1.msra.mxu0 %v4208
        %4238 = vmatprep.subr.mxu0 0.0
        %4239 = vmatpush1.msra.mxu0 %v4209
        %4240 = vmatprep.subr.mxu0 0.0
        %4241 = vmatpush1.msra.mxu0 %v4210
        %4242 = vmatprep.subr.mxu0 0.0
        %4243 = vmatpush1.msra.mxu0 %v4211
        %4244 = vmatprep.subr.mxu0 0.0
        %4245 = vmatpush1.msra.mxu0 0.0
        %4246 = vmatprep.subr.mxu0 0.0
        %4247 = vmatpush1.msra.mxu0 0.0
        %4248 = vmatprep.subr.mxu0 0.0
        %4249 = vmatpush1.msra.mxu0 0.0
        %4250 = vmatprep.subr.mxu0 0.0
        %4251 = vmatpush1.msra.mxu0 0.0
        %4252 = vmatprep.subr.mxu0 0.0
        %4253 = vmatpush1.msra.mxu0 0.0
        %4254 = vmatprep.subr.mxu0 0.0
        %4255 = vmatpush1.msra.mxu0 0.0
        %4256 = vmatprep.subr.mxu0 0.0
        %4257 = vmatpush1.msra.mxu0 0.0
        %4258 = vmatprep.subr.mxu0 0.0
        %4259 = vmatpush1.msra.mxu0 0.0
        %4260 = vmatprep.subr.mxu0 0.0
        %4261 = vmatpush1.msra.mxu0 0.0
        %4262 = vmatprep.subr.mxu0 0.0
        %4263 = vmatpush1.msra.mxu0 0.0
        %4264 = vmatprep.subr.mxu0 0.0
        %4265 = vmatpush1.msra.mxu0 0.0
        %4266 = vmatprep.subr.mxu0 0.0
        %4267 = vmatpush1.msra.mxu0 0.0
        %4268 = vmatprep.subr.mxu0 0.0
        %4269 = vmatpush1.msra.mxu0 0.0
        %4270 = vmatprep.subr.mxu0 0.0
        %4271 = vmatpush1.msra.mxu0 0.0
        %4272 = vmatprep.subr.mxu0 0.0
        %4273 = vmatpush1.msra.mxu0 0.0
        %4274 = vmatprep.subr.mxu0 0.0
        %4275 = vmatpush1.msra.mxu0 0.0
        %4276 = vmatprep.mubr.f32.mxu0 0.0
        %4277 = vmatmul.mubr.f32.gmra.mrb[0].mxu0 %v4092
        %v4278 = vpop.f32.mrb[0].mxu0
        %v4279 = vadd.f32 0.0, %v4278
        %v4280 = vpop.f32.mrb[0].mxu0
        %4281 = vmatprep.mubr.f32.mxu0 0.0
        %4282 = vmatmul.mubr.f32.gmra.mrb[0].mxu0 %v4094
        %v4283 = vpop.f32.mrb[0].mxu0
        %v4284 = vadd.f32 0.0, %v4283
        %v4285 = vpop.f32.mrb[0].mxu0
        %4286 = vmatprep.mubr.f32.mxu0 0.0
        %4287 = vmatmul.mubr.f32.gmra.mrb[0].mxu0 %v4097
        %v4288 = vpop.f32.mrb[0].mxu0
        %v4289 = vadd.f32 0.0, %v4288
        %v4290 = vpop.f32.mrb[0].mxu0
        %4291 = vmatprep.mubr.f32.mxu0 0.0
        %4292 = vmatmul.mubr.f32.gmra.mrb[0].mxu0 %v4099
        %v4293 = vpop.f32.mrb[0].mxu0
        %v4294 = vadd.f32 0.0, %v4293
        %v4295 = vpop.f32.mrb[0].mxu0
        %4296 = vmatprep.mubr.f32.mxu0 0.0
        %4297 = vmatmul.mubr.f32.gmra.mrb[0].mxu0 %v4092
        %v4298 = vpop.f32.mrb[0].mxu0
        %v4299 = vadd.f32 0.0, %v4298
        %v4300 = vpop.f32.mrb[0].mxu0
        %4301 = vmatprep.mubr.f32.mxu0 0.0
        %4302 = vmatmul.mubr.f32.gmra.mrb[0].mxu0 %v4094
        %v4303 = vpop.f32.mrb[0].mxu0
        %v4304 = vadd.f32 0.0, %v4303
        %v4305 = vpop.f32.mrb[0].mxu0
        %4306 = vmatprep.mubr.f32.mxu0 0.0
        %4307 = vmatmul.mubr.f32.gmra.mrb[0].mxu0 %v4102
        %v4308 = vpop.f32.mrb[0].mxu0
        %v4309 = vadd.f32 0.0, %v4308
        %v4310 = vpop.f32.mrb[0].mxu0
        %4311 = vmatprep.mubr.f32.mxu0 0.0
        %4312 = vmatmul.mubr.f32.gmra.mrb[0].mxu0 %v4104
        %v4313 = vpop.f32.mrb[0].mxu0
        %v4314 = vadd.f32 0.0, %v4313
        %v4315 = vpop.f32.mrb[0].mxu0
        %4316 = vmatprep.mubr.f32.mxu0 0.0
        %4317 = vmatmul.mubr.f32.gmra.mrb[0].mxu0 %v4107
        %v4318 = vpop.f32.mrb[0].mxu0
        %v4319 = vadd.f32 0.0, %v4318
        %v4320 = vpop.f32.mrb[0].mxu0
        %4321 = vmatprep.mubr.f32.mxu0 0.0
        %4322 = vmatmul.mubr.f32.gmra.mrb[0].mxu0 %v4109
        %v4323 = vpop.f32.mrb[0].mxu0
        %v4324 = vadd.f32 0.0, %v4323
        %v4325 = vpop.f32.mrb[0].mxu0
        %4326 = vmatprep.mubr.f32.mxu0 0.0
        %4327 = vmatmul.mubr.f32.gmra.mrb[0].mxu0 %v4112
        %v4328 = vpop.f32.mrb[0].mxu0
        %v4329 = vadd.f32 0.0, %v4328
        %v4330 = vpop.f32.mrb[0].mxu0
        %4331 = vmatprep.mubr.f32.mxu0 0.0
        %4332 = vmatmul.mubr.f32.gmra.mrb[0].mxu0 %v4114
        %v4333 = vpop.f32.mrb[0].mxu0
        %v4334 = vadd.f32 0.0, %v4333
        %v4335 = vpop.f32.mrb[0].mxu0
        %4336 = vmatprep.mubr.f32.mxu0 0.0
        %4337 = vmatmul.mubr.f32.gmra.mrb[0].mxu0 %v4117
        %v4338 = vpop.f32.mrb[0].mxu0
        %v4339 = vadd.f32 0.0, %v4338
        %v4340 = vpop.f32.mrb[0].mxu0
        %4341 = vmatprep.mubr.f32.mxu0 0.0
        %4342 = vmatmul.mubr.f32.gmra.mrb[0].mxu0 %v4119
        %v4343 = vpop.f32.mrb[0].mxu0
        %v4344 = vadd.f32 0.0, %v4343
        %v4345 = vpop.f32.mrb[0].mxu0
        %4346 = vmatprep.mubr.f32.mxu0 0.0
        %4347 = vmatmul.mubr.f32.gmra.mrb[0].mxu0 %v4122
        %v4348 = vpop.f32.mrb[0].mxu0
        %v4349 = vadd.f32 0.0, %v4348
        %v4350 = vpop.f32.mrb[0].mxu0
        %4351 = vmatprep.mubr.f32.mxu0 0.0
        %4352 = vmatmul.mubr.f32.gmra.mrb[0].mxu0 %v4124
        %v4353 = vpop.f32.mrb[0].mxu0
        %v4354 = vadd.f32 0.0, %v4353
        %v4355 = vpop.f32.mrb[0].mxu0
        %4356 = vmatprep.mubr.f32.mxu0 0.0
        %4357 = vmatmul.mubr.f32.gmra.mrb[0].mxu0 %v4127
        %v4358 = vpop.f32.mrb[0].mxu0
        %v4359 = vadd.f32 0.0, %v4358
        %v4360 = vpop.f32.mrb[0].mxu0
        %4361 = vmatprep.mubr.f32.mxu0 0.0
        %4362 = vmatmul.mubr.f32.gmra.mrb[0].mxu0 %v4129
        %v4363 = vpop.f32.mrb[0].mxu0
        %v4364 = vadd.f32 0.0, %v4363
        %v4365 = vpop.f32.mrb[0].mxu0
        %4366 = vmatprep.mubr.f32.mxu0 0.0
        %4367 = vmatmul.mubr.f32.gmra.mrb[0].mxu0 %v4132
        %v4368 = vpop.f32.mrb[0].mxu0
        %v4369 = vadd.f32 0.0, %v4368
        %v4370 = vpop.f32.mrb[0].mxu0
        %4371 = vmatprep.mubr.f32.mxu0 0.0
        %4372 = vmatmul.mubr.f32.gmra.mrb[0].mxu0 %v4134
        %v4373 = vpop.f32.mrb[0].mxu0
        %v4374 = vadd.f32 0.0, %v4373
        %v4375 = vpop.f32.mrb[0].mxu0
        %4376 = vmatprep.mubr.f32.mxu0 0.0
        %4377 = vmatmul.mubr.f32.gmra.mrb[0].mxu0 %v4137
        %v4378 = vpop.f32.mrb[0].mxu0
        %v4379 = vadd.f32 0.0, %v4378
        %v4380 = vpop.f32.mrb[0].mxu0
        %4381 = vmatprep.mubr.f32.mxu0 0.0
        %4382 = vmatmul.mubr.f32.gmra.mrb[0].mxu0 %v4139
        %v4383 = vpop.f32.mrb[0].mxu0
        %v4384 = vadd.f32 0.0, %v4383
        %v4385 = vpop.f32.mrb[0].mxu0
        %4386 = vmatprep.mubr.f32.mxu0 0.0
        %4387 = vmatmul.mubr.f32.gmra.mrb[0].mxu0 %v4142
        %v4388 = vpop.f32.mrb[0].mxu0
        %v4389 = vadd.f32 0.0, %v4388
        %v4390 = vpop.f32.mrb[0].mxu0
        %4391 = vmatprep.mubr.f32.mxu0 0.0
        %4392 = vmatmul.mubr.f32.gmra.mrb[0].mxu0 %v4144
        %v4393 = vpop.f32.mrb[0].mxu0
        %v4394 = vadd.f32 0.0, %v4393
        %v4395 = vpop.f32.mrb[0].mxu0
        %4396 = vmatprep.mubr.f32.mxu0 0.0
        %4397 = vmatmul.mubr.f32.gmra.mrb[0].mxu0 %v4147
        %v4398 = vpop.f32.mrb[0].mxu0
        %v4399 = vadd.f32 0.0, %v4398
        %v4400 = vpop.f32.mrb[0].mxu0
        %4401 = vmatprep.mubr.f32.mxu0 0.0
        %4402 = vmatmul.mubr.f32.gmra.mrb[0].mxu0 %v4149
        %v4403 = vpop.f32.mrb[0].mxu0
        %v4404 = vadd.f32 0.0, %v4403
        %v4405 = vpop.f32.mrb[0].mxu0
        %4406 = vmatprep.mubr.f32.mxu0 0.0
        %4407 = vmatmul.mubr.f32.gmra.mrb[0].mxu0 %v4152
        %v4408 = vpop.f32.mrb[0].mxu0
        %v4409 = vadd.f32 0.0, %v4408
        %v4410 = vpop.f32.mrb[0].mxu0
        %4411 = vmatprep.mubr.f32.mxu0 0.0
        %4412 = vmatmul.mubr.f32.gmra.mrb[0].mxu0 %v4154
        %v4413 = vpop.f32.mrb[0].mxu0
        %v4414 = vadd.f32 0.0, %v4413
        %v4415 = vpop.f32.mrb[0].mxu0
        %4416 = vmatprep.mubr.f32.mxu0 0.0
        %4417 = vmatmul.mubr.f32.gmra.mrb[0].mxu0 %v4157
        %v4418 = vpop.f32.mrb[0].mxu0
        %v4419 = vadd.f32 0.0, %v4418
        %v4420 = vpop.f32.mrb[0].mxu0
        %4421 = vmatprep.mubr.f32.mxu0 0.0
        %4422 = vmatmul.mubr.f32.gmra.mrb[0].mxu0 %v4159
        %v4423 = vpop.f32.mrb[0].mxu0
        %v4424 = vadd.f32 0.0, %v4423
        %v4425 = vpop.f32.mrb[0].mxu0
        %4426 = vmatprep.mubr.f32.mxu0 0.0
        %4427 = vmatmul.mubr.f32.gmra.mrb[0].mxu0 %v4162
        %v4428 = vpop.f32.mrb[0].mxu0
        %v4429 = vadd.f32 0.0, %v4428
        %v4430 = vpop.f32.mrb[0].mxu0
        %4431 = vmatprep.mubr.f32.mxu0 0.0
        %4432 = vmatmul.mubr.f32.gmra.mrb[0].mxu0 %v4164
        %v4433 = vpop.f32.mrb[0].mxu0
        %v4434 = vadd.f32 0.0, %v4433
        %v4435 = vpop.f32.mrb[0].mxu0
        %4436 = vdwg.mxu0
        %v4437 = vadd.f32 %v3932, %v4279
        %v4438 = vadd.f32 %v3937, %v4284
        %v4439 = vadd.f32 %v3942, %v4289
        %v4440 = vadd.f32 %v3947, %v4294
        %v4441 = vadd.f32 %v3952, %v4299
        %v4442 = vadd.f32 %v3957, %v4304
        %v4443 = vadd.f32 %v3962, %v4309
        %v4444 = vadd.f32 %v3967, %v4314
        %v4445 = vadd.f32 %v3972, %v4319
        %v4446 = vadd.f32 %v3977, %v4324
        %v4447 = vadd.f32 %v3982, %v4329
        %v4448 = vadd.f32 %v3987, %v4334
        %v4449 = vadd.f32 %v3992, %v4339
        %v4450 = vadd.f32 %v3997, %v4344
        %v4451 = vadd.f32 %v4002, %v4349
        %v4452 = vadd.f32 %v4007, %v4354
        %v4453 = vadd.f32 %v4012, %v4359
        %v4454 = vadd.f32 %v4017, %v4364
        %v4455 = vadd.f32 %v4022, %v4369
        %v4456 = vadd.f32 %v4027, %v4374
        %v4457 = vadd.f32 %v4032, %v4379
        %v4458 = vadd.f32 %v4037, %v4384
        %v4459 = vadd.f32 %v4042, %v4389
        %v4460 = vadd.f32 %v4047, %v4394
        %v4461 = vadd.f32 %v4052, %v4399
        %v4462 = vadd.f32 %v4057, %v4404
        %v4463 = vadd.f32 %v4062, %v4409
        %v4464 = vadd.f32 %v4067, %v4414
        %v4465 = vadd.f32 %v4072, %v4419
        %v4466 = vadd.f32 %v4077, %v4424
        %v4467 = vadd.f32 %v4082, %v4429
        %v4468 = vadd.f32 %v4087, %v4434
        %s4469 = scalar_lea.vmem [#allocation2], 384
        %v4470 = vld [vmem:[%s4469] sm:$0xff]
        %v4471 = vld [vmem:[%s4469 + $0x8] sm:$0xff]
        %v4472 = vld [vmem:[%s4469 + $0x10] sm:$0xff]
        %v4473 = vld [vmem:[%s4469 + $0x18] sm:$0xff]
        %v4474 = vld [vmem:[%s4469 + $0x20] sm:$0xff]
        %v4475 = vld [vmem:[%s4469 + $0x28] sm:$0xff]
        %v4476 = vld [vmem:[%s4469 + $0x30] sm:$0xff]
        %v4477 = vld [vmem:[%s4469 + $0x38] sm:$0xff]
        %v4478 = vld [vmem:[%s4469 + $0x40] sm:$0xff]
        %v4479 = vld [vmem:[%s4469 + $0x48] sm:$0xff]
        %v4480 = vld [vmem:[%s4469 + $0x50] sm:$0xff]
        %v4481 = vld [vmem:[%s4469 + $0x58] sm:$0xff]
        %v4482 = vld [vmem:[%s4469 + $0x60] sm:$0xff]
        %v4483 = vld [vmem:[%s4469 + $0x68] sm:$0xff]
        %v4484 = vld [vmem:[%s4469 + $0x70] sm:$0xff]
        %v4485 = vld [vmem:[%s4469 + $0x78] sm:$0xff]
        %4486 = vmatprep.subr.mxu0 0.0
        %4487 = vmatpush1.msra.mxu0 %v4470
        %4488 = vmatprep.subr.mxu0 0.0
        %4489 = vmatpush1.msra.mxu0 %v4471
        %4490 = vmatprep.subr.mxu0 0.0
        %4491 = vmatpush1.msra.mxu0 %v4472
        %4492 = vmatprep.subr.mxu0 0.0
        %4493 = vmatpush1.msra.mxu0 %v4473
        %4494 = vmatprep.subr.mxu0 0.0
        %4495 = vmatpush1.msra.mxu0 %v4474
        %4496 = vmatprep.subr.mxu0 0.0
        %4497 = vmatpush1.msra.mxu0 %v4475
        %4498 = vmatprep.subr.mxu0 0.0
        %4499 = vmatpush1.msra.mxu0 %v4476
        %4500 = vmatprep.subr.mxu0 0.0
        %4501 = vmatpush1.msra.mxu0 %v4477
        %4502 = vmatprep.subr.mxu0 0.0
        %4503 = vmatpush1.msra.mxu0 %v4478
        %4504 = vmatprep.subr.mxu0 0.0
        %4505 = vmatpush1.msra.mxu0 %v4479
        %4506 = vmatprep.subr.mxu0 0.0
        %4507 = vmatpush1.msra.mxu0 %v4480
        %4508 = vmatprep.subr.mxu0 0.0
        %4509 = vmatpush1.msra.mxu0 %v4481
        %4510 = vmatprep.subr.mxu0 0.0
        %4511 = vmatpush1.msra.mxu0 %v4482
        %4512 = vmatprep.subr.mxu0 0.0
        %4513 = vmatpush1.msra.mxu0 %v4483
        %4514 = vmatprep.subr.mxu0 0.0
        %4515 = vmatpush1.msra.mxu0 %v4484
        %4516 = vmatprep.subr.mxu0 0.0
        %4517 = vmatpush1.msra.mxu0 %v4485
        %4518 = vmatprep.subr.mxu0 0.0
        %4519 = vmatpush1.msra.mxu0 0.0
        %4520 = vmatprep.subr.mxu0 0.0
        %4521 = vmatpush1.msra.mxu0 0.0
        %4522 = vmatprep.subr.mxu0 0.0
        %4523 = vmatpush1.msra.mxu0 0.0
        %4524 = vmatprep.subr.mxu0 0.0
        %4525 = vmatpush1.msra.mxu0 0.0
        %4526 = vmatprep.subr.mxu0 0.0
        %4527 = vmatpush1.msra.mxu0 0.0
        %4528 = vmatprep.subr.mxu0 0.0
        %4529 = vmatpush1.msra.mxu0 0.0
        %4530 = vmatprep.subr.mxu0 0.0
        %4531 = vmatpush1.msra.mxu0 0.0
        %4532 = vmatprep.subr.mxu0 0.0
        %4533 = vmatpush1.msra.mxu0 0.0
        %4534 = vmatprep.subr.mxu0 0.0
        %4535 = vmatpush1.msra.mxu0 0.0
        %4536 = vmatprep.subr.mxu0 0.0
        %4537 = vmatpush1.msra.mxu0 0.0
        %4538 = vmatprep.subr.mxu0 0.0
        %4539 = vmatpush1.msra.mxu0 0.0
        %4540 = vmatprep.subr.mxu0 0.0
        %4541 = vmatpush1.msra.mxu0 0.0
        %4542 = vmatprep.subr.mxu0 0.0
        %4543 = vmatpush1.msra.mxu0 0.0
        %4544 = vmatprep.subr.mxu0 0.0
        %4545 = vmatpush1.msra.mxu0 0.0
        %4546 = vmatprep.subr.mxu0 0.0
        %4547 = vmatpush1.msra.mxu0 0.0
        %4548 = vmatprep.subr.mxu0 0.0
        %4549 = vmatpush1.msra.mxu0 0.0
        %4550 = vmatprep.mubr.f32.mxu0 0.0
        %4551 = vmatmul.mubr.f32.gmra.mrb[0].mxu0 %v3441
        %v4552 = vpop.f32.mrb[0].mxu0
        %v4553 = vadd.f32 0.0, %v4552
        %v4554 = vpop.f32.mrb[0].mxu0
        %4555 = vmatprep.mubr.f32.mxu0 0.0
        %4556 = vmatmul.mubr.f32.gmra.mrb[0].mxu0 %v3317
        %v4557 = vpop.f32.mrb[0].mxu0
        %v4558 = vadd.f32 0.0, %v4557
        %v4559 = vpop.f32.mrb[0].mxu0
        %4560 = vmatprep.mubr.f32.mxu0 0.0
        %4561 = vmatmul.mubr.f32.gmra.mrb[0].mxu0 %v3440
        %v4562 = vpop.f32.mrb[0].mxu0
        %v4563 = vadd.f32 0.0, %v4562
        %v4564 = vpop.f32.mrb[0].mxu0
        %4565 = vmatprep.mubr.f32.mxu0 0.0
        %4566 = vmatmul.mubr.f32.gmra.mrb[0].mxu0 %v3314
        %v4567 = vpop.f32.mrb[0].mxu0
        %v4568 = vadd.f32 0.0, %v4567
        %v4569 = vpop.f32.mrb[0].mxu0
        %4570 = vmatprep.mubr.f32.mxu0 0.0
        %4571 = vmatmul.mubr.f32.gmra.mrb[0].mxu0 %v3442
        %v4572 = vpop.f32.mrb[0].mxu0
        %v4573 = vadd.f32 0.0, %v4572
        %v4574 = vpop.f32.mrb[0].mxu0
        %4575 = vmatprep.mubr.f32.mxu0 0.0
        %4576 = vmatmul.mubr.f32.gmra.mrb[0].mxu0 %v3320
        %v4577 = vpop.f32.mrb[0].mxu0
        %v4578 = vadd.f32 0.0, %v4577
        %v4579 = vpop.f32.mrb[0].mxu0
        %4580 = vmatprep.mubr.f32.mxu0 0.0
        %4581 = vmatmul.mubr.f32.gmra.mrb[0].mxu0 %v3443
        %v4582 = vpop.f32.mrb[0].mxu0
        %v4583 = vadd.f32 0.0, %v4582
        %v4584 = vpop.f32.mrb[0].mxu0
        %4585 = vmatprep.mubr.f32.mxu0 0.0
        %4586 = vmatmul.mubr.f32.gmra.mrb[0].mxu0 %v3323
        %v4587 = vpop.f32.mrb[0].mxu0
        %v4588 = vadd.f32 0.0, %v4587
        %v4589 = vpop.f32.mrb[0].mxu0
        %4590 = vmatprep.mubr.f32.mxu0 0.0
        %4591 = vmatmul.mubr.f32.gmra.mrb[0].mxu0 %v3444
        %v4592 = vpop.f32.mrb[0].mxu0
        %v4593 = vadd.f32 0.0, %v4592
        %v4594 = vpop.f32.mrb[0].mxu0
        %4595 = vmatprep.mubr.f32.mxu0 0.0
        %4596 = vmatmul.mubr.f32.gmra.mrb[0].mxu0 %v3326
        %v4597 = vpop.f32.mrb[0].mxu0
        %v4598 = vadd.f32 0.0, %v4597
        %v4599 = vpop.f32.mrb[0].mxu0
        %4600 = vmatprep.mubr.f32.mxu0 0.0
        %4601 = vmatmul.mubr.f32.gmra.mrb[0].mxu0 %v3445
        %v4602 = vpop.f32.mrb[0].mxu0
        %v4603 = vadd.f32 0.0, %v4602
        %v4604 = vpop.f32.mrb[0].mxu0
        %4605 = vmatprep.mubr.f32.mxu0 0.0
        %4606 = vmatmul.mubr.f32.gmra.mrb[0].mxu0 %v3329
        %v4607 = vpop.f32.mrb[0].mxu0
        %v4608 = vadd.f32 0.0, %v4607
        %v4609 = vpop.f32.mrb[0].mxu0
        %4610 = vmatprep.mubr.f32.mxu0 0.0
        %4611 = vmatmul.mubr.f32.gmra.mrb[0].mxu0 %v3446
        %v4612 = vpop.f32.mrb[0].mxu0
        %v4613 = vadd.f32 0.0, %v4612
        %v4614 = vpop.f32.mrb[0].mxu0
        %4615 = vmatprep.mubr.f32.mxu0 0.0
        %4616 = vmatmul.mubr.f32.gmra.mrb[0].mxu0 %v3332
        %v4617 = vpop.f32.mrb[0].mxu0
        %v4618 = vadd.f32 0.0, %v4617
        %v4619 = vpop.f32.mrb[0].mxu0
        %4620 = vmatprep.mubr.f32.mxu0 0.0
        %4621 = vmatmul.mubr.f32.gmra.mrb[0].mxu0 %v3447
        %v4622 = vpop.f32.mrb[0].mxu0
        %v4623 = vadd.f32 0.0, %v4622
        %v4624 = vpop.f32.mrb[0].mxu0
        %4625 = vmatprep.mubr.f32.mxu0 0.0
        %4626 = vmatmul.mubr.f32.gmra.mrb[0].mxu0 %v3335
        %v4627 = vpop.f32.mrb[0].mxu0
        %v4628 = vadd.f32 0.0, %v4627
        %v4629 = vpop.f32.mrb[0].mxu0
        %4630 = vmatprep.mubr.f32.mxu0 0.0
        %4631 = vmatmul.mubr.f32.gmra.mrb[0].mxu0 %v3448
        %v4632 = vpop.f32.mrb[0].mxu0
        %v4633 = vadd.f32 0.0, %v4632
        %v4634 = vpop.f32.mrb[0].mxu0
        %4635 = vmatprep.mubr.f32.mxu0 0.0
        %4636 = vmatmul.mubr.f32.gmra.mrb[0].mxu0 %v3338
        %v4637 = vpop.f32.mrb[0].mxu0
        %v4638 = vadd.f32 0.0, %v4637
        %v4639 = vpop.f32.mrb[0].mxu0
        %4640 = vmatprep.mubr.f32.mxu0 0.0
        %4641 = vmatmul.mubr.f32.gmra.mrb[0].mxu0 %v3449
        %v4642 = vpop.f32.mrb[0].mxu0
        %v4643 = vadd.f32 0.0, %v4642
        %v4644 = vpop.f32.mrb[0].mxu0
        %4645 = vmatprep.mubr.f32.mxu0 0.0
        %4646 = vmatmul.mubr.f32.gmra.mrb[0].mxu0 %v3341
        %v4647 = vpop.f32.mrb[0].mxu0
        %v4648 = vadd.f32 0.0, %v4647
        %v4649 = vpop.f32.mrb[0].mxu0
        %4650 = vmatprep.mubr.f32.mxu0 0.0
        %4651 = vmatmul.mubr.f32.gmra.mrb[0].mxu0 %v3450
        %v4652 = vpop.f32.mrb[0].mxu0
        %v4653 = vadd.f32 0.0, %v4652
        %v4654 = vpop.f32.mrb[0].mxu0
        %4655 = vmatprep.mubr.f32.mxu0 0.0
        %4656 = vmatmul.mubr.f32.gmra.mrb[0].mxu0 %v3344
        %v4657 = vpop.f32.mrb[0].mxu0
        %v4658 = vadd.f32 0.0, %v4657
        %v4659 = vpop.f32.mrb[0].mxu0
        %4660 = vmatprep.mubr.f32.mxu0 0.0
        %4661 = vmatmul.mubr.f32.gmra.mrb[0].mxu0 %v3451
        %v4662 = vpop.f32.mrb[0].mxu0
        %v4663 = vadd.f32 0.0, %v4662
        %v4664 = vpop.f32.mrb[0].mxu0
        %4665 = vmatprep.mubr.f32.mxu0 0.0
        %4666 = vmatmul.mubr.f32.gmra.mrb[0].mxu0 %v3347
        %v4667 = vpop.f32.mrb[0].mxu0
        %v4668 = vadd.f32 0.0, %v4667
        %v4669 = vpop.f32.mrb[0].mxu0
        %4670 = vmatprep.mubr.f32.mxu0 0.0
        %4671 = vmatmul.mubr.f32.gmra.mrb[0].mxu0 %v3452
        %v4672 = vpop.f32.mrb[0].mxu0
        %v4673 = vadd.f32 0.0, %v4672
        %v4674 = vpop.f32.mrb[0].mxu0
        %4675 = vmatprep.mubr.f32.mxu0 0.0
        %4676 = vmatmul.mubr.f32.gmra.mrb[0].mxu0 %v3350
        %v4677 = vpop.f32.mrb[0].mxu0
        %v4678 = vadd.f32 0.0, %v4677
        %v4679 = vpop.f32.mrb[0].mxu0
        %4680 = vmatprep.mubr.f32.mxu0 0.0
        %4681 = vmatmul.mubr.f32.gmra.mrb[0].mxu0 %v3453
        %v4682 = vpop.f32.mrb[0].mxu0
        %v4683 = vadd.f32 0.0, %v4682
        %v4684 = vpop.f32.mrb[0].mxu0
        %4685 = vmatprep.mubr.f32.mxu0 0.0
        %4686 = vmatmul.mubr.f32.gmra.mrb[0].mxu0 %v3353
        %v4687 = vpop.f32.mrb[0].mxu0
        %v4688 = vadd.f32 0.0, %v4687
        %v4689 = vpop.f32.mrb[0].mxu0
        %4690 = vmatprep.mubr.f32.mxu0 0.0
        %4691 = vmatmul.mubr.f32.gmra.mrb[0].mxu0 %v3454
        %v4692 = vpop.f32.mrb[0].mxu0
        %v4693 = vadd.f32 0.0, %v4692
        %v4694 = vpop.f32.mrb[0].mxu0
        %4695 = vmatprep.mubr.f32.mxu0 0.0
        %4696 = vmatmul.mubr.f32.gmra.mrb[0].mxu0 %v3356
        %v4697 = vpop.f32.mrb[0].mxu0
        %v4698 = vadd.f32 0.0, %v4697
        %v4699 = vpop.f32.mrb[0].mxu0
        %4700 = vmatprep.mubr.f32.mxu0 0.0
        %4701 = vmatmul.mubr.f32.gmra.mrb[0].mxu0 %v3455
        %v4702 = vpop.f32.mrb[0].mxu0
        %v4703 = vadd.f32 0.0, %v4702
        %v4704 = vpop.f32.mrb[0].mxu0
        %4705 = vmatprep.mubr.f32.mxu0 0.0
        %4706 = vmatmul.mubr.f32.gmra.mrb[0].mxu0 %v3359
        %v4707 = vpop.f32.mrb[0].mxu0
        %v4708 = vadd.f32 0.0, %v4707
        %v4709 = vpop.f32.mrb[0].mxu0
        %4710 = vdwg.mxu0
        %v4711 = vadd.f32 %v4437, %v4553
        %v4712 = vadd.f32 %v4438, %v4558
        %v4713 = vadd.f32 %v4439, %v4563
        %v4714 = vadd.f32 %v4440, %v4568
        %v4715 = vadd.f32 %v4441, %v4573
        %v4716 = vadd.f32 %v4442, %v4578
        %v4717 = vadd.f32 %v4443, %v4583
        %v4718 = vadd.f32 %v4444, %v4588
        %v4719 = vadd.f32 %v4445, %v4593
        %v4720 = vadd.f32 %v4446, %v4598
        %v4721 = vadd.f32 %v4447, %v4603
        %v4722 = vadd.f32 %v4448, %v4608
        %v4723 = vadd.f32 %v4449, %v4613
        %v4724 = vadd.f32 %v4450, %v4618
        %v4725 = vadd.f32 %v4451, %v4623
        %v4726 = vadd.f32 %v4452, %v4628
        %v4727 = vadd.f32 %v4453, %v4633
        %v4728 = vadd.f32 %v4454, %v4638
        %v4729 = vadd.f32 %v4455, %v4643
        %v4730 = vadd.f32 %v4456, %v4648
        %v4731 = vadd.f32 %v4457, %v4653
        %v4732 = vadd.f32 %v4458, %v4658
        %v4733 = vadd.f32 %v4459, %v4663
        %v4734 = vadd.f32 %v4460, %v4668
        %v4735 = vadd.f32 %v4461, %v4673
        %v4736 = vadd.f32 %v4462, %v4678
        %v4737 = vadd.f32 %v4463, %v4683
        %v4738 = vadd.f32 %v4464, %v4688
        %v4739 = vadd.f32 %v4465, %v4693
        %v4740 = vadd.f32 %v4466, %v4698
        %v4741 = vadd.f32 %v4467, %v4703
        %v4742 = vadd.f32 %v4468, %v4708
        %v4745 = vrot.slane %v3455, 1
        %v4746 = vrot.slane %v3359, 1
        %v4747 = vsel %vm356, %v4745, %v4746
        %v4748 = vrot.slane %v3471, 1
        %v4749 = vsel %vm356, %v4746, %v4748
        %s4752 = scalar_lea.vmem [#allocation2], 512
        %v4753 = vld [vmem:[%s4752] sm:$0xff]
        %v4754 = vld [vmem:[%s4752 + $0x8] sm:$0xff]
        %v4755 = vld [vmem:[%s4752 + $0x10] sm:$0xff]
        %v4756 = vld [vmem:[%s4752 + $0x18] sm:$0xff]
        %v4757 = vld [vmem:[%s4752 + $0x20] sm:$0xff]
        %v4758 = vld [vmem:[%s4752 + $0x28] sm:$0xff]
        %v4759 = vld [vmem:[%s4752 + $0x30] sm:$0xff]
        %v4760 = vld [vmem:[%s4752 + $0x38] sm:$0xff]
        %v4761 = vld [vmem:[%s4752 + $0x40] sm:$0xff]
        %v4762 = vld [vmem:[%s4752 + $0x48] sm:$0xff]
        %v4763 = vld [vmem:[%s4752 + $0x50] sm:$0xff]
        %v4764 = vld [vmem:[%s4752 + $0x58] sm:$0xff]
        %v4765 = vld [vmem:[%s4752 + $0x60] sm:$0xff]
        %v4766 = vld [vmem:[%s4752 + $0x68] sm:$0xff]
        %v4767 = vld [vmem:[%s4752 + $0x70] sm:$0xff]
        %v4768 = vld [vmem:[%s4752 + $0x78] sm:$0xff]
        %4769 = vmatprep.subr.mxu0 0.0
        %4770 = vmatpush1.msra.mxu0 %v4753
        %4771 = vmatprep.subr.mxu0 0.0
        %4772 = vmatpush1.msra.mxu0 %v4754
        %4773 = vmatprep.subr.mxu0 0.0
        %4774 = vmatpush1.msra.mxu0 %v4755
        %4775 = vmatprep.subr.mxu0 0.0
        %4776 = vmatpush1.msra.mxu0 %v4756
        %4777 = vmatprep.subr.mxu0 0.0
        %4778 = vmatpush1.msra.mxu0 %v4757
        %4779 = vmatprep.subr.mxu0 0.0
        %4780 = vmatpush1.msra.mxu0 %v4758
        %4781 = vmatprep.subr.mxu0 0.0
        %4782 = vmatpush1.msra.mxu0 %v4759
        %4783 = vmatprep.subr.mxu0 0.0
        %4784 = vmatpush1.msra.mxu0 %v4760
        %4785 = vmatprep.subr.mxu0 0.0
        %4786 = vmatpush1.msra.mxu0 %v4761
        %4787 = vmatprep.subr.mxu0 0.0
        %4788 = vmatpush1.msra.mxu0 %v4762
        %4789 = vmatprep.subr.mxu0 0.0
        %4790 = vmatpush1.msra.mxu0 %v4763
        %4791 = vmatprep.subr.mxu0 0.0
        %4792 = vmatpush1.msra.mxu0 %v4764
        %4793 = vmatprep.subr.mxu0 0.0
        %4794 = vmatpush1.msra.mxu0 %v4765
        %4795 = vmatprep.subr.mxu0 0.0
        %4796 = vmatpush1.msra.mxu0 %v4766
        %4797 = vmatprep.subr.mxu0 0.0
        %4798 = vmatpush1.msra.mxu0 %v4767
        %4799 = vmatprep.subr.mxu0 0.0
        %4800 = vmatpush1.msra.mxu0 %v4768
        %4801 = vmatprep.subr.mxu0 0.0
        %4802 = vmatpush1.msra.mxu0 0.0
        %4803 = vmatprep.subr.mxu0 0.0
        %4804 = vmatpush1.msra.mxu0 0.0
        %4805 = vmatprep.subr.mxu0 0.0
        %4806 = vmatpush1.msra.mxu0 0.0
        %4807 = vmatprep.subr.mxu0 0.0
        %4808 = vmatpush1.msra.mxu0 0.0
        %4809 = vmatprep.subr.mxu0 0.0
        %4810 = vmatpush1.msra.mxu0 0.0
        %4811 = vmatprep.subr.mxu0 0.0
        %4812 = vmatpush1.msra.mxu0 0.0
        %4813 = vmatprep.subr.mxu0 0.0
        %4814 = vmatpush1.msra.mxu0 0.0
        %4815 = vmatprep.subr.mxu0 0.0
        %4816 = vmatpush1.msra.mxu0 0.0
        %4817 = vmatprep.subr.mxu0 0.0
        %4818 = vmatpush1.msra.mxu0 0.0
        %4819 = vmatprep.subr.mxu0 0.0
        %4820 = vmatpush1.msra.mxu0 0.0
        %4821 = vmatprep.subr.mxu0 0.0
        %4822 = vmatpush1.msra.mxu0 0.0
        %4823 = vmatprep.subr.mxu0 0.0
        %4824 = vmatpush1.msra.mxu0 0.0
        %4825 = vmatprep.subr.mxu0 0.0
        %4826 = vmatpush1.msra.mxu0 0.0
        %4827 = vmatprep.subr.mxu0 0.0
        %4828 = vmatpush1.msra.mxu0 0.0
        %4829 = vmatprep.subr.mxu0 0.0
        %4830 = vmatpush1.msra.mxu0 0.0
        %4831 = vmatprep.subr.mxu0 0.0
        %4832 = vmatpush1.msra.mxu0 0.0
        %4833 = vmatprep.mubr.f32.mxu0 0.0
        %4834 = vmatmul.mubr.f32.gmra.mrb[0].mxu0 %v3525
        %v4835 = vpop.f32.mrb[0].mxu0
        %v4836 = vadd.f32 0.0, %v4835
        %v4837 = vpop.f32.mrb[0].mxu0
        %4838 = vmatprep.mubr.f32.mxu0 0.0
        %4839 = vmatmul.mubr.f32.gmra.mrb[0].mxu0 %v3527
        %v4840 = vpop.f32.mrb[0].mxu0
        %v4841 = vadd.f32 0.0, %v4840
        %v4842 = vpop.f32.mrb[0].mxu0
        %4843 = vmatprep.mubr.f32.mxu0 0.0
        %4844 = vmatmul.mubr.f32.gmra.mrb[0].mxu0 %v3520
        %v4845 = vpop.f32.mrb[0].mxu0
        %v4846 = vadd.f32 0.0, %v4845
        %v4847 = vpop.f32.mrb[0].mxu0
        %4848 = vmatprep.mubr.f32.mxu0 0.0
        %4849 = vmatmul.mubr.f32.gmra.mrb[0].mxu0 %v3522
        %v4850 = vpop.f32.mrb[0].mxu0
        %v4851 = vadd.f32 0.0, %v4850
        %v4852 = vpop.f32.mrb[0].mxu0
        %4853 = vmatprep.mubr.f32.mxu0 0.0
        %4854 = vmatmul.mubr.f32.gmra.mrb[0].mxu0 %v3530
        %v4855 = vpop.f32.mrb[0].mxu0
        %v4856 = vadd.f32 0.0, %v4855
        %v4857 = vpop.f32.mrb[0].mxu0
        %4858 = vmatprep.mubr.f32.mxu0 0.0
        %4859 = vmatmul.mubr.f32.gmra.mrb[0].mxu0 %v3532
        %v4860 = vpop.f32.mrb[0].mxu0
        %v4861 = vadd.f32 0.0, %v4860
        %v4862 = vpop.f32.mrb[0].mxu0
        %4863 = vmatprep.mubr.f32.mxu0 0.0
        %4864 = vmatmul.mubr.f32.gmra.mrb[0].mxu0 %v3535
        %v4865 = vpop.f32.mrb[0].mxu0
        %v4866 = vadd.f32 0.0, %v4865
        %v4867 = vpop.f32.mrb[0].mxu0
        %4868 = vmatprep.mubr.f32.mxu0 0.0
        %4869 = vmatmul.mubr.f32.gmra.mrb[0].mxu0 %v3537
        %v4870 = vpop.f32.mrb[0].mxu0
        %v4871 = vadd.f32 0.0, %v4870
        %v4872 = vpop.f32.mrb[0].mxu0
        %4873 = vmatprep.mubr.f32.mxu0 0.0
        %4874 = vmatmul.mubr.f32.gmra.mrb[0].mxu0 %v3540
        %v4875 = vpop.f32.mrb[0].mxu0
        %v4876 = vadd.f32 0.0, %v4875
        %v4877 = vpop.f32.mrb[0].mxu0
        %4878 = vmatprep.mubr.f32.mxu0 0.0
        %4879 = vmatmul.mubr.f32.gmra.mrb[0].mxu0 %v3542
        %v4880 = vpop.f32.mrb[0].mxu0
        %v4881 = vadd.f32 0.0, %v4880
        %v4882 = vpop.f32.mrb[0].mxu0
        %4883 = vmatprep.mubr.f32.mxu0 0.0
        %4884 = vmatmul.mubr.f32.gmra.mrb[0].mxu0 %v3545
        %v4885 = vpop.f32.mrb[0].mxu0
        %v4886 = vadd.f32 0.0, %v4885
        %v4887 = vpop.f32.mrb[0].mxu0
        %4888 = vmatprep.mubr.f32.mxu0 0.0
        %4889 = vmatmul.mubr.f32.gmra.mrb[0].mxu0 %v3547
        %v4890 = vpop.f32.mrb[0].mxu0
        %v4891 = vadd.f32 0.0, %v4890
        %v4892 = vpop.f32.mrb[0].mxu0
        %4893 = vmatprep.mubr.f32.mxu0 0.0
        %4894 = vmatmul.mubr.f32.gmra.mrb[0].mxu0 %v3550
        %v4895 = vpop.f32.mrb[0].mxu0
        %v4896 = vadd.f32 0.0, %v4895
        %v4897 = vpop.f32.mrb[0].mxu0
        %4898 = vmatprep.mubr.f32.mxu0 0.0
        %4899 = vmatmul.mubr.f32.gmra.mrb[0].mxu0 %v3552
        %v4900 = vpop.f32.mrb[0].mxu0
        %v4901 = vadd.f32 0.0, %v4900
        %v4902 = vpop.f32.mrb[0].mxu0
        %4903 = vmatprep.mubr.f32.mxu0 0.0
        %4904 = vmatmul.mubr.f32.gmra.mrb[0].mxu0 %v3555
        %v4905 = vpop.f32.mrb[0].mxu0
        %v4906 = vadd.f32 0.0, %v4905
        %v4907 = vpop.f32.mrb[0].mxu0
        %4908 = vmatprep.mubr.f32.mxu0 0.0
        %4909 = vmatmul.mubr.f32.gmra.mrb[0].mxu0 %v3557
        %v4910 = vpop.f32.mrb[0].mxu0
        %v4911 = vadd.f32 0.0, %v4910
        %v4912 = vpop.f32.mrb[0].mxu0
        %4913 = vmatprep.mubr.f32.mxu0 0.0
        %4914 = vmatmul.mubr.f32.gmra.mrb[0].mxu0 %v3560
        %v4915 = vpop.f32.mrb[0].mxu0
        %v4916 = vadd.f32 0.0, %v4915
        %v4917 = vpop.f32.mrb[0].mxu0
        %4918 = vmatprep.mubr.f32.mxu0 0.0
        %4919 = vmatmul.mubr.f32.gmra.mrb[0].mxu0 %v3562
        %v4920 = vpop.f32.mrb[0].mxu0
        %v4921 = vadd.f32 0.0, %v4920
        %v4922 = vpop.f32.mrb[0].mxu0
        %4923 = vmatprep.mubr.f32.mxu0 0.0
        %4924 = vmatmul.mubr.f32.gmra.mrb[0].mxu0 %v3565
        %v4925 = vpop.f32.mrb[0].mxu0
        %v4926 = vadd.f32 0.0, %v4925
        %v4927 = vpop.f32.mrb[0].mxu0
        %4928 = vmatprep.mubr.f32.mxu0 0.0
        %4929 = vmatmul.mubr.f32.gmra.mrb[0].mxu0 %v3567
        %v4930 = vpop.f32.mrb[0].mxu0
        %v4931 = vadd.f32 0.0, %v4930
        %v4932 = vpop.f32.mrb[0].mxu0
        %4933 = vmatprep.mubr.f32.mxu0 0.0
        %4934 = vmatmul.mubr.f32.gmra.mrb[0].mxu0 %v3570
        %v4935 = vpop.f32.mrb[0].mxu0
        %v4936 = vadd.f32 0.0, %v4935
        %v4937 = vpop.f32.mrb[0].mxu0
        %4938 = vmatprep.mubr.f32.mxu0 0.0
        %4939 = vmatmul.mubr.f32.gmra.mrb[0].mxu0 %v3572
        %v4940 = vpop.f32.mrb[0].mxu0
        %v4941 = vadd.f32 0.0, %v4940
        %v4942 = vpop.f32.mrb[0].mxu0
        %4943 = vmatprep.mubr.f32.mxu0 0.0
        %4944 = vmatmul.mubr.f32.gmra.mrb[0].mxu0 %v3575
        %v4945 = vpop.f32.mrb[0].mxu0
        %v4946 = vadd.f32 0.0, %v4945
        %v4947 = vpop.f32.mrb[0].mxu0
        %4948 = vmatprep.mubr.f32.mxu0 0.0
        %4949 = vmatmul.mubr.f32.gmra.mrb[0].mxu0 %v3577
        %v4950 = vpop.f32.mrb[0].mxu0
        %v4951 = vadd.f32 0.0, %v4950
        %v4952 = vpop.f32.mrb[0].mxu0
        %4953 = vmatprep.mubr.f32.mxu0 0.0
        %4954 = vmatmul.mubr.f32.gmra.mrb[0].mxu0 %v3580
        %v4955 = vpop.f32.mrb[0].mxu0
        %v4956 = vadd.f32 0.0, %v4955
        %v4957 = vpop.f32.mrb[0].mxu0
        %4958 = vmatprep.mubr.f32.mxu0 0.0
        %4959 = vmatmul.mubr.f32.gmra.mrb[0].mxu0 %v3582
        %v4960 = vpop.f32.mrb[0].mxu0
        %v4961 = vadd.f32 0.0, %v4960
        %v4962 = vpop.f32.mrb[0].mxu0
        %4963 = vmatprep.mubr.f32.mxu0 0.0
        %4964 = vmatmul.mubr.f32.gmra.mrb[0].mxu0 %v3585
        %v4965 = vpop.f32.mrb[0].mxu0
        %v4966 = vadd.f32 0.0, %v4965
        %v4967 = vpop.f32.mrb[0].mxu0
        %4968 = vmatprep.mubr.f32.mxu0 0.0
        %4969 = vmatmul.mubr.f32.gmra.mrb[0].mxu0 %v3587
        %v4970 = vpop.f32.mrb[0].mxu0
        %v4971 = vadd.f32 0.0, %v4970
        %v4972 = vpop.f32.mrb[0].mxu0
        %4973 = vmatprep.mubr.f32.mxu0 0.0
        %4974 = vmatmul.mubr.f32.gmra.mrb[0].mxu0 %v3590
        %v4975 = vpop.f32.mrb[0].mxu0
        %v4976 = vadd.f32 0.0, %v4975
        %v4977 = vpop.f32.mrb[0].mxu0
        %4978 = vmatprep.mubr.f32.mxu0 0.0
        %4979 = vmatmul.mubr.f32.gmra.mrb[0].mxu0 %v3592
        %v4980 = vpop.f32.mrb[0].mxu0
        %v4981 = vadd.f32 0.0, %v4980
        %v4982 = vpop.f32.mrb[0].mxu0
        %4983 = vmatprep.mubr.f32.mxu0 0.0
        %4984 = vmatmul.mubr.f32.gmra.mrb[0].mxu0 %v4747
        %v4985 = vpop.f32.mrb[0].mxu0
        %v4986 = vadd.f32 0.0, %v4985
        %v4987 = vpop.f32.mrb[0].mxu0
        %4988 = vmatprep.mubr.f32.mxu0 0.0
        %4989 = vmatmul.mubr.f32.gmra.mrb[0].mxu0 %v4749
        %v4990 = vpop.f32.mrb[0].mxu0
        %v4991 = vadd.f32 0.0, %v4990
        %v4992 = vpop.f32.mrb[0].mxu0
        %4993 = vdwg.mxu0
        %v4994 = vadd.f32 %v4711, %v4836
        %v4995 = vadd.f32 %v4712, %v4841
        %v4996 = vadd.f32 %v4713, %v4846
        %v4997 = vadd.f32 %v4714, %v4851
        %v4998 = vadd.f32 %v4715, %v4856
        %v4999 = vadd.f32 %v4716, %v4861
        %v5000 = vadd.f32 %v4717, %v4866
        %v5001 = vadd.f32 %v4718, %v4871
        %v5002 = vadd.f32 %v4719, %v4876
        %v5003 = vadd.f32 %v4720, %v4881
        %v5004 = vadd.f32 %v4721, %v4886
        %v5005 = vadd.f32 %v4722, %v4891
        %v5006 = vadd.f32 %v4723, %v4896
        %v5007 = vadd.f32 %v4724, %v4901
        %v5008 = vadd.f32 %v4725, %v4906
        %v5009 = vadd.f32 %v4726, %v4911
        %v5010 = vadd.f32 %v4727, %v4916
        %v5011 = vadd.f32 %v4728, %v4921
        %v5012 = vadd.f32 %v4729, %v4926
        %v5013 = vadd.f32 %v4730, %v4931
        %v5014 = vadd.f32 %v4731, %v4936
        %v5015 = vadd.f32 %v4732, %v4941
        %v5016 = vadd.f32 %v4733, %v4946
        %v5017 = vadd.f32 %v4734, %v4951
        %v5018 = vadd.f32 %v4735, %v4956
        %v5019 = vadd.f32 %v4736, %v4961
        %v5020 = vadd.f32 %v4737, %v4966
        %v5021 = vadd.f32 %v4738, %v4971
        %v5022 = vadd.f32 %v4739, %v4976
        %v5023 = vadd.f32 %v4740, %v4981
        %v5024 = vadd.f32 %v4741, %v4986
        %v5025 = vadd.f32 %v4742, %v4991
        %v5026 = vrot.slane %v3455, 2
        %v5027 = vrot.slane %v3359, 2
        %v5028 = vsel %vm936, %v5026, %v5027
        %v5029 = vrot.slane %v3471, 2
        %v5030 = vsel %vm936, %v5027, %v5029
        %s5033 = scalar_lea.vmem [#allocation2], 640
        %v5034 = vld [vmem:[%s5033] sm:$0xff]
        %v5035 = vld [vmem:[%s5033 + $0x8] sm:$0xff]
        %v5036 = vld [vmem:[%s5033 + $0x10] sm:$0xff]
        %v5037 = vld [vmem:[%s5033 + $0x18] sm:$0xff]
        %v5038 = vld [vmem:[%s5033 + $0x20] sm:$0xff]
        %v5039 = vld [vmem:[%s5033 + $0x28] sm:$0xff]
        %v5040 = vld [vmem:[%s5033 + $0x30] sm:$0xff]
        %v5041 = vld [vmem:[%s5033 + $0x38] sm:$0xff]
        %v5042 = vld [vmem:[%s5033 + $0x40] sm:$0xff]
        %v5043 = vld [vmem:[%s5033 + $0x48] sm:$0xff]
        %v5044 = vld [vmem:[%s5033 + $0x50] sm:$0xff]
        %v5045 = vld [vmem:[%s5033 + $0x58] sm:$0xff]
        %v5046 = vld [vmem:[%s5033 + $0x60] sm:$0xff]
        %v5047 = vld [vmem:[%s5033 + $0x68] sm:$0xff]
        %v5048 = vld [vmem:[%s5033 + $0x70] sm:$0xff]
        %v5049 = vld [vmem:[%s5033 + $0x78] sm:$0xff]
        %5050 = vmatprep.subr.mxu0 0.0
        %5051 = vmatpush1.msra.mxu0 %v5034
        %5052 = vmatprep.subr.mxu0 0.0
        %5053 = vmatpush1.msra.mxu0 %v5035
        %5054 = vmatprep.subr.mxu0 0.0
        %5055 = vmatpush1.msra.mxu0 %v5036
        %5056 = vmatprep.subr.mxu0 0.0
        %5057 = vmatpush1.msra.mxu0 %v5037
        %5058 = vmatprep.subr.mxu0 0.0
        %5059 = vmatpush1.msra.mxu0 %v5038
        %5060 = vmatprep.subr.mxu0 0.0
        %5061 = vmatpush1.msra.mxu0 %v5039
        %5062 = vmatprep.subr.mxu0 0.0
        %5063 = vmatpush1.msra.mxu0 %v5040
        %5064 = vmatprep.subr.mxu0 0.0
        %5065 = vmatpush1.msra.mxu0 %v5041
        %5066 = vmatprep.subr.mxu0 0.0
        %5067 = vmatpush1.msra.mxu0 %v5042
        %5068 = vmatprep.subr.mxu0 0.0
        %5069 = vmatpush1.msra.mxu0 %v5043
        %5070 = vmatprep.subr.mxu0 0.0
        %5071 = vmatpush1.msra.mxu0 %v5044
        %5072 = vmatprep.subr.mxu0 0.0
        %5073 = vmatpush1.msra.mxu0 %v5045
        %5074 = vmatprep.subr.mxu0 0.0
        %5075 = vmatpush1.msra.mxu0 %v5046
        %5076 = vmatprep.subr.mxu0 0.0
        %5077 = vmatpush1.msra.mxu0 %v5047
        %5078 = vmatprep.subr.mxu0 0.0
        %5079 = vmatpush1.msra.mxu0 %v5048
        %5080 = vmatprep.subr.mxu0 0.0
        %5081 = vmatpush1.msra.mxu0 %v5049
        %5082 = vmatprep.subr.mxu0 0.0
        %5083 = vmatpush1.msra.mxu0 0.0
        %5084 = vmatprep.subr.mxu0 0.0
        %5085 = vmatpush1.msra.mxu0 0.0
        %5086 = vmatprep.subr.mxu0 0.0
        %5087 = vmatpush1.msra.mxu0 0.0
        %5088 = vmatprep.subr.mxu0 0.0
        %5089 = vmatpush1.msra.mxu0 0.0
        %5090 = vmatprep.subr.mxu0 0.0
        %5091 = vmatpush1.msra.mxu0 0.0
        %5092 = vmatprep.subr.mxu0 0.0
        %5093 = vmatpush1.msra.mxu0 0.0
        %5094 = vmatprep.subr.mxu0 0.0
        %5095 = vmatpush1.msra.mxu0 0.0
        %5096 = vmatprep.subr.mxu0 0.0
        %5097 = vmatpush1.msra.mxu0 0.0
        %5098 = vmatprep.subr.mxu0 0.0
        %5099 = vmatpush1.msra.mxu0 0.0
        %5100 = vmatprep.subr.mxu0 0.0
        %5101 = vmatpush1.msra.mxu0 0.0
        %5102 = vmatprep.subr.mxu0 0.0
        %5103 = vmatpush1.msra.mxu0 0.0
        %5104 = vmatprep.subr.mxu0 0.0
        %5105 = vmatpush1.msra.mxu0 0.0
        %5106 = vmatprep.subr.mxu0 0.0
        %5107 = vmatpush1.msra.mxu0 0.0
        %5108 = vmatprep.subr.mxu0 0.0
        %5109 = vmatpush1.msra.mxu0 0.0
        %5110 = vmatprep.subr.mxu0 0.0
        %5111 = vmatpush1.msra.mxu0 0.0
        %5112 = vmatprep.subr.mxu0 0.0
        %5113 = vmatpush1.msra.mxu0 0.0
        %5114 = vmatprep.mubr.f32.mxu0 0.0
        %5115 = vmatmul.mubr.f32.gmra.mrb[0].mxu0 %v4097
        %v5116 = vpop.f32.mrb[0].mxu0
        %v5117 = vadd.f32 0.0, %v5116
        %v5118 = vpop.f32.mrb[0].mxu0
        %5119 = vmatprep.mubr.f32.mxu0 0.0
        %5120 = vmatmul.mubr.f32.gmra.mrb[0].mxu0 %v4099
        %v5121 = vpop.f32.mrb[0].mxu0
        %v5122 = vadd.f32 0.0, %v5121
        %v5123 = vpop.f32.mrb[0].mxu0
        %5124 = vmatprep.mubr.f32.mxu0 0.0
        %5125 = vmatmul.mubr.f32.gmra.mrb[0].mxu0 %v4092
        %v5126 = vpop.f32.mrb[0].mxu0
        %v5127 = vadd.f32 0.0, %v5126
        %v5128 = vpop.f32.mrb[0].mxu0
        %5129 = vmatprep.mubr.f32.mxu0 0.0
        %5130 = vmatmul.mubr.f32.gmra.mrb[0].mxu0 %v4094
        %v5131 = vpop.f32.mrb[0].mxu0
        %v5132 = vadd.f32 0.0, %v5131
        %v5133 = vpop.f32.mrb[0].mxu0
        %5134 = vmatprep.mubr.f32.mxu0 0.0
        %5135 = vmatmul.mubr.f32.gmra.mrb[0].mxu0 %v4102
        %v5136 = vpop.f32.mrb[0].mxu0
        %v5137 = vadd.f32 0.0, %v5136
        %v5138 = vpop.f32.mrb[0].mxu0
        %5139 = vmatprep.mubr.f32.mxu0 0.0
        %5140 = vmatmul.mubr.f32.gmra.mrb[0].mxu0 %v4104
        %v5141 = vpop.f32.mrb[0].mxu0
        %v5142 = vadd.f32 0.0, %v5141
        %v5143 = vpop.f32.mrb[0].mxu0
        %5144 = vmatprep.mubr.f32.mxu0 0.0
        %5145 = vmatmul.mubr.f32.gmra.mrb[0].mxu0 %v4107
        %v5146 = vpop.f32.mrb[0].mxu0
        %v5147 = vadd.f32 0.0, %v5146
        %v5148 = vpop.f32.mrb[0].mxu0
        %5149 = vmatprep.mubr.f32.mxu0 0.0
        %5150 = vmatmul.mubr.f32.gmra.mrb[0].mxu0 %v4109
        %v5151 = vpop.f32.mrb[0].mxu0
        %v5152 = vadd.f32 0.0, %v5151
        %v5153 = vpop.f32.mrb[0].mxu0
        %5154 = vmatprep.mubr.f32.mxu0 0.0
        %5155 = vmatmul.mubr.f32.gmra.mrb[0].mxu0 %v4112
        %v5156 = vpop.f32.mrb[0].mxu0
        %v5157 = vadd.f32 0.0, %v5156
        %v5158 = vpop.f32.mrb[0].mxu0
        %5159 = vmatprep.mubr.f32.mxu0 0.0
        %5160 = vmatmul.mubr.f32.gmra.mrb[0].mxu0 %v4114
        %v5161 = vpop.f32.mrb[0].mxu0
        %v5162 = vadd.f32 0.0, %v5161
        %v5163 = vpop.f32.mrb[0].mxu0
        %5164 = vmatprep.mubr.f32.mxu0 0.0
        %5165 = vmatmul.mubr.f32.gmra.mrb[0].mxu0 %v4117
        %v5166 = vpop.f32.mrb[0].mxu0
        %v5167 = vadd.f32 0.0, %v5166
        %v5168 = vpop.f32.mrb[0].mxu0
        %5169 = vmatprep.mubr.f32.mxu0 0.0
        %5170 = vmatmul.mubr.f32.gmra.mrb[0].mxu0 %v4119
        %v5171 = vpop.f32.mrb[0].mxu0
        %v5172 = vadd.f32 0.0, %v5171
        %v5173 = vpop.f32.mrb[0].mxu0
        %5174 = vmatprep.mubr.f32.mxu0 0.0
        %5175 = vmatmul.mubr.f32.gmra.mrb[0].mxu0 %v4122
        %v5176 = vpop.f32.mrb[0].mxu0
        %v5177 = vadd.f32 0.0, %v5176
        %v5178 = vpop.f32.mrb[0].mxu0
        %5179 = vmatprep.mubr.f32.mxu0 0.0
        %5180 = vmatmul.mubr.f32.gmra.mrb[0].mxu0 %v4124
        %v5181 = vpop.f32.mrb[0].mxu0
        %v5182 = vadd.f32 0.0, %v5181
        %v5183 = vpop.f32.mrb[0].mxu0
        %5184 = vmatprep.mubr.f32.mxu0 0.0
        %5185 = vmatmul.mubr.f32.gmra.mrb[0].mxu0 %v4127
        %v5186 = vpop.f32.mrb[0].mxu0
        %v5187 = vadd.f32 0.0, %v5186
        %v5188 = vpop.f32.mrb[0].mxu0
        %5189 = vmatprep.mubr.f32.mxu0 0.0
        %5190 = vmatmul.mubr.f32.gmra.mrb[0].mxu0 %v4129
        %v5191 = vpop.f32.mrb[0].mxu0
        %v5192 = vadd.f32 0.0, %v5191
        %v5193 = vpop.f32.mrb[0].mxu0
        %5194 = vmatprep.mubr.f32.mxu0 0.0
        %5195 = vmatmul.mubr.f32.gmra.mrb[0].mxu0 %v4132
        %v5196 = vpop.f32.mrb[0].mxu0
        %v5197 = vadd.f32 0.0, %v5196
        %v5198 = vpop.f32.mrb[0].mxu0
        %5199 = vmatprep.mubr.f32.mxu0 0.0
        %5200 = vmatmul.mubr.f32.gmra.mrb[0].mxu0 %v4134
        %v5201 = vpop.f32.mrb[0].mxu0
        %v5202 = vadd.f32 0.0, %v5201
        %v5203 = vpop.f32.mrb[0].mxu0
        %5204 = vmatprep.mubr.f32.mxu0 0.0
        %5205 = vmatmul.mubr.f32.gmra.mrb[0].mxu0 %v4137
        %v5206 = vpop.f32.mrb[0].mxu0
        %v5207 = vadd.f32 0.0, %v5206
        %v5208 = vpop.f32.mrb[0].mxu0
        %5209 = vmatprep.mubr.f32.mxu0 0.0
        %5210 = vmatmul.mubr.f32.gmra.mrb[0].mxu0 %v4139
        %v5211 = vpop.f32.mrb[0].mxu0
        %v5212 = vadd.f32 0.0, %v5211
        %v5213 = vpop.f32.mrb[0].mxu0
        %5214 = vmatprep.mubr.f32.mxu0 0.0
        %5215 = vmatmul.mubr.f32.gmra.mrb[0].mxu0 %v4142
        %v5216 = vpop.f32.mrb[0].mxu0
        %v5217 = vadd.f32 0.0, %v5216
        %v5218 = vpop.f32.mrb[0].mxu0
        %5219 = vmatprep.mubr.f32.mxu0 0.0
        %5220 = vmatmul.mubr.f32.gmra.mrb[0].mxu0 %v4144
        %v5221 = vpop.f32.mrb[0].mxu0
        %v5222 = vadd.f32 0.0, %v5221
        %v5223 = vpop.f32.mrb[0].mxu0
        %5224 = vmatprep.mubr.f32.mxu0 0.0
        %5225 = vmatmul.mubr.f32.gmra.mrb[0].mxu0 %v4147
        %v5226 = vpop.f32.mrb[0].mxu0
        %v5227 = vadd.f32 0.0, %v5226
        %v5228 = vpop.f32.mrb[0].mxu0
        %5229 = vmatprep.mubr.f32.mxu0 0.0
        %5230 = vmatmul.mubr.f32.gmra.mrb[0].mxu0 %v4149
        %v5231 = vpop.f32.mrb[0].mxu0
        %v5232 = vadd.f32 0.0, %v5231
        %v5233 = vpop.f32.mrb[0].mxu0
        %5234 = vmatprep.mubr.f32.mxu0 0.0
        %5235 = vmatmul.mubr.f32.gmra.mrb[0].mxu0 %v4152
        %v5236 = vpop.f32.mrb[0].mxu0
        %v5237 = vadd.f32 0.0, %v5236
        %v5238 = vpop.f32.mrb[0].mxu0
        %5239 = vmatprep.mubr.f32.mxu0 0.0
        %5240 = vmatmul.mubr.f32.gmra.mrb[0].mxu0 %v4154
        %v5241 = vpop.f32.mrb[0].mxu0
        %v5242 = vadd.f32 0.0, %v5241
        %v5243 = vpop.f32.mrb[0].mxu0
        %5244 = vmatprep.mubr.f32.mxu0 0.0
        %5245 = vmatmul.mubr.f32.gmra.mrb[0].mxu0 %v4157
        %v5246 = vpop.f32.mrb[0].mxu0
        %v5247 = vadd.f32 0.0, %v5246
        %v5248 = vpop.f32.mrb[0].mxu0
        %5249 = vmatprep.mubr.f32.mxu0 0.0
        %5250 = vmatmul.mubr.f32.gmra.mrb[0].mxu0 %v4159
        %v5251 = vpop.f32.mrb[0].mxu0
        %v5252 = vadd.f32 0.0, %v5251
        %v5253 = vpop.f32.mrb[0].mxu0
        %5254 = vmatprep.mubr.f32.mxu0 0.0
        %5255 = vmatmul.mubr.f32.gmra.mrb[0].mxu0 %v4162
        %v5256 = vpop.f32.mrb[0].mxu0
        %v5257 = vadd.f32 0.0, %v5256
        %v5258 = vpop.f32.mrb[0].mxu0
        %5259 = vmatprep.mubr.f32.mxu0 0.0
        %5260 = vmatmul.mubr.f32.gmra.mrb[0].mxu0 %v4164
        %v5261 = vpop.f32.mrb[0].mxu0
        %v5262 = vadd.f32 0.0, %v5261
        %v5263 = vpop.f32.mrb[0].mxu0
        %5264 = vmatprep.mubr.f32.mxu0 0.0
        %5265 = vmatmul.mubr.f32.gmra.mrb[0].mxu0 %v5028
        %v5266 = vpop.f32.mrb[0].mxu0
        %v5267 = vadd.f32 0.0, %v5266
        %v5268 = vpop.f32.mrb[0].mxu0
        %5269 = vmatprep.mubr.f32.mxu0 0.0
        %5270 = vmatmul.mubr.f32.gmra.mrb[0].mxu0 %v5030
        %v5271 = vpop.f32.mrb[0].mxu0
        %v5272 = vadd.f32 0.0, %v5271
        %v5273 = vpop.f32.mrb[0].mxu0
        %5274 = vdwg.mxu0
        %v5275 = vadd.f32 %v4994, %v5117
        %v5276 = vadd.f32 %v4995, %v5122
        %v5277 = vadd.f32 %v4996, %v5127
        %v5278 = vadd.f32 %v4997, %v5132
        %v5279 = vadd.f32 %v4998, %v5137
        %v5280 = vadd.f32 %v4999, %v5142
        %v5281 = vadd.f32 %v5000, %v5147
        %v5282 = vadd.f32 %v5001, %v5152
        %v5283 = vadd.f32 %v5002, %v5157
        %v5284 = vadd.f32 %v5003, %v5162
        %v5285 = vadd.f32 %v5004, %v5167
        %v5286 = vadd.f32 %v5005, %v5172
        %v5287 = vadd.f32 %v5006, %v5177
        %v5288 = vadd.f32 %v5007, %v5182
        %v5289 = vadd.f32 %v5008, %v5187
        %v5290 = vadd.f32 %v5009, %v5192
        %v5291 = vadd.f32 %v5010, %v5197
        %v5292 = vadd.f32 %v5011, %v5202
        %v5293 = vadd.f32 %v5012, %v5207
        %v5294 = vadd.f32 %v5013, %v5212
        %v5295 = vadd.f32 %v5014, %v5217
        %v5296 = vadd.f32 %v5015, %v5222
        %v5297 = vadd.f32 %v5016, %v5227
        %v5298 = vadd.f32 %v5017, %v5232
        %v5299 = vadd.f32 %v5018, %v5237
        %v5300 = vadd.f32 %v5019, %v5242
        %v5301 = vadd.f32 %v5020, %v5247
        %v5302 = vadd.f32 %v5021, %v5252
        %v5303 = vadd.f32 %v5022, %v5257
        %v5304 = vadd.f32 %v5023, %v5262
        %v5305 = vadd.f32 %v5024, %v5267
        %v5306 = vadd.f32 %v5025, %v5272
        %s5307 = scalar_lea.vmem [#allocation2], 768
        %v5308 = vld [vmem:[%s5307] sm:$0xff]
        %v5309 = vld [vmem:[%s5307 + $0x8] sm:$0xff]
        %v5310 = vld [vmem:[%s5307 + $0x10] sm:$0xff]
        %v5311 = vld [vmem:[%s5307 + $0x18] sm:$0xff]
        %v5312 = vld [vmem:[%s5307 + $0x20] sm:$0xff]
        %v5313 = vld [vmem:[%s5307 + $0x28] sm:$0xff]
        %v5314 = vld [vmem:[%s5307 + $0x30] sm:$0xff]
        %v5315 = vld [vmem:[%s5307 + $0x38] sm:$0xff]
        %v5316 = vld [vmem:[%s5307 + $0x40] sm:$0xff]
        %v5317 = vld [vmem:[%s5307 + $0x48] sm:$0xff]
        %v5318 = vld [vmem:[%s5307 + $0x50] sm:$0xff]
        %v5319 = vld [vmem:[%s5307 + $0x58] sm:$0xff]
        %v5320 = vld [vmem:[%s5307 + $0x60] sm:$0xff]
        %v5321 = vld [vmem:[%s5307 + $0x68] sm:$0xff]
        %v5322 = vld [vmem:[%s5307 + $0x70] sm:$0xff]
        %v5323 = vld [vmem:[%s5307 + $0x78] sm:$0xff]
        %5324 = vmatprep.subr.mxu0 0.0
        %5325 = vmatpush1.msra.mxu0 %v5308
        %5326 = vmatprep.subr.mxu0 0.0
        %5327 = vmatpush1.msra.mxu0 %v5309
        %5328 = vmatprep.subr.mxu0 0.0
        %5329 = vmatpush1.msra.mxu0 %v5310
        %5330 = vmatprep.subr.mxu0 0.0
        %5331 = vmatpush1.msra.mxu0 %v5311
        %5332 = vmatprep.subr.mxu0 0.0
        %5333 = vmatpush1.msra.mxu0 %v5312
        %5334 = vmatprep.subr.mxu0 0.0
        %5335 = vmatpush1.msra.mxu0 %v5313
        %5336 = vmatprep.subr.mxu0 0.0
        %5337 = vmatpush1.msra.mxu0 %v5314
        %5338 = vmatprep.subr.mxu0 0.0
        %5339 = vmatpush1.msra.mxu0 %v5315
        %5340 = vmatprep.subr.mxu0 0.0
        %5341 = vmatpush1.msra.mxu0 %v5316
        %5342 = vmatprep.subr.mxu0 0.0
        %5343 = vmatpush1.msra.mxu0 %v5317
        %5344 = vmatprep.subr.mxu0 0.0
        %5345 = vmatpush1.msra.mxu0 %v5318
        %5346 = vmatprep.subr.mxu0 0.0
        %5347 = vmatpush1.msra.mxu0 %v5319
        %5348 = vmatprep.subr.mxu0 0.0
        %5349 = vmatpush1.msra.mxu0 %v5320
        %5350 = vmatprep.subr.mxu0 0.0
        %5351 = vmatpush1.msra.mxu0 %v5321
        %5352 = vmatprep.subr.mxu0 0.0
        %5353 = vmatpush1.msra.mxu0 %v5322
        %5354 = vmatprep.subr.mxu0 0.0
        %5355 = vmatpush1.msra.mxu0 %v5323
        %5356 = vmatprep.subr.mxu0 0.0
        %5357 = vmatpush1.msra.mxu0 0.0
        %5358 = vmatprep.subr.mxu0 0.0
        %5359 = vmatpush1.msra.mxu0 0.0
        %5360 = vmatprep.subr.mxu0 0.0
        %5361 = vmatpush1.msra.mxu0 0.0
        %5362 = vmatprep.subr.mxu0 0.0
        %5363 = vmatpush1.msra.mxu0 0.0
        %5364 = vmatprep.subr.mxu0 0.0
        %5365 = vmatpush1.msra.mxu0 0.0
        %5366 = vmatprep.subr.mxu0 0.0
        %5367 = vmatpush1.msra.mxu0 0.0
        %5368 = vmatprep.subr.mxu0 0.0
        %5369 = vmatpush1.msra.mxu0 0.0
        %5370 = vmatprep.subr.mxu0 0.0
        %5371 = vmatpush1.msra.mxu0 0.0
        %5372 = vmatprep.subr.mxu0 0.0
        %5373 = vmatpush1.msra.mxu0 0.0
        %5374 = vmatprep.subr.mxu0 0.0
        %5375 = vmatpush1.msra.mxu0 0.0
        %5376 = vmatprep.subr.mxu0 0.0
        %5377 = vmatpush1.msra.mxu0 0.0
        %5378 = vmatprep.subr.mxu0 0.0
        %5379 = vmatpush1.msra.mxu0 0.0
        %5380 = vmatprep.subr.mxu0 0.0
        %5381 = vmatpush1.msra.mxu0 0.0
        %5382 = vmatprep.subr.mxu0 0.0
        %5383 = vmatpush1.msra.mxu0 0.0
        %5384 = vmatprep.subr.mxu0 0.0
        %5385 = vmatpush1.msra.mxu0 0.0
        %5386 = vmatprep.subr.mxu0 0.0
        %5387 = vmatpush1.msra.mxu0 0.0
        %5388 = vmatprep.mubr.f32.mxu0 0.0
        %5389 = vmatmul.mubr.f32.gmra.mrb[0].mxu0 %v3440
        %v5390 = vpop.f32.mrb[0].mxu0
        %v5391 = vadd.f32 0.0, %v5390
        %v5392 = vpop.f32.mrb[0].mxu0
        %5393 = vmatprep.mubr.f32.mxu0 0.0
        %5394 = vmatmul.mubr.f32.gmra.mrb[0].mxu0 %v3314
        %v5395 = vpop.f32.mrb[0].mxu0
        %v5396 = vadd.f32 0.0, %v5395
        %v5397 = vpop.f32.mrb[0].mxu0
        %5398 = vmatprep.mubr.f32.mxu0 0.0
        %5399 = vmatmul.mubr.f32.gmra.mrb[0].mxu0 %v3442
        %v5400 = vpop.f32.mrb[0].mxu0
        %v5401 = vadd.f32 0.0, %v5400
        %v5402 = vpop.f32.mrb[0].mxu0
        %5403 = vmatprep.mubr.f32.mxu0 0.0
        %5404 = vmatmul.mubr.f32.gmra.mrb[0].mxu0 %v3320
        %v5405 = vpop.f32.mrb[0].mxu0
        %v5406 = vadd.f32 0.0, %v5405
        %v5407 = vpop.f32.mrb[0].mxu0
        %5408 = vmatprep.mubr.f32.mxu0 0.0
        %5409 = vmatmul.mubr.f32.gmra.mrb[0].mxu0 %v3443
        %v5410 = vpop.f32.mrb[0].mxu0
        %v5411 = vadd.f32 0.0, %v5410
        %v5412 = vpop.f32.mrb[0].mxu0
        %5413 = vmatprep.mubr.f32.mxu0 0.0
        %5414 = vmatmul.mubr.f32.gmra.mrb[0].mxu0 %v3323
        %v5415 = vpop.f32.mrb[0].mxu0
        %v5416 = vadd.f32 0.0, %v5415
        %v5417 = vpop.f32.mrb[0].mxu0
        %5418 = vmatprep.mubr.f32.mxu0 0.0
        %5419 = vmatmul.mubr.f32.gmra.mrb[0].mxu0 %v3444
        %v5420 = vpop.f32.mrb[0].mxu0
        %v5421 = vadd.f32 0.0, %v5420
        %v5422 = vpop.f32.mrb[0].mxu0
        %5423 = vmatprep.mubr.f32.mxu0 0.0
        %5424 = vmatmul.mubr.f32.gmra.mrb[0].mxu0 %v3326
        %v5425 = vpop.f32.mrb[0].mxu0
        %v5426 = vadd.f32 0.0, %v5425
        %v5427 = vpop.f32.mrb[0].mxu0
        %5428 = vmatprep.mubr.f32.mxu0 0.0
        %5429 = vmatmul.mubr.f32.gmra.mrb[0].mxu0 %v3445
        %v5430 = vpop.f32.mrb[0].mxu0
        %v5431 = vadd.f32 0.0, %v5430
        %v5432 = vpop.f32.mrb[0].mxu0
        %5433 = vmatprep.mubr.f32.mxu0 0.0
        %5434 = vmatmul.mubr.f32.gmra.mrb[0].mxu0 %v3329
        %v5435 = vpop.f32.mrb[0].mxu0
        %v5436 = vadd.f32 0.0, %v5435
        %v5437 = vpop.f32.mrb[0].mxu0
        %5438 = vmatprep.mubr.f32.mxu0 0.0
        %5439 = vmatmul.mubr.f32.gmra.mrb[0].mxu0 %v3446
        %v5440 = vpop.f32.mrb[0].mxu0
        %v5441 = vadd.f32 0.0, %v5440
        %v5442 = vpop.f32.mrb[0].mxu0
        %5443 = vmatprep.mubr.f32.mxu0 0.0
        %5444 = vmatmul.mubr.f32.gmra.mrb[0].mxu0 %v3332
        %v5445 = vpop.f32.mrb[0].mxu0
        %v5446 = vadd.f32 0.0, %v5445
        %v5447 = vpop.f32.mrb[0].mxu0
        %5448 = vmatprep.mubr.f32.mxu0 0.0
        %5449 = vmatmul.mubr.f32.gmra.mrb[0].mxu0 %v3447
        %v5450 = vpop.f32.mrb[0].mxu0
        %v5451 = vadd.f32 0.0, %v5450
        %v5452 = vpop.f32.mrb[0].mxu0
        %5453 = vmatprep.mubr.f32.mxu0 0.0
        %5454 = vmatmul.mubr.f32.gmra.mrb[0].mxu0 %v3335
        %v5455 = vpop.f32.mrb[0].mxu0
        %v5456 = vadd.f32 0.0, %v5455
        %v5457 = vpop.f32.mrb[0].mxu0
        %5458 = vmatprep.mubr.f32.mxu0 0.0
        %5459 = vmatmul.mubr.f32.gmra.mrb[0].mxu0 %v3448
        %v5460 = vpop.f32.mrb[0].mxu0
        %v5461 = vadd.f32 0.0, %v5460
        %v5462 = vpop.f32.mrb[0].mxu0
        %5463 = vmatprep.mubr.f32.mxu0 0.0
        %5464 = vmatmul.mubr.f32.gmra.mrb[0].mxu0 %v3338
        %v5465 = vpop.f32.mrb[0].mxu0
        %v5466 = vadd.f32 0.0, %v5465
        %v5467 = vpop.f32.mrb[0].mxu0
        %5468 = vmatprep.mubr.f32.mxu0 0.0
        %5469 = vmatmul.mubr.f32.gmra.mrb[0].mxu0 %v3449
        %v5470 = vpop.f32.mrb[0].mxu0
        %v5471 = vadd.f32 0.0, %v5470
        %v5472 = vpop.f32.mrb[0].mxu0
        %5473 = vmatprep.mubr.f32.mxu0 0.0
        %5474 = vmatmul.mubr.f32.gmra.mrb[0].mxu0 %v3341
        %v5475 = vpop.f32.mrb[0].mxu0
        %v5476 = vadd.f32 0.0, %v5475
        %v5477 = vpop.f32.mrb[0].mxu0
        %5478 = vmatprep.mubr.f32.mxu0 0.0
        %5479 = vmatmul.mubr.f32.gmra.mrb[0].mxu0 %v3450
        %v5480 = vpop.f32.mrb[0].mxu0
        %v5481 = vadd.f32 0.0, %v5480
        %v5482 = vpop.f32.mrb[0].mxu0
        %5483 = vmatprep.mubr.f32.mxu0 0.0
        %5484 = vmatmul.mubr.f32.gmra.mrb[0].mxu0 %v3344
        %v5485 = vpop.f32.mrb[0].mxu0
        %v5486 = vadd.f32 0.0, %v5485
        %v5487 = vpop.f32.mrb[0].mxu0
        %5488 = vmatprep.mubr.f32.mxu0 0.0
        %5489 = vmatmul.mubr.f32.gmra.mrb[0].mxu0 %v3451
        %v5490 = vpop.f32.mrb[0].mxu0
        %v5491 = vadd.f32 0.0, %v5490
        %v5492 = vpop.f32.mrb[0].mxu0
        %5493 = vmatprep.mubr.f32.mxu0 0.0
        %5494 = vmatmul.mubr.f32.gmra.mrb[0].mxu0 %v3347
        %v5495 = vpop.f32.mrb[0].mxu0
        %v5496 = vadd.f32 0.0, %v5495
        %v5497 = vpop.f32.mrb[0].mxu0
        %5498 = vmatprep.mubr.f32.mxu0 0.0
        %5499 = vmatmul.mubr.f32.gmra.mrb[0].mxu0 %v3452
        %v5500 = vpop.f32.mrb[0].mxu0
        %v5501 = vadd.f32 0.0, %v5500
        %v5502 = vpop.f32.mrb[0].mxu0
        %5503 = vmatprep.mubr.f32.mxu0 0.0
        %5504 = vmatmul.mubr.f32.gmra.mrb[0].mxu0 %v3350
        %v5505 = vpop.f32.mrb[0].mxu0
        %v5506 = vadd.f32 0.0, %v5505
        %v5507 = vpop.f32.mrb[0].mxu0
        %5508 = vmatprep.mubr.f32.mxu0 0.0
        %5509 = vmatmul.mubr.f32.gmra.mrb[0].mxu0 %v3453
        %v5510 = vpop.f32.mrb[0].mxu0
        %v5511 = vadd.f32 0.0, %v5510
        %v5512 = vpop.f32.mrb[0].mxu0
        %5513 = vmatprep.mubr.f32.mxu0 0.0
        %5514 = vmatmul.mubr.f32.gmra.mrb[0].mxu0 %v3353
        %v5515 = vpop.f32.mrb[0].mxu0
        %v5516 = vadd.f32 0.0, %v5515
        %v5517 = vpop.f32.mrb[0].mxu0
        %5518 = vmatprep.mubr.f32.mxu0 0.0
        %5519 = vmatmul.mubr.f32.gmra.mrb[0].mxu0 %v3454
        %v5520 = vpop.f32.mrb[0].mxu0
        %v5521 = vadd.f32 0.0, %v5520
        %v5522 = vpop.f32.mrb[0].mxu0
        %5523 = vmatprep.mubr.f32.mxu0 0.0
        %5524 = vmatmul.mubr.f32.gmra.mrb[0].mxu0 %v3356
        %v5525 = vpop.f32.mrb[0].mxu0
        %v5526 = vadd.f32 0.0, %v5525
        %v5527 = vpop.f32.mrb[0].mxu0
        %5528 = vmatprep.mubr.f32.mxu0 0.0
        %5529 = vmatmul.mubr.f32.gmra.mrb[0].mxu0 %v3455
        %v5530 = vpop.f32.mrb[0].mxu0
        %v5531 = vadd.f32 0.0, %v5530
        %v5532 = vpop.f32.mrb[0].mxu0
        %5533 = vmatprep.mubr.f32.mxu0 0.0
        %5534 = vmatmul.mubr.f32.gmra.mrb[0].mxu0 %v3359
        %v5535 = vpop.f32.mrb[0].mxu0
        %v5536 = vadd.f32 0.0, %v5535
        %v5537 = vpop.f32.mrb[0].mxu0
        %5538 = vmatprep.mubr.f32.mxu0 0.0
        %5539 = vmatmul.mubr.f32.gmra.mrb[0].mxu0 %v3454
        %v5540 = vpop.f32.mrb[0].mxu0
        %v5541 = vadd.f32 0.0, %v5540
        %v5542 = vpop.f32.mrb[0].mxu0
        %5543 = vmatprep.mubr.f32.mxu0 0.0
        %5544 = vmatmul.mubr.f32.gmra.mrb[0].mxu0 %v3356
        %v5545 = vpop.f32.mrb[0].mxu0
        %v5546 = vadd.f32 0.0, %v5545
        %v5547 = vpop.f32.mrb[0].mxu0
        %5548 = vdwg.mxu0
        %v5549 = vadd.f32 %v5275, %v5391
        %v5550 = vadd.f32 %v5276, %v5396
        %v5551 = vadd.f32 %v5277, %v5401
        %v5552 = vadd.f32 %v5278, %v5406
        %v5553 = vadd.f32 %v5279, %v5411
        %v5554 = vadd.f32 %v5280, %v5416
        %v5555 = vadd.f32 %v5281, %v5421
        %v5556 = vadd.f32 %v5282, %v5426
        %v5557 = vadd.f32 %v5283, %v5431
        %v5558 = vadd.f32 %v5284, %v5436
        %v5559 = vadd.f32 %v5285, %v5441
        %v5560 = vadd.f32 %v5286, %v5446
        %v5561 = vadd.f32 %v5287, %v5451
        %v5562 = vadd.f32 %v5288, %v5456
        %v5563 = vadd.f32 %v5289, %v5461
        %v5564 = vadd.f32 %v5290, %v5466
        %v5565 = vadd.f32 %v5291, %v5471
        %v5566 = vadd.f32 %v5292, %v5476
        %v5567 = vadd.f32 %v5293, %v5481
        %v5568 = vadd.f32 %v5294, %v5486
        %v5569 = vadd.f32 %v5295, %v5491
        %v5570 = vadd.f32 %v5296, %v5496
        %v5571 = vadd.f32 %v5297, %v5501
        %v5572 = vadd.f32 %v5298, %v5506
        %v5573 = vadd.f32 %v5299, %v5511
        %v5574 = vadd.f32 %v5300, %v5516
        %v5575 = vadd.f32 %v5301, %v5521
        %v5576 = vadd.f32 %v5302, %v5526
        %v5577 = vadd.f32 %v5303, %v5531
        %v5578 = vadd.f32 %v5304, %v5536
        %v5579 = vadd.f32 %v5305, %v5541
        %v5580 = vadd.f32 %v5306, %v5546
        %s5581 = scalar_lea.vmem [#allocation2], 896
        %v5582 = vld [vmem:[%s5581] sm:$0xff]
        %v5583 = vld [vmem:[%s5581 + $0x8] sm:$0xff]
        %v5584 = vld [vmem:[%s5581 + $0x10] sm:$0xff]
        %v5585 = vld [vmem:[%s5581 + $0x18] sm:$0xff]
        %v5586 = vld [vmem:[%s5581 + $0x20] sm:$0xff]
        %v5587 = vld [vmem:[%s5581 + $0x28] sm:$0xff]
        %v5588 = vld [vmem:[%s5581 + $0x30] sm:$0xff]
        %v5589 = vld [vmem:[%s5581 + $0x38] sm:$0xff]
        %v5590 = vld [vmem:[%s5581 + $0x40] sm:$0xff]
        %v5591 = vld [vmem:[%s5581 + $0x48] sm:$0xff]
        %v5592 = vld [vmem:[%s5581 + $0x50] sm:$0xff]
        %v5593 = vld [vmem:[%s5581 + $0x58] sm:$0xff]
        %v5594 = vld [vmem:[%s5581 + $0x60] sm:$0xff]
        %v5595 = vld [vmem:[%s5581 + $0x68] sm:$0xff]
        %v5596 = vld [vmem:[%s5581 + $0x70] sm:$0xff]
        %v5597 = vld [vmem:[%s5581 + $0x78] sm:$0xff]
        %5598 = vmatprep.subr.mxu0 0.0
        %5599 = vmatpush1.msra.mxu0 %v5582
        %5600 = vmatprep.subr.mxu0 0.0
        %5601 = vmatpush1.msra.mxu0 %v5583
        %5602 = vmatprep.subr.mxu0 0.0
        %5603 = vmatpush1.msra.mxu0 %v5584
        %5604 = vmatprep.subr.mxu0 0.0
        %5605 = vmatpush1.msra.mxu0 %v5585
        %5606 = vmatprep.subr.mxu0 0.0
        %5607 = vmatpush1.msra.mxu0 %v5586
        %5608 = vmatprep.subr.mxu0 0.0
        %5609 = vmatpush1.msra.mxu0 %v5587
        %5610 = vmatprep.subr.mxu0 0.0
        %5611 = vmatpush1.msra.mxu0 %v5588
        %5612 = vmatprep.subr.mxu0 0.0
        %5613 = vmatpush1.msra.mxu0 %v5589
        %5614 = vmatprep.subr.mxu0 0.0
        %5615 = vmatpush1.msra.mxu0 %v5590
        %5616 = vmatprep.subr.mxu0 0.0
        %5617 = vmatpush1.msra.mxu0 %v5591
        %5618 = vmatprep.subr.mxu0 0.0
        %5619 = vmatpush1.msra.mxu0 %v5592
        %5620 = vmatprep.subr.mxu0 0.0
        %5621 = vmatpush1.msra.mxu0 %v5593
        %5622 = vmatprep.subr.mxu0 0.0
        %5623 = vmatpush1.msra.mxu0 %v5594
        %5624 = vmatprep.subr.mxu0 0.0
        %5625 = vmatpush1.msra.mxu0 %v5595
        %5626 = vmatprep.subr.mxu0 0.0
        %5627 = vmatpush1.msra.mxu0 %v5596
        %5628 = vmatprep.subr.mxu0 0.0
        %5629 = vmatpush1.msra.mxu0 %v5597
        %5630 = vmatprep.subr.mxu0 0.0
        %5631 = vmatpush1.msra.mxu0 0.0
        %5632 = vmatprep.subr.mxu0 0.0
        %5633 = vmatpush1.msra.mxu0 0.0
        %5634 = vmatprep.subr.mxu0 0.0
        %5635 = vmatpush1.msra.mxu0 0.0
        %5636 = vmatprep.subr.mxu0 0.0
        %5637 = vmatpush1.msra.mxu0 0.0
        %5638 = vmatprep.subr.mxu0 0.0
        %5639 = vmatpush1.msra.mxu0 0.0
        %5640 = vmatprep.subr.mxu0 0.0
        %5641 = vmatpush1.msra.mxu0 0.0
        %5642 = vmatprep.subr.mxu0 0.0
        %5643 = vmatpush1.msra.mxu0 0.0
        %5644 = vmatprep.subr.mxu0 0.0
        %5645 = vmatpush1.msra.mxu0 0.0
        %5646 = vmatprep.subr.mxu0 0.0
        %5647 = vmatpush1.msra.mxu0 0.0
        %5648 = vmatprep.subr.mxu0 0.0
        %5649 = vmatpush1.msra.mxu0 0.0
        %5650 = vmatprep.subr.mxu0 0.0
        %5651 = vmatpush1.msra.mxu0 0.0
        %5652 = vmatprep.subr.mxu0 0.0
        %5653 = vmatpush1.msra.mxu0 0.0
        %5654 = vmatprep.subr.mxu0 0.0
        %5655 = vmatpush1.msra.mxu0 0.0
        %5656 = vmatprep.subr.mxu0 0.0
        %5657 = vmatpush1.msra.mxu0 0.0
        %5658 = vmatprep.subr.mxu0 0.0
        %5659 = vmatpush1.msra.mxu0 0.0
        %5660 = vmatprep.subr.mxu0 0.0
        %5661 = vmatpush1.msra.mxu0 0.0
        %5662 = vmatprep.mubr.f32.mxu0 0.0
        %5663 = vmatmul.mubr.f32.gmra.mrb[0].mxu0 %v3520
        %v5664 = vpop.f32.mrb[0].mxu0
        %v5665 = vadd.f32 0.0, %v5664
        %v5666 = vpop.f32.mrb[0].mxu0
        %5667 = vmatprep.mubr.f32.mxu0 0.0
        %5668 = vmatmul.mubr.f32.gmra.mrb[0].mxu0 %v3522
        %v5669 = vpop.f32.mrb[0].mxu0
        %v5670 = vadd.f32 0.0, %v5669
        %v5671 = vpop.f32.mrb[0].mxu0
        %5672 = vmatprep.mubr.f32.mxu0 0.0
        %5673 = vmatmul.mubr.f32.gmra.mrb[0].mxu0 %v3530
        %v5674 = vpop.f32.mrb[0].mxu0
        %v5675 = vadd.f32 0.0, %v5674
        %v5676 = vpop.f32.mrb[0].mxu0
        %5677 = vmatprep.mubr.f32.mxu0 0.0
        %5678 = vmatmul.mubr.f32.gmra.mrb[0].mxu0 %v3532
        %v5679 = vpop.f32.mrb[0].mxu0
        %v5680 = vadd.f32 0.0, %v5679
        %v5681 = vpop.f32.mrb[0].mxu0
        %5682 = vmatprep.mubr.f32.mxu0 0.0
        %5683 = vmatmul.mubr.f32.gmra.mrb[0].mxu0 %v3535
        %v5684 = vpop.f32.mrb[0].mxu0
        %v5685 = vadd.f32 0.0, %v5684
        %v5686 = vpop.f32.mrb[0].mxu0
        %5687 = vmatprep.mubr.f32.mxu0 0.0
        %5688 = vmatmul.mubr.f32.gmra.mrb[0].mxu0 %v3537
        %v5689 = vpop.f32.mrb[0].mxu0
        %v5690 = vadd.f32 0.0, %v5689
        %v5691 = vpop.f32.mrb[0].mxu0
        %5692 = vmatprep.mubr.f32.mxu0 0.0
        %5693 = vmatmul.mubr.f32.gmra.mrb[0].mxu0 %v3540
        %v5694 = vpop.f32.mrb[0].mxu0
        %v5695 = vadd.f32 0.0, %v5694
        %v5696 = vpop.f32.mrb[0].mxu0
        %5697 = vmatprep.mubr.f32.mxu0 0.0
        %5698 = vmatmul.mubr.f32.gmra.mrb[0].mxu0 %v3542
        %v5699 = vpop.f32.mrb[0].mxu0
        %v5700 = vadd.f32 0.0, %v5699
        %v5701 = vpop.f32.mrb[0].mxu0
        %5702 = vmatprep.mubr.f32.mxu0 0.0
        %5703 = vmatmul.mubr.f32.gmra.mrb[0].mxu0 %v3545
        %v5704 = vpop.f32.mrb[0].mxu0
        %v5705 = vadd.f32 0.0, %v5704
        %v5706 = vpop.f32.mrb[0].mxu0
        %5707 = vmatprep.mubr.f32.mxu0 0.0
        %5708 = vmatmul.mubr.f32.gmra.mrb[0].mxu0 %v3547
        %v5709 = vpop.f32.mrb[0].mxu0
        %v5710 = vadd.f32 0.0, %v5709
        %v5711 = vpop.f32.mrb[0].mxu0
        %5712 = vmatprep.mubr.f32.mxu0 0.0
        %5713 = vmatmul.mubr.f32.gmra.mrb[0].mxu0 %v3550
        %v5714 = vpop.f32.mrb[0].mxu0
        %v5715 = vadd.f32 0.0, %v5714
        %v5716 = vpop.f32.mrb[0].mxu0
        %5717 = vmatprep.mubr.f32.mxu0 0.0
        %5718 = vmatmul.mubr.f32.gmra.mrb[0].mxu0 %v3552
        %v5719 = vpop.f32.mrb[0].mxu0
        %v5720 = vadd.f32 0.0, %v5719
        %v5721 = vpop.f32.mrb[0].mxu0
        %5722 = vmatprep.mubr.f32.mxu0 0.0
        %5723 = vmatmul.mubr.f32.gmra.mrb[0].mxu0 %v3555
        %v5724 = vpop.f32.mrb[0].mxu0
        %v5725 = vadd.f32 0.0, %v5724
        %v5726 = vpop.f32.mrb[0].mxu0
        %5727 = vmatprep.mubr.f32.mxu0 0.0
        %5728 = vmatmul.mubr.f32.gmra.mrb[0].mxu0 %v3557
        %v5729 = vpop.f32.mrb[0].mxu0
        %v5730 = vadd.f32 0.0, %v5729
        %v5731 = vpop.f32.mrb[0].mxu0
        %5732 = vmatprep.mubr.f32.mxu0 0.0
        %5733 = vmatmul.mubr.f32.gmra.mrb[0].mxu0 %v3560
        %v5734 = vpop.f32.mrb[0].mxu0
        %v5735 = vadd.f32 0.0, %v5734
        %v5736 = vpop.f32.mrb[0].mxu0
        %5737 = vmatprep.mubr.f32.mxu0 0.0
        %5738 = vmatmul.mubr.f32.gmra.mrb[0].mxu0 %v3562
        %v5739 = vpop.f32.mrb[0].mxu0
        %v5740 = vadd.f32 0.0, %v5739
        %v5741 = vpop.f32.mrb[0].mxu0
        %5742 = vmatprep.mubr.f32.mxu0 0.0
        %5743 = vmatmul.mubr.f32.gmra.mrb[0].mxu0 %v3565
        %v5744 = vpop.f32.mrb[0].mxu0
        %v5745 = vadd.f32 0.0, %v5744
        %v5746 = vpop.f32.mrb[0].mxu0
        %5747 = vmatprep.mubr.f32.mxu0 0.0
        %5748 = vmatmul.mubr.f32.gmra.mrb[0].mxu0 %v3567
        %v5749 = vpop.f32.mrb[0].mxu0
        %v5750 = vadd.f32 0.0, %v5749
        %v5751 = vpop.f32.mrb[0].mxu0
        %5752 = vmatprep.mubr.f32.mxu0 0.0
        %5753 = vmatmul.mubr.f32.gmra.mrb[0].mxu0 %v3570
        %v5754 = vpop.f32.mrb[0].mxu0
        %v5755 = vadd.f32 0.0, %v5754
        %v5756 = vpop.f32.mrb[0].mxu0
        %5757 = vmatprep.mubr.f32.mxu0 0.0
        %5758 = vmatmul.mubr.f32.gmra.mrb[0].mxu0 %v3572
        %v5759 = vpop.f32.mrb[0].mxu0
        %v5760 = vadd.f32 0.0, %v5759
        %v5761 = vpop.f32.mrb[0].mxu0
        %5762 = vmatprep.mubr.f32.mxu0 0.0
        %5763 = vmatmul.mubr.f32.gmra.mrb[0].mxu0 %v3575
        %v5764 = vpop.f32.mrb[0].mxu0
        %v5765 = vadd.f32 0.0, %v5764
        %v5766 = vpop.f32.mrb[0].mxu0
        %5767 = vmatprep.mubr.f32.mxu0 0.0
        %5768 = vmatmul.mubr.f32.gmra.mrb[0].mxu0 %v3577
        %v5769 = vpop.f32.mrb[0].mxu0
        %v5770 = vadd.f32 0.0, %v5769
        %v5771 = vpop.f32.mrb[0].mxu0
        %5772 = vmatprep.mubr.f32.mxu0 0.0
        %5773 = vmatmul.mubr.f32.gmra.mrb[0].mxu0 %v3580
        %v5774 = vpop.f32.mrb[0].mxu0
        %v5775 = vadd.f32 0.0, %v5774
        %v5776 = vpop.f32.mrb[0].mxu0
        %5777 = vmatprep.mubr.f32.mxu0 0.0
        %5778 = vmatmul.mubr.f32.gmra.mrb[0].mxu0 %v3582
        %v5779 = vpop.f32.mrb[0].mxu0
        %v5780 = vadd.f32 0.0, %v5779
        %v5781 = vpop.f32.mrb[0].mxu0
        %5782 = vmatprep.mubr.f32.mxu0 0.0
        %5783 = vmatmul.mubr.f32.gmra.mrb[0].mxu0 %v3585
        %v5784 = vpop.f32.mrb[0].mxu0
        %v5785 = vadd.f32 0.0, %v5784
        %v5786 = vpop.f32.mrb[0].mxu0
        %5787 = vmatprep.mubr.f32.mxu0 0.0
        %5788 = vmatmul.mubr.f32.gmra.mrb[0].mxu0 %v3587
        %v5789 = vpop.f32.mrb[0].mxu0
        %v5790 = vadd.f32 0.0, %v5789
        %v5791 = vpop.f32.mrb[0].mxu0
        %5792 = vmatprep.mubr.f32.mxu0 0.0
        %5793 = vmatmul.mubr.f32.gmra.mrb[0].mxu0 %v3590
        %v5794 = vpop.f32.mrb[0].mxu0
        %v5795 = vadd.f32 0.0, %v5794
        %v5796 = vpop.f32.mrb[0].mxu0
        %5797 = vmatprep.mubr.f32.mxu0 0.0
        %5798 = vmatmul.mubr.f32.gmra.mrb[0].mxu0 %v3592
        %v5799 = vpop.f32.mrb[0].mxu0
        %v5800 = vadd.f32 0.0, %v5799
        %v5801 = vpop.f32.mrb[0].mxu0
        %5802 = vmatprep.mubr.f32.mxu0 0.0
        %5803 = vmatmul.mubr.f32.gmra.mrb[0].mxu0 %v4747
        %v5804 = vpop.f32.mrb[0].mxu0
        %v5805 = vadd.f32 0.0, %v5804
        %v5806 = vpop.f32.mrb[0].mxu0
        %5807 = vmatprep.mubr.f32.mxu0 0.0
        %5808 = vmatmul.mubr.f32.gmra.mrb[0].mxu0 %v4749
        %v5809 = vpop.f32.mrb[0].mxu0
        %v5810 = vadd.f32 0.0, %v5809
        %v5811 = vpop.f32.mrb[0].mxu0
        %5812 = vmatprep.mubr.f32.mxu0 0.0
        %5813 = vmatmul.mubr.f32.gmra.mrb[0].mxu0 %v3590
        %v5814 = vpop.f32.mrb[0].mxu0
        %v5815 = vadd.f32 0.0, %v5814
        %v5816 = vpop.f32.mrb[0].mxu0
        %5817 = vmatprep.mubr.f32.mxu0 0.0
        %5818 = vmatmul.mubr.f32.gmra.mrb[0].mxu0 %v3592
        %v5819 = vpop.f32.mrb[0].mxu0
        %v5820 = vadd.f32 0.0, %v5819
        %v5821 = vpop.f32.mrb[0].mxu0
        %5822 = vdwg.mxu0
        %v5823 = vadd.f32 %v5549, %v5665
        %v5824 = vadd.f32 %v5550, %v5670
        %v5825 = vadd.f32 %v5551, %v5675
        %v5826 = vadd.f32 %v5552, %v5680
        %v5827 = vadd.f32 %v5553, %v5685
        %v5828 = vadd.f32 %v5554, %v5690
        %v5829 = vadd.f32 %v5555, %v5695
        %v5830 = vadd.f32 %v5556, %v5700
        %v5831 = vadd.f32 %v5557, %v5705
        %v5832 = vadd.f32 %v5558, %v5710
        %v5833 = vadd.f32 %v5559, %v5715
        %v5834 = vadd.f32 %v5560, %v5720
        %v5835 = vadd.f32 %v5561, %v5725
        %v5836 = vadd.f32 %v5562, %v5730
        %v5837 = vadd.f32 %v5563, %v5735
        %v5838 = vadd.f32 %v5564, %v5740
        %v5839 = vadd.f32 %v5565, %v5745
        %v5840 = vadd.f32 %v5566, %v5750
        %v5841 = vadd.f32 %v5567, %v5755
        %v5842 = vadd.f32 %v5568, %v5760
        %v5843 = vadd.f32 %v5569, %v5765
        %v5844 = vadd.f32 %v5570, %v5770
        %v5845 = vadd.f32 %v5571, %v5775
        %v5846 = vadd.f32 %v5572, %v5780
        %v5847 = vadd.f32 %v5573, %v5785
        %v5848 = vadd.f32 %v5574, %v5790
        %v5849 = vadd.f32 %v5575, %v5795
        %v5850 = vadd.f32 %v5576, %v5800
        %v5851 = vadd.f32 %v5577, %v5805
        %v5852 = vadd.f32 %v5578, %v5810
        %v5853 = vadd.f32 %v5579, %v5815
        %v5854 = vadd.f32 %v5580, %v5820
        %s5855 = scalar_lea.vmem [#allocation2], 1024
        %v5856 = vld [vmem:[%s5855] sm:$0xff]
        %v5857 = vld [vmem:[%s5855 + $0x8] sm:$0xff]
        %v5858 = vld [vmem:[%s5855 + $0x10] sm:$0xff]
        %v5859 = vld [vmem:[%s5855 + $0x18] sm:$0xff]
        %v5860 = vld [vmem:[%s5855 + $0x20] sm:$0xff]
        %v5861 = vld [vmem:[%s5855 + $0x28] sm:$0xff]
        %v5862 = vld [vmem:[%s5855 + $0x30] sm:$0xff]
        %v5863 = vld [vmem:[%s5855 + $0x38] sm:$0xff]
        %v5864 = vld [vmem:[%s5855 + $0x40] sm:$0xff]
        %v5865 = vld [vmem:[%s5855 + $0x48] sm:$0xff]
        %v5866 = vld [vmem:[%s5855 + $0x50] sm:$0xff]
        %v5867 = vld [vmem:[%s5855 + $0x58] sm:$0xff]
        %v5868 = vld [vmem:[%s5855 + $0x60] sm:$0xff]
        %v5869 = vld [vmem:[%s5855 + $0x68] sm:$0xff]
        %v5870 = vld [vmem:[%s5855 + $0x70] sm:$0xff]
        %v5871 = vld [vmem:[%s5855 + $0x78] sm:$0xff]
        %5872 = vmatprep.subr.mxu0 0.0
        %5873 = vmatpush1.msra.mxu0 %v5856
        %5874 = vmatprep.subr.mxu0 0.0
        %5875 = vmatpush1.msra.mxu0 %v5857
        %5876 = vmatprep.subr.mxu0 0.0
        %5877 = vmatpush1.msra.mxu0 %v5858
        %5878 = vmatprep.subr.mxu0 0.0
        %5879 = vmatpush1.msra.mxu0 %v5859
        %5880 = vmatprep.subr.mxu0 0.0
        %5881 = vmatpush1.msra.mxu0 %v5860
        %5882 = vmatprep.subr.mxu0 0.0
        %5883 = vmatpush1.msra.mxu0 %v5861
        %5884 = vmatprep.subr.mxu0 0.0
        %5885 = vmatpush1.msra.mxu0 %v5862
        %5886 = vmatprep.subr.mxu0 0.0
        %5887 = vmatpush1.msra.mxu0 %v5863
        %5888 = vmatprep.subr.mxu0 0.0
        %5889 = vmatpush1.msra.mxu0 %v5864
        %5890 = vmatprep.subr.mxu0 0.0
        %5891 = vmatpush1.msra.mxu0 %v5865
        %5892 = vmatprep.subr.mxu0 0.0
        %5893 = vmatpush1.msra.mxu0 %v5866
        %5894 = vmatprep.subr.mxu0 0.0
        %5895 = vmatpush1.msra.mxu0 %v5867
        %5896 = vmatprep.subr.mxu0 0.0
        %5897 = vmatpush1.msra.mxu0 %v5868
        %5898 = vmatprep.subr.mxu0 0.0
        %5899 = vmatpush1.msra.mxu0 %v5869
        %5900 = vmatprep.subr.mxu0 0.0
        %5901 = vmatpush1.msra.mxu0 %v5870
        %5902 = vmatprep.subr.mxu0 0.0
        %5903 = vmatpush1.msra.mxu0 %v5871
        %5904 = vmatprep.subr.mxu0 0.0
        %5905 = vmatpush1.msra.mxu0 0.0
        %5906 = vmatprep.subr.mxu0 0.0
        %5907 = vmatpush1.msra.mxu0 0.0
        %5908 = vmatprep.subr.mxu0 0.0
        %5909 = vmatpush1.msra.mxu0 0.0
        %5910 = vmatprep.subr.mxu0 0.0
        %5911 = vmatpush1.msra.mxu0 0.0
        %5912 = vmatprep.subr.mxu0 0.0
        %5913 = vmatpush1.msra.mxu0 0.0
        %5914 = vmatprep.subr.mxu0 0.0
        %5915 = vmatpush1.msra.mxu0 0.0
        %5916 = vmatprep.subr.mxu0 0.0
        %5917 = vmatpush1.msra.mxu0 0.0
        %5918 = vmatprep.subr.mxu0 0.0
        %5919 = vmatpush1.msra.mxu0 0.0
        %5920 = vmatprep.subr.mxu0 0.0
        %5921 = vmatpush1.msra.mxu0 0.0
        %5922 = vmatprep.subr.mxu0 0.0
        %5923 = vmatpush1.msra.mxu0 0.0
        %5924 = vmatprep.subr.mxu0 0.0
        %5925 = vmatpush1.msra.mxu0 0.0
        %5926 = vmatprep.subr.mxu0 0.0
        %5927 = vmatpush1.msra.mxu0 0.0
        %5928 = vmatprep.subr.mxu0 0.0
        %5929 = vmatpush1.msra.mxu0 0.0
        %5930 = vmatprep.subr.mxu0 0.0
        %5931 = vmatpush1.msra.mxu0 0.0
        %5932 = vmatprep.subr.mxu0 0.0
        %5933 = vmatpush1.msra.mxu0 0.0
        %5934 = vmatprep.subr.mxu0 0.0
        %5935 = vmatpush1.msra.mxu0 0.0
        %5936 = vmatprep.mubr.f32.mxu0 0.0
        %5937 = vmatmul.mubr.f32.gmra.mrb[0].mxu0 %v4092
        %v5938 = vpop.f32.mrb[0].mxu0
        %v5939 = vadd.f32 0.0, %v5938
        %v5940 = vpop.f32.mrb[0].mxu0
        %5941 = vmatprep.mubr.f32.mxu0 0.0
        %5942 = vmatmul.mubr.f32.gmra.mrb[0].mxu0 %v4094
        %v5943 = vpop.f32.mrb[0].mxu0
        %v5944 = vadd.f32 0.0, %v5943
        %v5945 = vpop.f32.mrb[0].mxu0
        %5946 = vmatprep.mubr.f32.mxu0 0.0
        %5947 = vmatmul.mubr.f32.gmra.mrb[0].mxu0 %v4102
        %v5948 = vpop.f32.mrb[0].mxu0
        %v5949 = vadd.f32 0.0, %v5948
        %v5950 = vpop.f32.mrb[0].mxu0
        %5951 = vmatprep.mubr.f32.mxu0 0.0
        %5952 = vmatmul.mubr.f32.gmra.mrb[0].mxu0 %v4104
        %v5953 = vpop.f32.mrb[0].mxu0
        %v5954 = vadd.f32 0.0, %v5953
        %v5955 = vpop.f32.mrb[0].mxu0
        %5956 = vmatprep.mubr.f32.mxu0 0.0
        %5957 = vmatmul.mubr.f32.gmra.mrb[0].mxu0 %v4107
        %v5958 = vpop.f32.mrb[0].mxu0
        %v5959 = vadd.f32 0.0, %v5958
        %v5960 = vpop.f32.mrb[0].mxu0
        %5961 = vmatprep.mubr.f32.mxu0 0.0
        %5962 = vmatmul.mubr.f32.gmra.mrb[0].mxu0 %v4109
        %v5963 = vpop.f32.mrb[0].mxu0
        %v5964 = vadd.f32 0.0, %v5963
        %v5965 = vpop.f32.mrb[0].mxu0
        %5966 = vmatprep.mubr.f32.mxu0 0.0
        %5967 = vmatmul.mubr.f32.gmra.mrb[0].mxu0 %v4112
        %v5968 = vpop.f32.mrb[0].mxu0
        %v5969 = vadd.f32 0.0, %v5968
        %v5970 = vpop.f32.mrb[0].mxu0
        %5971 = vmatprep.mubr.f32.mxu0 0.0
        %5972 = vmatmul.mubr.f32.gmra.mrb[0].mxu0 %v4114
        %v5973 = vpop.f32.mrb[0].mxu0
        %v5974 = vadd.f32 0.0, %v5973
        %v5975 = vpop.f32.mrb[0].mxu0
        %5976 = vmatprep.mubr.f32.mxu0 0.0
        %5977 = vmatmul.mubr.f32.gmra.mrb[0].mxu0 %v4117
        %v5978 = vpop.f32.mrb[0].mxu0
        %v5979 = vadd.f32 0.0, %v5978
        %v5980 = vpop.f32.mrb[0].mxu0
        %5981 = vmatprep.mubr.f32.mxu0 0.0
        %5982 = vmatmul.mubr.f32.gmra.mrb[0].mxu0 %v4119
        %v5983 = vpop.f32.mrb[0].mxu0
        %v5984 = vadd.f32 0.0, %v5983
        %v5985 = vpop.f32.mrb[0].mxu0
        %5986 = vmatprep.mubr.f32.mxu0 0.0
        %5987 = vmatmul.mubr.f32.gmra.mrb[0].mxu0 %v4122
        %v5988 = vpop.f32.mrb[0].mxu0
        %v5989 = vadd.f32 0.0, %v5988
        %v5990 = vpop.f32.mrb[0].mxu0
        %5991 = vmatprep.mubr.f32.mxu0 0.0
        %5992 = vmatmul.mubr.f32.gmra.mrb[0].mxu0 %v4124
        %v5993 = vpop.f32.mrb[0].mxu0
        %v5994 = vadd.f32 0.0, %v5993
        %v5995 = vpop.f32.mrb[0].mxu0
        %5996 = vmatprep.mubr.f32.mxu0 0.0
        %5997 = vmatmul.mubr.f32.gmra.mrb[0].mxu0 %v4127
        %v5998 = vpop.f32.mrb[0].mxu0
        %v5999 = vadd.f32 0.0, %v5998
        %v6000 = vpop.f32.mrb[0].mxu0
        %6001 = vmatprep.mubr.f32.mxu0 0.0
        %6002 = vmatmul.mubr.f32.gmra.mrb[0].mxu0 %v4129
        %v6003 = vpop.f32.mrb[0].mxu0
        %v6004 = vadd.f32 0.0, %v6003
        %v6005 = vpop.f32.mrb[0].mxu0
        %6006 = vmatprep.mubr.f32.mxu0 0.0
        %6007 = vmatmul.mubr.f32.gmra.mrb[0].mxu0 %v4132
        %v6008 = vpop.f32.mrb[0].mxu0
        %v6009 = vadd.f32 0.0, %v6008
        %v6010 = vpop.f32.mrb[0].mxu0
        %6011 = vmatprep.mubr.f32.mxu0 0.0
        %6012 = vmatmul.mubr.f32.gmra.mrb[0].mxu0 %v4134
        %v6013 = vpop.f32.mrb[0].mxu0
        %v6014 = vadd.f32 0.0, %v6013
        %v6015 = vpop.f32.mrb[0].mxu0
        %6016 = vmatprep.mubr.f32.mxu0 0.0
        %6017 = vmatmul.mubr.f32.gmra.mrb[0].mxu0 %v4137
        %v6018 = vpop.f32.mrb[0].mxu0
        %v6019 = vadd.f32 0.0, %v6018
        %v6020 = vpop.f32.mrb[0].mxu0
        %6021 = vmatprep.mubr.f32.mxu0 0.0
        %6022 = vmatmul.mubr.f32.gmra.mrb[0].mxu0 %v4139
        %v6023 = vpop.f32.mrb[0].mxu0
        %v6024 = vadd.f32 0.0, %v6023
        %v6025 = vpop.f32.mrb[0].mxu0
        %6026 = vmatprep.mubr.f32.mxu0 0.0
        %6027 = vmatmul.mubr.f32.gmra.mrb[0].mxu0 %v4142
        %v6028 = vpop.f32.mrb[0].mxu0
        %v6029 = vadd.f32 0.0, %v6028
        %v6030 = vpop.f32.mrb[0].mxu0
        %6031 = vmatprep.mubr.f32.mxu0 0.0
        %6032 = vmatmul.mubr.f32.gmra.mrb[0].mxu0 %v4144
        %v6033 = vpop.f32.mrb[0].mxu0
        %v6034 = vadd.f32 0.0, %v6033
        %v6035 = vpop.f32.mrb[0].mxu0
        %6036 = vmatprep.mubr.f32.mxu0 0.0
        %6037 = vmatmul.mubr.f32.gmra.mrb[0].mxu0 %v4147
        %v6038 = vpop.f32.mrb[0].mxu0
        %v6039 = vadd.f32 0.0, %v6038
        %v6040 = vpop.f32.mrb[0].mxu0
        %6041 = vmatprep.mubr.f32.mxu0 0.0
        %6042 = vmatmul.mubr.f32.gmra.mrb[0].mxu0 %v4149
        %v6043 = vpop.f32.mrb[0].mxu0
        %v6044 = vadd.f32 0.0, %v6043
        %v6045 = vpop.f32.mrb[0].mxu0
        %6046 = vmatprep.mubr.f32.mxu0 0.0
        %6047 = vmatmul.mubr.f32.gmra.mrb[0].mxu0 %v4152
        %v6048 = vpop.f32.mrb[0].mxu0
        %v6049 = vadd.f32 0.0, %v6048
        %v6050 = vpop.f32.mrb[0].mxu0
        %6051 = vmatprep.mubr.f32.mxu0 0.0
        %6052 = vmatmul.mubr.f32.gmra.mrb[0].mxu0 %v4154
        %v6053 = vpop.f32.mrb[0].mxu0
        %v6054 = vadd.f32 0.0, %v6053
        %v6055 = vpop.f32.mrb[0].mxu0
        %6056 = vmatprep.mubr.f32.mxu0 0.0
        %6057 = vmatmul.mubr.f32.gmra.mrb[0].mxu0 %v4157
        %v6058 = vpop.f32.mrb[0].mxu0
        %v6059 = vadd.f32 0.0, %v6058
        %v6060 = vpop.f32.mrb[0].mxu0
        %6061 = vmatprep.mubr.f32.mxu0 0.0
        %6062 = vmatmul.mubr.f32.gmra.mrb[0].mxu0 %v4159
        %v6063 = vpop.f32.mrb[0].mxu0
        %v6064 = vadd.f32 0.0, %v6063
        %v6065 = vpop.f32.mrb[0].mxu0
        %6066 = vmatprep.mubr.f32.mxu0 0.0
        %6067 = vmatmul.mubr.f32.gmra.mrb[0].mxu0 %v4162
        %v6068 = vpop.f32.mrb[0].mxu0
        %v6069 = vadd.f32 0.0, %v6068
        %v6070 = vpop.f32.mrb[0].mxu0
        %6071 = vmatprep.mubr.f32.mxu0 0.0
        %6072 = vmatmul.mubr.f32.gmra.mrb[0].mxu0 %v4164
        %v6073 = vpop.f32.mrb[0].mxu0
        %v6074 = vadd.f32 0.0, %v6073
        %v6075 = vpop.f32.mrb[0].mxu0
        %6076 = vmatprep.mubr.f32.mxu0 0.0
        %6077 = vmatmul.mubr.f32.gmra.mrb[0].mxu0 %v5028
        %v6078 = vpop.f32.mrb[0].mxu0
        %v6079 = vadd.f32 0.0, %v6078
        %v6080 = vpop.f32.mrb[0].mxu0
        %6081 = vmatprep.mubr.f32.mxu0 0.0
        %6082 = vmatmul.mubr.f32.gmra.mrb[0].mxu0 %v5030
        %v6083 = vpop.f32.mrb[0].mxu0
        %v6084 = vadd.f32 0.0, %v6083
        %v6085 = vpop.f32.mrb[0].mxu0
        %6086 = vmatprep.mubr.f32.mxu0 0.0
        %6087 = vmatmul.mubr.f32.gmra.mrb[0].mxu0 %v4162
        %v6088 = vpop.f32.mrb[0].mxu0
        %v6089 = vadd.f32 0.0, %v6088
        %v6090 = vpop.f32.mrb[0].mxu0
        %6091 = vmatprep.mubr.f32.mxu0 0.0
        %6092 = vmatmul.mubr.f32.gmra.mrb[0].mxu0 %v4164
        %v6093 = vpop.f32.mrb[0].mxu0
        %v6094 = vadd.f32 0.0, %v6093
        %v6095 = vpop.f32.mrb[0].mxu0
        %6096 = vdwg.mxu0
        %v6097 = vadd.f32 %v5823, %v5939
        %v6098 = vadd.f32 %v5824, %v5944
        %v6099 = vadd.f32 %v5825, %v5949
        %v6100 = vadd.f32 %v5826, %v5954
        %v6101 = vadd.f32 %v5827, %v5959
        %v6102 = vadd.f32 %v5828, %v5964
        %v6103 = vadd.f32 %v5829, %v5969
        %v6104 = vadd.f32 %v5830, %v5974
        %v6105 = vadd.f32 %v5831, %v5979
        %v6106 = vadd.f32 %v5832, %v5984
        %v6107 = vadd.f32 %v5833, %v5989
        %v6108 = vadd.f32 %v5834, %v5994
        %v6109 = vadd.f32 %v5835, %v5999
        %v6110 = vadd.f32 %v5836, %v6004
        %v6111 = vadd.f32 %v5837, %v6009
        %v6112 = vadd.f32 %v5838, %v6014
        %v6113 = vadd.f32 %v5839, %v6019
        %v6114 = vadd.f32 %v5840, %v6024
        %v6115 = vadd.f32 %v5841, %v6029
        %v6116 = vadd.f32 %v5842, %v6034
        %v6117 = vadd.f32 %v5843, %v6039
        %v6118 = vadd.f32 %v5844, %v6044
        %v6119 = vadd.f32 %v5845, %v6049
        %v6120 = vadd.f32 %v5846, %v6054
        %v6121 = vadd.f32 %v5847, %v6059
        %v6122 = vadd.f32 %v5848, %v6064
        %v6123 = vadd.f32 %v5849, %v6069
        %v6124 = vadd.f32 %v5850, %v6074
        %v6125 = vadd.f32 %v5851, %v6079
        %v6126 = vadd.f32 %v5852, %v6084
        %v6127 = vadd.f32 %v5853, %v6089
        %v6128 = vadd.f32 %v5854, %v6094
        %v6129 = vld [vmem:[%s4] sm:$0x1]
        %v6131 = vlaneseq
        %v6132 = vshrl.u32 %v6131, 7
        %v6133 = vsub.s32 0, %v6132
        %v6134 = vrot.slane %v6129, %v6133
        %v6136 = vadd.f32 %v6097, %v6134
        %v6137 = vadd.f32 %v6098, %v6134
        %v6138 = vadd.f32 %v6099, %v6134
        %v6139 = vadd.f32 %v6100, %v6134
        %v6140 = vadd.f32 %v6101, %v6134
        %v6141 = vadd.f32 %v6102, %v6134
        %v6142 = vadd.f32 %v6103, %v6134
        %v6143 = vadd.f32 %v6104, %v6134
        %v6144 = vadd.f32 %v6105, %v6134
        %v6145 = vadd.f32 %v6106, %v6134
        %v6146 = vadd.f32 %v6107, %v6134
        %v6147 = vadd.f32 %v6108, %v6134
        %v6148 = vadd.f32 %v6109, %v6134
        %v6149 = vadd.f32 %v6110, %v6134
        %v6150 = vadd.f32 %v6111, %v6134
        %v6151 = vadd.f32 %v6112, %v6134
        %v6152 = vadd.f32 %v6113, %v6134
        %v6153 = vadd.f32 %v6114, %v6134
        %v6154 = vadd.f32 %v6115, %v6134
        %v6155 = vadd.f32 %v6116, %v6134
        %v6156 = vadd.f32 %v6117, %v6134
        %v6157 = vadd.f32 %v6118, %v6134
        %v6158 = vadd.f32 %v6119, %v6134
        %v6159 = vadd.f32 %v6120, %v6134
        %v6160 = vadd.f32 %v6121, %v6134
        %v6161 = vadd.f32 %v6122, %v6134
        %v6162 = vadd.f32 %v6123, %v6134
        %v6163 = vadd.f32 %v6124, %v6134
        %v6164 = vadd.f32 %v6125, %v6134
        %v6165 = vadd.f32 %v6126, %v6134
        %v6166 = vadd.f32 %v6127, %v6134
        %v6167 = vadd.f32 %v6128, %v6134
        %v6168 = vadd.f32 %v6136, %v6137
        %v6169 = vadd.f32 %v6168, %v6138
        %v6170 = vadd.f32 %v6169, %v6139
        %v6171 = vadd.f32 %v6170, %v6140
        %v6172 = vadd.f32 %v6171, %v6141
        %v6173 = vadd.f32 %v6172, %v6142
        %v6174 = vadd.f32 %v6173, %v6143
        %v6175 = vadd.f32 %v6174, %v6144
        %v6176 = vadd.f32 %v6175, %v6145
        %v6177 = vadd.f32 %v6176, %v6146
        %v6178 = vadd.f32 %v6177, %v6147
        %v6179 = vadd.f32 %v6178, %v6148
        %v6180 = vadd.f32 %v6179, %v6149
        %v6181 = vadd.f32 %v6180, %v6150
        %v6182 = vadd.f32 %v6181, %v6151
        %v6183 = vadd.f32 %v6182, %v6152
        %v6184 = vadd.f32 %v6183, %v6153
        %v6185 = vadd.f32 %v6184, %v6154
        %v6186 = vadd.f32 %v6185, %v6155
        %v6187 = vadd.f32 %v6186, %v6156
        %v6188 = vadd.f32 %v6187, %v6157
        %v6189 = vadd.f32 %v6188, %v6158
        %v6190 = vadd.f32 %v6189, %v6159
        %v6191 = vadd.f32 %v6190, %v6160
        %v6192 = vadd.f32 %v6191, %v6161
        %v6193 = vadd.f32 %v6192, %v6162
        %v6194 = vadd.f32 %v6193, %v6163
        %v6195 = vadd.f32 %v6194, %v6164
        %v6196 = vadd.f32 %v6195, %v6165
        %v6197 = vadd.f32 %v6196, %v6166
        %v6198 = vadd.f32 %v6197, %v6167
        %v6199 = vrot.slane %v6198, 4
        %v6200 = vadd.f32 %v6198, %v6199
        %v6201 = vrot.slane %v6200, 2
        %v6202 = vadd.f32 %v6200, %v6201
        %v6203 = vrot.slane %v6202, 1
        %v6204 = vadd.f32 %v6202, %v6203
        %v6205 = vmul.f32 %v6204, %v3077
        %v6206 = vsub.f32 %v6136, %v6205
        %v6207 = vsub.f32 %v6137, %v6205
        %v6208 = vsub.f32 %v6138, %v6205
        %v6209 = vsub.f32 %v6139, %v6205
        %v6210 = vsub.f32 %v6140, %v6205
        %v6211 = vsub.f32 %v6141, %v6205
        %v6212 = vsub.f32 %v6142, %v6205
        %v6213 = vsub.f32 %v6143, %v6205
        %v6214 = vsub.f32 %v6144, %v6205
        %v6215 = vsub.f32 %v6145, %v6205
        %v6216 = vsub.f32 %v6146, %v6205
        %v6217 = vsub.f32 %v6147, %v6205
        %v6218 = vsub.f32 %v6148, %v6205
        %v6219 = vsub.f32 %v6149, %v6205
        %v6220 = vsub.f32 %v6150, %v6205
        %v6221 = vsub.f32 %v6151, %v6205
        %v6222 = vsub.f32 %v6152, %v6205
        %v6223 = vsub.f32 %v6153, %v6205
        %v6224 = vsub.f32 %v6154, %v6205
        %v6225 = vsub.f32 %v6155, %v6205
        %v6226 = vsub.f32 %v6156, %v6205
        %v6227 = vsub.f32 %v6157, %v6205
        %v6228 = vsub.f32 %v6158, %v6205
        %v6229 = vsub.f32 %v6159, %v6205
        %v6230 = vsub.f32 %v6160, %v6205
        %v6231 = vsub.f32 %v6161, %v6205
        %v6232 = vsub.f32 %v6162, %v6205
        %v6233 = vsub.f32 %v6163, %v6205
        %v6234 = vsub.f32 %v6164, %v6205
        %v6235 = vsub.f32 %v6165, %v6205
        %v6236 = vsub.f32 %v6166, %v6205
        %v6237 = vsub.f32 %v6167, %v6205
        %v6238 = vmul.f32 %v6206, %v6206
        %v6239 = vmul.f32 %v6207, %v6207
        %v6240 = vmul.f32 %v6208, %v6208
        %v6241 = vmul.f32 %v6209, %v6209
        %v6242 = vmul.f32 %v6210, %v6210
        %v6243 = vmul.f32 %v6211, %v6211
        %v6244 = vmul.f32 %v6212, %v6212
        %v6245 = vmul.f32 %v6213, %v6213
        %v6246 = vmul.f32 %v6214, %v6214
        %v6247 = vmul.f32 %v6215, %v6215
        %v6248 = vmul.f32 %v6216, %v6216
        %v6249 = vmul.f32 %v6217, %v6217
        %v6250 = vmul.f32 %v6218, %v6218
        %v6251 = vmul.f32 %v6219, %v6219
        %v6252 = vmul.f32 %v6220, %v6220
        %v6253 = vmul.f32 %v6221, %v6221
        %v6254 = vmul.f32 %v6222, %v6222
        %v6255 = vmul.f32 %v6223, %v6223
        %v6256 = vmul.f32 %v6224, %v6224
        %v6257 = vmul.f32 %v6225, %v6225
        %v6258 = vmul.f32 %v6226, %v6226
        %v6259 = vmul.f32 %v6227, %v6227
        %v6260 = vmul.f32 %v6228, %v6228
        %v6261 = vmul.f32 %v6229, %v6229
        %v6262 = vmul.f32 %v6230, %v6230
        %v6263 = vmul.f32 %v6231, %v6231
        %v6264 = vmul.f32 %v6232, %v6232
        %v6265 = vmul.f32 %v6233, %v6233
        %v6266 = vmul.f32 %v6234, %v6234
        %v6267 = vmul.f32 %v6235, %v6235
        %v6268 = vmul.f32 %v6236, %v6236
        %v6269 = vmul.f32 %v6237, %v6237
        %v6270 = vadd.f32 %v6238, %v6239
        %v6271 = vadd.f32 %v6270, %v6240
        %v6272 = vadd.f32 %v6271, %v6241
        %v6273 = vadd.f32 %v6272, %v6242
        %v6274 = vadd.f32 %v6273, %v6243
        %v6275 = vadd.f32 %v6274, %v6244
        %v6276 = vadd.f32 %v6275, %v6245
        %v6277 = vadd.f32 %v6276, %v6246
        %v6278 = vadd.f32 %v6277, %v6247
        %v6279 = vadd.f32 %v6278, %v6248
        %v6280 = vadd.f32 %v6279, %v6249
        %v6281 = vadd.f32 %v6280, %v6250
        %v6282 = vadd.f32 %v6281, %v6251
        %v6283 = vadd.f32 %v6282, %v6252
        %v6284 = vadd.f32 %v6283, %v6253
        %v6285 = vadd.f32 %v6284, %v6254
        %v6286 = vadd.f32 %v6285, %v6255
        %v6287 = vadd.f32 %v6286, %v6256
        %v6288 = vadd.f32 %v6287, %v6257
        %v6289 = vadd.f32 %v6288, %v6258
        %v6290 = vadd.f32 %v6289, %v6259
        %v6291 = vadd.f32 %v6290, %v6260
        %v6292 = vadd.f32 %v6291, %v6261
        %v6293 = vadd.f32 %v6292, %v6262
        %v6294 = vadd.f32 %v6293, %v6263
        %v6295 = vadd.f32 %v6294, %v6264
        %v6296 = vadd.f32 %v6295, %v6265
        %v6297 = vadd.f32 %v6296, %v6266
        %v6298 = vadd.f32 %v6297, %v6267
        %v6299 = vadd.f32 %v6298, %v6268
        %v6300 = vadd.f32 %v6299, %v6269
        %v6301 = vrot.slane %v6300, 4
        %v6302 = vadd.f32 %v6300, %v6301
        %v6303 = vrot.slane %v6302, 2
        %v6304 = vadd.f32 %v6302, %v6303
        %v6305 = vrot.slane %v6304, 1
        %v6306 = vadd.f32 %v6304, %v6305
        %v6307 = vmul.f32 %v6306, %v3077
        %v6308 = vadd.f32 %v6307, 1e-05
        %v6309 = vrsqrt.pop %v6308
        %v6310 = vmul.f32 %v6206, %v6309
        %v6311 = vmul.f32 %v6207, %v6309
        %v6312 = vmul.f32 %v6208, %v6309
        %v6313 = vmul.f32 %v6209, %v6309
        %v6314 = vmul.f32 %v6210, %v6309
        %v6315 = vmul.f32 %v6211, %v6309
        %v6316 = vmul.f32 %v6212, %v6309
        %v6317 = vmul.f32 %v6213, %v6309
        %v6318 = vmul.f32 %v6214, %v6309
        %v6319 = vmul.f32 %v6215, %v6309
        %v6320 = vmul.f32 %v6216, %v6309
        %v6321 = vmul.f32 %v6217, %v6309
        %v6322 = vmul.f32 %v6218, %v6309
        %v6323 = vmul.f32 %v6219, %v6309
        %v6324 = vmul.f32 %v6220, %v6309
        %v6325 = vmul.f32 %v6221, %v6309
        %v6326 = vmul.f32 %v6222, %v6309
        %v6327 = vmul.f32 %v6223, %v6309
        %v6328 = vmul.f32 %v6224, %v6309
        %v6329 = vmul.f32 %v6225, %v6309
        %v6330 = vmul.f32 %v6226, %v6309
        %v6331 = vmul.f32 %v6227, %v6309
        %v6332 = vmul.f32 %v6228, %v6309
        %v6333 = vmul.f32 %v6229, %v6309
        %v6334 = vmul.f32 %v6230, %v6309
        %v6335 = vmul.f32 %v6231, %v6309
        %v6336 = vmul.f32 %v6232, %v6309
        %v6337 = vmul.f32 %v6233, %v6309
        %v6338 = vmul.f32 %v6234, %v6309
        %v6339 = vmul.f32 %v6235, %v6309
        %v6340 = vmul.f32 %v6236, %v6309
        %v6341 = vmul.f32 %v6237, %v6309
        %v6342 = vadd.f32 %v364, %v6310
        %v6343 = vadd.f32 %v366, %v6311
        %v6344 = vadd.f32 %v369, %v6312
        %v6345 = vadd.f32 %v371, %v6313
        %v6346 = vadd.f32 %v374, %v6314
        %v6347 = vadd.f32 %v376, %v6315
        %v6348 = vadd.f32 %v379, %v6316
        %v6349 = vadd.f32 %v381, %v6317
        %v6350 = vadd.f32 %v384, %v6318
        %v6351 = vadd.f32 %v386, %v6319
        %v6352 = vadd.f32 %v389, %v6320
        %v6353 = vadd.f32 %v391, %v6321
        %v6354 = vadd.f32 %v394, %v6322
        %v6355 = vadd.f32 %v396, %v6323
        %v6356 = vadd.f32 %v399, %v6324
        %v6357 = vadd.f32 %v401, %v6325
        %v6358 = vadd.f32 %v404, %v6326
        %v6359 = vadd.f32 %v406, %v6327
        %v6360 = vadd.f32 %v409, %v6328
        %v6361 = vadd.f32 %v411, %v6329
        %v6362 = vadd.f32 %v414, %v6330
        %v6363 = vadd.f32 %v416, %v6331
        %v6364 = vadd.f32 %v419, %v6332
        %v6365 = vadd.f32 %v421, %v6333
        %v6366 = vadd.f32 %v424, %v6334
        %v6367 = vadd.f32 %v426, %v6335
        %v6368 = vadd.f32 %v429, %v6336
        %v6369 = vadd.f32 %v431, %v6337
        %v6370 = vadd.f32 %v434, %v6338
        %v6371 = vadd.f32 %v436, %v6339
        %v6372 = vadd.f32 %v1602, %v6340
        %v6373 = vadd.f32 %v1604, %v6341
        %6374 = vst [vmem:[%s232] sm:$0xff] %v6342
        %6375 = vst [vmem:[%s232 + $0x8] sm:$0xff] %v6343
        %6376 = vst [vmem:[%s232 + $0x10] sm:$0xff] %v6344
        %6377 = vst [vmem:[%s232 + $0x18] sm:$0xff] %v6345
        %6378 = vst [vmem:[%s232 + $0x20] sm:$0xff] %v6346
        %6379 = vst [vmem:[%s232 + $0x28] sm:$0xff] %v6347
        %6380 = vst [vmem:[%s232 + $0x30] sm:$0xff] %v6348
        %6381 = vst [vmem:[%s232 + $0x38] sm:$0xff] %v6349
        %6382 = vst [vmem:[%s232 + $0x40] sm:$0xff] %v6350
        %6383 = vst [vmem:[%s232 + $0x48] sm:$0xff] %v6351
        %6384 = vst [vmem:[%s232 + $0x50] sm:$0xff] %v6352
        %6385 = vst [vmem:[%s232 + $0x58] sm:$0xff] %v6353
        %6386 = vst [vmem:[%s232 + $0x60] sm:$0xff] %v6354
        %6387 = vst [vmem:[%s232 + $0x68] sm:$0xff] %v6355
        %6388 = vst [vmem:[%s232 + $0x70] sm:$0xff] %v6356
        %6389 = vst [vmem:[%s232 + $0x78] sm:$0xff] %v6357
        %6390 = vst [vmem:[%s232 + $0x80] sm:$0xff] %v6358
        %6391 = vst [vmem:[%s232 + $0x88] sm:$0xff] %v6359
        %6392 = vst [vmem:[%s232 + $0x90] sm:$0xff] %v6360
        %6393 = vst [vmem:[%s232 + $0x98] sm:$0xff] %v6361
        %6394 = vst [vmem:[%s232 + $0xa0] sm:$0xff] %v6362
        %6395 = vst [vmem:[%s232 + $0xa8] sm:$0xff] %v6363
        %6396 = vst [vmem:[%s232 + $0xb0] sm:$0xff] %v6364
        %6397 = vst [vmem:[%s232 + $0xb8] sm:$0xff] %v6365
        %6398 = vst [vmem:[%s232 + $0xc0] sm:$0xff] %v6366
        %6399 = vst [vmem:[%s232 + $0xc8] sm:$0xff] %v6367
        %6400 = vst [vmem:[%s232 + $0xd0] sm:$0xff] %v6368
        %6401 = vst [vmem:[%s232 + $0xd8] sm:$0xff] %v6369
        %6402 = vst [vmem:[%s232 + $0xe0] sm:$0xff] %v6370
        %6403 = vst [vmem:[%s232 + $0xe8] sm:$0xff] %v6371
        %6404 = vst [vmem:[%s232 + $0xf0] sm:$0xff] %v6372
        %6405 = vst [vmem:[%s232 + $0xf8] sm:$0xff] %v6373
        %s6406 = sand.u32 %s138, 1
        %s6407 = scalar_lea.sflag [#allocation4], %s6406
        %s6408 = sand.u32 %s138, 1
        %s6409 = smul.addr %s6408, 256
        %s6410 = scalar_lea.vmem [#allocation5], %s6409
        // Predicated region
        $region45: #{tpu_custom_call.1} parent=39 // pred_check
          %p6411 = pneg %p148
        $region46: #{tpu_custom_call.1} parent=39 // pred_check_branch
          %6413 = sbr.rel (%p6411) target = $region48
        $region47: #{tpu_custom_call.1} parent=39 // pred_region
          %s6415 = ssub.s32 4096, 4096
          %6416 = vsyncadd %s6407, %s6415
          %s6417 = smul.addr %s20, 32
          %s6418 = smul.addr %s6417, 128
          %s6419 = scalar_lea.hbm %s5, %s6418
          %s6420 = sshll.u32 %s6410, 4
          %s6421 = int_to_ptr.vmem [resolvable:$true] %s6420
          %6426 = dma.vmem_to_hbm [thread:$0]  %s6421, 4096, %s6419, %s6407, 128, 128, 8
        $region48: #{tpu_custom_call.1} parent=39 // pred_fallthru
          _
      $region40: #{tpu_custom_call.1} parent=5 // pred_fallthru
        _
      %p6427 = scmp.le.s32.totalorder 2, %s15
      // Predicated region
      $region49: #{tpu_custom_call.1} parent=5 // pred_check
        %p6428 = pneg %p6427
      $region50: #{tpu_custom_call.1} parent=5 // pred_check_branch
        %6430 = sbr.rel (%p6428) target = $region52
      $region51: #{tpu_custom_call.1} parent=5 // pred_region
        %s6431 = ssub.s32 %s15, 2
        // Predicated region
        $region53: #{tpu_custom_call.1} parent=51 // pred_check
          %p6432 = pneg %p154
        $region54: #{tpu_custom_call.1} parent=51 // pred_check_branch
          %6434 = sbr.rel (%p6432) target = $region56
        $region55: #{tpu_custom_call.1} parent=51 // pred_region
          %s6435 = sand.u32 %s139, 1
          %s6436 = scalar_lea.sflag [#allocation4], %s6435
          %s6437 = sand.u32 %s139, 1
          %s6438 = smul.addr %s6437, 256
          %s6439 = scalar_lea.vmem [#allocation5], %s6438
          %6440 = dma.done %s6436, 4096
        $region56: #{tpu_custom_call.1} parent=51 // pred_fallthru
          _
      $region52: #{tpu_custom_call.1} parent=5 // pred_fallthru
        _
    $region6: #{tpu_custom_call.1} parent=1 // loop_footer
      %s19 = sadd.s32 1, %s15
    $region7: #{tpu_custom_call.1} parent=1 // loop_footer_branch
      %14 = sbr.rel target = $region3
    $region8: #{tpu_custom_call.1} parent=1 // loop_exit
      _
    %6441 = vsyncpa [#allocation3], 1
    %s6442 = scalar_lea.sflag [#allocation3], 1
    %6443 = vsyncpa %s6442, 1
    %6444 = vsyncpa [#allocation4], 1
    %s6445 = scalar_lea.sflag [#allocation4], 1
    %6446 = vsyncpa %s6445, 1

</llo_original>
